<compile_context>
chip_gen: v6e
topology: v6e:2x2x1
jax: 0.10.0
libtpu: 0.0.40
codegen_flags: <defaults>
</compile_context>

<pallas_src>
import functools

import numpy as np

import jax
import jax.numpy as jnp
from jax.experimental import pallas as pl
from jax.experimental.pallas import tpu as pltpu


_PAD_LEFT = 128   # lane-aligned left padding for the stride-1 depthwise taps


# ----------------------------------------------------------------------------
# Static helpers (tap offsets / masks / layout permutation & pooling matrices)
# ----------------------------------------------------------------------------
def _stride2_tap_offsets(mo, wo):
    """Lane offset of each 3x3 tap in the parity-ordered full-res tensor.

    Input lanes are ordered q*Mo + n*Ho*Wo + (h//2)*Wo + (w//2) with
    q = 2*(h&1) + (w&1).  Output lane l = n*Ho*Wo + ho*Wo + wo.  Tap (kh, kw)
    of output l lives at lane l + offset(kh, kw) with a constant offset, so
    every tap is a static unit-stride lane slice (no im2col, no strided loads).
    """
    par = ((1, -1), (0, 0), (1, 0))          # (parity, within-parity delta)
    offs = []
    for kh in range(3):
        a, dh = par[kh]
        for kw in range(3):
            b, dw = par[kw]
            offs.append((2 * a + b) * mo + dh * wo + dw)
    return offs


def _make_mask_s2(n, ho, wo):
    """(9, N*Ho*Wo) validity mask for the stride-2 taps (zero padding)."""
    mo = n * ho * wo
    l = np.arange(mo)
    wo_i = l % wo
    ho_i = (l // wo) % ho
    m = np.ones((9, mo), np.float32)
    for kh in range(3):
        for kw in range(3):
            ok = np.ones((mo,), bool)
            if kh == 0:
                ok &= ho_i >= 1
            if kw == 0:
                ok &= wo_i >= 1
            m[kh * 3 + kw] = ok.astype(np.float32)
    return jnp.asarray(m)


def _make_mask_s1(n, h, w):
    """(9, N*H*W) validity mask for the stride-1 taps (zero padding)."""
    mm = n * h * w
    l = np.arange(mm)
    wi = l % w
    hi = (l // w) % h
    m = np.ones((9, mm), np.float32)
    for kh in range(3):
        for kw in range(3):
            ok = ((hi + kh - 1 >= 0) & (hi + kh - 1 < h)
                  & (wi + kw - 1 >= 0) & (wi + kw - 1 < w))
            m[kh * 3 + kw] = ok.astype(np.float32)
    return jnp.asarray(m)


def _parity_permute(x_cnhw):
    """(C, N, H, W) -> (C, 4*N*(H//2)*(W//2)) with lane order
    q*(N*Ho*Wo) + n*Ho*Wo + (h//2)*Wo + (w//2), q = 2*(h&1) + (w&1)."""
    c, n, h, w = x_cnhw.shape
    parts = [x_cnhw[:, :, a::2, b::2] for a in (0, 1) for b in (0, 1)]
    p = jnp.stack(parts, axis=1)             # (C, 4, N, H//2, W//2)
    return p.reshape(c, 4 * n * (h // 2) * (w // 2))


def _parity_perm_matrix(n, h, w):
    """(M, M) 0/1 matrix P such that (row-major act) @ P == parity-ordered act.

    Used to re-layout an activation in-kernel (exact for bf16 values since it
    only moves lanes), keeping every stride-2 tap a static lane slice."""
    ho, wo = h // 2, w // 2
    mo = n * ho * wo
    m = n * h * w
    l = np.arange(m)
    wi = l % w
    hi = (l // w) % h
    ni = l // (h * w)
    lp = (2 * (hi % 2) + (wi % 2)) * mo + ni * ho * wo + (hi // 2) * wo + (wi // 2)
    P = np.zeros((m, m), np.float32)
    P[l, lp] = 1.0
    return jnp.asarray(P, jnp.bfloat16)


def _pool_matrix(n, hw):
    """(n*hw, n) matrix averaging the hw pixels of each image (4x4 avg pool)."""
    P = np.zeros((n * hw, n), np.float32)
    for i in range(n):
        P[i * hw:(i + 1) * hw, i] = 1.0 / hw
    return jnp.asarray(P)


# ----------------------------------------------------------------------------
# The single fused Pallas kernel
# ----------------------------------------------------------------------------
def _shufflenet_kernel(*refs, geo):
    """Whole ShuffleNet forward in one kernel invocation.

    Activation layout is (channels, pixels): channels on sublanes, flattened
    N*H*W pixels on lanes, so every 1x1 conv is one MXU matmul with a
    lane-dense output and the depthwise 3x3 taps are static lane slices."""
    *ins, o_ref, act_s, pad_s = refs
    it = iter(ins)

    # ---- stem: 1x1 conv (3->24) + BN + ReLU on the parity-ordered input ----
    x = next(it)[...]                                       # (3, 4*Mo0) bf16
    sw, ss, sb = next(it)[...], next(it)[...], next(it)[...]
    act_f32 = jnp.maximum(
        jnp.dot(sw, x, preferred_element_type=jnp.float32) * ss + sb, 0.0)
    act_bf16 = act_f32.astype(jnp.bfloat16)

    branch_a = branch_b = None
    for bi, g in enumerate(geo):
        last = bi == len(geo) - 1
        if g["stride"] == 2:
            if bi > 0:
                # Re-layout row-major pixels -> parity order via a tiny bf16
                # permutation matmul (exact; keeps data in VMEM).
                P = next(it)[...]
                act_f32 = jnp.dot(act_bf16, P,
                                  preferred_element_type=jnp.float32)
                act_bf16 = act_f32.astype(jnp.bfloat16)
            w1_ref, s1_ref, b1_ref = next(it), next(it), next(it)
            w2_ref, s2_ref, b2_ref = next(it), next(it), next(it)
            w3_ref, s3_ref, b3_ref = next(it), next(it), next(it)
            m_ref = next(it)
            mo = g["mo"]

            # conv1 (grouped 1x1, shuffle folded into rows) + BN1 + ReLU
            y1 = jnp.dot(w1_ref[...], act_bf16,
                         preferred_element_type=jnp.float32)
            y1 = jnp.maximum(y1 * s1_ref[...] + b1_ref[...], 0.0)

            # depthwise 3x3 stride-2 + BN2 + ReLU and AvgPool2d(3,2,1)
            # shortcut, both as 9 masked static lane slices.
            mid = y1.shape[0]
            cin = act_f32.shape[0]
            acc = jnp.zeros((mid, mo), jnp.float32)
            res = jnp.zeros((cin, mo), jnp.float32)
            for k, off in enumerate(g["offsets"]):
                m = m_ref[k:k + 1, :]                        # (1, Mo)
                acc = acc + y1[:, off:off + mo] * m * w2_ref[:, k:k + 1]
                res = res + act_f32[:, off:off + mo] * m
            z = jnp.maximum(acc * s2_ref[...] + b2_ref[...], 0.0)
            res = jnp.maximum(res * (1.0 / 9.0), 0.0)        # relu(avgpool(x))

            # conv3 (grouped 1x1) + BN3; relu(cat([out, res])) per half.
            y3 = jnp.dot(w3_ref[...], z.astype(jnp.bfloat16),
                         preferred_element_type=jnp.float32)
            y3 = jnp.maximum(y3 * s3_ref[...] + b3_ref[...], 0.0)

            if last:
                branch_a, branch_b = y3, res
            else:
                # Assemble the channel concat in an aligned VMEM scratch.
                cb = y3.shape[0]
                act_s[0:cb, 0:mo] = y3
                act_s[cb:cb + cin, 0:mo] = res
                act_f32 = act_s[0:cb + cin, 0:mo]
                act_bf16 = act_f32.astype(jnp.bfloat16)
        else:
            # ---- stride-1 bottleneck (residual add) ----
            w1_ref, s1_ref, b1_ref = next(it), next(it), next(it)
            w2_ref, s2_ref, b2_ref = next(it), next(it), next(it)
            w3_ref, s3_ref, b3_ref = next(it), next(it), next(it)
            m_ref = next(it)
            M, W = g["m"], g["w"]
            cin = act_f32.shape[0]

            # Lane-pad the input inside a zeroed scratch so every tap is a
            # static unit-stride lane slice (out-of-image taps are masked).
            pad_s[...] = jnp.zeros(pad_s.shape, pad_s.dtype)
            pad_s[0:cin, _PAD_LEFT:_PAD_LEFT + M] = act_bf16
            xp = pad_s[0:cin, :]

            y1 = jnp.dot(w1_ref[...], xp, preferred_element_type=jnp.float32)
            y1 = jnp.maximum(y1 * s1_ref[...] + b1_ref[...], 0.0)
            mid = y1.shape[0]
            acc = jnp.zeros((mid, M), jnp.float32)
            for kh in range(3):
                for kw in range(3):
                    k = kh * 3 + kw
                    off = _PAD_LEFT + (kh - 1) * W + (kw - 1)
                    acc = acc + (y1[:, off:off + M] * m_ref[k:k + 1, :]
                                 * w2_ref[:, k:k + 1])
            z = jnp.maximum(acc * s2_ref[...] + b2_ref[...], 0.0)

            y3 = jnp.dot(w3_ref[...], z.astype(jnp.bfloat16),
                         preferred_element_type=jnp.float32)
            y3 = y3 * s3_ref[...] + b3_ref[...]
            act_f32 = jnp.maximum(y3 + act_f32, 0.0)          # residual + relu
            act_bf16 = act_f32.astype(jnp.bfloat16)
            if last:
                branch_a, branch_b = act_f32, None

    # ---- head: global 4x4 avg-pool (pooling matmul) + Linear ----
    pool = next(it)[...]                                      # (lanes, N)
    wl, bl = next(it)[...], next(it)[...]
    if branch_b is not None:
        cb = branch_a.shape[0]
        pa = jnp.dot(branch_a, pool, preferred_element_type=jnp.float32)
        pb = jnp.dot(branch_b, pool, preferred_element_type=jnp.float32)
        logits = (jnp.dot(wl[:, :cb], pa, preferred_element_type=jnp.float32)
                  + jnp.dot(wl[:, cb:], pb, preferred_element_type=jnp.float32)
                  + bl)
    else:
        p = jnp.dot(branch_a, pool, preferred_element_type=jnp.float32)
        logits = jnp.dot(wl, p, preferred_element_type=jnp.float32) + bl
    o_ref[...] = logits


# ----------------------------------------------------------------------------
# Parameter construction (deterministic, synthetic; BN folded to scale/bias)
# ----------------------------------------------------------------------------
def fold_bn(gamma, beta, mean, var, eps=1e-5):
    scale = gamma / jnp.sqrt(var + eps)
    bias = beta - mean * scale
    return scale, bias


def init_bn(key, c):
    k = jax.random.split(key, 4)
    gamma = 1.0 + 0.1 * jax.random.normal(k[0], (c,), jnp.float32)
    beta = 0.1 * jax.random.normal(k[1], (c,), jnp.float32)
    mean = 0.1 * jax.random.normal(k[2], (c,), jnp.float32)
    var = 1.0 + 0.1 * jnp.abs(jax.random.normal(k[3], (c,), jnp.float32))
    return fold_bn(gamma, beta, mean, var)


def shuffle_perm(c, g):
    j = np.arange(c)
    return (j % g) * (c // g) + (j // g)


def expand_grouped(w, cout, cin, g):
    """Grouped 1x1 conv weight (cout, cin//g) -> dense (cout, cin)."""
    cout_g, cin_g = cout // g, cin // g
    dense = jnp.zeros((cout, cin), jnp.float32)
    for gi in range(g):
        dense = dense.at[gi * cout_g:(gi + 1) * cout_g,
                         gi * cin_g:(gi + 1) * cin_g].set(
            w[gi * cout_g:(gi + 1) * cout_g, :])
    return dense


def init_bottleneck(key, in_planes, block_out, groups):
    mid = block_out // 4
    g1 = 1 if in_planes == 24 else groups
    k = jax.random.split(key, 6)
    conv1 = 0.1 * jax.random.normal(k[0], (mid, in_planes // g1), jnp.float32)
    conv2 = 0.1 * jax.random.normal(k[1], (mid, 3, 3), jnp.float32)   # depthwise
    conv3 = 0.1 * jax.random.normal(k[2], (block_out, mid // groups), jnp.float32)
    s1, b1 = init_bn(k[3], mid)
    s2, b2 = init_bn(k[4], mid)
    s3, b3 = init_bn(k[5], block_out)

    # Fold the channel shuffle (groups=g1) into conv1/bn1 output channels.
    w1 = expand_grouped(conv1, mid, in_planes, g1)
    perm = shuffle_perm(mid, g1)
    w1, s1, b1 = w1[perm, :], s1[perm], b1[perm]
    w3 = expand_grouped(conv3, block_out, mid, groups)
    return {
        "w1": w1.astype(jnp.bfloat16),
        "s1": s1.reshape(mid, 1), "b1": b1.reshape(mid, 1),
        "w2": conv2.reshape(mid, 9),                  # column index = kh*3+kw
        "s2": s2.reshape(mid, 1), "b2": b2.reshape(mid, 1),
        "w3": w3.astype(jnp.bfloat16),
        "s3": s3.reshape(block_out, 1), "b3": b3.reshape(block_out, 1),
    }


def build_shufflenet(key, cfg):
    out_planes, num_blocks, groups = (cfg["out_planes"], cfg["num_blocks"],
                                      cfg["groups"])
    keys = jax.random.split(key, 8)
    params = {}
    stem_w = 0.1 * jax.random.normal(keys[0], (24, 3), jnp.float32)
    ss, sb = init_bn(keys[1], 24)
    params["stem"] = {"W": stem_w.astype(jnp.bfloat16),
                      "s": ss.reshape(24, 1), "b": sb.reshape(24, 1)}

    params["blocks"], statics = [], []
    in_planes = 24
    bkeys = jax.random.split(keys[2], sum(num_blocks))
    bi = 0
    for op, nb in zip(out_planes, num_blocks):
        for i in range(nb):
            stride = 2 if i == 0 else 1
            cat_planes = in_planes if i == 0 else 0
            block_out = op - cat_planes
            params["blocks"].append(
                init_bottleneck(bkeys[bi], in_planes, block_out, groups))
            statics.append({"in": in_planes, "out": block_out, "stride": stride})
            in_planes = op
            bi += 1

    params["lin_W"] = 0.1 * jax.random.normal(keys[3], (10, out_planes[-1]),
                                              jnp.float32)
    params["lin_b"] = (0.1 * jax.random.normal(keys[4], (10,), jnp.float32)
                       ).reshape(10, 1)
    return params, statics


# ----------------------------------------------------------------------------
# Forward pass: assemble operands + one pallas_call
# ----------------------------------------------------------------------------
def make_forward(statics):
    assert statics[0]["stride"] == 2   # stem is fused into the first (s2) block

    def forward(params, x_nchw):
        N, _, H, W = x_nchw.shape
        img = jnp.transpose(x_nchw, (1, 0, 2, 3)).astype(jnp.bfloat16)  # (3,N,H,W)
        xin = _parity_permute(img)                                      # (3, N*H*W)

        inputs = [xin, params["stem"]["W"], params["stem"]["s"],
                  params["stem"]["b"]]
        geo = []
        h, w = H, W
        act_c, act_l = 8, 128
        pad_c, pad_l = 8, 2 * _PAD_LEFT + 128
        n_blocks = len(statics)
        for i, st in enumerate(statics):
            bp = params["blocks"][i]
            if st["stride"] == 2:
                ho, wo = h // 2, w // 2
                mo = N * ho * wo
                if i > 0:
                    inputs.append(_parity_perm_matrix(N, h, w))
                inputs += [bp["w1"], bp["s1"], bp["b1"],
                           bp["w2"], bp["s2"], bp["b2"],
                           bp["w3"], bp["s3"], bp["b3"],
                           _make_mask_s2(N, ho, wo)]
                geo.append({"stride": 2, "mo": mo,
                            "offsets": _stride2_tap_offsets(mo, wo)})
                if i < n_blocks - 1:
                    act_c = max(act_c, st["out"] + st["in"])
                    act_l = max(act_l, mo)
                h, w = ho, wo
            else:
                M = N * h * w
                inputs += [bp["w1"], bp["s1"], bp["b1"],
                           bp["w2"], bp["s2"], bp["b2"],
                           bp["w3"], bp["s3"], bp["b3"],
                           _make_mask_s1(N, h, w)]
                geo.append({"stride": 1, "m": M, "w": w})
                pad_c = max(pad_c, st["in"])
                pad_l = max(pad_l, 2 * _PAD_LEFT + M)

        # F.avg_pool2d(out, 4) on the final 4x4 map == per-image global mean,
        # realised as a matmul with a pooling matrix and fused with the Linear.
        inputs += [_pool_matrix(N, h * w), params["lin_W"], params["lin_b"]]

        kernel = functools.partial(_shufflenet_kernel, geo=tuple(geo))
        logits = pl.pallas_call(
            kernel,
            out_shape=jax.ShapeDtypeStruct((params["lin_W"].shape[0], N),
                                           jnp.float32),
            scratch_shapes=[pltpu.VMEM((act_c, act_l), jnp.float32),
                            pltpu.VMEM((pad_c, pad_l), jnp.bfloat16)],
        )(*inputs)
        return jnp.transpose(logits, (1, 0))          # logits (N, 10)

    return forward


# ----------------------------------------------------------------------------
if __name__ == "__main__":
    key = jax.random.PRNGKey(0)
    cfg = {"out_planes": [40, 80, 160], "num_blocks": [1, 2, 1], "groups": 2}

    pkey, xkey = jax.random.split(key)
    params, statics = build_shufflenet(pkey, cfg)

    # CIFAR-like input: 32x32 so the three stride-2 stages leave 4x4 before
    # the final avg_pool2d(., 4).
    x = jax.random.normal(xkey, (2, 3, 32, 32), jnp.float32)

    forward = jax.jit(make_forward(statics))
    logits = forward(params, x)
    jax.block_until_ready(logits)

    assert logits.shape == (2, 10)
    assert bool(jnp.all(jnp.isfinite(logits)))
    print("KERNEL_OK")
</pallas_src>

<mosaic_0001>
module attributes {stable_mosaic.version = 11 : i64} {
  func.func @_shufflenet_kernel(%arg0: memref<3x2048xbf16, #tpu.memory_space<vmem>>, %arg1: memref<24x3xbf16, #tpu.memory_space<vmem>>, %arg2: memref<24x1xf32, #tpu.memory_space<vmem>>, %arg3: memref<24x1xf32, #tpu.memory_space<vmem>>, %arg4: memref<4x24xbf16, #tpu.memory_space<vmem>>, %arg5: memref<4x1xf32, #tpu.memory_space<vmem>>, %arg6: memref<4x1xf32, #tpu.memory_space<vmem>>, %arg7: memref<4x9xf32, #tpu.memory_space<vmem>>, %arg8: memref<4x1xf32, #tpu.memory_space<vmem>>, %arg9: memref<4x1xf32, #tpu.memory_space<vmem>>, %arg10: memref<16x4xbf16, #tpu.memory_space<vmem>>, %arg11: memref<16x1xf32, #tpu.memory_space<vmem>>, %arg12: memref<16x1xf32, #tpu.memory_space<vmem>>, %arg13: memref<9x512xf32, #tpu.memory_space<vmem>>, %arg14: memref<512x512xbf16, #tpu.memory_space<vmem>>, %arg15: memref<10x40xbf16, #tpu.memory_space<vmem>>, %arg16: memref<10x1xf32, #tpu.memory_space<vmem>>, %arg17: memref<10x1xf32, #tpu.memory_space<vmem>>, %arg18: memref<10x9xf32, #tpu.memory_space<vmem>>, %arg19: memref<10x1xf32, #tpu.memory_space<vmem>>, %arg20: memref<10x1xf32, #tpu.memory_space<vmem>>, %arg21: memref<40x10xbf16, #tpu.memory_space<vmem>>, %arg22: memref<40x1xf32, #tpu.memory_space<vmem>>, %arg23: memref<40x1xf32, #tpu.memory_space<vmem>>, %arg24: memref<9x128xf32, #tpu.memory_space<vmem>>, %arg25: memref<20x80xbf16, #tpu.memory_space<vmem>>, %arg26: memref<20x1xf32, #tpu.memory_space<vmem>>, %arg27: memref<20x1xf32, #tpu.memory_space<vmem>>, %arg28: memref<20x9xf32, #tpu.memory_space<vmem>>, %arg29: memref<20x1xf32, #tpu.memory_space<vmem>>, %arg30: memref<20x1xf32, #tpu.memory_space<vmem>>, %arg31: memref<80x20xbf16, #tpu.memory_space<vmem>>, %arg32: memref<80x1xf32, #tpu.memory_space<vmem>>, %arg33: memref<80x1xf32, #tpu.memory_space<vmem>>, %arg34: memref<9x128xf32, #tpu.memory_space<vmem>>, %arg35: memref<128x128xbf16, #tpu.memory_space<vmem>>, %arg36: memref<20x80xbf16, #tpu.memory_space<vmem>>, %arg37: memref<20x1xf32, #tpu.memory_space<vmem>>, %arg38: memref<20x1xf32, #tpu.memory_space<vmem>>, %arg39: memref<20x9xf32, #tpu.memory_space<vmem>>, %arg40: memref<20x1xf32, #tpu.memory_space<vmem>>, %arg41: memref<20x1xf32, #tpu.memory_space<vmem>>, %arg42: memref<80x20xbf16, #tpu.memory_space<vmem>>, %arg43: memref<80x1xf32, #tpu.memory_space<vmem>>, %arg44: memref<80x1xf32, #tpu.memory_space<vmem>>, %arg45: memref<9x32xf32, #tpu.memory_space<vmem>>, %arg46: memref<32x2xf32, #tpu.memory_space<vmem>>, %arg47: memref<10x160xf32, #tpu.memory_space<vmem>>, %arg48: memref<10x1xf32, #tpu.memory_space<vmem>>, %arg49: memref<10x2xf32, #tpu.memory_space<vmem>>, %arg50: memref<80x512xf32, #tpu.memory_space<vmem>>, %arg51: memref<80x384xbf16, #tpu.memory_space<vmem>>) attributes {dimension_semantics = [], scalar_prefetch = 0 : i64, scratch_operands = 2 : i64, tpu.core_type = #tpu.core_type<tc>} {
    %c0 = arith.constant 0 : index
    %c0_0 = arith.constant 0 : index
    %0 = vector.load %arg0[%c0, %c0_0] : memref<3x2048xbf16, #tpu.memory_space<vmem>>, vector<3x2048xbf16>
    %c0_1 = arith.constant 0 : index
    %c0_2 = arith.constant 0 : index
    %1 = vector.load %arg1[%c0_1, %c0_2] : memref<24x3xbf16, #tpu.memory_space<vmem>>, vector<24x3xbf16>
    %c0_3 = arith.constant 0 : index
    %c0_4 = arith.constant 0 : index
    %2 = vector.load %arg2[%c0_3, %c0_4] : memref<24x1xf32, #tpu.memory_space<vmem>>, vector<24x1xf32>
    %c0_5 = arith.constant 0 : index
    %c0_6 = arith.constant 0 : index
    %3 = vector.load %arg3[%c0_5, %c0_6] : memref<24x1xf32, #tpu.memory_space<vmem>>, vector<24x1xf32>
    %cst = arith.constant dense<0.000000e+00> : vector<24x2048xf32>
    %4 = tpu.matmul %1, %0, %cst {dimension_numbers = #tpu.dot_dimension_numbers<[1], [0], [0], [1], [0, 0, 1, 1], [], []>} : vector<24x3xbf16>, vector<3x2048xbf16>, vector<24x2048xf32> -> vector<24x2048xf32>
    %5 = vector.broadcast %2 : vector<24x1xf32> to vector<24x2048xf32>
    %6 = arith.mulf %4, %5 : vector<24x2048xf32>
    %7 = vector.broadcast %3 : vector<24x1xf32> to vector<24x2048xf32>
    %8 = arith.addf %6, %7 : vector<24x2048xf32>
    %cst_7 = arith.constant 0.000000e+00 : f32
    %9 = vector.broadcast %cst_7 : f32 to vector<24x2048xf32>
    %10 = arith.maximumf %8, %9 : vector<24x2048xf32>
    %11 = arith.truncf %10 : vector<24x2048xf32> to vector<24x2048xbf16>
    %c0_8 = arith.constant 0 : index
    %c0_9 = arith.constant 0 : index
    %12 = vector.load %arg4[%c0_8, %c0_9] : memref<4x24xbf16, #tpu.memory_space<vmem>>, vector<4x24xbf16>
    %cst_10 = arith.constant dense<0.000000e+00> : vector<4x2048xf32>
    %13 = tpu.matmul %12, %11, %cst_10 {dimension_numbers = #tpu.dot_dimension_numbers<[1], [0], [0], [1], [0, 0, 1, 1], [], []>} : vector<4x24xbf16>, vector<24x2048xbf16>, vector<4x2048xf32> -> vector<4x2048xf32>
    %c0_11 = arith.constant 0 : index
    %c0_12 = arith.constant 0 : index
    %14 = vector.load %arg5[%c0_11, %c0_12] : memref<4x1xf32, #tpu.memory_space<vmem>>, vector<4x1xf32>
    %15 = vector.broadcast %14 : vector<4x1xf32> to vector<4x2048xf32>
    %16 = arith.mulf %13, %15 : vector<4x2048xf32>
    %c0_13 = arith.constant 0 : index
    %c0_14 = arith.constant 0 : index
    %17 = vector.load %arg6[%c0_13, %c0_14] : memref<4x1xf32, #tpu.memory_space<vmem>>, vector<4x1xf32>
    %18 = vector.broadcast %17 : vector<4x1xf32> to vector<4x2048xf32>
    %19 = arith.addf %16, %18 : vector<4x2048xf32>
    %cst_15 = arith.constant 0.000000e+00 : f32
    %20 = vector.broadcast %cst_15 : f32 to vector<4x2048xf32>
    %21 = arith.maximumf %19, %20 : vector<4x2048xf32>
    %cst_16 = arith.constant 0.000000e+00 : f32
    %22 = vector.broadcast %cst_16 : f32 to vector<4x512xf32>
    %cst_17 = arith.constant 0.000000e+00 : f32
    %23 = vector.broadcast %cst_17 : f32 to vector<24x512xf32>
    %c0_18 = arith.constant 0 : index
    %c0_19 = arith.constant 0 : index
    %24 = vector.load %arg13[%c0_18, %c0_19] : memref<9x512xf32, #tpu.memory_space<vmem>>, vector<1x512xf32>
    %25 = vector.extract_strided_slice %21 {offsets = [0, 1519], sizes = [4, 512], strides = [1, 1]} : vector<4x2048xf32> to vector<4x512xf32>
    %26 = vector.broadcast %24 : vector<1x512xf32> to vector<4x512xf32>
    %27 = arith.mulf %25, %26 : vector<4x512xf32>
    %c0_20 = arith.constant 0 : index
    %c0_21 = arith.constant 0 : index
    %28 = vector.load %arg7[%c0_20, %c0_21] : memref<4x9xf32, #tpu.memory_space<vmem>>, vector<4x1xf32>
    %29 = vector.broadcast %28 : vector<4x1xf32> to vector<4x512xf32>
    %30 = arith.mulf %27, %29 : vector<4x512xf32>
    %31 = arith.addf %22, %30 : vector<4x512xf32>
    %32 = vector.extract_strided_slice %10 {offsets = [0, 1519], sizes = [24, 512], strides = [1, 1]} : vector<24x2048xf32> to vector<24x512xf32>
    %33 = vector.broadcast %24 : vector<1x512xf32> to vector<24x512xf32>
    %34 = arith.mulf %32, %33 : vector<24x512xf32>
    %35 = arith.addf %23, %34 : vector<24x512xf32>
    %c1 = arith.constant 1 : index
    %c0_22 = arith.constant 0 : index
    %36 = vector.load %arg13[%c1, %c0_22] : memref<9x512xf32, #tpu.memory_space<vmem>>, vector<1x512xf32>
    %37 = vector.extract_strided_slice %21 {offsets = [0, 1008], sizes = [4, 512], strides = [1, 1]} : vector<4x2048xf32> to vector<4x512xf32>
    %38 = vector.broadcast %36 : vector<1x512xf32> to vector<4x512xf32>
    %39 = arith.mulf %37, %38 : vector<4x512xf32>
    %c0_23 = arith.constant 0 : index
    %c1_24 = arith.constant 1 : index
    %40 = vector.load %arg7[%c0_23, %c1_24] : memref<4x9xf32, #tpu.memory_space<vmem>>, vector<4x1xf32>
    %41 = vector.broadcast %40 : vector<4x1xf32> to vector<4x512xf32>
    %42 = arith.mulf %39, %41 : vector<4x512xf32>
    %43 = arith.addf %31, %42 : vector<4x512xf32>
    %44 = vector.extract_strided_slice %10 {offsets = [0, 1008], sizes = [24, 512], strides = [1, 1]} : vector<24x2048xf32> to vector<24x512xf32>
    %45 = vector.broadcast %36 : vector<1x512xf32> to vector<24x512xf32>
    %46 = arith.mulf %44, %45 : vector<24x512xf32>
    %47 = arith.addf %35, %46 : vector<24x512xf32>
    %c2 = arith.constant 2 : index
    %c0_25 = arith.constant 0 : index
    %48 = vector.load %arg13[%c2, %c0_25] : memref<9x512xf32, #tpu.memory_space<vmem>>, vector<1x512xf32>
    %49 = vector.extract_strided_slice %21 {offsets = [0, 1520], sizes = [4, 512], strides = [1, 1]} : vector<4x2048xf32> to vector<4x512xf32>
    %50 = vector.broadcast %48 : vector<1x512xf32> to vector<4x512xf32>
    %51 = arith.mulf %49, %50 : vector<4x512xf32>
    %c0_26 = arith.constant 0 : index
    %c2_27 = arith.constant 2 : index
    %52 = vector.load %arg7[%c0_26, %c2_27] : memref<4x9xf32, #tpu.memory_space<vmem>>, vector<4x1xf32>
    %53 = vector.broadcast %52 : vector<4x1xf32> to vector<4x512xf32>
    %54 = arith.mulf %51, %53 : vector<4x512xf32>
    %55 = arith.addf %43, %54 : vector<4x512xf32>
    %56 = vector.extract_strided_slice %10 {offsets = [0, 1520], sizes = [24, 512], strides = [1, 1]} : vector<24x2048xf32> to vector<24x512xf32>
    %57 = vector.broadcast %48 : vector<1x512xf32> to vector<24x512xf32>
    %58 = arith.mulf %56, %57 : vector<24x512xf32>
    %59 = arith.addf %47, %58 : vector<24x512xf32>
    %c3 = arith.constant 3 : index
    %c0_28 = arith.constant 0 : index
    %60 = vector.load %arg13[%c3, %c0_28] : memref<9x512xf32, #tpu.memory_space<vmem>>, vector<1x512xf32>
    %61 = vector.extract_strided_slice %21 {offsets = [0, 511], sizes = [4, 512], strides = [1, 1]} : vector<4x2048xf32> to vector<4x512xf32>
    %62 = vector.broadcast %60 : vector<1x512xf32> to vector<4x512xf32>
    %63 = arith.mulf %61, %62 : vector<4x512xf32>
    %c0_29 = arith.constant 0 : index
    %c3_30 = arith.constant 3 : index
    %64 = vector.load %arg7[%c0_29, %c3_30] : memref<4x9xf32, #tpu.memory_space<vmem>>, vector<4x1xf32>
    %65 = vector.broadcast %64 : vector<4x1xf32> to vector<4x512xf32>
    %66 = arith.mulf %63, %65 : vector<4x512xf32>
    %67 = arith.addf %55, %66 : vector<4x512xf32>
    %68 = vector.extract_strided_slice %10 {offsets = [0, 511], sizes = [24, 512], strides = [1, 1]} : vector<24x2048xf32> to vector<24x512xf32>
    %69 = vector.broadcast %60 : vector<1x512xf32> to vector<24x512xf32>
    %70 = arith.mulf %68, %69 : vector<24x512xf32>
    %71 = arith.addf %59, %70 : vector<24x512xf32>
    %c4 = arith.constant 4 : index
    %c0_31 = arith.constant 0 : index
    %72 = vector.load %arg13[%c4, %c0_31] : memref<9x512xf32, #tpu.memory_space<vmem>>, vector<1x512xf32>
    %73 = vector.extract_strided_slice %21 {offsets = [0, 0], sizes = [4, 512], strides = [1, 1]} : vector<4x2048xf32> to vector<4x512xf32>
    %74 = vector.broadcast %72 : vector<1x512xf32> to vector<4x512xf32>
    %75 = arith.mulf %73, %74 : vector<4x512xf32>
    %c0_32 = arith.constant 0 : index
    %c4_33 = arith.constant 4 : index
    %76 = vector.load %arg7[%c0_32, %c4_33] : memref<4x9xf32, #tpu.memory_space<vmem>>, vector<4x1xf32>
    %77 = vector.broadcast %76 : vector<4x1xf32> to vector<4x512xf32>
    %78 = arith.mulf %75, %77 : vector<4x512xf32>
    %79 = arith.addf %67, %78 : vector<4x512xf32>
    %80 = vector.extract_strided_slice %10 {offsets = [0, 0], sizes = [24, 512], strides = [1, 1]} : vector<24x2048xf32> to vector<24x512xf32>
    %81 = vector.broadcast %72 : vector<1x512xf32> to vector<24x512xf32>
    %82 = arith.mulf %80, %81 : vector<24x512xf32>
    %83 = arith.addf %71, %82 : vector<24x512xf32>
    %c5 = arith.constant 5 : index
    %c0_34 = arith.constant 0 : index
    %84 = vector.load %arg13[%c5, %c0_34] : memref<9x512xf32, #tpu.memory_space<vmem>>, vector<1x512xf32>
    %85 = vector.extract_strided_slice %21 {offsets = [0, 512], sizes = [4, 512], strides = [1, 1]} : vector<4x2048xf32> to vector<4x512xf32>
    %86 = vector.broadcast %84 : vector<1x512xf32> to vector<4x512xf32>
    %87 = arith.mulf %85, %86 : vector<4x512xf32>
    %c0_35 = arith.constant 0 : index
    %c5_36 = arith.constant 5 : index
    %88 = vector.load %arg7[%c0_35, %c5_36] : memref<4x9xf32, #tpu.memory_space<vmem>>, vector<4x1xf32>
    %89 = vector.broadcast %88 : vector<4x1xf32> to vector<4x512xf32>
    %90 = arith.mulf %87, %89 : vector<4x512xf32>
    %91 = arith.addf %79, %90 : vector<4x512xf32>
    %92 = vector.extract_strided_slice %10 {offsets = [0, 512], sizes = [24, 512], strides = [1, 1]} : vector<24x2048xf32> to vector<24x512xf32>
    %93 = vector.broadcast %84 : vector<1x512xf32> to vector<24x512xf32>
    %94 = arith.mulf %92, %93 : vector<24x512xf32>
    %95 = arith.addf %83, %94 : vector<24x512xf32>
    %c6 = arith.constant 6 : index
    %c0_37 = arith.constant 0 : index
    %96 = vector.load %arg13[%c6, %c0_37] : memref<9x512xf32, #tpu.memory_space<vmem>>, vector<1x512xf32>
    %97 = vector.extract_strided_slice %21 {offsets = [0, 1535], sizes = [4, 512], strides = [1, 1]} : vector<4x2048xf32> to vector<4x512xf32>
    %98 = vector.broadcast %96 : vector<1x512xf32> to vector<4x512xf32>
    %99 = arith.mulf %97, %98 : vector<4x512xf32>
    %c0_38 = arith.constant 0 : index
    %c6_39 = arith.constant 6 : index
    %100 = vector.load %arg7[%c0_38, %c6_39] : memref<4x9xf32, #tpu.memory_space<vmem>>, vector<4x1xf32>
    %101 = vector.broadcast %100 : vector<4x1xf32> to vector<4x512xf32>
    %102 = arith.mulf %99, %101 : vector<4x512xf32>
    %103 = arith.addf %91, %102 : vector<4x512xf32>
    %104 = vector.extract_strided_slice %10 {offsets = [0, 1535], sizes = [24, 512], strides = [1, 1]} : vector<24x2048xf32> to vector<24x512xf32>
    %105 = vector.broadcast %96 : vector<1x512xf32> to vector<24x512xf32>
    %106 = arith.mulf %104, %105 : vector<24x512xf32>
    %107 = arith.addf %95, %106 : vector<24x512xf32>
    %c7 = arith.constant 7 : index
    %c0_40 = arith.constant 0 : index
    %108 = vector.load %arg13[%c7, %c0_40] : memref<9x512xf32, #tpu.memory_space<vmem>>, vector<1x512xf32>
    %109 = vector.extract_strided_slice %21 {offsets = [0, 1024], sizes = [4, 512], strides = [1, 1]} : vector<4x2048xf32> to vector<4x512xf32>
    %110 = vector.broadcast %108 : vector<1x512xf32> to vector<4x512xf32>
    %111 = arith.mulf %109, %110 : vector<4x512xf32>
    %c0_41 = arith.constant 0 : index
    %c7_42 = arith.constant 7 : index
    %112 = vector.load %arg7[%c0_41, %c7_42] : memref<4x9xf32, #tpu.memory_space<vmem>>, vector<4x1xf32>
    %113 = vector.broadcast %112 : vector<4x1xf32> to vector<4x512xf32>
    %114 = arith.mulf %111, %113 : vector<4x512xf32>
    %115 = arith.addf %103, %114 : vector<4x512xf32>
    %116 = vector.extract_strided_slice %10 {offsets = [0, 1024], sizes = [24, 512], strides = [1, 1]} : vector<24x2048xf32> to vector<24x512xf32>
    %117 = vector.broadcast %108 : vector<1x512xf32> to vector<24x512xf32>
    %118 = arith.mulf %116, %117 : vector<24x512xf32>
    %119 = arith.addf %107, %118 : vector<24x512xf32>
    %c8 = arith.constant 8 : index
    %c0_43 = arith.constant 0 : index
    %120 = vector.load %arg13[%c8, %c0_43] : memref<9x512xf32, #tpu.memory_space<vmem>>, vector<1x512xf32>
    %121 = vector.extract_strided_slice %21 {offsets = [0, 1536], sizes = [4, 512], strides = [1, 1]} : vector<4x2048xf32> to vector<4x512xf32>
    %122 = vector.broadcast %120 : vector<1x512xf32> to vector<4x512xf32>
    %123 = arith.mulf %121, %122 : vector<4x512xf32>
    %c0_44 = arith.constant 0 : index
    %c8_45 = arith.constant 8 : index
    %124 = vector.load %arg7[%c0_44, %c8_45] : memref<4x9xf32, #tpu.memory_space<vmem>>, vector<4x1xf32>
    %125 = vector.broadcast %124 : vector<4x1xf32> to vector<4x512xf32>
    %126 = arith.mulf %123, %125 : vector<4x512xf32>
    %127 = arith.addf %115, %126 : vector<4x512xf32>
    %128 = vector.extract_strided_slice %10 {offsets = [0, 1536], sizes = [24, 512], strides = [1, 1]} : vector<24x2048xf32> to vector<24x512xf32>
    %129 = vector.broadcast %120 : vector<1x512xf32> to vector<24x512xf32>
    %130 = arith.mulf %128, %129 : vector<24x512xf32>
    %131 = arith.addf %119, %130 : vector<24x512xf32>
    %c0_46 = arith.constant 0 : index
    %c0_47 = arith.constant 0 : index
    %132 = vector.load %arg8[%c0_46, %c0_47] : memref<4x1xf32, #tpu.memory_space<vmem>>, vector<4x1xf32>
    %133 = vector.broadcast %132 : vector<4x1xf32> to vector<4x512xf32>
    %134 = arith.mulf %127, %133 : vector<4x512xf32>
    %c0_48 = arith.constant 0 : index
    %c0_49 = arith.constant 0 : index
    %135 = vector.load %arg9[%c0_48, %c0_49] : memref<4x1xf32, #tpu.memory_space<vmem>>, vector<4x1xf32>
    %136 = vector.broadcast %135 : vector<4x1xf32> to vector<4x512xf32>
    %137 = arith.addf %134, %136 : vector<4x512xf32>
    %cst_50 = arith.constant 0.000000e+00 : f32
    %138 = vector.broadcast %cst_50 : f32 to vector<4x512xf32>
    %139 = arith.maximumf %137, %138 : vector<4x512xf32>
    %cst_51 = arith.constant 0.111111112 : f32
    %140 = vector.broadcast %cst_51 : f32 to vector<24x512xf32>
    %141 = arith.mulf %131, %140 : vector<24x512xf32>
    %cst_52 = arith.constant 0.000000e+00 : f32
    %142 = vector.broadcast %cst_52 : f32 to vector<24x512xf32>
    %143 = arith.maximumf %141, %142 : vector<24x512xf32>
    %c0_53 = arith.constant 0 : index
    %c0_54 = arith.constant 0 : index
    %144 = vector.load %arg10[%c0_53, %c0_54] : memref<16x4xbf16, #tpu.memory_space<vmem>>, vector<16x4xbf16>
    %145 = arith.truncf %139 : vector<4x512xf32> to vector<4x512xbf16>
    %cst_55 = arith.constant dense<0.000000e+00> : vector<16x512xf32>
    %146 = tpu.matmul %144, %145, %cst_55 {dimension_numbers = #tpu.dot_dimension_numbers<[1], [0], [0], [1], [0, 0, 1, 1], [], []>} : vector<16x4xbf16>, vector<4x512xbf16>, vector<16x512xf32> -> vector<16x512xf32>
    %c0_56 = arith.constant 0 : index
    %c0_57 = arith.constant 0 : index
    %147 = vector.load %arg11[%c0_56, %c0_57] : memref<16x1xf32, #tpu.memory_space<vmem>>, vector<16x1xf32>
    %148 = vector.broadcast %147 : vector<16x1xf32> to vector<16x512xf32>
    %149 = arith.mulf %146, %148 : vector<16x512xf32>
    %c0_58 = arith.constant 0 : index
    %c0_59 = arith.constant 0 : index
    %150 = vector.load %arg12[%c0_58, %c0_59] : memref<16x1xf32, #tpu.memory_space<vmem>>, vector<16x1xf32>
    %151 = vector.broadcast %150 : vector<16x1xf32> to vector<16x512xf32>
    %152 = arith.addf %149, %151 : vector<16x512xf32>
    %cst_60 = arith.constant 0.000000e+00 : f32
    %153 = vector.broadcast %cst_60 : f32 to vector<16x512xf32>
    %154 = arith.maximumf %152, %153 : vector<16x512xf32>
    %c0_61 = arith.constant 0 : index
    %c0_62 = arith.constant 0 : index
    %155 = vector.load %arg50[%c0_61, %c0_62] : memref<80x512xf32, #tpu.memory_space<vmem>>, vector<16x512xf32>
    tpu.vector_store %arg50[%c0_61, %c0_62], %154 {strides = array<i32>} : memref<80x512xf32, #tpu.memory_space<vmem>>, vector<16x512xf32>,
    %c16 = arith.constant 16 : index
    %c0_63 = arith.constant 0 : index
    %156 = vector.load %arg50[%c16, %c0_63] : memref<80x512xf32, #tpu.memory_space<vmem>>, vector<24x512xf32>
    tpu.vector_store %arg50[%c16, %c0_63], %143 {strides = array<i32>} : memref<80x512xf32, #tpu.memory_space<vmem>>, vector<24x512xf32>,
    %c0_64 = arith.constant 0 : index
    %c0_65 = arith.constant 0 : index
    %157 = vector.load %arg50[%c0_64, %c0_65] : memref<80x512xf32, #tpu.memory_space<vmem>>, vector<40x512xf32>
    %158 = arith.truncf %157 : vector<40x512xf32> to vector<40x512xbf16>
    %c0_66 = arith.constant 0 : index
    %c0_67 = arith.constant 0 : index
    %159 = vector.load %arg14[%c0_66, %c0_67] : memref<512x512xbf16, #tpu.memory_space<vmem>>, vector<512x512xbf16>
    %cst_68 = arith.constant dense<0.000000e+00> : vector<40x512xf32>
    %160 = tpu.matmul %158, %159, %cst_68 {dimension_numbers = #tpu.dot_dimension_numbers<[1], [0], [0], [1], [0, 0, 1, 1], [], []>} : vector<40x512xbf16>, vector<512x512xbf16>, vector<40x512xf32> -> vector<40x512xf32>
    %161 = arith.truncf %160 : vector<40x512xf32> to vector<40x512xbf16>
    %c0_69 = arith.constant 0 : index
    %c0_70 = arith.constant 0 : index
    %162 = vector.load %arg15[%c0_69, %c0_70] : memref<10x40xbf16, #tpu.memory_space<vmem>>, vector<10x40xbf16>
    %cst_71 = arith.constant dense<0.000000e+00> : vector<10x512xf32>
    %163 = tpu.matmul %162, %161, %cst_71 {dimension_numbers = #tpu.dot_dimension_numbers<[1], [0], [0], [1], [0, 0, 1, 1], [], []>} : vector<10x40xbf16>, vector<40x512xbf16>, vector<10x512xf32> -> vector<10x512xf32>
    %c0_72 = arith.constant 0 : index
    %c0_73 = arith.constant 0 : index
    %164 = vector.load %arg16[%c0_72, %c0_73] : memref<10x1xf32, #tpu.memory_space<vmem>>, vector<10x1xf32>
    %165 = vector.broadcast %164 : vector<10x1xf32> to vector<10x512xf32>
    %166 = arith.mulf %163, %165 : vector<10x512xf32>
    %c0_74 = arith.constant 0 : index
    %c0_75 = arith.constant 0 : index
    %167 = vector.load %arg17[%c0_74, %c0_75] : memref<10x1xf32, #tpu.memory_space<vmem>>, vector<10x1xf32>
    %168 = vector.broadcast %167 : vector<10x1xf32> to vector<10x512xf32>
    %169 = arith.addf %166, %168 : vector<10x512xf32>
    %cst_76 = arith.constant 0.000000e+00 : f32
    %170 = vector.broadcast %cst_76 : f32 to vector<10x512xf32>
    %171 = arith.maximumf %169, %170 : vector<10x512xf32>
    %cst_77 = arith.constant 0.000000e+00 : f32
    %172 = vector.broadcast %cst_77 : f32 to vector<10x128xf32>
    %cst_78 = arith.constant 0.000000e+00 : f32
    %173 = vector.broadcast %cst_78 : f32 to vector<40x128xf32>
    %c0_79 = arith.constant 0 : index
    %c0_80 = arith.constant 0 : index
    %174 = vector.load %arg24[%c0_79, %c0_80] : memref<9x128xf32, #tpu.memory_space<vmem>>, vector<1x128xf32>
    %175 = vector.extract_strided_slice %171 {offsets = [0, 375], sizes = [10, 128], strides = [1, 1]} : vector<10x512xf32> to vector<10x128xf32>
    %176 = vector.broadcast %174 : vector<1x128xf32> to vector<10x128xf32>
    %177 = arith.mulf %175, %176 : vector<10x128xf32>
    %c0_81 = arith.constant 0 : index
    %c0_82 = arith.constant 0 : index
    %178 = vector.load %arg18[%c0_81, %c0_82] : memref<10x9xf32, #tpu.memory_space<vmem>>, vector<10x1xf32>
    %179 = vector.broadcast %178 : vector<10x1xf32> to vector<10x128xf32>
    %180 = arith.mulf %177, %179 : vector<10x128xf32>
    %181 = arith.addf %172, %180 : vector<10x128xf32>
    %182 = vector.extract_strided_slice %160 {offsets = [0, 375], sizes = [40, 128], strides = [1, 1]} : vector<40x512xf32> to vector<40x128xf32>
    %183 = vector.broadcast %174 : vector<1x128xf32> to vector<40x128xf32>
    %184 = arith.mulf %182, %183 : vector<40x128xf32>
    %185 = arith.addf %173, %184 : vector<40x128xf32>
    %c1_83 = arith.constant 1 : index
    %c0_84 = arith.constant 0 : index
    %186 = vector.load %arg24[%c1_83, %c0_84] : memref<9x128xf32, #tpu.memory_space<vmem>>, vector<1x128xf32>
    %187 = vector.extract_strided_slice %171 {offsets = [0, 248], sizes = [10, 128], strides = [1, 1]} : vector<10x512xf32> to vector<10x128xf32>
    %188 = vector.broadcast %186 : vector<1x128xf32> to vector<10x128xf32>
    %189 = arith.mulf %187, %188 : vector<10x128xf32>
    %c0_85 = arith.constant 0 : index
    %c1_86 = arith.constant 1 : index
    %190 = vector.load %arg18[%c0_85, %c1_86] : memref<10x9xf32, #tpu.memory_space<vmem>>, vector<10x1xf32>
    %191 = vector.broadcast %190 : vector<10x1xf32> to vector<10x128xf32>
    %192 = arith.mulf %189, %191 : vector<10x128xf32>
    %193 = arith.addf %181, %192 : vector<10x128xf32>
    %194 = vector.extract_strided_slice %160 {offsets = [0, 248], sizes = [40, 128], strides = [1, 1]} : vector<40x512xf32> to vector<40x128xf32>
    %195 = vector.broadcast %186 : vector<1x128xf32> to vector<40x128xf32>
    %196 = arith.mulf %194, %195 : vector<40x128xf32>
    %197 = arith.addf %185, %196 : vector<40x128xf32>
    %c2_87 = arith.constant 2 : index
    %c0_88 = arith.constant 0 : index
    %198 = vector.load %arg24[%c2_87, %c0_88] : memref<9x128xf32, #tpu.memory_space<vmem>>, vector<1x128xf32>
    %199 = vector.extract_strided_slice %171 {offsets = [0, 376], sizes = [10, 128], strides = [1, 1]} : vector<10x512xf32> to vector<10x128xf32>
    %200 = vector.broadcast %198 : vector<1x128xf32> to vector<10x128xf32>
    %201 = arith.mulf %199, %200 : vector<10x128xf32>
    %c0_89 = arith.constant 0 : index
    %c2_90 = arith.constant 2 : index
    %202 = vector.load %arg18[%c0_89, %c2_90] : memref<10x9xf32, #tpu.memory_space<vmem>>, vector<10x1xf32>
    %203 = vector.broadcast %202 : vector<10x1xf32> to vector<10x128xf32>
    %204 = arith.mulf %201, %203 : vector<10x128xf32>
    %205 = arith.addf %193, %204 : vector<10x128xf32>
    %206 = vector.extract_strided_slice %160 {offsets = [0, 376], sizes = [40, 128], strides = [1, 1]} : vector<40x512xf32> to vector<40x128xf32>
    %207 = vector.broadcast %198 : vector<1x128xf32> to vector<40x128xf32>
    %208 = arith.mulf %206, %207 : vector<40x128xf32>
    %209 = arith.addf %197, %208 : vector<40x128xf32>
    %c3_91 = arith.constant 3 : index
    %c0_92 = arith.constant 0 : index
    %210 = vector.load %arg24[%c3_91, %c0_92] : memref<9x128xf32, #tpu.memory_space<vmem>>, vector<1x128xf32>
    %211 = vector.extract_strided_slice %171 {offsets = [0, 127], sizes = [10, 128], strides = [1, 1]} : vector<10x512xf32> to vector<10x128xf32>
    %212 = vector.broadcast %210 : vector<1x128xf32> to vector<10x128xf32>
    %213 = arith.mulf %211, %212 : vector<10x128xf32>
    %c0_93 = arith.constant 0 : index
    %c3_94 = arith.constant 3 : index
    %214 = vector.load %arg18[%c0_93, %c3_94] : memref<10x9xf32, #tpu.memory_space<vmem>>, vector<10x1xf32>
    %215 = vector.broadcast %214 : vector<10x1xf32> to vector<10x128xf32>
    %216 = arith.mulf %213, %215 : vector<10x128xf32>
    %217 = arith.addf %205, %216 : vector<10x128xf32>
    %218 = vector.extract_strided_slice %160 {offsets = [0, 127], sizes = [40, 128], strides = [1, 1]} : vector<40x512xf32> to vector<40x128xf32>
    %219 = vector.broadcast %210 : vector<1x128xf32> to vector<40x128xf32>
    %220 = arith.mulf %218, %219 : vector<40x128xf32>
    %221 = arith.addf %209, %220 : vector<40x128xf32>
    %c4_95 = arith.constant 4 : index
    %c0_96 = arith.constant 0 : index
    %222 = vector.load %arg24[%c4_95, %c0_96] : memref<9x128xf32, #tpu.memory_space<vmem>>, vector<1x128xf32>
    %223 = vector.extract_strided_slice %171 {offsets = [0, 0], sizes = [10, 128], strides = [1, 1]} : vector<10x512xf32> to vector<10x128xf32>
    %224 = vector.broadcast %222 : vector<1x128xf32> to vector<10x128xf32>
    %225 = arith.mulf %223, %224 : vector<10x128xf32>
    %c0_97 = arith.constant 0 : index
    %c4_98 = arith.constant 4 : index
    %226 = vector.load %arg18[%c0_97, %c4_98] : memref<10x9xf32, #tpu.memory_space<vmem>>, vector<10x1xf32>
    %227 = vector.broadcast %226 : vector<10x1xf32> to vector<10x128xf32>
    %228 = arith.mulf %225, %227 : vector<10x128xf32>
    %229 = arith.addf %217, %228 : vector<10x128xf32>
    %230 = vector.extract_strided_slice %160 {offsets = [0, 0], sizes = [40, 128], strides = [1, 1]} : vector<40x512xf32> to vector<40x128xf32>
    %231 = vector.broadcast %222 : vector<1x128xf32> to vector<40x128xf32>
    %232 = arith.mulf %230, %231 : vector<40x128xf32>
    %233 = arith.addf %221, %232 : vector<40x128xf32>
    %c5_99 = arith.constant 5 : index
    %c0_100 = arith.constant 0 : index
    %234 = vector.load %arg24[%c5_99, %c0_100] : memref<9x128xf32, #tpu.memory_space<vmem>>, vector<1x128xf32>
    %235 = vector.extract_strided_slice %171 {offsets = [0, 128], sizes = [10, 128], strides = [1, 1]} : vector<10x512xf32> to vector<10x128xf32>
    %236 = vector.broadcast %234 : vector<1x128xf32> to vector<10x128xf32>
    %237 = arith.mulf %235, %236 : vector<10x128xf32>
    %c0_101 = arith.constant 0 : index
    %c5_102 = arith.constant 5 : index
    %238 = vector.load %arg18[%c0_101, %c5_102] : memref<10x9xf32, #tpu.memory_space<vmem>>, vector<10x1xf32>
    %239 = vector.broadcast %238 : vector<10x1xf32> to vector<10x128xf32>
    %240 = arith.mulf %237, %239 : vector<10x128xf32>
    %241 = arith.addf %229, %240 : vector<10x128xf32>
    %242 = vector.extract_strided_slice %160 {offsets = [0, 128], sizes = [40, 128], strides = [1, 1]} : vector<40x512xf32> to vector<40x128xf32>
    %243 = vector.broadcast %234 : vector<1x128xf32> to vector<40x128xf32>
    %244 = arith.mulf %242, %243 : vector<40x128xf32>
    %245 = arith.addf %233, %244 : vector<40x128xf32>
    %c6_103 = arith.constant 6 : index
    %c0_104 = arith.constant 0 : index
    %246 = vector.load %arg24[%c6_103, %c0_104] : memref<9x128xf32, #tpu.memory_space<vmem>>, vector<1x128xf32>
    %247 = vector.extract_strided_slice %171 {offsets = [0, 383], sizes = [10, 128], strides = [1, 1]} : vector<10x512xf32> to vector<10x128xf32>
    %248 = vector.broadcast %246 : vector<1x128xf32> to vector<10x128xf32>
    %249 = arith.mulf %247, %248 : vector<10x128xf32>
    %c0_105 = arith.constant 0 : index
    %c6_106 = arith.constant 6 : index
    %250 = vector.load %arg18[%c0_105, %c6_106] : memref<10x9xf32, #tpu.memory_space<vmem>>, vector<10x1xf32>
    %251 = vector.broadcast %250 : vector<10x1xf32> to vector<10x128xf32>
    %252 = arith.mulf %249, %251 : vector<10x128xf32>
    %253 = arith.addf %241, %252 : vector<10x128xf32>
    %254 = vector.extract_strided_slice %160 {offsets = [0, 383], sizes = [40, 128], strides = [1, 1]} : vector<40x512xf32> to vector<40x128xf32>
    %255 = vector.broadcast %246 : vector<1x128xf32> to vector<40x128xf32>
    %256 = arith.mulf %254, %255 : vector<40x128xf32>
    %257 = arith.addf %245, %256 : vector<40x128xf32>
    %c7_107 = arith.constant 7 : index
    %c0_108 = arith.constant 0 : index
    %258 = vector.load %arg24[%c7_107, %c0_108] : memref<9x128xf32, #tpu.memory_space<vmem>>, vector<1x128xf32>
    %259 = vector.extract_strided_slice %171 {offsets = [0, 256], sizes = [10, 128], strides = [1, 1]} : vector<10x512xf32> to vector<10x128xf32>
    %260 = vector.broadcast %258 : vector<1x128xf32> to vector<10x128xf32>
    %261 = arith.mulf %259, %260 : vector<10x128xf32>
    %c0_109 = arith.constant 0 : index
    %c7_110 = arith.constant 7 : index
    %262 = vector.load %arg18[%c0_109, %c7_110] : memref<10x9xf32, #tpu.memory_space<vmem>>, vector<10x1xf32>
    %263 = vector.broadcast %262 : vector<10x1xf32> to vector<10x128xf32>
    %264 = arith.mulf %261, %263 : vector<10x128xf32>
    %265 = arith.addf %253, %264 : vector<10x128xf32>
    %266 = vector.extract_strided_slice %160 {offsets = [0, 256], sizes = [40, 128], strides = [1, 1]} : vector<40x512xf32> to vector<40x128xf32>
    %267 = vector.broadcast %258 : vector<1x128xf32> to vector<40x128xf32>
    %268 = arith.mulf %266, %267 : vector<40x128xf32>
    %269 = arith.addf %257, %268 : vector<40x128xf32>
    %c8_111 = arith.constant 8 : index
    %c0_112 = arith.constant 0 : index
    %270 = vector.load %arg24[%c8_111, %c0_112] : memref<9x128xf32, #tpu.memory_space<vmem>>, vector<1x128xf32>
    %271 = vector.extract_strided_slice %171 {offsets = [0, 384], sizes = [10, 128], strides = [1, 1]} : vector<10x512xf32> to vector<10x128xf32>
    %272 = vector.broadcast %270 : vector<1x128xf32> to vector<10x128xf32>
    %273 = arith.mulf %271, %272 : vector<10x128xf32>
    %c0_113 = arith.constant 0 : index
    %c8_114 = arith.constant 8 : index
    %274 = vector.load %arg18[%c0_113, %c8_114] : memref<10x9xf32, #tpu.memory_space<vmem>>, vector<10x1xf32>
    %275 = vector.broadcast %274 : vector<10x1xf32> to vector<10x128xf32>
    %276 = arith.mulf %273, %275 : vector<10x128xf32>
    %277 = arith.addf %265, %276 : vector<10x128xf32>
    %278 = vector.extract_strided_slice %160 {offsets = [0, 384], sizes = [40, 128], strides = [1, 1]} : vector<40x512xf32> to vector<40x128xf32>
    %279 = vector.broadcast %270 : vector<1x128xf32> to vector<40x128xf32>
    %280 = arith.mulf %278, %279 : vector<40x128xf32>
    %281 = arith.addf %269, %280 : vector<40x128xf32>
    %c0_115 = arith.constant 0 : index
    %c0_116 = arith.constant 0 : index
    %282 = vector.load %arg19[%c0_115, %c0_116] : memref<10x1xf32, #tpu.memory_space<vmem>>, vector<10x1xf32>
    %283 = vector.broadcast %282 : vector<10x1xf32> to vector<10x128xf32>
    %284 = arith.mulf %277, %283 : vector<10x128xf32>
    %c0_117 = arith.constant 0 : index
    %c0_118 = arith.constant 0 : index
    %285 = vector.load %arg20[%c0_117, %c0_118] : memref<10x1xf32, #tpu.memory_space<vmem>>, vector<10x1xf32>
    %286 = vector.broadcast %285 : vector<10x1xf32> to vector<10x128xf32>
    %287 = arith.addf %284, %286 : vector<10x128xf32>
    %cst_119 = arith.constant 0.000000e+00 : f32
    %288 = vector.broadcast %cst_119 : f32 to vector<10x128xf32>
    %289 = arith.maximumf %287, %288 : vector<10x128xf32>
    %cst_120 = arith.constant 0.111111112 : f32
    %290 = vector.broadcast %cst_120 : f32 to vector<40x128xf32>
    %291 = arith.mulf %281, %290 : vector<40x128xf32>
    %cst_121 = arith.constant 0.000000e+00 : f32
    %292 = vector.broadcast %cst_121 : f32 to vector<40x128xf32>
    %293 = arith.maximumf %291, %292 : vector<40x128xf32>
    %c0_122 = arith.constant 0 : index
    %c0_123 = arith.constant 0 : index
    %294 = vector.load %arg21[%c0_122, %c0_123] : memref<40x10xbf16, #tpu.memory_space<vmem>>, vector<40x10xbf16>
    %295 = arith.truncf %289 : vector<10x128xf32> to vector<10x128xbf16>
    %cst_124 = arith.constant dense<0.000000e+00> : vector<40x128xf32>
    %296 = tpu.matmul %294, %295, %cst_124 {dimension_numbers = #tpu.dot_dimension_numbers<[1], [0], [0], [1], [0, 0, 1, 1], [], []>} : vector<40x10xbf16>, vector<10x128xbf16>, vector<40x128xf32> -> vector<40x128xf32>
    %c0_125 = arith.constant 0 : index
    %c0_126 = arith.constant 0 : index
    %297 = vector.load %arg22[%c0_125, %c0_126] : memref<40x1xf32, #tpu.memory_space<vmem>>, vector<40x1xf32>
    %298 = vector.broadcast %297 : vector<40x1xf32> to vector<40x128xf32>
    %299 = arith.mulf %296, %298 : vector<40x128xf32>
    %c0_127 = arith.constant 0 : index
    %c0_128 = arith.constant 0 : index
    %300 = vector.load %arg23[%c0_127, %c0_128] : memref<40x1xf32, #tpu.memory_space<vmem>>, vector<40x1xf32>
    %301 = vector.broadcast %300 : vector<40x1xf32> to vector<40x128xf32>
    %302 = arith.addf %299, %301 : vector<40x128xf32>
    %cst_129 = arith.constant 0.000000e+00 : f32
    %303 = vector.broadcast %cst_129 : f32 to vector<40x128xf32>
    %304 = arith.maximumf %302, %303 : vector<40x128xf32>
    %c0_130 = arith.constant 0 : index
    %c0_131 = arith.constant 0 : index
    %305 = vector.load %arg50[%c0_130, %c0_131] : memref<80x512xf32, #tpu.memory_space<vmem>>, vector<40x128xf32>
    tpu.vector_store %arg50[%c0_130, %c0_131], %304 {strides = array<i32>} : memref<80x512xf32, #tpu.memory_space<vmem>>, vector<40x128xf32>,
    %c40 = arith.constant 40 : index
    %c0_132 = arith.constant 0 : index
    %306 = vector.load %arg50[%c40, %c0_132] : memref<80x512xf32, #tpu.memory_space<vmem>>, vector<40x128xf32>
    tpu.vector_store %arg50[%c40, %c0_132], %293 {strides = array<i32>} : memref<80x512xf32, #tpu.memory_space<vmem>>, vector<40x128xf32>,
    %c0_133 = arith.constant 0 : index
    %c0_134 = arith.constant 0 : index
    %307 = vector.load %arg50[%c0_133, %c0_134] : memref<80x512xf32, #tpu.memory_space<vmem>>, vector<80x128xf32>
    %308 = arith.truncf %307 : vector<80x128xf32> to vector<80x128xbf16>
    %cst_135 = arith.constant 0.000000e+00 : bf16
    %309 = vector.broadcast %cst_135 : bf16 to vector<80x384xbf16>
    %c0_136 = arith.constant 0 : index
    %c0_137 = arith.constant 0 : index
    %310 = vector.load %arg51[%c0_136, %c0_137] : memref<80x384xbf16, #tpu.memory_space<vmem>>, vector<80x384xbf16>
    tpu.vector_store %arg51[%c0_136, %c0_137], %309 {strides = array<i32>} : memref<80x384xbf16, #tpu.memory_space<vmem>>, vector<80x384xbf16>,
    %c0_138 = arith.constant 0 : index
    %c128 = arith.constant 128 : index
    %311 = vector.load %arg51[%c0_138, %c128] : memref<80x384xbf16, #tpu.memory_space<vmem>>, vector<80x128xbf16>
    tpu.vector_store %arg51[%c0_138, %c128], %308 {strides = array<i32>} : memref<80x384xbf16, #tpu.memory_space<vmem>>, vector<80x128xbf16>,
    %c0_139 = arith.constant 0 : index
    %c0_140 = arith.constant 0 : index
    %312 = vector.load %arg51[%c0_139, %c0_140] : memref<80x384xbf16, #tpu.memory_space<vmem>>, vector<80x384xbf16>
    %c0_141 = arith.constant 0 : index
    %c0_142 = arith.constant 0 : index
    %313 = vector.load %arg25[%c0_141, %c0_142] : memref<20x80xbf16, #tpu.memory_space<vmem>>, vector<20x80xbf16>
    %cst_143 = arith.constant dense<0.000000e+00> : vector<20x384xf32>
    %314 = tpu.matmul %313, %312, %cst_143 {dimension_numbers = #tpu.dot_dimension_numbers<[1], [0], [0], [1], [0, 0, 1, 1], [], []>} : vector<20x80xbf16>, vector<80x384xbf16>, vector<20x384xf32> -> vector<20x384xf32>
    %c0_144 = arith.constant 0 : index
    %c0_145 = arith.constant 0 : index
    %315 = vector.load %arg26[%c0_144, %c0_145] : memref<20x1xf32, #tpu.memory_space<vmem>>, vector<20x1xf32>
    %316 = vector.broadcast %315 : vector<20x1xf32> to vector<20x384xf32>
    %317 = arith.mulf %314, %316 : vector<20x384xf32>
    %c0_146 = arith.constant 0 : index
    %c0_147 = arith.constant 0 : index
    %318 = vector.load %arg27[%c0_146, %c0_147] : memref<20x1xf32, #tpu.memory_space<vmem>>, vector<20x1xf32>
    %319 = vector.broadcast %318 : vector<20x1xf32> to vector<20x384xf32>
    %320 = arith.addf %317, %319 : vector<20x384xf32>
    %cst_148 = arith.constant 0.000000e+00 : f32
    %321 = vector.broadcast %cst_148 : f32 to vector<20x384xf32>
    %322 = arith.maximumf %320, %321 : vector<20x384xf32>
    %cst_149 = arith.constant 0.000000e+00 : f32
    %323 = vector.broadcast %cst_149 : f32 to vector<20x128xf32>
    %324 = vector.extract_strided_slice %322 {offsets = [0, 119], sizes = [20, 128], strides = [1, 1]} : vector<20x384xf32> to vector<20x128xf32>
    %c0_150 = arith.constant 0 : index
    %c0_151 = arith.constant 0 : index
    %325 = vector.load %arg34[%c0_150, %c0_151] : memref<9x128xf32, #tpu.memory_space<vmem>>, vector<1x128xf32>
    %326 = vector.broadcast %325 : vector<1x128xf32> to vector<20x128xf32>
    %327 = arith.mulf %324, %326 : vector<20x128xf32>
    %c0_152 = arith.constant 0 : index
    %c0_153 = arith.constant 0 : index
    %328 = vector.load %arg28[%c0_152, %c0_153] : memref<20x9xf32, #tpu.memory_space<vmem>>, vector<20x1xf32>
    %329 = vector.broadcast %328 : vector<20x1xf32> to vector<20x128xf32>
    %330 = arith.mulf %327, %329 : vector<20x128xf32>
    %331 = arith.addf %323, %330 : vector<20x128xf32>
    %332 = vector.extract_strided_slice %322 {offsets = [0, 120], sizes = [20, 128], strides = [1, 1]} : vector<20x384xf32> to vector<20x128xf32>
    %c1_154 = arith.constant 1 : index
    %c0_155 = arith.constant 0 : index
    %333 = vector.load %arg34[%c1_154, %c0_155] : memref<9x128xf32, #tpu.memory_space<vmem>>, vector<1x128xf32>
    %334 = vector.broadcast %333 : vector<1x128xf32> to vector<20x128xf32>
    %335 = arith.mulf %332, %334 : vector<20x128xf32>
    %c0_156 = arith.constant 0 : index
    %c1_157 = arith.constant 1 : index
    %336 = vector.load %arg28[%c0_156, %c1_157] : memref<20x9xf32, #tpu.memory_space<vmem>>, vector<20x1xf32>
    %337 = vector.broadcast %336 : vector<20x1xf32> to vector<20x128xf32>
    %338 = arith.mulf %335, %337 : vector<20x128xf32>
    %339 = arith.addf %331, %338 : vector<20x128xf32>
    %340 = vector.extract_strided_slice %322 {offsets = [0, 121], sizes = [20, 128], strides = [1, 1]} : vector<20x384xf32> to vector<20x128xf32>
    %c2_158 = arith.constant 2 : index
    %c0_159 = arith.constant 0 : index
    %341 = vector.load %arg34[%c2_158, %c0_159] : memref<9x128xf32, #tpu.memory_space<vmem>>, vector<1x128xf32>
    %342 = vector.broadcast %341 : vector<1x128xf32> to vector<20x128xf32>
    %343 = arith.mulf %340, %342 : vector<20x128xf32>
    %c0_160 = arith.constant 0 : index
    %c2_161 = arith.constant 2 : index
    %344 = vector.load %arg28[%c0_160, %c2_161] : memref<20x9xf32, #tpu.memory_space<vmem>>, vector<20x1xf32>
    %345 = vector.broadcast %344 : vector<20x1xf32> to vector<20x128xf32>
    %346 = arith.mulf %343, %345 : vector<20x128xf32>
    %347 = arith.addf %339, %346 : vector<20x128xf32>
    %348 = vector.extract_strided_slice %322 {offsets = [0, 127], sizes = [20, 128], strides = [1, 1]} : vector<20x384xf32> to vector<20x128xf32>
    %c3_162 = arith.constant 3 : index
    %c0_163 = arith.constant 0 : index
    %349 = vector.load %arg34[%c3_162, %c0_163] : memref<9x128xf32, #tpu.memory_space<vmem>>, vector<1x128xf32>
    %350 = vector.broadcast %349 : vector<1x128xf32> to vector<20x128xf32>
    %351 = arith.mulf %348, %350 : vector<20x128xf32>
    %c0_164 = arith.constant 0 : index
    %c3_165 = arith.constant 3 : index
    %352 = vector.load %arg28[%c0_164, %c3_165] : memref<20x9xf32, #tpu.memory_space<vmem>>, vector<20x1xf32>
    %353 = vector.broadcast %352 : vector<20x1xf32> to vector<20x128xf32>
    %354 = arith.mulf %351, %353 : vector<20x128xf32>
    %355 = arith.addf %347, %354 : vector<20x128xf32>
    %356 = vector.extract_strided_slice %322 {offsets = [0, 128], sizes = [20, 128], strides = [1, 1]} : vector<20x384xf32> to vector<20x128xf32>
    %c4_166 = arith.constant 4 : index
    %c0_167 = arith.constant 0 : index
    %357 = vector.load %arg34[%c4_166, %c0_167] : memref<9x128xf32, #tpu.memory_space<vmem>>, vector<1x128xf32>
    %358 = vector.broadcast %357 : vector<1x128xf32> to vector<20x128xf32>
    %359 = arith.mulf %356, %358 : vector<20x128xf32>
    %c0_168 = arith.constant 0 : index
    %c4_169 = arith.constant 4 : index
    %360 = vector.load %arg28[%c0_168, %c4_169] : memref<20x9xf32, #tpu.memory_space<vmem>>, vector<20x1xf32>
    %361 = vector.broadcast %360 : vector<20x1xf32> to vector<20x128xf32>
    %362 = arith.mulf %359, %361 : vector<20x128xf32>
    %363 = arith.addf %355, %362 : vector<20x128xf32>
    %364 = vector.extract_strided_slice %322 {offsets = [0, 129], sizes = [20, 128], strides = [1, 1]} : vector<20x384xf32> to vector<20x128xf32>
    %c5_170 = arith.constant 5 : index
    %c0_171 = arith.constant 0 : index
    %365 = vector.load %arg34[%c5_170, %c0_171] : memref<9x128xf32, #tpu.memory_space<vmem>>, vector<1x128xf32>
    %366 = vector.broadcast %365 : vector<1x128xf32> to vector<20x128xf32>
    %367 = arith.mulf %364, %366 : vector<20x128xf32>
    %c0_172 = arith.constant 0 : index
    %c5_173 = arith.constant 5 : index
    %368 = vector.load %arg28[%c0_172, %c5_173] : memref<20x9xf32, #tpu.memory_space<vmem>>, vector<20x1xf32>
    %369 = vector.broadcast %368 : vector<20x1xf32> to vector<20x128xf32>
    %370 = arith.mulf %367, %369 : vector<20x128xf32>
    %371 = arith.addf %363, %370 : vector<20x128xf32>
    %372 = vector.extract_strided_slice %322 {offsets = [0, 135], sizes = [20, 128], strides = [1, 1]} : vector<20x384xf32> to vector<20x128xf32>
    %c6_174 = arith.constant 6 : index
    %c0_175 = arith.constant 0 : index
    %373 = vector.load %arg34[%c6_174, %c0_175] : memref<9x128xf32, #tpu.memory_space<vmem>>, vector<1x128xf32>
    %374 = vector.broadcast %373 : vector<1x128xf32> to vector<20x128xf32>
    %375 = arith.mulf %372, %374 : vector<20x128xf32>
    %c0_176 = arith.constant 0 : index
    %c6_177 = arith.constant 6 : index
    %376 = vector.load %arg28[%c0_176, %c6_177] : memref<20x9xf32, #tpu.memory_space<vmem>>, vector<20x1xf32>
    %377 = vector.broadcast %376 : vector<20x1xf32> to vector<20x128xf32>
    %378 = arith.mulf %375, %377 : vector<20x128xf32>
    %379 = arith.addf %371, %378 : vector<20x128xf32>
    %380 = vector.extract_strided_slice %322 {offsets = [0, 136], sizes = [20, 128], strides = [1, 1]} : vector<20x384xf32> to vector<20x128xf32>
    %c7_178 = arith.constant 7 : index
    %c0_179 = arith.constant 0 : index
    %381 = vector.load %arg34[%c7_178, %c0_179] : memref<9x128xf32, #tpu.memory_space<vmem>>, vector<1x128xf32>
    %382 = vector.broadcast %381 : vector<1x128xf32> to vector<20x128xf32>
    %383 = arith.mulf %380, %382 : vector<20x128xf32>
    %c0_180 = arith.constant 0 : index
    %c7_181 = arith.constant 7 : index
    %384 = vector.load %arg28[%c0_180, %c7_181] : memref<20x9xf32, #tpu.memory_space<vmem>>, vector<20x1xf32>
    %385 = vector.broadcast %384 : vector<20x1xf32> to vector<20x128xf32>
    %386 = arith.mulf %383, %385 : vector<20x128xf32>
    %387 = arith.addf %379, %386 : vector<20x128xf32>
    %388 = vector.extract_strided_slice %322 {offsets = [0, 137], sizes = [20, 128], strides = [1, 1]} : vector<20x384xf32> to vector<20x128xf32>
    %c8_182 = arith.constant 8 : index
    %c0_183 = arith.constant 0 : index
    %389 = vector.load %arg34[%c8_182, %c0_183] : memref<9x128xf32, #tpu.memory_space<vmem>>, vector<1x128xf32>
    %390 = vector.broadcast %389 : vector<1x128xf32> to vector<20x128xf32>
    %391 = arith.mulf %388, %390 : vector<20x128xf32>
    %c0_184 = arith.constant 0 : index
    %c8_185 = arith.constant 8 : index
    %392 = vector.load %arg28[%c0_184, %c8_185] : memref<20x9xf32, #tpu.memory_space<vmem>>, vector<20x1xf32>
    %393 = vector.broadcast %392 : vector<20x1xf32> to vector<20x128xf32>
    %394 = arith.mulf %391, %393 : vector<20x128xf32>
    %395 = arith.addf %387, %394 : vector<20x128xf32>
    %c0_186 = arith.constant 0 : index
    %c0_187 = arith.constant 0 : index
    %396 = vector.load %arg29[%c0_186, %c0_187] : memref<20x1xf32, #tpu.memory_space<vmem>>, vector<20x1xf32>
    %397 = vector.broadcast %396 : vector<20x1xf32> to vector<20x128xf32>
    %398 = arith.mulf %395, %397 : vector<20x128xf32>
    %c0_188 = arith.constant 0 : index
    %c0_189 = arith.constant 0 : index
    %399 = vector.load %arg30[%c0_188, %c0_189] : memref<20x1xf32, #tpu.memory_space<vmem>>, vector<20x1xf32>
    %400 = vector.broadcast %399 : vector<20x1xf32> to vector<20x128xf32>
    %401 = arith.addf %398, %400 : vector<20x128xf32>
    %cst_190 = arith.constant 0.000000e+00 : f32
    %402 = vector.broadcast %cst_190 : f32 to vector<20x128xf32>
    %403 = arith.maximumf %401, %402 : vector<20x128xf32>
    %c0_191 = arith.constant 0 : index
    %c0_192 = arith.constant 0 : index
    %404 = vector.load %arg31[%c0_191, %c0_192] : memref<80x20xbf16, #tpu.memory_space<vmem>>, vector<80x20xbf16>
    %405 = arith.truncf %403 : vector<20x128xf32> to vector<20x128xbf16>
    %cst_193 = arith.constant dense<0.000000e+00> : vector<80x128xf32>
    %406 = tpu.matmul %404, %405, %cst_193 {dimension_numbers = #tpu.dot_dimension_numbers<[1], [0], [0], [1], [0, 0, 1, 1], [], []>} : vector<80x20xbf16>, vector<20x128xbf16>, vector<80x128xf32> -> vector<80x128xf32>
    %c0_194 = arith.constant 0 : index
    %c0_195 = arith.constant 0 : index
    %407 = vector.load %arg32[%c0_194, %c0_195] : memref<80x1xf32, #tpu.memory_space<vmem>>, vector<80x1xf32>
    %408 = vector.broadcast %407 : vector<80x1xf32> to vector<80x128xf32>
    %409 = arith.mulf %406, %408 : vector<80x128xf32>
    %c0_196 = arith.constant 0 : index
    %c0_197 = arith.constant 0 : index
    %410 = vector.load %arg33[%c0_196, %c0_197] : memref<80x1xf32, #tpu.memory_space<vmem>>, vector<80x1xf32>
    %411 = vector.broadcast %410 : vector<80x1xf32> to vector<80x128xf32>
    %412 = arith.addf %409, %411 : vector<80x128xf32>
    %413 = arith.addf %412, %307 : vector<80x128xf32>
    %cst_198 = arith.constant 0.000000e+00 : f32
    %414 = vector.broadcast %cst_198 : f32 to vector<80x128xf32>
    %415 = arith.maximumf %413, %414 : vector<80x128xf32>
    %416 = arith.truncf %415 : vector<80x128xf32> to vector<80x128xbf16>
    %c0_199 = arith.constant 0 : index
    %c0_200 = arith.constant 0 : index
    %417 = vector.load %arg35[%c0_199, %c0_200] : memref<128x128xbf16, #tpu.memory_space<vmem>>, vector<128x128xbf16>
    %cst_201 = arith.constant dense<0.000000e+00> : vector<80x128xf32>
    %418 = tpu.matmul %416, %417, %cst_201 {dimension_numbers = #tpu.dot_dimension_numbers<[1], [0], [0], [1], [0, 0, 1, 1], [], []>} : vector<80x128xbf16>, vector<128x128xbf16>, vector<80x128xf32> -> vector<80x128xf32>
    %419 = arith.truncf %418 : vector<80x128xf32> to vector<80x128xbf16>
    %c0_202 = arith.constant 0 : index
    %c0_203 = arith.constant 0 : index
    %420 = vector.load %arg36[%c0_202, %c0_203] : memref<20x80xbf16, #tpu.memory_space<vmem>>, vector<20x80xbf16>
    %cst_204 = arith.constant dense<0.000000e+00> : vector<20x128xf32>
    %421 = tpu.matmul %420, %419, %cst_204 {dimension_numbers = #tpu.dot_dimension_numbers<[1], [0], [0], [1], [0, 0, 1, 1], [], []>} : vector<20x80xbf16>, vector<80x128xbf16>, vector<20x128xf32> -> vector<20x128xf32>
    %c0_205 = arith.constant 0 : index
    %c0_206 = arith.constant 0 : index
    %422 = vector.load %arg37[%c0_205, %c0_206] : memref<20x1xf32, #tpu.memory_space<vmem>>, vector<20x1xf32>
    %423 = vector.broadcast %422 : vector<20x1xf32> to vector<20x128xf32>
    %424 = arith.mulf %421, %423 : vector<20x128xf32>
    %c0_207 = arith.constant 0 : index
    %c0_208 = arith.constant 0 : index
    %425 = vector.load %arg38[%c0_207, %c0_208] : memref<20x1xf32, #tpu.memory_space<vmem>>, vector<20x1xf32>
    %426 = vector.broadcast %425 : vector<20x1xf32> to vector<20x128xf32>
    %427 = arith.addf %424, %426 : vector<20x128xf32>
    %cst_209 = arith.constant 0.000000e+00 : f32
    %428 = vector.broadcast %cst_209 : f32 to vector<20x128xf32>
    %429 = arith.maximumf %427, %428 : vector<20x128xf32>
    %cst_210 = arith.constant 0.000000e+00 : f32
    %430 = vector.broadcast %cst_210 : f32 to vector<20x32xf32>
    %cst_211 = arith.constant 0.000000e+00 : f32
    %431 = vector.broadcast %cst_211 : f32 to vector<80x32xf32>
    %c0_212 = arith.constant 0 : index
    %c0_213 = arith.constant 0 : index
    %432 = vector.load %arg45[%c0_212, %c0_213] : memref<9x32xf32, #tpu.memory_space<vmem>>, vector<1x32xf32>
    %433 = vector.extract_strided_slice %429 {offsets = [0, 91], sizes = [20, 32], strides = [1, 1]} : vector<20x128xf32> to vector<20x32xf32>
    %434 = vector.broadcast %432 : vector<1x32xf32> to vector<20x32xf32>
    %435 = arith.mulf %433, %434 : vector<20x32xf32>
    %c0_214 = arith.constant 0 : index
    %c0_215 = arith.constant 0 : index
    %436 = vector.load %arg39[%c0_214, %c0_215] : memref<20x9xf32, #tpu.memory_space<vmem>>, vector<20x1xf32>
    %437 = vector.broadcast %436 : vector<20x1xf32> to vector<20x32xf32>
    %438 = arith.mulf %435, %437 : vector<20x32xf32>
    %439 = arith.addf %430, %438 : vector<20x32xf32>
    %440 = vector.extract_strided_slice %418 {offsets = [0, 91], sizes = [80, 32], strides = [1, 1]} : vector<80x128xf32> to vector<80x32xf32>
    %441 = vector.broadcast %432 : vector<1x32xf32> to vector<80x32xf32>
    %442 = arith.mulf %440, %441 : vector<80x32xf32>
    %443 = arith.addf %431, %442 : vector<80x32xf32>
    %c1_216 = arith.constant 1 : index
    %c0_217 = arith.constant 0 : index
    %444 = vector.load %arg45[%c1_216, %c0_217] : memref<9x32xf32, #tpu.memory_space<vmem>>, vector<1x32xf32>
    %445 = vector.extract_strided_slice %429 {offsets = [0, 60], sizes = [20, 32], strides = [1, 1]} : vector<20x128xf32> to vector<20x32xf32>
    %446 = vector.broadcast %444 : vector<1x32xf32> to vector<20x32xf32>
    %447 = arith.mulf %445, %446 : vector<20x32xf32>
    %c0_218 = arith.constant 0 : index
    %c1_219 = arith.constant 1 : index
    %448 = vector.load %arg39[%c0_218, %c1_219] : memref<20x9xf32, #tpu.memory_space<vmem>>, vector<20x1xf32>
    %449 = vector.broadcast %448 : vector<20x1xf32> to vector<20x32xf32>
    %450 = arith.mulf %447, %449 : vector<20x32xf32>
    %451 = arith.addf %439, %450 : vector<20x32xf32>
    %452 = vector.extract_strided_slice %418 {offsets = [0, 60], sizes = [80, 32], strides = [1, 1]} : vector<80x128xf32> to vector<80x32xf32>
    %453 = vector.broadcast %444 : vector<1x32xf32> to vector<80x32xf32>
    %454 = arith.mulf %452, %453 : vector<80x32xf32>
    %455 = arith.addf %443, %454 : vector<80x32xf32>
    %c2_220 = arith.constant 2 : index
    %c0_221 = arith.constant 0 : index
    %456 = vector.load %arg45[%c2_220, %c0_221] : memref<9x32xf32, #tpu.memory_space<vmem>>, vector<1x32xf32>
    %457 = vector.extract_strided_slice %429 {offsets = [0, 92], sizes = [20, 32], strides = [1, 1]} : vector<20x128xf32> to vector<20x32xf32>
    %458 = vector.broadcast %456 : vector<1x32xf32> to vector<20x32xf32>
    %459 = arith.mulf %457, %458 : vector<20x32xf32>
    %c0_222 = arith.constant 0 : index
    %c2_223 = arith.constant 2 : index
    %460 = vector.load %arg39[%c0_222, %c2_223] : memref<20x9xf32, #tpu.memory_space<vmem>>, vector<20x1xf32>
    %461 = vector.broadcast %460 : vector<20x1xf32> to vector<20x32xf32>
    %462 = arith.mulf %459, %461 : vector<20x32xf32>
    %463 = arith.addf %451, %462 : vector<20x32xf32>
    %464 = vector.extract_strided_slice %418 {offsets = [0, 92], sizes = [80, 32], strides = [1, 1]} : vector<80x128xf32> to vector<80x32xf32>
    %465 = vector.broadcast %456 : vector<1x32xf32> to vector<80x32xf32>
    %466 = arith.mulf %464, %465 : vector<80x32xf32>
    %467 = arith.addf %455, %466 : vector<80x32xf32>
    %c3_224 = arith.constant 3 : index
    %c0_225 = arith.constant 0 : index
    %468 = vector.load %arg45[%c3_224, %c0_225] : memref<9x32xf32, #tpu.memory_space<vmem>>, vector<1x32xf32>
    %469 = vector.extract_strided_slice %429 {offsets = [0, 31], sizes = [20, 32], strides = [1, 1]} : vector<20x128xf32> to vector<20x32xf32>
    %470 = vector.broadcast %468 : vector<1x32xf32> to vector<20x32xf32>
    %471 = arith.mulf %469, %470 : vector<20x32xf32>
    %c0_226 = arith.constant 0 : index
    %c3_227 = arith.constant 3 : index
    %472 = vector.load %arg39[%c0_226, %c3_227] : memref<20x9xf32, #tpu.memory_space<vmem>>, vector<20x1xf32>
    %473 = vector.broadcast %472 : vector<20x1xf32> to vector<20x32xf32>
    %474 = arith.mulf %471, %473 : vector<20x32xf32>
    %475 = arith.addf %463, %474 : vector<20x32xf32>
    %476 = vector.extract_strided_slice %418 {offsets = [0, 31], sizes = [80, 32], strides = [1, 1]} : vector<80x128xf32> to vector<80x32xf32>
    %477 = vector.broadcast %468 : vector<1x32xf32> to vector<80x32xf32>
    %478 = arith.mulf %476, %477 : vector<80x32xf32>
    %479 = arith.addf %467, %478 : vector<80x32xf32>
    %c4_228 = arith.constant 4 : index
    %c0_229 = arith.constant 0 : index
    %480 = vector.load %arg45[%c4_228, %c0_229] : memref<9x32xf32, #tpu.memory_space<vmem>>, vector<1x32xf32>
    %481 = vector.extract_strided_slice %429 {offsets = [0, 0], sizes = [20, 32], strides = [1, 1]} : vector<20x128xf32> to vector<20x32xf32>
    %482 = vector.broadcast %480 : vector<1x32xf32> to vector<20x32xf32>
    %483 = arith.mulf %481, %482 : vector<20x32xf32>
    %c0_230 = arith.constant 0 : index
    %c4_231 = arith.constant 4 : index
    %484 = vector.load %arg39[%c0_230, %c4_231] : memref<20x9xf32, #tpu.memory_space<vmem>>, vector<20x1xf32>
    %485 = vector.broadcast %484 : vector<20x1xf32> to vector<20x32xf32>
    %486 = arith.mulf %483, %485 : vector<20x32xf32>
    %487 = arith.addf %475, %486 : vector<20x32xf32>
    %488 = vector.extract_strided_slice %418 {offsets = [0, 0], sizes = [80, 32], strides = [1, 1]} : vector<80x128xf32> to vector<80x32xf32>
    %489 = vector.broadcast %480 : vector<1x32xf32> to vector<80x32xf32>
    %490 = arith.mulf %488, %489 : vector<80x32xf32>
    %491 = arith.addf %479, %490 : vector<80x32xf32>
    %c5_232 = arith.constant 5 : index
    %c0_233 = arith.constant 0 : index
    %492 = vector.load %arg45[%c5_232, %c0_233] : memref<9x32xf32, #tpu.memory_space<vmem>>, vector<1x32xf32>
    %493 = vector.extract_strided_slice %429 {offsets = [0, 32], sizes = [20, 32], strides = [1, 1]} : vector<20x128xf32> to vector<20x32xf32>
    %494 = vector.broadcast %492 : vector<1x32xf32> to vector<20x32xf32>
    %495 = arith.mulf %493, %494 : vector<20x32xf32>
    %c0_234 = arith.constant 0 : index
    %c5_235 = arith.constant 5 : index
    %496 = vector.load %arg39[%c0_234, %c5_235] : memref<20x9xf32, #tpu.memory_space<vmem>>, vector<20x1xf32>
    %497 = vector.broadcast %496 : vector<20x1xf32> to vector<20x32xf32>
    %498 = arith.mulf %495, %497 : vector<20x32xf32>
    %499 = arith.addf %487, %498 : vector<20x32xf32>
    %500 = vector.extract_strided_slice %418 {offsets = [0, 32], sizes = [80, 32], strides = [1, 1]} : vector<80x128xf32> to vector<80x32xf32>
    %501 = vector.broadcast %492 : vector<1x32xf32> to vector<80x32xf32>
    %502 = arith.mulf %500, %501 : vector<80x32xf32>
    %503 = arith.addf %491, %502 : vector<80x32xf32>
    %c6_236 = arith.constant 6 : index
    %c0_237 = arith.constant 0 : index
    %504 = vector.load %arg45[%c6_236, %c0_237] : memref<9x32xf32, #tpu.memory_space<vmem>>, vector<1x32xf32>
    %505 = vector.extract_strided_slice %429 {offsets = [0, 95], sizes = [20, 32], strides = [1, 1]} : vector<20x128xf32> to vector<20x32xf32>
    %506 = vector.broadcast %504 : vector<1x32xf32> to vector<20x32xf32>
    %507 = arith.mulf %505, %506 : vector<20x32xf32>
    %c0_238 = arith.constant 0 : index
    %c6_239 = arith.constant 6 : index
    %508 = vector.load %arg39[%c0_238, %c6_239] : memref<20x9xf32, #tpu.memory_space<vmem>>, vector<20x1xf32>
    %509 = vector.broadcast %508 : vector<20x1xf32> to vector<20x32xf32>
    %510 = arith.mulf %507, %509 : vector<20x32xf32>
    %511 = arith.addf %499, %510 : vector<20x32xf32>
    %512 = vector.extract_strided_slice %418 {offsets = [0, 95], sizes = [80, 32], strides = [1, 1]} : vector<80x128xf32> to vector<80x32xf32>
    %513 = vector.broadcast %504 : vector<1x32xf32> to vector<80x32xf32>
    %514 = arith.mulf %512, %513 : vector<80x32xf32>
    %515 = arith.addf %503, %514 : vector<80x32xf32>
    %c7_240 = arith.constant 7 : index
    %c0_241 = arith.constant 0 : index
    %516 = vector.load %arg45[%c7_240, %c0_241] : memref<9x32xf32, #tpu.memory_space<vmem>>, vector<1x32xf32>
    %517 = vector.extract_strided_slice %429 {offsets = [0, 64], sizes = [20, 32], strides = [1, 1]} : vector<20x128xf32> to vector<20x32xf32>
    %518 = vector.broadcast %516 : vector<1x32xf32> to vector<20x32xf32>
    %519 = arith.mulf %517, %518 : vector<20x32xf32>
    %c0_242 = arith.constant 0 : index
    %c7_243 = arith.constant 7 : index
    %520 = vector.load %arg39[%c0_242, %c7_243] : memref<20x9xf32, #tpu.memory_space<vmem>>, vector<20x1xf32>
    %521 = vector.broadcast %520 : vector<20x1xf32> to vector<20x32xf32>
    %522 = arith.mulf %519, %521 : vector<20x32xf32>
    %523 = arith.addf %511, %522 : vector<20x32xf32>
    %524 = vector.extract_strided_slice %418 {offsets = [0, 64], sizes = [80, 32], strides = [1, 1]} : vector<80x128xf32> to vector<80x32xf32>
    %525 = vector.broadcast %516 : vector<1x32xf32> to vector<80x32xf32>
    %526 = arith.mulf %524, %525 : vector<80x32xf32>
    %527 = arith.addf %515, %526 : vector<80x32xf32>
    %c8_244 = arith.constant 8 : index
    %c0_245 = arith.constant 0 : index
    %528 = vector.load %arg45[%c8_244, %c0_245] : memref<9x32xf32, #tpu.memory_space<vmem>>, vector<1x32xf32>
    %529 = vector.extract_strided_slice %429 {offsets = [0, 96], sizes = [20, 32], strides = [1, 1]} : vector<20x128xf32> to vector<20x32xf32>
    %530 = vector.broadcast %528 : vector<1x32xf32> to vector<20x32xf32>
    %531 = arith.mulf %529, %530 : vector<20x32xf32>
    %c0_246 = arith.constant 0 : index
    %c8_247 = arith.constant 8 : index
    %532 = vector.load %arg39[%c0_246, %c8_247] : memref<20x9xf32, #tpu.memory_space<vmem>>, vector<20x1xf32>
    %533 = vector.broadcast %532 : vector<20x1xf32> to vector<20x32xf32>
    %534 = arith.mulf %531, %533 : vector<20x32xf32>
    %535 = arith.addf %523, %534 : vector<20x32xf32>
    %536 = vector.extract_strided_slice %418 {offsets = [0, 96], sizes = [80, 32], strides = [1, 1]} : vector<80x128xf32> to vector<80x32xf32>
    %537 = vector.broadcast %528 : vector<1x32xf32> to vector<80x32xf32>
    %538 = arith.mulf %536, %537 : vector<80x32xf32>
    %539 = arith.addf %527, %538 : vector<80x32xf32>
    %c0_248 = arith.constant 0 : index
    %c0_249 = arith.constant 0 : index
    %540 = vector.load %arg40[%c0_248, %c0_249] : memref<20x1xf32, #tpu.memory_space<vmem>>, vector<20x1xf32>
    %541 = vector.broadcast %540 : vector<20x1xf32> to vector<20x32xf32>
    %542 = arith.mulf %535, %541 : vector<20x32xf32>
    %c0_250 = arith.constant 0 : index
    %c0_251 = arith.constant 0 : index
    %543 = vector.load %arg41[%c0_250, %c0_251] : memref<20x1xf32, #tpu.memory_space<vmem>>, vector<20x1xf32>
    %544 = vector.broadcast %543 : vector<20x1xf32> to vector<20x32xf32>
    %545 = arith.addf %542, %544 : vector<20x32xf32>
    %cst_252 = arith.constant 0.000000e+00 : f32
    %546 = vector.broadcast %cst_252 : f32 to vector<20x32xf32>
    %547 = arith.maximumf %545, %546 : vector<20x32xf32>
    %cst_253 = arith.constant 0.111111112 : f32
    %548 = vector.broadcast %cst_253 : f32 to vector<80x32xf32>
    %549 = arith.mulf %539, %548 : vector<80x32xf32>
    %cst_254 = arith.constant 0.000000e+00 : f32
    %550 = vector.broadcast %cst_254 : f32 to vector<80x32xf32>
    %551 = arith.maximumf %549, %550 : vector<80x32xf32>
    %c0_255 = arith.constant 0 : index
    %c0_256 = arith.constant 0 : index
    %552 = vector.load %arg42[%c0_255, %c0_256] : memref<80x20xbf16, #tpu.memory_space<vmem>>, vector<80x20xbf16>
    %553 = arith.truncf %547 : vector<20x32xf32> to vector<20x32xbf16>
    %cst_257 = arith.constant dense<0.000000e+00> : vector<80x32xf32>
    %554 = tpu.matmul %552, %553, %cst_257 {dimension_numbers = #tpu.dot_dimension_numbers<[1], [0], [0], [1], [0, 0, 1, 1], [], []>} : vector<80x20xbf16>, vector<20x32xbf16>, vector<80x32xf32> -> vector<80x32xf32>
    %c0_258 = arith.constant 0 : index
    %c0_259 = arith.constant 0 : index
    %555 = vector.load %arg43[%c0_258, %c0_259] : memref<80x1xf32, #tpu.memory_space<vmem>>, vector<80x1xf32>
    %556 = vector.broadcast %555 : vector<80x1xf32> to vector<80x32xf32>
    %557 = arith.mulf %554, %556 : vector<80x32xf32>
    %c0_260 = arith.constant 0 : index
    %c0_261 = arith.constant 0 : index
    %558 = vector.load %arg44[%c0_260, %c0_261] : memref<80x1xf32, #tpu.memory_space<vmem>>, vector<80x1xf32>
    %559 = vector.broadcast %558 : vector<80x1xf32> to vector<80x32xf32>
    %560 = arith.addf %557, %559 : vector<80x32xf32>
    %cst_262 = arith.constant 0.000000e+00 : f32
    %561 = vector.broadcast %cst_262 : f32 to vector<80x32xf32>
    %562 = arith.maximumf %560, %561 : vector<80x32xf32>
    %c0_263 = arith.constant 0 : index
    %c0_264 = arith.constant 0 : index
    %563 = vector.load %arg46[%c0_263, %c0_264] : memref<32x2xf32, #tpu.memory_space<vmem>>, vector<32x2xf32>
    %c0_265 = arith.constant 0 : index
    %c0_266 = arith.constant 0 : index
    %564 = vector.load %arg47[%c0_265, %c0_266] : memref<10x160xf32, #tpu.memory_space<vmem>>, vector<10x160xf32>
    %c0_267 = arith.constant 0 : index
    %c0_268 = arith.constant 0 : index
    %565 = vector.load %arg48[%c0_267, %c0_268] : memref<10x1xf32, #tpu.memory_space<vmem>>, vector<10x1xf32>
    %cst_269 = arith.constant dense<0.000000e+00> : vector<80x2xf32>
    %566 = tpu.matmul %562, %563, %cst_269 {dimension_numbers = #tpu.dot_dimension_numbers<[1], [0], [0], [1], [0, 0, 1, 1], [], []>} : vector<80x32xf32>, vector<32x2xf32>, vector<80x2xf32> -> vector<80x2xf32>
    %cst_270 = arith.constant dense<0.000000e+00> : vector<80x2xf32>
    %567 = tpu.matmul %551, %563, %cst_270 {dimension_numbers = #tpu.dot_dimension_numbers<[1], [0], [0], [1], [0, 0, 1, 1], [], []>} : vector<80x32xf32>, vector<32x2xf32>, vector<80x2xf32> -> vector<80x2xf32>
    %568 = vector.extract_strided_slice %564 {offsets = [0, 0], sizes = [10, 80], strides = [1, 1]} : vector<10x160xf32> to vector<10x80xf32>
    %cst_271 = arith.constant dense<0.000000e+00> : vector<10x2xf32>
    %569 = tpu.matmul %568, %566, %cst_271 {dimension_numbers = #tpu.dot_dimension_numbers<[1], [0], [0], [1], [0, 0, 1, 1], [], []>} : vector<10x80xf32>, vector<80x2xf32>, vector<10x2xf32> -> vector<10x2xf32>
    %570 = vector.extract_strided_slice %564 {offsets = [0, 80], sizes = [10, 80], strides = [1, 1]} : vector<10x160xf32> to vector<10x80xf32>
    %cst_272 = arith.constant dense<0.000000e+00> : vector<10x2xf32>
    %571 = tpu.matmul %570, %567, %cst_272 {dimension_numbers = #tpu.dot_dimension_numbers<[1], [0], [0], [1], [0, 0, 1, 1], [], []>} : vector<10x80xf32>, vector<80x2xf32>, vector<10x2xf32> -> vector<10x2xf32>
    %572 = arith.addf %569, %571 : vector<10x2xf32>
    %573 = vector.broadcast %565 : vector<10x1xf32> to vector<10x2xf32>
    %574 = arith.addf %572, %573 : vector<10x2xf32>
    %c0_273 = arith.constant 0 : index
    %c0_274 = arith.constant 0 : index
    %575 = vector.load %arg49[%c0_273, %c0_274] : memref<10x2xf32, #tpu.memory_space<vmem>>, vector<10x2xf32>
    tpu.vector_store %arg49[%c0_273, %c0_274], %574 {strides = array<i32>} : memref<10x2xf32, #tpu.memory_space<vmem>>, vector<10x2xf32>,
    return
  }
}

</mosaic_0001>

<llo_original>
// kernel: forward.1
$region0: #{forward.1}
  #allocation0 [shape = 'u32[]', space=smem, size = 0x4, offset = 0x4, fixed_abs, tag = 'smem constant byte address 0x4 - core index']
  #allocation1 [shape = 'u32[144,128]{1,0:T(1,128)}', space=vmem, size = 0x12000, scoped, tag = 'internal scratch']
  #allocation2 [shape = 'f32[80,512]{1,0:T(8,128)}', space=vmem, size = 0x28000, scoped, tag = 'scratch operand']
  #allocation3 [shape = 'bf16[80,384]{1,0:T(8,128)(2,1)}', space=vmem, size = 0xf000, scoped, tag = 'scratch operand']
  %s0 = inlined_call_operand.smem [shape: u32[50], index: -1, kind: input, shape index: {}]
  %s1 = sld [smem:[%s0]]
  %s2 = scalar_lea.smem %s0, 1
  %s3 = sld [smem:[%s2]]
  %s4 = scalar_lea.smem %s0, 2
  %s5 = sld [smem:[%s4]]
  %s6 = scalar_lea.smem %s0, 3
  %s7 = sld [smem:[%s6]]
  %s8 = scalar_lea.smem %s0, 4
  %s9 = sld [smem:[%s8]]
  %s10 = scalar_lea.smem %s0, 5
  %s11 = sld [smem:[%s10]]
  %s12 = scalar_lea.smem %s0, 6
  %s13 = sld [smem:[%s12]]
  %s14 = scalar_lea.smem %s0, 7
  %s15 = sld [smem:[%s14]]
  %s16 = scalar_lea.smem %s0, 8
  %s17 = sld [smem:[%s16]]
  %s18 = scalar_lea.smem %s0, 9
  %s19 = sld [smem:[%s18]]
  %s20 = scalar_lea.smem %s0, 10
  %s21 = sld [smem:[%s20]]
  %s22 = scalar_lea.smem %s0, 11
  %s23 = sld [smem:[%s22]]
  %s24 = scalar_lea.smem %s0, 12
  %s25 = sld [smem:[%s24]]
  %s26 = scalar_lea.smem %s0, 13
  %s27 = sld [smem:[%s26]]
  %s28 = scalar_lea.smem %s0, 14
  %s29 = sld [smem:[%s28]]
  %s30 = scalar_lea.smem %s0, 15
  %s31 = sld [smem:[%s30]]
  %s32 = scalar_lea.smem %s0, 16
  %s33 = sld [smem:[%s32]]
  %s34 = scalar_lea.smem %s0, 17
  %s35 = sld [smem:[%s34]]
  %s36 = scalar_lea.smem %s0, 18
  %s37 = sld [smem:[%s36]]
  %s38 = scalar_lea.smem %s0, 19
  %s39 = sld [smem:[%s38]]
  %s40 = scalar_lea.smem %s0, 20
  %s41 = sld [smem:[%s40]]
  %s42 = scalar_lea.smem %s0, 21
  %s43 = sld [smem:[%s42]]
  %s44 = scalar_lea.smem %s0, 22
  %s45 = sld [smem:[%s44]]
  %s46 = scalar_lea.smem %s0, 23
  %s47 = sld [smem:[%s46]]
  %s48 = scalar_lea.smem %s0, 24
  %s49 = sld [smem:[%s48]]
  %s50 = scalar_lea.smem %s0, 25
  %s51 = sld [smem:[%s50]]
  %s52 = scalar_lea.smem %s0, 26
  %s53 = sld [smem:[%s52]]
  %s54 = scalar_lea.smem %s0, 27
  %s55 = sld [smem:[%s54]]
  %s56 = scalar_lea.smem %s0, 28
  %s57 = sld [smem:[%s56]]
  %s58 = scalar_lea.smem %s0, 29
  %s59 = sld [smem:[%s58]]
  %s60 = scalar_lea.smem %s0, 30
  %s61 = sld [smem:[%s60]]
  %s62 = scalar_lea.smem %s0, 31
  %s63 = sld [smem:[%s62]]
  %s64 = scalar_lea.smem %s0, 32
  %s65 = sld [smem:[%s64]]
  %s66 = scalar_lea.smem %s0, 33
  %s67 = sld [smem:[%s66]]
  %s68 = scalar_lea.smem %s0, 34
  %s69 = sld [smem:[%s68]]
  %s70 = scalar_lea.smem %s0, 35
  %s71 = sld [smem:[%s70]]
  %s72 = scalar_lea.smem %s0, 36
  %s73 = sld [smem:[%s72]]
  %s74 = scalar_lea.smem %s0, 37
  %s75 = sld [smem:[%s74]]
  %s76 = scalar_lea.smem %s0, 38
  %s77 = sld [smem:[%s76]]
  %s78 = scalar_lea.smem %s0, 39
  %s79 = sld [smem:[%s78]]
  %s80 = scalar_lea.smem %s0, 40
  %s81 = sld [smem:[%s80]]
  %s82 = scalar_lea.smem %s0, 41
  %s83 = sld [smem:[%s82]]
  %s84 = scalar_lea.smem %s0, 42
  %s85 = sld [smem:[%s84]]
  %s86 = scalar_lea.smem %s0, 43
  %s87 = sld [smem:[%s86]]
  %s88 = scalar_lea.smem %s0, 44
  %s89 = sld [smem:[%s88]]
  %s90 = scalar_lea.smem %s0, 45
  %s91 = sld [smem:[%s90]]
  %s92 = scalar_lea.smem %s0, 46
  %s93 = sld [smem:[%s92]]
  %s94 = scalar_lea.smem %s0, 47
  %s95 = sld [smem:[%s94]]
  %s96 = scalar_lea.smem %s0, 48
  %s97 = sld [smem:[%s96]]
  %s98 = scalar_lea.smem %s0, 49
  %s99 = sld [smem:[%s98]]
  %s100 = sld [smem:[#allocation0]]
  $region206: #{forward.1} parent=0
    _
  %s102 = ssub.s32 1, %s100
  %s103 = scalar_select 0, %s102, %s100
  // Predicated region
  $region2: #{forward.1} parent=0 // pred_check
    _
  $region3: #{forward.1} parent=0 // pred_check_branch
    %105 = sbr.rel (0) target = $region5
  $region4: #{forward.1} parent=0 // pred_region
    _
  $region5: #{forward.1} parent=0 // pred_fallthru
    _
  // Predicated region
  $region6: #{forward.1} parent=0 // pred_check
    _
  $region7: #{forward.1} parent=0 // pred_check_branch
    %107 = sbr.rel (0) target = $region9
  $region8: #{forward.1} parent=0 // pred_region
    _
  $region9: #{forward.1} parent=0 // pred_fallthru
    _
  // Predicated region
  $region10: #{forward.1} parent=0 // pred_check
    _
  $region11: #{forward.1} parent=0 // pred_check_branch
    %109 = sbr.rel (0) target = $region13
  $region12: #{forward.1} parent=0 // pred_region
    _
  $region13: #{forward.1} parent=0 // pred_fallthru
    _
  // Predicated region
  $region14: #{forward.1} parent=0 // pred_check
    _
  $region15: #{forward.1} parent=0 // pred_check_branch
    %111 = sbr.rel (0) target = $region17
  $region16: #{forward.1} parent=0 // pred_region
    _
  $region17: #{forward.1} parent=0 // pred_fallthru
    _
  // Predicated region
  $region18: #{forward.1} parent=0 // pred_check
    _
  $region19: #{forward.1} parent=0 // pred_check_branch
    %113 = sbr.rel (0) target = $region21
  $region20: #{forward.1} parent=0 // pred_region
    _
  $region21: #{forward.1} parent=0 // pred_fallthru
    _
  // Predicated region
  $region22: #{forward.1} parent=0 // pred_check
    _
  $region23: #{forward.1} parent=0 // pred_check_branch
    %115 = sbr.rel (0) target = $region25
  $region24: #{forward.1} parent=0 // pred_region
    _
  $region25: #{forward.1} parent=0 // pred_fallthru
    _
  // Predicated region
  $region26: #{forward.1} parent=0 // pred_check
    _
  $region27: #{forward.1} parent=0 // pred_check_branch
    %117 = sbr.rel (0) target = $region29
  $region28: #{forward.1} parent=0 // pred_region
    _
  $region29: #{forward.1} parent=0 // pred_fallthru
    _
  // Predicated region
  $region30: #{forward.1} parent=0 // pred_check
    _
  $region31: #{forward.1} parent=0 // pred_check_branch
    %119 = sbr.rel (0) target = $region33
  $region32: #{forward.1} parent=0 // pred_region
    _
  $region33: #{forward.1} parent=0 // pred_fallthru
    _
  // Predicated region
  $region34: #{forward.1} parent=0 // pred_check
    _
  $region35: #{forward.1} parent=0 // pred_check_branch
    %121 = sbr.rel (0) target = $region37
  $region36: #{forward.1} parent=0 // pred_region
    _
  $region37: #{forward.1} parent=0 // pred_fallthru
    _
  // Predicated region
  $region38: #{forward.1} parent=0 // pred_check
    _
  $region39: #{forward.1} parent=0 // pred_check_branch
    %123 = sbr.rel (0) target = $region41
  $region40: #{forward.1} parent=0 // pred_region
    _
  $region41: #{forward.1} parent=0 // pred_fallthru
    _
  // Predicated region
  $region42: #{forward.1} parent=0 // pred_check
    _
  $region43: #{forward.1} parent=0 // pred_check_branch
    %125 = sbr.rel (0) target = $region45
  $region44: #{forward.1} parent=0 // pred_region
    _
  $region45: #{forward.1} parent=0 // pred_fallthru
    _
  // Predicated region
  $region46: #{forward.1} parent=0 // pred_check
    _
  $region47: #{forward.1} parent=0 // pred_check_branch
    %127 = sbr.rel (0) target = $region49
  $region48: #{forward.1} parent=0 // pred_region
    _
  $region49: #{forward.1} parent=0 // pred_fallthru
    _
  // Predicated region
  $region50: #{forward.1} parent=0 // pred_check
    _
  $region51: #{forward.1} parent=0 // pred_check_branch
    %129 = sbr.rel (0) target = $region53
  $region52: #{forward.1} parent=0 // pred_region
    _
  $region53: #{forward.1} parent=0 // pred_fallthru
    _
  // Predicated region
  $region54: #{forward.1} parent=0 // pred_check
    _
  $region55: #{forward.1} parent=0 // pred_check_branch
    %131 = sbr.rel (0) target = $region57
  $region56: #{forward.1} parent=0 // pred_region
    _
  $region57: #{forward.1} parent=0 // pred_fallthru
    _
  // Predicated region
  $region58: #{forward.1} parent=0 // pred_check
    _
  $region59: #{forward.1} parent=0 // pred_check_branch
    %133 = sbr.rel (0) target = $region61
  $region60: #{forward.1} parent=0 // pred_region
    _
  $region61: #{forward.1} parent=0 // pred_fallthru
    _
  // Predicated region
  $region62: #{forward.1} parent=0 // pred_check
    _
  $region63: #{forward.1} parent=0 // pred_check_branch
    %135 = sbr.rel (0) target = $region65
  $region64: #{forward.1} parent=0 // pred_region
    _
  $region65: #{forward.1} parent=0 // pred_fallthru
    _
  // Predicated region
  $region66: #{forward.1} parent=0 // pred_check
    _
  $region67: #{forward.1} parent=0 // pred_check_branch
    %137 = sbr.rel (0) target = $region69
  $region68: #{forward.1} parent=0 // pred_region
    _
  $region69: #{forward.1} parent=0 // pred_fallthru
    _
  // Predicated region
  $region70: #{forward.1} parent=0 // pred_check
    _
  $region71: #{forward.1} parent=0 // pred_check_branch
    %139 = sbr.rel (0) target = $region73
  $region72: #{forward.1} parent=0 // pred_region
    _
  $region73: #{forward.1} parent=0 // pred_fallthru
    _
  // Predicated region
  $region74: #{forward.1} parent=0 // pred_check
    _
  $region75: #{forward.1} parent=0 // pred_check_branch
    %141 = sbr.rel (0) target = $region77
  $region76: #{forward.1} parent=0 // pred_region
    _
  $region77: #{forward.1} parent=0 // pred_fallthru
    _
  // Predicated region
  $region78: #{forward.1} parent=0 // pred_check
    _
  $region79: #{forward.1} parent=0 // pred_check_branch
    %143 = sbr.rel (0) target = $region81
  $region80: #{forward.1} parent=0 // pred_region
    _
  $region81: #{forward.1} parent=0 // pred_fallthru
    _
  // Predicated region
  $region82: #{forward.1} parent=0 // pred_check
    _
  $region83: #{forward.1} parent=0 // pred_check_branch
    %145 = sbr.rel (0) target = $region85
  $region84: #{forward.1} parent=0 // pred_region
    _
  $region85: #{forward.1} parent=0 // pred_fallthru
    _
  // Predicated region
  $region86: #{forward.1} parent=0 // pred_check
    _
  $region87: #{forward.1} parent=0 // pred_check_branch
    %147 = sbr.rel (0) target = $region89
  $region88: #{forward.1} parent=0 // pred_region
    _
  $region89: #{forward.1} parent=0 // pred_fallthru
    _
  // Predicated region
  $region90: #{forward.1} parent=0 // pred_check
    _
  $region91: #{forward.1} parent=0 // pred_check_branch
    %149 = sbr.rel (0) target = $region93
  $region92: #{forward.1} parent=0 // pred_region
    _
  $region93: #{forward.1} parent=0 // pred_fallthru
    _
  // Predicated region
  $region94: #{forward.1} parent=0 // pred_check
    _
  $region95: #{forward.1} parent=0 // pred_check_branch
    %151 = sbr.rel (0) target = $region97
  $region96: #{forward.1} parent=0 // pred_region
    _
  $region97: #{forward.1} parent=0 // pred_fallthru
    _
  // Predicated region
  $region98: #{forward.1} parent=0 // pred_check
    _
  $region99: #{forward.1} parent=0 // pred_check_branch
    %153 = sbr.rel (0) target = $region101
  $region100: #{forward.1} parent=0 // pred_region
    _
  $region101: #{forward.1} parent=0 // pred_fallthru
    _
  // Predicated region
  $region102: #{forward.1} parent=0 // pred_check
    _
  $region103: #{forward.1} parent=0 // pred_check_branch
    %155 = sbr.rel (0) target = $region105
  $region104: #{forward.1} parent=0 // pred_region
    _
  $region105: #{forward.1} parent=0 // pred_fallthru
    _
  // Predicated region
  $region106: #{forward.1} parent=0 // pred_check
    _
  $region107: #{forward.1} parent=0 // pred_check_branch
    %157 = sbr.rel (0) target = $region109
  $region108: #{forward.1} parent=0 // pred_region
    _
  $region109: #{forward.1} parent=0 // pred_fallthru
    _
  // Predicated region
  $region110: #{forward.1} parent=0 // pred_check
    _
  $region111: #{forward.1} parent=0 // pred_check_branch
    %159 = sbr.rel (0) target = $region113
  $region112: #{forward.1} parent=0 // pred_region
    _
  $region113: #{forward.1} parent=0 // pred_fallthru
    _
  // Predicated region
  $region114: #{forward.1} parent=0 // pred_check
    _
  $region115: #{forward.1} parent=0 // pred_check_branch
    %161 = sbr.rel (0) target = $region117
  $region116: #{forward.1} parent=0 // pred_region
    _
  $region117: #{forward.1} parent=0 // pred_fallthru
    _
  // Predicated region
  $region118: #{forward.1} parent=0 // pred_check
    _
  $region119: #{forward.1} parent=0 // pred_check_branch
    %163 = sbr.rel (0) target = $region121
  $region120: #{forward.1} parent=0 // pred_region
    _
  $region121: #{forward.1} parent=0 // pred_fallthru
    _
  // Predicated region
  $region122: #{forward.1} parent=0 // pred_check
    _
  $region123: #{forward.1} parent=0 // pred_check_branch
    %165 = sbr.rel (0) target = $region125
  $region124: #{forward.1} parent=0 // pred_region
    _
  $region125: #{forward.1} parent=0 // pred_fallthru
    _
  // Predicated region
  $region126: #{forward.1} parent=0 // pred_check
    _
  $region127: #{forward.1} parent=0 // pred_check_branch
    %167 = sbr.rel (0) target = $region129
  $region128: #{forward.1} parent=0 // pred_region
    _
  $region129: #{forward.1} parent=0 // pred_fallthru
    _
  // Predicated region
  $region130: #{forward.1} parent=0 // pred_check
    _
  $region131: #{forward.1} parent=0 // pred_check_branch
    %169 = sbr.rel (0) target = $region133
  $region132: #{forward.1} parent=0 // pred_region
    _
  $region133: #{forward.1} parent=0 // pred_fallthru
    _
  // Predicated region
  $region134: #{forward.1} parent=0 // pred_check
    _
  $region135: #{forward.1} parent=0 // pred_check_branch
    %171 = sbr.rel (0) target = $region137
  $region136: #{forward.1} parent=0 // pred_region
    _
  $region137: #{forward.1} parent=0 // pred_fallthru
    _
  // Predicated region
  $region138: #{forward.1} parent=0 // pred_check
    _
  $region139: #{forward.1} parent=0 // pred_check_branch
    %173 = sbr.rel (0) target = $region141
  $region140: #{forward.1} parent=0 // pred_region
    _
  $region141: #{forward.1} parent=0 // pred_fallthru
    _
  // Predicated region
  $region142: #{forward.1} parent=0 // pred_check
    _
  $region143: #{forward.1} parent=0 // pred_check_branch
    %175 = sbr.rel (0) target = $region145
  $region144: #{forward.1} parent=0 // pred_region
    _
  $region145: #{forward.1} parent=0 // pred_fallthru
    _
  // Predicated region
  $region146: #{forward.1} parent=0 // pred_check
    _
  $region147: #{forward.1} parent=0 // pred_check_branch
    %177 = sbr.rel (0) target = $region149
  $region148: #{forward.1} parent=0 // pred_region
    _
  $region149: #{forward.1} parent=0 // pred_fallthru
    _
  // Predicated region
  $region150: #{forward.1} parent=0 // pred_check
    _
  $region151: #{forward.1} parent=0 // pred_check_branch
    %179 = sbr.rel (0) target = $region153
  $region152: #{forward.1} parent=0 // pred_region
    _
  $region153: #{forward.1} parent=0 // pred_fallthru
    _
  // Predicated region
  $region154: #{forward.1} parent=0 // pred_check
    _
  $region155: #{forward.1} parent=0 // pred_check_branch
    %181 = sbr.rel (0) target = $region157
  $region156: #{forward.1} parent=0 // pred_region
    _
  $region157: #{forward.1} parent=0 // pred_fallthru
    _
  // Predicated region
  $region158: #{forward.1} parent=0 // pred_check
    _
  $region159: #{forward.1} parent=0 // pred_check_branch
    %183 = sbr.rel (0) target = $region161
  $region160: #{forward.1} parent=0 // pred_region
    _
  $region161: #{forward.1} parent=0 // pred_fallthru
    _
  // Predicated region
  $region162: #{forward.1} parent=0 // pred_check
    _
  $region163: #{forward.1} parent=0 // pred_check_branch
    %185 = sbr.rel (0) target = $region165
  $region164: #{forward.1} parent=0 // pred_region
    _
  $region165: #{forward.1} parent=0 // pred_fallthru
    _
  // Predicated region
  $region166: #{forward.1} parent=0 // pred_check
    _
  $region167: #{forward.1} parent=0 // pred_check_branch
    %187 = sbr.rel (0) target = $region169
  $region168: #{forward.1} parent=0 // pred_region
    _
  $region169: #{forward.1} parent=0 // pred_fallthru
    _
  // Predicated region
  $region170: #{forward.1} parent=0 // pred_check
    _
  $region171: #{forward.1} parent=0 // pred_check_branch
    %189 = sbr.rel (0) target = $region173
  $region172: #{forward.1} parent=0 // pred_region
    _
  $region173: #{forward.1} parent=0 // pred_fallthru
    _
  // Predicated region
  $region174: #{forward.1} parent=0 // pred_check
    _
  $region175: #{forward.1} parent=0 // pred_check_branch
    %191 = sbr.rel (0) target = $region177
  $region176: #{forward.1} parent=0 // pred_region
    _
  $region177: #{forward.1} parent=0 // pred_fallthru
    _
  // Predicated region
  $region178: #{forward.1} parent=0 // pred_check
    _
  $region179: #{forward.1} parent=0 // pred_check_branch
    %193 = sbr.rel (0) target = $region181
  $region180: #{forward.1} parent=0 // pred_region
    _
  $region181: #{forward.1} parent=0 // pred_fallthru
    _
  // Predicated region
  $region182: #{forward.1} parent=0 // pred_check
    _
  $region183: #{forward.1} parent=0 // pred_check_branch
    %195 = sbr.rel (0) target = $region185
  $region184: #{forward.1} parent=0 // pred_region
    _
  $region185: #{forward.1} parent=0 // pred_fallthru
    _
  // Predicated region
  $region186: #{forward.1} parent=0 // pred_check
    _
  $region187: #{forward.1} parent=0 // pred_check_branch
    %197 = sbr.rel (0) target = $region189
  $region188: #{forward.1} parent=0 // pred_region
    _
  $region189: #{forward.1} parent=0 // pred_fallthru
    _
  // Predicated region
  $region190: #{forward.1} parent=0 // pred_check
    _
  $region191: #{forward.1} parent=0 // pred_check_branch
    %199 = sbr.rel (0) target = $region193
  $region192: #{forward.1} parent=0 // pred_region
    _
  $region193: #{forward.1} parent=0 // pred_fallthru
    _
  // Predicated region
  $region194: #{forward.1} parent=0 // pred_check
    _
  $region195: #{forward.1} parent=0 // pred_check_branch
    %201 = sbr.rel (0) target = $region197
  $region196: #{forward.1} parent=0 // pred_region
    _
  $region197: #{forward.1} parent=0 // pred_fallthru
    _
  %v203 = vld [vmem:[%s1] sm:$0xff]
  %v204 = vld [vmem:[%s1 + $0x8] sm:$0xff]
  %v205 = vld [vmem:[%s1 + $0x10] sm:$0xff]
  %v206 = vld [vmem:[%s1 + $0x18] sm:$0xff]
  %v207 = vld [vmem:[%s3] sm:$0xf]
  %v208 = vld [vmem:[%s3 + $0x4] sm:$0xf]
  %v209 = vld [vmem:[%s3 + $0x8] sm:$0xf]
  %v210 = vld [vmem:[%s5] sm:$0xff]
  %v211 = vld [vmem:[%s5 + $0x8] sm:$0xff]
  %v212 = vld [vmem:[%s5 + $0x10] sm:$0xff]
  %v213 = vld [vmem:[%s7] sm:$0xff]
  %v214 = vld [vmem:[%s7 + $0x8] sm:$0xff]
  %v215 = vld [vmem:[%s7 + $0x10] sm:$0xff]
  %v219 = vunpack.c.l.b16 %v207
  %v220 = vunpack.c.l.b16 %v208
  %v221 = vunpack.c.l.b16 %v209
  %v222 = vpack.c.b16 %v220, %v219
  %v223 = vpack.c.b16 %v221, %v221
  %v228 = vcombine.high %v203, %v203
  %v230 = vunpack.c.l.s4 1983009808
  %v231 = vunpack.c.0.s8 %v230
  %v232 = vlaneseq
  %v233 = vshrl.u32 %v232, 7
  %v234 = vsub.s32 %v231, %v233
  %v235 = vrot.slane %v203, %v234
  %v237 = vunpack.c.l.s4 1983009808
  %v238 = vunpack.c.0.s8 %v237
  %v239 = vlaneseq
  %v240 = vshrl.u32 %v239, 7
  %v241 = vsub.s32 %v238, %v240
  %v242 = vrot.slane %v228, %v241
  %v243 = vcombine.high %v235, %v235
  %v244 = vcombine.high %v242, %v242
  %v245 = vcombine.high %v204, %v204
  %v247 = vunpack.c.l.s4 1983009808
  %v248 = vunpack.c.0.s8 %v247
  %v249 = vlaneseq
  %v250 = vshrl.u32 %v249, 7
  %v251 = vsub.s32 %v248, %v250
  %v252 = vrot.slane %v204, %v251
  %v254 = vunpack.c.l.s4 1983009808
  %v255 = vunpack.c.0.s8 %v254
  %v256 = vlaneseq
  %v257 = vshrl.u32 %v256, 7
  %v258 = vsub.s32 %v255, %v257
  %v259 = vrot.slane %v245, %v258
  %v260 = vcombine.high %v252, %v252
  %v261 = vcombine.high %v259, %v259
  %v262 = vcombine.high %v205, %v205
  %v264 = vunpack.c.l.s4 1983009808
  %v265 = vunpack.c.0.s8 %v264
  %v266 = vlaneseq
  %v267 = vshrl.u32 %v266, 7
  %v268 = vsub.s32 %v265, %v267
  %v269 = vrot.slane %v205, %v268
  %v271 = vunpack.c.l.s4 1983009808
  %v272 = vunpack.c.0.s8 %v271
  %v273 = vlaneseq
  %v274 = vshrl.u32 %v273, 7
  %v275 = vsub.s32 %v272, %v274
  %v276 = vrot.slane %v262, %v275
  %v277 = vcombine.high %v269, %v269
  %v278 = vcombine.high %v276, %v276
  %v279 = vcombine.high %v206, %v206
  %v281 = vunpack.c.l.s4 1983009808
  %v282 = vunpack.c.0.s8 %v281
  %v283 = vlaneseq
  %v284 = vshrl.u32 %v283, 7
  %v285 = vsub.s32 %v282, %v284
  %v286 = vrot.slane %v206, %v285
  %v288 = vunpack.c.l.s4 1983009808
  %v289 = vunpack.c.0.s8 %v288
  %v290 = vlaneseq
  %v291 = vshrl.u32 %v290, 7
  %v292 = vsub.s32 %v289, %v291
  %v293 = vrot.slane %v279, %v292
  %v294 = vcombine.high %v286, %v286
  %v295 = vcombine.high %v293, %v293
  %vm296 = vcmask 23552
  %v298 = vsel %vm296, %v222, 0
  %v301 = vsel %vm296, %v223, 0
  %vm303 = vcmask 1040384
  %vm304 = vcmask 1041408
  %v305 = vsel %vm303, 4294967295, 65535
  %v306 = vsel %vm304, %v305, 0
  %v308 = vand.u32 %v235, %v306
  %v311 = vand.u32 %v243, %v306
  %v314 = vand.u32 %v242, %v306
  %v317 = vand.u32 %v244, %v306
  %v320 = vand.u32 %v252, %v306
  %v323 = vand.u32 %v260, %v306
  %v326 = vand.u32 %v259, %v306
  %v329 = vand.u32 %v261, %v306
  %v332 = vand.u32 %v269, %v306
  %v335 = vand.u32 %v277, %v306
  %v338 = vand.u32 %v276, %v306
  %v341 = vand.u32 %v278, %v306
  %v344 = vand.u32 %v286, %v306
  %v347 = vand.u32 %v294, %v306
  %v350 = vand.u32 %v293, %v306
  %v353 = vand.u32 %v295, %v306
  %355 = vmatprep.subr.bf16.mxu0 0
  %356 = vmatpush1.bf16.msra.mxu0 0
  %357 = vmatprep.subr.bf16.mxu0 0
  %358 = vmatpush1.bf16.msra.mxu0 0
  %359 = vmatprep.subr.bf16.mxu0 0
  %360 = vmatpush1.bf16.msra.mxu0 0
  %361 = vmatprep.subr.bf16.mxu0 0
  %362 = vmatpush1.bf16.msra.mxu0 0
  %363 = vmatprep.subr.bf16.mxu0 0
  %364 = vmatpush1.bf16.msra.mxu0 0
  %365 = vmatprep.subr.bf16.mxu0 0
  %366 = vmatpush1.bf16.msra.mxu0 0
  %367 = vmatprep.subr.bf16.mxu0 0
  %368 = vmatpush1.bf16.msra.mxu0 0
  %369 = vmatprep.subr.bf16.mxu0 %v311
  %370 = vmatpush1.bf16.msra.mxu0 %v308
  %371 = vmatprep.subr.bf16.mxu0 0
  %372 = vmatpush2.bf16.msra.mxu0 0
  %373 = vmatprep.subr.bf16.mxu0 0
  %374 = vmatpush2.bf16.msra.mxu0 0
  %375 = vmatprep.subr.bf16.mxu0 0
  %376 = vmatpush2.bf16.msra.mxu0 0
  %377 = vmatprep.subr.bf16.mxu0 0
  %378 = vmatpush2.bf16.msra.mxu0 0
  %379 = vmatprep.subr.bf16.mxu0 0
  %380 = vmatpush2.bf16.msra.mxu0 0
  %381 = vmatprep.subr.bf16.mxu0 0
  %382 = vmatpush2.bf16.msra.mxu0 0
  %383 = vmatprep.subr.bf16.mxu0 0
  %384 = vmatpush2.bf16.msra.mxu0 0
  %385 = vmatprep.subr.bf16.mxu0 0
  %386 = vmatpush2.bf16.msra.mxu0 0
  %387 = vmatprep.mubr.bf16.mxu0 0
  %388 = vmatmul.mubr.bf16.gmra.mxu0 %v298
  %v389 = vpop.f32.mrf.mxu0
  %v390 = vadd.f32 0.0, %v389
  %v391 = vpop.f32.mrf.mxu0
  %v392 = vadd.f32 0.0, %v391
  %v393 = vpop.f32.mrf.mxu0
  %v394 = vadd.f32 0.0, %v393
  %v395 = vpop.f32.mrf.mxu0
  %v396 = vadd.f32 0.0, %v395
  %397 = vmatprep.mubr.bf16.mxu0 0
  %398 = vmatmul.mubr.bf16.gmra.mxu0 %v301
  %v399 = vpop.f32.mrf.mxu0
  %v400 = vadd.f32 0.0, %v399
  %v401 = vpop.f32.mrf.mxu0
  %v402 = vadd.f32 0.0, %v401
  %v403 = vpop.f32.mrf.mxu0
  %v404 = vpop.f32.mrf.mxu0
  %405 = vdwg.mxu0
  %406 = vmatprep.subr.bf16.mxu0 0
  %407 = vmatpush1.bf16.msra.mxu0 0
  %408 = vmatprep.subr.bf16.mxu0 0
  %409 = vmatpush1.bf16.msra.mxu0 0
  %410 = vmatprep.subr.bf16.mxu0 0
  %411 = vmatpush1.bf16.msra.mxu0 0
  %412 = vmatprep.subr.bf16.mxu0 0
  %413 = vmatpush1.bf16.msra.mxu0 0
  %414 = vmatprep.subr.bf16.mxu0 0
  %415 = vmatpush1.bf16.msra.mxu0 0
  %416 = vmatprep.subr.bf16.mxu0 0
  %417 = vmatpush1.bf16.msra.mxu0 0
  %418 = vmatprep.subr.bf16.mxu0 0
  %419 = vmatpush1.bf16.msra.mxu0 0
  %420 = vmatprep.subr.bf16.mxu0 %v317
  %421 = vmatpush1.bf16.msra.mxu0 %v314
  %422 = vmatprep.subr.bf16.mxu0 0
  %423 = vmatpush2.bf16.msra.mxu0 0
  %424 = vmatprep.subr.bf16.mxu0 0
  %425 = vmatpush2.bf16.msra.mxu0 0
  %426 = vmatprep.subr.bf16.mxu0 0
  %427 = vmatpush2.bf16.msra.mxu0 0
  %428 = vmatprep.subr.bf16.mxu0 0
  %429 = vmatpush2.bf16.msra.mxu0 0
  %430 = vmatprep.subr.bf16.mxu0 0
  %431 = vmatpush2.bf16.msra.mxu0 0
  %432 = vmatprep.subr.bf16.mxu0 0
  %433 = vmatpush2.bf16.msra.mxu0 0
  %434 = vmatprep.subr.bf16.mxu0 0
  %435 = vmatpush2.bf16.msra.mxu0 0
  %436 = vmatprep.subr.bf16.mxu0 0
  %437 = vmatpush2.bf16.msra.mxu0 0
  %438 = vmatprep.mubr.bf16.mxu0 0
  %439 = vmatmul.mubr.bf16.gmra.mxu0 %v298
  %v440 = vpop.f32.mrf.mxu0
  %v441 = vadd.f32 0.0, %v440
  %v442 = vpop.f32.mrf.mxu0
  %v443 = vadd.f32 0.0, %v442
  %v444 = vpop.f32.mrf.mxu0
  %v445 = vadd.f32 0.0, %v444
  %v446 = vpop.f32.mrf.mxu0
  %v447 = vadd.f32 0.0, %v446
  %448 = vmatprep.mubr.bf16.mxu0 0
  %449 = vmatmul.mubr.bf16.gmra.mxu0 %v301
  %v450 = vpop.f32.mrf.mxu0
  %v451 = vadd.f32 0.0, %v450
  %v452 = vpop.f32.mrf.mxu0
  %v453 = vadd.f32 0.0, %v452
  %v454 = vpop.f32.mrf.mxu0
  %v455 = vpop.f32.mrf.mxu0
  %456 = vdwg.mxu0
  %457 = vmatprep.subr.bf16.mxu0 0
  %458 = vmatpush1.bf16.msra.mxu0 0
  %459 = vmatprep.subr.bf16.mxu0 0
  %460 = vmatpush1.bf16.msra.mxu0 0
  %461 = vmatprep.subr.bf16.mxu0 0
  %462 = vmatpush1.bf16.msra.mxu0 0
  %463 = vmatprep.subr.bf16.mxu0 0
  %464 = vmatpush1.bf16.msra.mxu0 0
  %465 = vmatprep.subr.bf16.mxu0 0
  %466 = vmatpush1.bf16.msra.mxu0 0
  %467 = vmatprep.subr.bf16.mxu0 0
  %468 = vmatpush1.bf16.msra.mxu0 0
  %469 = vmatprep.subr.bf16.mxu0 0
  %470 = vmatpush1.bf16.msra.mxu0 0
  %471 = vmatprep.subr.bf16.mxu0 %v323
  %472 = vmatpush1.bf16.msra.mxu0 %v320
  %473 = vmatprep.subr.bf16.mxu0 0
  %474 = vmatpush2.bf16.msra.mxu0 0
  %475 = vmatprep.subr.bf16.mxu0 0
  %476 = vmatpush2.bf16.msra.mxu0 0
  %477 = vmatprep.subr.bf16.mxu0 0
  %478 = vmatpush2.bf16.msra.mxu0 0
  %479 = vmatprep.subr.bf16.mxu0 0
  %480 = vmatpush2.bf16.msra.mxu0 0
  %481 = vmatprep.subr.bf16.mxu0 0
  %482 = vmatpush2.bf16.msra.mxu0 0
  %483 = vmatprep.subr.bf16.mxu0 0
  %484 = vmatpush2.bf16.msra.mxu0 0
  %485 = vmatprep.subr.bf16.mxu0 0
  %486 = vmatpush2.bf16.msra.mxu0 0
  %487 = vmatprep.subr.bf16.mxu0 0
  %488 = vmatpush2.bf16.msra.mxu0 0
  %489 = vmatprep.mubr.bf16.mxu0 0
  %490 = vmatmul.mubr.bf16.gmra.mxu0 %v298
  %v491 = vpop.f32.mrf.mxu0
  %v492 = vadd.f32 0.0, %v491
  %v493 = vpop.f32.mrf.mxu0
  %v494 = vadd.f32 0.0, %v493
  %v495 = vpop.f32.mrf.mxu0
  %v496 = vadd.f32 0.0, %v495
  %v497 = vpop.f32.mrf.mxu0
  %v498 = vadd.f32 0.0, %v497
  %499 = vmatprep.mubr.bf16.mxu0 0
  %500 = vmatmul.mubr.bf16.gmra.mxu0 %v301
  %v501 = vpop.f32.mrf.mxu0
  %v502 = vadd.f32 0.0, %v501
  %v503 = vpop.f32.mrf.mxu0
  %v504 = vadd.f32 0.0, %v503
  %v505 = vpop.f32.mrf.mxu0
  %v506 = vpop.f32.mrf.mxu0
  %507 = vdwg.mxu0
  %508 = vmatprep.subr.bf16.mxu0 0
  %509 = vmatpush1.bf16.msra.mxu0 0
  %510 = vmatprep.subr.bf16.mxu0 0
  %511 = vmatpush1.bf16.msra.mxu0 0
  %512 = vmatprep.subr.bf16.mxu0 0
  %513 = vmatpush1.bf16.msra.mxu0 0
  %514 = vmatprep.subr.bf16.mxu0 0
  %515 = vmatpush1.bf16.msra.mxu0 0
  %516 = vmatprep.subr.bf16.mxu0 0
  %517 = vmatpush1.bf16.msra.mxu0 0
  %518 = vmatprep.subr.bf16.mxu0 0
  %519 = vmatpush1.bf16.msra.mxu0 0
  %520 = vmatprep.subr.bf16.mxu0 0
  %521 = vmatpush1.bf16.msra.mxu0 0
  %522 = vmatprep.subr.bf16.mxu0 %v329
  %523 = vmatpush1.bf16.msra.mxu0 %v326
  %524 = vmatprep.subr.bf16.mxu0 0
  %525 = vmatpush2.bf16.msra.mxu0 0
  %526 = vmatprep.subr.bf16.mxu0 0
  %527 = vmatpush2.bf16.msra.mxu0 0
  %528 = vmatprep.subr.bf16.mxu0 0
  %529 = vmatpush2.bf16.msra.mxu0 0
  %530 = vmatprep.subr.bf16.mxu0 0
  %531 = vmatpush2.bf16.msra.mxu0 0
  %532 = vmatprep.subr.bf16.mxu0 0
  %533 = vmatpush2.bf16.msra.mxu0 0
  %534 = vmatprep.subr.bf16.mxu0 0
  %535 = vmatpush2.bf16.msra.mxu0 0
  %536 = vmatprep.subr.bf16.mxu0 0
  %537 = vmatpush2.bf16.msra.mxu0 0
  %538 = vmatprep.subr.bf16.mxu0 0
  %539 = vmatpush2.bf16.msra.mxu0 0
  %540 = vmatprep.mubr.bf16.mxu0 0
  %541 = vmatmul.mubr.bf16.gmra.mxu0 %v298
  %v542 = vpop.f32.mrf.mxu0
  %v543 = vadd.f32 0.0, %v542
  %v544 = vpop.f32.mrf.mxu0
  %v545 = vadd.f32 0.0, %v544
  %v546 = vpop.f32.mrf.mxu0
  %v547 = vadd.f32 0.0, %v546
  %v548 = vpop.f32.mrf.mxu0
  %v549 = vadd.f32 0.0, %v548
  %550 = vmatprep.mubr.bf16.mxu0 0
  %551 = vmatmul.mubr.bf16.gmra.mxu0 %v301
  %v552 = vpop.f32.mrf.mxu0
  %v553 = vadd.f32 0.0, %v552
  %v554 = vpop.f32.mrf.mxu0
  %v555 = vadd.f32 0.0, %v554
  %v556 = vpop.f32.mrf.mxu0
  %v557 = vpop.f32.mrf.mxu0
  %558 = vdwg.mxu0
  %559 = vmatprep.subr.bf16.mxu0 0
  %560 = vmatpush1.bf16.msra.mxu0 0
  %561 = vmatprep.subr.bf16.mxu0 0
  %562 = vmatpush1.bf16.msra.mxu0 0
  %563 = vmatprep.subr.bf16.mxu0 0
  %564 = vmatpush1.bf16.msra.mxu0 0
  %565 = vmatprep.subr.bf16.mxu0 0
  %566 = vmatpush1.bf16.msra.mxu0 0
  %567 = vmatprep.subr.bf16.mxu0 0
  %568 = vmatpush1.bf16.msra.mxu0 0
  %569 = vmatprep.subr.bf16.mxu0 0
  %570 = vmatpush1.bf16.msra.mxu0 0
  %571 = vmatprep.subr.bf16.mxu0 0
  %572 = vmatpush1.bf16.msra.mxu0 0
  %573 = vmatprep.subr.bf16.mxu0 %v335
  %574 = vmatpush1.bf16.msra.mxu0 %v332
  %575 = vmatprep.subr.bf16.mxu0 0
  %576 = vmatpush2.bf16.msra.mxu0 0
  %577 = vmatprep.subr.bf16.mxu0 0
  %578 = vmatpush2.bf16.msra.mxu0 0
  %579 = vmatprep.subr.bf16.mxu0 0
  %580 = vmatpush2.bf16.msra.mxu0 0
  %581 = vmatprep.subr.bf16.mxu0 0
  %582 = vmatpush2.bf16.msra.mxu0 0
  %583 = vmatprep.subr.bf16.mxu0 0
  %584 = vmatpush2.bf16.msra.mxu0 0
  %585 = vmatprep.subr.bf16.mxu0 0
  %586 = vmatpush2.bf16.msra.mxu0 0
  %587 = vmatprep.subr.bf16.mxu0 0
  %588 = vmatpush2.bf16.msra.mxu0 0
  %589 = vmatprep.subr.bf16.mxu0 0
  %590 = vmatpush2.bf16.msra.mxu0 0
  %591 = vmatprep.mubr.bf16.mxu0 0
  %592 = vmatmul.mubr.bf16.gmra.mxu0 %v298
  %v593 = vpop.f32.mrf.mxu0
  %v594 = vadd.f32 0.0, %v593
  %v595 = vpop.f32.mrf.mxu0
  %v596 = vadd.f32 0.0, %v595
  %v597 = vpop.f32.mrf.mxu0
  %v598 = vadd.f32 0.0, %v597
  %v599 = vpop.f32.mrf.mxu0
  %v600 = vadd.f32 0.0, %v599
  %601 = vmatprep.mubr.bf16.mxu0 0
  %602 = vmatmul.mubr.bf16.gmra.mxu0 %v301
  %v603 = vpop.f32.mrf.mxu0
  %v604 = vadd.f32 0.0, %v603
  %v605 = vpop.f32.mrf.mxu0
  %v606 = vadd.f32 0.0, %v605
  %v607 = vpop.f32.mrf.mxu0
  %v608 = vpop.f32.mrf.mxu0
  %609 = vdwg.mxu0
  %610 = vmatprep.subr.bf16.mxu0 0
  %611 = vmatpush1.bf16.msra.mxu0 0
  %612 = vmatprep.subr.bf16.mxu0 0
  %613 = vmatpush1.bf16.msra.mxu0 0
  %614 = vmatprep.subr.bf16.mxu0 0
  %615 = vmatpush1.bf16.msra.mxu0 0
  %616 = vmatprep.subr.bf16.mxu0 0
  %617 = vmatpush1.bf16.msra.mxu0 0
  %618 = vmatprep.subr.bf16.mxu0 0
  %619 = vmatpush1.bf16.msra.mxu0 0
  %620 = vmatprep.subr.bf16.mxu0 0
  %621 = vmatpush1.bf16.msra.mxu0 0
  %622 = vmatprep.subr.bf16.mxu0 0
  %623 = vmatpush1.bf16.msra.mxu0 0
  %624 = vmatprep.subr.bf16.mxu0 %v341
  %625 = vmatpush1.bf16.msra.mxu0 %v338
  %626 = vmatprep.subr.bf16.mxu0 0
  %627 = vmatpush2.bf16.msra.mxu0 0
  %628 = vmatprep.subr.bf16.mxu0 0
  %629 = vmatpush2.bf16.msra.mxu0 0
  %630 = vmatprep.subr.bf16.mxu0 0
  %631 = vmatpush2.bf16.msra.mxu0 0
  %632 = vmatprep.subr.bf16.mxu0 0
  %633 = vmatpush2.bf16.msra.mxu0 0
  %634 = vmatprep.subr.bf16.mxu0 0
  %635 = vmatpush2.bf16.msra.mxu0 0
  %636 = vmatprep.subr.bf16.mxu0 0
  %637 = vmatpush2.bf16.msra.mxu0 0
  %638 = vmatprep.subr.bf16.mxu0 0
  %639 = vmatpush2.bf16.msra.mxu0 0
  %640 = vmatprep.subr.bf16.mxu0 0
  %641 = vmatpush2.bf16.msra.mxu0 0
  %642 = vmatprep.mubr.bf16.mxu0 0
  %643 = vmatmul.mubr.bf16.gmra.mxu0 %v298
  %v644 = vpop.f32.mrf.mxu0
  %v645 = vadd.f32 0.0, %v644
  %v646 = vpop.f32.mrf.mxu0
  %v647 = vadd.f32 0.0, %v646
  %v648 = vpop.f32.mrf.mxu0
  %v649 = vadd.f32 0.0, %v648
  %v650 = vpop.f32.mrf.mxu0
  %v651 = vadd.f32 0.0, %v650
  %652 = vmatprep.mubr.bf16.mxu0 0
  %653 = vmatmul.mubr.bf16.gmra.mxu0 %v301
  %v654 = vpop.f32.mrf.mxu0
  %v655 = vadd.f32 0.0, %v654
  %v656 = vpop.f32.mrf.mxu0
  %v657 = vadd.f32 0.0, %v656
  %v658 = vpop.f32.mrf.mxu0
  %v659 = vpop.f32.mrf.mxu0
  %660 = vdwg.mxu0
  %661 = vmatprep.subr.bf16.mxu0 0
  %662 = vmatpush1.bf16.msra.mxu0 0
  %663 = vmatprep.subr.bf16.mxu0 0
  %664 = vmatpush1.bf16.msra.mxu0 0
  %665 = vmatprep.subr.bf16.mxu0 0
  %666 = vmatpush1.bf16.msra.mxu0 0
  %667 = vmatprep.subr.bf16.mxu0 0
  %668 = vmatpush1.bf16.msra.mxu0 0
  %669 = vmatprep.subr.bf16.mxu0 0
  %670 = vmatpush1.bf16.msra.mxu0 0
  %671 = vmatprep.subr.bf16.mxu0 0
  %672 = vmatpush1.bf16.msra.mxu0 0
  %673 = vmatprep.subr.bf16.mxu0 0
  %674 = vmatpush1.bf16.msra.mxu0 0
  %675 = vmatprep.subr.bf16.mxu0 %v347
  %676 = vmatpush1.bf16.msra.mxu0 %v344
  %677 = vmatprep.subr.bf16.mxu0 0
  %678 = vmatpush2.bf16.msra.mxu0 0
  %679 = vmatprep.subr.bf16.mxu0 0
  %680 = vmatpush2.bf16.msra.mxu0 0
  %681 = vmatprep.subr.bf16.mxu0 0
  %682 = vmatpush2.bf16.msra.mxu0 0
  %683 = vmatprep.subr.bf16.mxu0 0
  %684 = vmatpush2.bf16.msra.mxu0 0
  %685 = vmatprep.subr.bf16.mxu0 0
  %686 = vmatpush2.bf16.msra.mxu0 0
  %687 = vmatprep.subr.bf16.mxu0 0
  %688 = vmatpush2.bf16.msra.mxu0 0
  %689 = vmatprep.subr.bf16.mxu0 0
  %690 = vmatpush2.bf16.msra.mxu0 0
  %691 = vmatprep.subr.bf16.mxu0 0
  %692 = vmatpush2.bf16.msra.mxu0 0
  %693 = vmatprep.mubr.bf16.mxu0 0
  %694 = vmatmul.mubr.bf16.gmra.mxu0 %v298
  %v695 = vpop.f32.mrf.mxu0
  %v696 = vadd.f32 0.0, %v695
  %v697 = vpop.f32.mrf.mxu0
  %v698 = vadd.f32 0.0, %v697
  %v699 = vpop.f32.mrf.mxu0
  %v700 = vadd.f32 0.0, %v699
  %v701 = vpop.f32.mrf.mxu0
  %v702 = vadd.f32 0.0, %v701
  %703 = vmatprep.mubr.bf16.mxu0 0
  %704 = vmatmul.mubr.bf16.gmra.mxu0 %v301
  %v705 = vpop.f32.mrf.mxu0
  %v706 = vadd.f32 0.0, %v705
  %v707 = vpop.f32.mrf.mxu0
  %v708 = vadd.f32 0.0, %v707
  %v709 = vpop.f32.mrf.mxu0
  %v710 = vpop.f32.mrf.mxu0
  %711 = vdwg.mxu0
  %712 = vmatprep.subr.bf16.mxu0 0
  %713 = vmatpush1.bf16.msra.mxu0 0
  %714 = vmatprep.subr.bf16.mxu0 0
  %715 = vmatpush1.bf16.msra.mxu0 0
  %716 = vmatprep.subr.bf16.mxu0 0
  %717 = vmatpush1.bf16.msra.mxu0 0
  %718 = vmatprep.subr.bf16.mxu0 0
  %719 = vmatpush1.bf16.msra.mxu0 0
  %720 = vmatprep.subr.bf16.mxu0 0
  %721 = vmatpush1.bf16.msra.mxu0 0
  %722 = vmatprep.subr.bf16.mxu0 0
  %723 = vmatpush1.bf16.msra.mxu0 0
  %724 = vmatprep.subr.bf16.mxu0 0
  %725 = vmatpush1.bf16.msra.mxu0 0
  %726 = vmatprep.subr.bf16.mxu0 %v353
  %727 = vmatpush1.bf16.msra.mxu0 %v350
  %728 = vmatprep.subr.bf16.mxu0 0
  %729 = vmatpush2.bf16.msra.mxu0 0
  %730 = vmatprep.subr.bf16.mxu0 0
  %731 = vmatpush2.bf16.msra.mxu0 0
  %732 = vmatprep.subr.bf16.mxu0 0
  %733 = vmatpush2.bf16.msra.mxu0 0
  %734 = vmatprep.subr.bf16.mxu0 0
  %735 = vmatpush2.bf16.msra.mxu0 0
  %736 = vmatprep.subr.bf16.mxu0 0
  %737 = vmatpush2.bf16.msra.mxu0 0
  %738 = vmatprep.subr.bf16.mxu0 0
  %739 = vmatpush2.bf16.msra.mxu0 0
  %740 = vmatprep.subr.bf16.mxu0 0
  %741 = vmatpush2.bf16.msra.mxu0 0
  %742 = vmatprep.subr.bf16.mxu0 0
  %743 = vmatpush2.bf16.msra.mxu0 0
  %744 = vmatprep.mubr.bf16.mxu0 0
  %745 = vmatmul.mubr.bf16.gmra.mxu0 %v298
  %v746 = vpop.f32.mrf.mxu0
  %v747 = vadd.f32 0.0, %v746
  %v748 = vpop.f32.mrf.mxu0
  %v749 = vadd.f32 0.0, %v748
  %v750 = vpop.f32.mrf.mxu0
  %v751 = vadd.f32 0.0, %v750
  %v752 = vpop.f32.mrf.mxu0
  %v753 = vadd.f32 0.0, %v752
  %754 = vmatprep.mubr.bf16.mxu0 0
  %755 = vmatmul.mubr.bf16.gmra.mxu0 %v301
  %v756 = vpop.f32.mrf.mxu0
  %v757 = vadd.f32 0.0, %v756
  %v758 = vpop.f32.mrf.mxu0
  %v759 = vadd.f32 0.0, %v758
  %v760 = vpop.f32.mrf.mxu0
  %v761 = vpop.f32.mrf.mxu0
  %762 = vdwg.mxu0
  %764 = vset.pattern.permute.xlu0 0
  %765 = vperm.xlu0 %764, %v210
  %v766 = vpop.permute.xlu0 %765
  %769 = vset.pattern.permute.xlu0 0
  %770 = vperm.xlu0 %769, %v211
  %v771 = vpop.permute.xlu0 %770
  %774 = vset.pattern.permute.xlu0 0
  %775 = vperm.xlu0 %774, %v212
  %v776 = vpop.permute.xlu0 %775
  %v778 = vmul.f32 %v390, %v766
  %v779 = vmul.f32 %v392, %v766
  %v780 = vmul.f32 %v441, %v766
  %v781 = vmul.f32 %v443, %v766
  %v782 = vmul.f32 %v492, %v766
  %v783 = vmul.f32 %v494, %v766
  %v784 = vmul.f32 %v543, %v766
  %v785 = vmul.f32 %v545, %v766
  %v786 = vmul.f32 %v594, %v766
  %v787 = vmul.f32 %v596, %v766
  %v788 = vmul.f32 %v645, %v766
  %v789 = vmul.f32 %v647, %v766
  %v790 = vmul.f32 %v696, %v766
  %v791 = vmul.f32 %v698, %v766
  %v792 = vmul.f32 %v747, %v766
  %v793 = vmul.f32 %v749, %v766
  %v794 = vmul.f32 %v394, %v771
  %v795 = vmul.f32 %v396, %v771
  %v796 = vmul.f32 %v445, %v771
  %v797 = vmul.f32 %v447, %v771
  %v798 = vmul.f32 %v496, %v771
  %v799 = vmul.f32 %v498, %v771
  %v800 = vmul.f32 %v547, %v771
  %v801 = vmul.f32 %v549, %v771
  %v802 = vmul.f32 %v598, %v771
  %v803 = vmul.f32 %v600, %v771
  %v804 = vmul.f32 %v649, %v771
  %v805 = vmul.f32 %v651, %v771
  %v806 = vmul.f32 %v700, %v771
  %v807 = vmul.f32 %v702, %v771
  %v808 = vmul.f32 %v751, %v771
  %v809 = vmul.f32 %v753, %v771
  %v810 = vmul.f32 %v400, %v776
  %v811 = vmul.f32 %v402, %v776
  %v812 = vmul.f32 %v451, %v776
  %v813 = vmul.f32 %v453, %v776
  %v814 = vmul.f32 %v502, %v776
  %v815 = vmul.f32 %v504, %v776
  %v816 = vmul.f32 %v553, %v776
  %v817 = vmul.f32 %v555, %v776
  %v818 = vmul.f32 %v604, %v776
  %v819 = vmul.f32 %v606, %v776
  %v820 = vmul.f32 %v655, %v776
  %v821 = vmul.f32 %v657, %v776
  %v822 = vmul.f32 %v706, %v776
  %v823 = vmul.f32 %v708, %v776
  %v824 = vmul.f32 %v757, %v776
  %v825 = vmul.f32 %v759, %v776
  %827 = vset.pattern.permute.xlu0 0
  %828 = vperm.xlu0 %827, %v213
  %v829 = vpop.permute.xlu0 %828
  %832 = vset.pattern.permute.xlu0 0
  %833 = vperm.xlu0 %832, %v214
  %v834 = vpop.permute.xlu0 %833
  %837 = vset.pattern.permute.xlu0 0
  %838 = vperm.xlu0 %837, %v215
  %v839 = vpop.permute.xlu0 %838
  %v841 = vadd.f32 %v778, %v829
  %v842 = vadd.f32 %v779, %v829
  %v843 = vadd.f32 %v780, %v829
  %v844 = vadd.f32 %v781, %v829
  %v845 = vadd.f32 %v782, %v829
  %v846 = vadd.f32 %v783, %v829
  %v847 = vadd.f32 %v784, %v829
  %v848 = vadd.f32 %v785, %v829
  %v849 = vadd.f32 %v786, %v829
  %v850 = vadd.f32 %v787, %v829
  %v851 = vadd.f32 %v788, %v829
  %v852 = vadd.f32 %v789, %v829
  %v853 = vadd.f32 %v790, %v829
  %v854 = vadd.f32 %v791, %v829
  %v855 = vadd.f32 %v792, %v829
  %v856 = vadd.f32 %v793, %v829
  %v857 = vadd.f32 %v794, %v834
  %v858 = vadd.f32 %v795, %v834
  %v859 = vadd.f32 %v796, %v834
  %v860 = vadd.f32 %v797, %v834
  %v861 = vadd.f32 %v798, %v834
  %v862 = vadd.f32 %v799, %v834
  %v863 = vadd.f32 %v800, %v834
  %v864 = vadd.f32 %v801, %v834
  %v865 = vadd.f32 %v802, %v834
  %v866 = vadd.f32 %v803, %v834
  %v867 = vadd.f32 %v804, %v834
  %v868 = vadd.f32 %v805, %v834
  %v869 = vadd.f32 %v806, %v834
  %v870 = vadd.f32 %v807, %v834
  %v871 = vadd.f32 %v808, %v834
  %v872 = vadd.f32 %v809, %v834
  %v873 = vadd.f32 %v810, %v839
  %v874 = vadd.f32 %v811, %v839
  %v875 = vadd.f32 %v812, %v839
  %v876 = vadd.f32 %v813, %v839
  %v877 = vadd.f32 %v814, %v839
  %v878 = vadd.f32 %v815, %v839
  %v879 = vadd.f32 %v816, %v839
  %v880 = vadd.f32 %v817, %v839
  %v881 = vadd.f32 %v818, %v839
  %v882 = vadd.f32 %v819, %v839
  %v883 = vadd.f32 %v820, %v839
  %v884 = vadd.f32 %v821, %v839
  %v885 = vadd.f32 %v822, %v839
  %v886 = vadd.f32 %v823, %v839
  %v887 = vadd.f32 %v824, %v839
  %v888 = vadd.f32 %v825, %v839
  %v889 = vmax.f32 %v841, 0.0
  %v890 = vmax.f32 %v842, 0.0
  %v891 = vmax.f32 %v843, 0.0
  %v892 = vmax.f32 %v844, 0.0
  %v893 = vmax.f32 %v845, 0.0
  %v894 = vmax.f32 %v846, 0.0
  %v895 = vmax.f32 %v847, 0.0
  %v896 = vmax.f32 %v848, 0.0
  %v897 = vmax.f32 %v849, 0.0
  %v898 = vmax.f32 %v850, 0.0
  %v899 = vmax.f32 %v851, 0.0
  %v900 = vmax.f32 %v852, 0.0
  %v901 = vmax.f32 %v853, 0.0
  %v902 = vmax.f32 %v854, 0.0
  %v903 = vmax.f32 %v855, 0.0
  %v904 = vmax.f32 %v856, 0.0
  %v905 = vmax.f32 %v857, 0.0
  %v906 = vmax.f32 %v858, 0.0
  %v907 = vmax.f32 %v859, 0.0
  %v908 = vmax.f32 %v860, 0.0
  %v909 = vmax.f32 %v861, 0.0
  %v910 = vmax.f32 %v862, 0.0
  %v911 = vmax.f32 %v863, 0.0
  %v912 = vmax.f32 %v864, 0.0
  %v913 = vmax.f32 %v865, 0.0
  %v914 = vmax.f32 %v866, 0.0
  %v915 = vmax.f32 %v867, 0.0
  %v916 = vmax.f32 %v868, 0.0
  %v917 = vmax.f32 %v869, 0.0
  %v918 = vmax.f32 %v870, 0.0
  %v919 = vmax.f32 %v871, 0.0
  %v920 = vmax.f32 %v872, 0.0
  %v921 = vmax.f32 %v873, 0.0
  %v922 = vmax.f32 %v874, 0.0
  %v923 = vmax.f32 %v875, 0.0
  %v924 = vmax.f32 %v876, 0.0
  %v925 = vmax.f32 %v877, 0.0
  %v926 = vmax.f32 %v878, 0.0
  %v927 = vmax.f32 %v879, 0.0
  %v928 = vmax.f32 %v880, 0.0
  %v929 = vmax.f32 %v881, 0.0
  %v930 = vmax.f32 %v882, 0.0
  %v931 = vmax.f32 %v883, 0.0
  %v932 = vmax.f32 %v884, 0.0
  %v933 = vmax.f32 %v885, 0.0
  %v934 = vmax.f32 %v886, 0.0
  %v935 = vmax.f32 %v887, 0.0
  %v936 = vmax.f32 %v888, 0.0
  %v937 = vpack.c.bf16 %v905, %v889
  %v938 = vpack.c.bf16 %v906, %v890
  %v939 = vpack.c.bf16 %v907, %v891
  %v940 = vpack.c.bf16 %v908, %v892
  %v941 = vpack.c.bf16 %v909, %v893
  %v942 = vpack.c.bf16 %v910, %v894
  %v943 = vpack.c.bf16 %v911, %v895
  %v944 = vpack.c.bf16 %v912, %v896
  %v945 = vpack.c.bf16 %v913, %v897
  %v946 = vpack.c.bf16 %v914, %v898
  %v947 = vpack.c.bf16 %v915, %v899
  %v948 = vpack.c.bf16 %v916, %v900
  %v949 = vpack.c.bf16 %v917, %v901
  %v950 = vpack.c.bf16 %v918, %v902
  %v951 = vpack.c.bf16 %v919, %v903
  %v952 = vpack.c.bf16 %v920, %v904
  %v953 = vpack.c.bf16 %v921, %v921
  %v954 = vpack.c.bf16 %v922, %v922
  %v955 = vpack.c.bf16 %v923, %v923
  %v956 = vpack.c.bf16 %v924, %v924
  %v957 = vpack.c.bf16 %v925, %v925
  %v958 = vpack.c.bf16 %v926, %v926
  %v959 = vpack.c.bf16 %v927, %v927
  %v960 = vpack.c.bf16 %v928, %v928
  %v961 = vpack.c.bf16 %v929, %v929
  %v962 = vpack.c.bf16 %v930, %v930
  %v963 = vpack.c.bf16 %v931, %v931
  %v964 = vpack.c.bf16 %v932, %v932
  %v965 = vpack.c.bf16 %v933, %v933
  %v966 = vpack.c.bf16 %v934, %v934
  %v967 = vpack.c.bf16 %v935, %v935
  %v968 = vpack.c.bf16 %v936, %v936
  %v969 = vld [vmem:[%s9] sm:$0x3]
  %vm970 = vcmask 195584
  %v972 = vsel %vm970, %v969, 0
  %vm974 = vcmask 1043456
  %v976 = vsel %vm974, %v953, 0
  %v979 = vsel %vm974, %v954, 0
  %v982 = vsel %vm974, %v955, 0
  %v985 = vsel %vm974, %v956, 0
  %v988 = vsel %vm974, %v957, 0
  %v991 = vsel %vm974, %v958, 0
  %v994 = vsel %vm974, %v959, 0
  %v997 = vsel %vm974, %v960, 0
  %v1000 = vsel %vm974, %v961, 0
  %v1003 = vsel %vm974, %v962, 0
  %v1006 = vsel %vm974, %v963, 0
  %v1009 = vsel %vm974, %v964, 0
  %v1012 = vsel %vm974, %v965, 0
  %v1015 = vsel %vm974, %v966, 0
  %v1018 = vsel %vm974, %v967, 0
  %v1021 = vsel %vm974, %v968, 0
  %1023 = vmatprep.subr.bf16.mxu0 0
  %1024 = vmatpush1.bf16.msra.mxu0 0
  %1025 = vmatprep.subr.bf16.mxu0 0
  %1026 = vmatpush1.bf16.msra.mxu0 0
  %1027 = vmatprep.subr.bf16.mxu0 0
  %1028 = vmatpush1.bf16.msra.mxu0 0
  %1029 = vmatprep.subr.bf16.mxu0 0
  %1030 = vmatpush1.bf16.msra.mxu0 0
  %1031 = vmatprep.subr.bf16.mxu0 0
  %1032 = vmatpush1.bf16.msra.mxu0 0
  %1033 = vmatprep.subr.bf16.mxu0 0
  %1034 = vmatpush1.bf16.msra.mxu0 0
  %1035 = vmatprep.subr.bf16.mxu0 %v979
  %1036 = vmatpush1.bf16.msra.mxu0 %v976
  %1037 = vmatprep.subr.bf16.mxu0 %v938
  %1038 = vmatpush1.bf16.msra.mxu0 %v937
  %1039 = vmatprep.subr.bf16.mxu0 0
  %1040 = vmatpush2.bf16.msra.mxu0 0
  %1041 = vmatprep.subr.bf16.mxu0 0
  %1042 = vmatpush2.bf16.msra.mxu0 0
  %1043 = vmatprep.subr.bf16.mxu0 0
  %1044 = vmatpush2.bf16.msra.mxu0 0
  %1045 = vmatprep.subr.bf16.mxu0 0
  %1046 = vmatpush2.bf16.msra.mxu0 0
  %1047 = vmatprep.subr.bf16.mxu0 0
  %1048 = vmatpush2.bf16.msra.mxu0 0
  %1049 = vmatprep.subr.bf16.mxu0 0
  %1050 = vmatpush2.bf16.msra.mxu0 0
  %1051 = vmatprep.subr.bf16.mxu0 0
  %1052 = vmatpush2.bf16.msra.mxu0 0
  %1053 = vmatprep.subr.bf16.mxu0 0
  %1054 = vmatpush2.bf16.msra.mxu0 0
  %1055 = vmatprep.mubr.bf16.mxu0 0
  %1056 = vmatmul.mubr.bf16.gmra.mxu0 %v972
  %v1057 = vpop.f32.mrf.mxu0
  %v1058 = vadd.f32 0.0, %v1057
  %v1059 = vpop.f32.mrf.mxu0
  %v1060 = vadd.f32 0.0, %v1059
  %v1061 = vpop.f32.mrf.mxu0
  %v1062 = vpop.f32.mrf.mxu0
  %1063 = vdwg.mxu0
  %1064 = vmatprep.subr.bf16.mxu0 0
  %1065 = vmatpush1.bf16.msra.mxu0 0
  %1066 = vmatprep.subr.bf16.mxu0 0
  %1067 = vmatpush1.bf16.msra.mxu0 0
  %1068 = vmatprep.subr.bf16.mxu0 0
  %1069 = vmatpush1.bf16.msra.mxu0 0
  %1070 = vmatprep.subr.bf16.mxu0 0
  %1071 = vmatpush1.bf16.msra.mxu0 0
  %1072 = vmatprep.subr.bf16.mxu0 0
  %1073 = vmatpush1.bf16.msra.mxu0 0
  %1074 = vmatprep.subr.bf16.mxu0 0
  %1075 = vmatpush1.bf16.msra.mxu0 0
  %1076 = vmatprep.subr.bf16.mxu0 %v985
  %1077 = vmatpush1.bf16.msra.mxu0 %v982
  %1078 = vmatprep.subr.bf16.mxu0 %v940
  %1079 = vmatpush1.bf16.msra.mxu0 %v939
  %1080 = vmatprep.subr.bf16.mxu0 0
  %1081 = vmatpush2.bf16.msra.mxu0 0
  %1082 = vmatprep.subr.bf16.mxu0 0
  %1083 = vmatpush2.bf16.msra.mxu0 0
  %1084 = vmatprep.subr.bf16.mxu0 0
  %1085 = vmatpush2.bf16.msra.mxu0 0
  %1086 = vmatprep.subr.bf16.mxu0 0
  %1087 = vmatpush2.bf16.msra.mxu0 0
  %1088 = vmatprep.subr.bf16.mxu0 0
  %1089 = vmatpush2.bf16.msra.mxu0 0
  %1090 = vmatprep.subr.bf16.mxu0 0
  %1091 = vmatpush2.bf16.msra.mxu0 0
  %1092 = vmatprep.subr.bf16.mxu0 0
  %1093 = vmatpush2.bf16.msra.mxu0 0
  %1094 = vmatprep.subr.bf16.mxu0 0
  %1095 = vmatpush2.bf16.msra.mxu0 0
  %1096 = vmatprep.mubr.bf16.mxu0 0
  %1097 = vmatmul.mubr.bf16.gmra.mxu0 %v972
  %v1098 = vpop.f32.mrf.mxu0
  %v1099 = vadd.f32 0.0, %v1098
  %v1100 = vpop.f32.mrf.mxu0
  %v1101 = vadd.f32 0.0, %v1100
  %v1102 = vpop.f32.mrf.mxu0
  %v1103 = vpop.f32.mrf.mxu0
  %1104 = vdwg.mxu0
  %1105 = vmatprep.subr.bf16.mxu0 0
  %1106 = vmatpush1.bf16.msra.mxu0 0
  %1107 = vmatprep.subr.bf16.mxu0 0
  %1108 = vmatpush1.bf16.msra.mxu0 0
  %1109 = vmatprep.subr.bf16.mxu0 0
  %1110 = vmatpush1.bf16.msra.mxu0 0
  %1111 = vmatprep.subr.bf16.mxu0 0
  %1112 = vmatpush1.bf16.msra.mxu0 0
  %1113 = vmatprep.subr.bf16.mxu0 0
  %1114 = vmatpush1.bf16.msra.mxu0 0
  %1115 = vmatprep.subr.bf16.mxu0 0
  %1116 = vmatpush1.bf16.msra.mxu0 0
  %1117 = vmatprep.subr.bf16.mxu0 %v991
  %1118 = vmatpush1.bf16.msra.mxu0 %v988
  %1119 = vmatprep.subr.bf16.mxu0 %v942
  %1120 = vmatpush1.bf16.msra.mxu0 %v941
  %1121 = vmatprep.subr.bf16.mxu0 0
  %1122 = vmatpush2.bf16.msra.mxu0 0
  %1123 = vmatprep.subr.bf16.mxu0 0
  %1124 = vmatpush2.bf16.msra.mxu0 0
  %1125 = vmatprep.subr.bf16.mxu0 0
  %1126 = vmatpush2.bf16.msra.mxu0 0
  %1127 = vmatprep.subr.bf16.mxu0 0
  %1128 = vmatpush2.bf16.msra.mxu0 0
  %1129 = vmatprep.subr.bf16.mxu0 0
  %1130 = vmatpush2.bf16.msra.mxu0 0
  %1131 = vmatprep.subr.bf16.mxu0 0
  %1132 = vmatpush2.bf16.msra.mxu0 0
  %1133 = vmatprep.subr.bf16.mxu0 0
  %1134 = vmatpush2.bf16.msra.mxu0 0
  %1135 = vmatprep.subr.bf16.mxu0 0
  %1136 = vmatpush2.bf16.msra.mxu0 0
  %1137 = vmatprep.mubr.bf16.mxu0 0
  %1138 = vmatmul.mubr.bf16.gmra.mxu0 %v972
  %v1139 = vpop.f32.mrf.mxu0
  %v1140 = vadd.f32 0.0, %v1139
  %v1141 = vpop.f32.mrf.mxu0
  %v1142 = vadd.f32 0.0, %v1141
  %v1143 = vpop.f32.mrf.mxu0
  %v1144 = vpop.f32.mrf.mxu0
  %1145 = vdwg.mxu0
  %1146 = vmatprep.subr.bf16.mxu0 0
  %1147 = vmatpush1.bf16.msra.mxu0 0
  %1148 = vmatprep.subr.bf16.mxu0 0
  %1149 = vmatpush1.bf16.msra.mxu0 0
  %1150 = vmatprep.subr.bf16.mxu0 0
  %1151 = vmatpush1.bf16.msra.mxu0 0
  %1152 = vmatprep.subr.bf16.mxu0 0
  %1153 = vmatpush1.bf16.msra.mxu0 0
  %1154 = vmatprep.subr.bf16.mxu0 0
  %1155 = vmatpush1.bf16.msra.mxu0 0
  %1156 = vmatprep.subr.bf16.mxu0 0
  %1157 = vmatpush1.bf16.msra.mxu0 0
  %1158 = vmatprep.subr.bf16.mxu0 %v997
  %1159 = vmatpush1.bf16.msra.mxu0 %v994
  %1160 = vmatprep.subr.bf16.mxu0 %v944
  %1161 = vmatpush1.bf16.msra.mxu0 %v943
  %1162 = vmatprep.subr.bf16.mxu0 0
  %1163 = vmatpush2.bf16.msra.mxu0 0
  %1164 = vmatprep.subr.bf16.mxu0 0
  %1165 = vmatpush2.bf16.msra.mxu0 0
  %1166 = vmatprep.subr.bf16.mxu0 0
  %1167 = vmatpush2.bf16.msra.mxu0 0
  %1168 = vmatprep.subr.bf16.mxu0 0
  %1169 = vmatpush2.bf16.msra.mxu0 0
  %1170 = vmatprep.subr.bf16.mxu0 0
  %1171 = vmatpush2.bf16.msra.mxu0 0
  %1172 = vmatprep.subr.bf16.mxu0 0
  %1173 = vmatpush2.bf16.msra.mxu0 0
  %1174 = vmatprep.subr.bf16.mxu0 0
  %1175 = vmatpush2.bf16.msra.mxu0 0
  %1176 = vmatprep.subr.bf16.mxu0 0
  %1177 = vmatpush2.bf16.msra.mxu0 0
  %1178 = vmatprep.mubr.bf16.mxu0 0
  %1179 = vmatmul.mubr.bf16.gmra.mxu0 %v972
  %v1180 = vpop.f32.mrf.mxu0
  %v1181 = vadd.f32 0.0, %v1180
  %v1182 = vpop.f32.mrf.mxu0
  %v1183 = vadd.f32 0.0, %v1182
  %v1184 = vpop.f32.mrf.mxu0
  %v1185 = vpop.f32.mrf.mxu0
  %1186 = vdwg.mxu0
  %1187 = vmatprep.subr.bf16.mxu0 0
  %1188 = vmatpush1.bf16.msra.mxu0 0
  %1189 = vmatprep.subr.bf16.mxu0 0
  %1190 = vmatpush1.bf16.msra.mxu0 0
  %1191 = vmatprep.subr.bf16.mxu0 0
  %1192 = vmatpush1.bf16.msra.mxu0 0
  %1193 = vmatprep.subr.bf16.mxu0 0
  %1194 = vmatpush1.bf16.msra.mxu0 0
  %1195 = vmatprep.subr.bf16.mxu0 0
  %1196 = vmatpush1.bf16.msra.mxu0 0
  %1197 = vmatprep.subr.bf16.mxu0 0
  %1198 = vmatpush1.bf16.msra.mxu0 0
  %1199 = vmatprep.subr.bf16.mxu0 %v1003
  %1200 = vmatpush1.bf16.msra.mxu0 %v1000
  %1201 = vmatprep.subr.bf16.mxu0 %v946
  %1202 = vmatpush1.bf16.msra.mxu0 %v945
  %1203 = vmatprep.subr.bf16.mxu0 0
  %1204 = vmatpush2.bf16.msra.mxu0 0
  %1205 = vmatprep.subr.bf16.mxu0 0
  %1206 = vmatpush2.bf16.msra.mxu0 0
  %1207 = vmatprep.subr.bf16.mxu0 0
  %1208 = vmatpush2.bf16.msra.mxu0 0
  %1209 = vmatprep.subr.bf16.mxu0 0
  %1210 = vmatpush2.bf16.msra.mxu0 0
  %1211 = vmatprep.subr.bf16.mxu0 0
  %1212 = vmatpush2.bf16.msra.mxu0 0
  %1213 = vmatprep.subr.bf16.mxu0 0
  %1214 = vmatpush2.bf16.msra.mxu0 0
  %1215 = vmatprep.subr.bf16.mxu0 0
  %1216 = vmatpush2.bf16.msra.mxu0 0
  %1217 = vmatprep.subr.bf16.mxu0 0
  %1218 = vmatpush2.bf16.msra.mxu0 0
  %1219 = vmatprep.mubr.bf16.mxu0 0
  %1220 = vmatmul.mubr.bf16.gmra.mxu0 %v972
  %v1221 = vpop.f32.mrf.mxu0
  %v1222 = vadd.f32 0.0, %v1221
  %v1223 = vpop.f32.mrf.mxu0
  %v1224 = vadd.f32 0.0, %v1223
  %v1225 = vpop.f32.mrf.mxu0
  %v1226 = vpop.f32.mrf.mxu0
  %1227 = vdwg.mxu0
  %1228 = vmatprep.subr.bf16.mxu0 0
  %1229 = vmatpush1.bf16.msra.mxu0 0
  %1230 = vmatprep.subr.bf16.mxu0 0
  %1231 = vmatpush1.bf16.msra.mxu0 0
  %1232 = vmatprep.subr.bf16.mxu0 0
  %1233 = vmatpush1.bf16.msra.mxu0 0
  %1234 = vmatprep.subr.bf16.mxu0 0
  %1235 = vmatpush1.bf16.msra.mxu0 0
  %1236 = vmatprep.subr.bf16.mxu0 0
  %1237 = vmatpush1.bf16.msra.mxu0 0
  %1238 = vmatprep.subr.bf16.mxu0 0
  %1239 = vmatpush1.bf16.msra.mxu0 0
  %1240 = vmatprep.subr.bf16.mxu0 %v1009
  %1241 = vmatpush1.bf16.msra.mxu0 %v1006
  %1242 = vmatprep.subr.bf16.mxu0 %v948
  %1243 = vmatpush1.bf16.msra.mxu0 %v947
  %1244 = vmatprep.subr.bf16.mxu0 0
  %1245 = vmatpush2.bf16.msra.mxu0 0
  %1246 = vmatprep.subr.bf16.mxu0 0
  %1247 = vmatpush2.bf16.msra.mxu0 0
  %1248 = vmatprep.subr.bf16.mxu0 0
  %1249 = vmatpush2.bf16.msra.mxu0 0
  %1250 = vmatprep.subr.bf16.mxu0 0
  %1251 = vmatpush2.bf16.msra.mxu0 0
  %1252 = vmatprep.subr.bf16.mxu0 0
  %1253 = vmatpush2.bf16.msra.mxu0 0
  %1254 = vmatprep.subr.bf16.mxu0 0
  %1255 = vmatpush2.bf16.msra.mxu0 0
  %1256 = vmatprep.subr.bf16.mxu0 0
  %1257 = vmatpush2.bf16.msra.mxu0 0
  %1258 = vmatprep.subr.bf16.mxu0 0
  %1259 = vmatpush2.bf16.msra.mxu0 0
  %1260 = vmatprep.mubr.bf16.mxu0 0
  %1261 = vmatmul.mubr.bf16.gmra.mxu0 %v972
  %v1262 = vpop.f32.mrf.mxu0
  %v1263 = vadd.f32 0.0, %v1262
  %v1264 = vpop.f32.mrf.mxu0
  %v1265 = vadd.f32 0.0, %v1264
  %v1266 = vpop.f32.mrf.mxu0
  %v1267 = vpop.f32.mrf.mxu0
  %1268 = vdwg.mxu0
  %1269 = vmatprep.subr.bf16.mxu0 0
  %1270 = vmatpush1.bf16.msra.mxu0 0
  %1271 = vmatprep.subr.bf16.mxu0 0
  %1272 = vmatpush1.bf16.msra.mxu0 0
  %1273 = vmatprep.subr.bf16.mxu0 0
  %1274 = vmatpush1.bf16.msra.mxu0 0
  %1275 = vmatprep.subr.bf16.mxu0 0
  %1276 = vmatpush1.bf16.msra.mxu0 0
  %1277 = vmatprep.subr.bf16.mxu0 0
  %1278 = vmatpush1.bf16.msra.mxu0 0
  %1279 = vmatprep.subr.bf16.mxu0 0
  %1280 = vmatpush1.bf16.msra.mxu0 0
  %1281 = vmatprep.subr.bf16.mxu0 %v1015
  %1282 = vmatpush1.bf16.msra.mxu0 %v1012
  %1283 = vmatprep.subr.bf16.mxu0 %v950
  %1284 = vmatpush1.bf16.msra.mxu0 %v949
  %1285 = vmatprep.subr.bf16.mxu0 0
  %1286 = vmatpush2.bf16.msra.mxu0 0
  %1287 = vmatprep.subr.bf16.mxu0 0
  %1288 = vmatpush2.bf16.msra.mxu0 0
  %1289 = vmatprep.subr.bf16.mxu0 0
  %1290 = vmatpush2.bf16.msra.mxu0 0
  %1291 = vmatprep.subr.bf16.mxu0 0
  %1292 = vmatpush2.bf16.msra.mxu0 0
  %1293 = vmatprep.subr.bf16.mxu0 0
  %1294 = vmatpush2.bf16.msra.mxu0 0
  %1295 = vmatprep.subr.bf16.mxu0 0
  %1296 = vmatpush2.bf16.msra.mxu0 0
  %1297 = vmatprep.subr.bf16.mxu0 0
  %1298 = vmatpush2.bf16.msra.mxu0 0
  %1299 = vmatprep.subr.bf16.mxu0 0
  %1300 = vmatpush2.bf16.msra.mxu0 0
  %1301 = vmatprep.mubr.bf16.mxu0 0
  %1302 = vmatmul.mubr.bf16.gmra.mxu0 %v972
  %v1303 = vpop.f32.mrf.mxu0
  %v1304 = vadd.f32 0.0, %v1303
  %v1305 = vpop.f32.mrf.mxu0
  %v1306 = vadd.f32 0.0, %v1305
  %v1307 = vpop.f32.mrf.mxu0
  %v1308 = vpop.f32.mrf.mxu0
  %1309 = vdwg.mxu0
  %1310 = vmatprep.subr.bf16.mxu0 0
  %1311 = vmatpush1.bf16.msra.mxu0 0
  %1312 = vmatprep.subr.bf16.mxu0 0
  %1313 = vmatpush1.bf16.msra.mxu0 0
  %1314 = vmatprep.subr.bf16.mxu0 0
  %1315 = vmatpush1.bf16.msra.mxu0 0
  %1316 = vmatprep.subr.bf16.mxu0 0
  %1317 = vmatpush1.bf16.msra.mxu0 0
  %1318 = vmatprep.subr.bf16.mxu0 0
  %1319 = vmatpush1.bf16.msra.mxu0 0
  %1320 = vmatprep.subr.bf16.mxu0 0
  %1321 = vmatpush1.bf16.msra.mxu0 0
  %1322 = vmatprep.subr.bf16.mxu0 %v1021
  %1323 = vmatpush1.bf16.msra.mxu0 %v1018
  %1324 = vmatprep.subr.bf16.mxu0 %v952
  %1325 = vmatpush1.bf16.msra.mxu0 %v951
  %1326 = vmatprep.subr.bf16.mxu0 0
  %1327 = vmatpush2.bf16.msra.mxu0 0
  %1328 = vmatprep.subr.bf16.mxu0 0
  %1329 = vmatpush2.bf16.msra.mxu0 0
  %1330 = vmatprep.subr.bf16.mxu0 0
  %1331 = vmatpush2.bf16.msra.mxu0 0
  %1332 = vmatprep.subr.bf16.mxu0 0
  %1333 = vmatpush2.bf16.msra.mxu0 0
  %1334 = vmatprep.subr.bf16.mxu0 0
  %1335 = vmatpush2.bf16.msra.mxu0 0
  %1336 = vmatprep.subr.bf16.mxu0 0
  %1337 = vmatpush2.bf16.msra.mxu0 0
  %1338 = vmatprep.subr.bf16.mxu0 0
  %1339 = vmatpush2.bf16.msra.mxu0 0
  %1340 = vmatprep.subr.bf16.mxu0 0
  %1341 = vmatpush2.bf16.msra.mxu0 0
  %1342 = vmatprep.mubr.bf16.mxu0 0
  %1343 = vmatmul.mubr.bf16.gmra.mxu0 %v972
  %v1344 = vpop.f32.mrf.mxu0
  %v1345 = vadd.f32 0.0, %v1344
  %v1346 = vpop.f32.mrf.mxu0
  %v1347 = vadd.f32 0.0, %v1346
  %v1348 = vpop.f32.mrf.mxu0
  %v1349 = vpop.f32.mrf.mxu0
  %1350 = vdwg.mxu0
  %v1351 = vld [vmem:[%s11] sm:$0xf]
  %1353 = vset.pattern.permute.xlu0 0
  %1354 = vperm.xlu0 %1353, %v1351
  %v1355 = vpop.permute.xlu0 %1354
  %v1357 = vmul.f32 %v1058, %v1355
  %v1358 = vmul.f32 %v1060, %v1355
  %v1359 = vmul.f32 %v1099, %v1355
  %v1360 = vmul.f32 %v1101, %v1355
  %v1361 = vmul.f32 %v1140, %v1355
  %v1362 = vmul.f32 %v1142, %v1355
  %v1363 = vmul.f32 %v1181, %v1355
  %v1364 = vmul.f32 %v1183, %v1355
  %v1365 = vmul.f32 %v1222, %v1355
  %v1366 = vmul.f32 %v1224, %v1355
  %v1367 = vmul.f32 %v1263, %v1355
  %v1368 = vmul.f32 %v1265, %v1355
  %v1369 = vmul.f32 %v1304, %v1355
  %v1370 = vmul.f32 %v1306, %v1355
  %v1371 = vmul.f32 %v1345, %v1355
  %v1372 = vmul.f32 %v1347, %v1355
  %v1373 = vld [vmem:[%s13] sm:$0xf]
  %1375 = vset.pattern.permute.xlu0 0
  %1376 = vperm.xlu0 %1375, %v1373
  %v1377 = vpop.permute.xlu0 %1376
  %v1379 = vadd.f32 %v1357, %v1377
  %v1380 = vadd.f32 %v1358, %v1377
  %v1381 = vadd.f32 %v1359, %v1377
  %v1382 = vadd.f32 %v1360, %v1377
  %v1383 = vadd.f32 %v1361, %v1377
  %v1384 = vadd.f32 %v1362, %v1377
  %v1385 = vadd.f32 %v1363, %v1377
  %v1386 = vadd.f32 %v1364, %v1377
  %v1387 = vadd.f32 %v1365, %v1377
  %v1388 = vadd.f32 %v1366, %v1377
  %v1389 = vadd.f32 %v1367, %v1377
  %v1390 = vadd.f32 %v1368, %v1377
  %v1391 = vadd.f32 %v1369, %v1377
  %v1392 = vadd.f32 %v1370, %v1377
  %v1393 = vadd.f32 %v1371, %v1377
  %v1394 = vadd.f32 %v1372, %v1377
  %v1395 = vmax.f32 %v1379, 0.0
  %v1396 = vmax.f32 %v1380, 0.0
  %v1397 = vmax.f32 %v1381, 0.0
  %v1398 = vmax.f32 %v1382, 0.0
  %v1399 = vmax.f32 %v1383, 0.0
  %v1400 = vmax.f32 %v1384, 0.0
  %v1401 = vmax.f32 %v1385, 0.0
  %v1402 = vmax.f32 %v1386, 0.0
  %v1403 = vmax.f32 %v1387, 0.0
  %v1404 = vmax.f32 %v1388, 0.0
  %v1405 = vmax.f32 %v1389, 0.0
  %v1406 = vmax.f32 %v1390, 0.0
  %v1407 = vmax.f32 %v1391, 0.0
  %v1408 = vmax.f32 %v1392, 0.0
  %v1409 = vmax.f32 %v1393, 0.0
  %v1410 = vmax.f32 %v1394, 0.0
  %v1411 = vld [vmem:[%s27] ss:$8 sm:$0xf]
  %v1413 = vlaneseq
  %v1414 = vshrl.u32 %v1413, 7
  %v1415 = vsub.s32 0, %v1414
  %v1416 = vrot.slane %v1411, %v1415
  %v1417 = vlaneseq
  %v1418 = vshrl.u32 %v1417, 7
  %v1419 = vsub.s32 1, %v1418
  %v1420 = vrot.slane %v1411, %v1419
  %v1421 = vlaneseq
  %v1422 = vshrl.u32 %v1421, 7
  %v1423 = vsub.s32 2, %v1422
  %v1424 = vrot.slane %v1411, %v1423
  %v1425 = vlaneseq
  %v1426 = vshrl.u32 %v1425, 7
  %v1427 = vsub.s32 3, %v1426
  %v1428 = vrot.slane %v1411, %v1427
  %1429 = vrot.lane.b32.xlu0 %v1416, 111
  %v1430 = vpop.permute.xlu0 %1429
  %1431 = vrot.lane.b32.xlu0 %v1420, 111
  %v1432 = vpop.permute.xlu0 %1431
  %1433 = vrot.lane.b32.xlu0 %v1424, 111
  %v1434 = vpop.permute.xlu0 %1433
  %1435 = vrot.lane.b32.xlu0 %v1428, 111
  %v1436 = vpop.permute.xlu0 %1435
  %vm1437 = vcmask 908288
  %v1438 = vsel %vm1437, %v1430, %v1432
  %v1439 = vsel %vm1437, %v1432, %v1434
  %v1440 = vsel %vm1437, %v1434, %v1436
  %v1446 = vmul.f32 %v1406, %v1430
  %v1447 = vmul.f32 %v1407, %v1438
  %v1448 = vmul.f32 %v1408, %v1439
  %v1449 = vmul.f32 %v1409, %v1440
  %v1450 = vmul.f32 %v1410, %v1436
  %v1451 = vld [vmem:[%s15] sm:$0xf]
  %1453 = vset.pattern.permute.xlu0 0
  %1454 = vperm.xlu0 %1453, %v1451
  %v1455 = vpop.permute.xlu0 %1454
  %v1457 = vmul.f32 %v1446, %v1455
  %v1458 = vmul.f32 %v1447, %v1455
  %v1459 = vmul.f32 %v1448, %v1455
  %v1460 = vmul.f32 %v1449, %v1455
  %v1461 = vmul.f32 %v1450, %v1455
  %v1462 = vadd.f32 %v1457, 0.0
  %v1463 = vadd.f32 %v1458, 0.0
  %v1464 = vadd.f32 %v1459, 0.0
  %v1465 = vadd.f32 %v1460, 0.0
  %v1466 = vadd.f32 %v1461, 0.0
  %v1467 = vmul.f32 %v900, %v1430
  %v1468 = vmul.f32 %v901, %v1438
  %v1469 = vmul.f32 %v902, %v1439
  %v1470 = vmul.f32 %v903, %v1440
  %v1471 = vmul.f32 %v904, %v1436
  %v1472 = vmul.f32 %v916, %v1430
  %v1473 = vmul.f32 %v917, %v1438
  %v1474 = vmul.f32 %v918, %v1439
  %v1475 = vmul.f32 %v919, %v1440
  %v1476 = vmul.f32 %v920, %v1436
  %v1477 = vmul.f32 %v932, %v1430
  %v1478 = vmul.f32 %v933, %v1438
  %v1479 = vmul.f32 %v934, %v1439
  %v1480 = vmul.f32 %v935, %v1440
  %v1481 = vmul.f32 %v936, %v1436
  %v1482 = vadd.f32 %v1467, 0.0
  %v1483 = vadd.f32 %v1468, 0.0
  %v1484 = vadd.f32 %v1469, 0.0
  %v1485 = vadd.f32 %v1470, 0.0
  %v1486 = vadd.f32 %v1471, 0.0
  %v1487 = vadd.f32 %v1472, 0.0
  %v1488 = vadd.f32 %v1473, 0.0
  %v1489 = vadd.f32 %v1474, 0.0
  %v1490 = vadd.f32 %v1475, 0.0
  %v1491 = vadd.f32 %v1476, 0.0
  %v1492 = vadd.f32 %v1477, 0.0
  %v1493 = vadd.f32 %v1478, 0.0
  %v1494 = vadd.f32 %v1479, 0.0
  %v1495 = vadd.f32 %v1480, 0.0
  %v1496 = vadd.f32 %v1481, 0.0
  %s1497 = scalar_lea.vmem %s27, 1
  %v1498 = vld [vmem:[%s1497] ss:$8 sm:$0xf]
  %v1500 = vlaneseq
  %v1501 = vshrl.u32 %v1500, 7
  %v1502 = vsub.s32 0, %v1501
  %v1503 = vrot.slane %v1498, %v1502
  %v1504 = vlaneseq
  %v1505 = vshrl.u32 %v1504, 7
  %v1506 = vsub.s32 1, %v1505
  %v1507 = vrot.slane %v1498, %v1506
  %v1508 = vlaneseq
  %v1509 = vshrl.u32 %v1508, 7
  %v1510 = vsub.s32 2, %v1509
  %v1511 = vrot.slane %v1498, %v1510
  %v1512 = vlaneseq
  %v1513 = vshrl.u32 %v1512, 7
  %v1514 = vsub.s32 3, %v1513
  %v1515 = vrot.slane %v1498, %v1514
  %1516 = vrot.lane.b32.xlu0 %v1503, 112
  %v1517 = vpop.permute.xlu0 %1516
  %1518 = vrot.lane.b32.xlu0 %v1507, 112
  %v1519 = vpop.permute.xlu0 %1518
  %1520 = vrot.lane.b32.xlu0 %v1511, 112
  %v1521 = vpop.permute.xlu0 %1520
  %1522 = vrot.lane.b32.xlu0 %v1515, 112
  %v1523 = vpop.permute.xlu0 %1522
  %vm1524 = vcmask 916480
  %v1525 = vsel %vm1524, %v1517, %v1519
  %v1526 = vsel %vm1524, %v1519, %v1521
  %v1527 = vsel %vm1524, %v1521, %v1523
  %v1533 = vmul.f32 %v1402, %v1517
  %v1534 = vmul.f32 %v1403, %v1525
  %v1535 = vmul.f32 %v1404, %v1526
  %v1536 = vmul.f32 %v1405, %v1527
  %v1537 = vmul.f32 %v1406, %v1523
  %1538 = vset.pattern.permute.xlu0 1
  %1539 = vperm.xlu0 %1538, %v1451
  %v1540 = vpop.permute.xlu0 %1539
  %v1542 = vmul.f32 %v1533, %v1540
  %v1543 = vmul.f32 %v1534, %v1540
  %v1544 = vmul.f32 %v1535, %v1540
  %v1545 = vmul.f32 %v1536, %v1540
  %v1546 = vmul.f32 %v1537, %v1540
  %1552 = vrot.lane.b32.xlu0 %v1542, 127
  %v1553 = vpop.permute.xlu0 %1552
  %1554 = vrot.lane.b32.xlu0 %v1543, 127
  %v1555 = vpop.permute.xlu0 %1554
  %1556 = vrot.lane.b32.xlu0 %v1544, 127
  %v1557 = vpop.permute.xlu0 %1556
  %1558 = vrot.lane.b32.xlu0 %v1545, 127
  %v1559 = vpop.permute.xlu0 %1558
  %1560 = vrot.lane.b32.xlu0 %v1546, 127
  %v1561 = vpop.permute.xlu0 %1560
  %vm1562 = vcmask 1039360
  %v1563 = vsel %vm1562, %v1553, %v1555
  %v1564 = vsel %vm1562, %v1555, %v1557
  %v1565 = vsel %vm1562, %v1557, %v1559
  %v1566 = vsel %vm1562, %v1559, %v1561
  %v1572 = vadd.f32 %v1462, %v1563
  %v1573 = vadd.f32 %v1463, %v1564
  %v1574 = vadd.f32 %v1464, %v1565
  %v1575 = vadd.f32 %v1465, %v1566
  %v1576 = vadd.f32 %v1466, %v1561
  %v1577 = vmul.f32 %v896, %v1517
  %v1578 = vmul.f32 %v897, %v1525
  %v1579 = vmul.f32 %v898, %v1526
  %v1580 = vmul.f32 %v899, %v1527
  %v1581 = vmul.f32 %v900, %v1523
  %v1582 = vmul.f32 %v912, %v1517
  %v1583 = vmul.f32 %v913, %v1525
  %v1584 = vmul.f32 %v914, %v1526
  %v1585 = vmul.f32 %v915, %v1527
  %v1586 = vmul.f32 %v916, %v1523
  %v1587 = vmul.f32 %v928, %v1517
  %v1588 = vmul.f32 %v929, %v1525
  %v1589 = vmul.f32 %v930, %v1526
  %v1590 = vmul.f32 %v931, %v1527
  %v1591 = vmul.f32 %v932, %v1523
  %1607 = vrot.lane.b32.xlu0 %v1577, 127
  %v1608 = vpop.permute.xlu0 %1607
  %1609 = vrot.lane.b32.xlu0 %v1578, 127
  %v1610 = vpop.permute.xlu0 %1609
  %1611 = vrot.lane.b32.xlu0 %v1579, 127
  %v1612 = vpop.permute.xlu0 %1611
  %1613 = vrot.lane.b32.xlu0 %v1580, 127
  %v1614 = vpop.permute.xlu0 %1613
  %1615 = vrot.lane.b32.xlu0 %v1581, 127
  %v1616 = vpop.permute.xlu0 %1615
  %1617 = vrot.lane.b32.xlu0 %v1582, 127
  %v1618 = vpop.permute.xlu0 %1617
  %1619 = vrot.lane.b32.xlu0 %v1583, 127
  %v1620 = vpop.permute.xlu0 %1619
  %1621 = vrot.lane.b32.xlu0 %v1584, 127
  %v1622 = vpop.permute.xlu0 %1621
  %1623 = vrot.lane.b32.xlu0 %v1585, 127
  %v1624 = vpop.permute.xlu0 %1623
  %1625 = vrot.lane.b32.xlu0 %v1586, 127
  %v1626 = vpop.permute.xlu0 %1625
  %1627 = vrot.lane.b32.xlu0 %v1587, 127
  %v1628 = vpop.permute.xlu0 %1627
  %1629 = vrot.lane.b32.xlu0 %v1588, 127
  %v1630 = vpop.permute.xlu0 %1629
  %1631 = vrot.lane.b32.xlu0 %v1589, 127
  %v1632 = vpop.permute.xlu0 %1631
  %1633 = vrot.lane.b32.xlu0 %v1590, 127
  %v1634 = vpop.permute.xlu0 %1633
  %1635 = vrot.lane.b32.xlu0 %v1591, 127
  %v1636 = vpop.permute.xlu0 %1635
  %v1637 = vsel %vm1562, %v1608, %v1610
  %v1638 = vsel %vm1562, %v1610, %v1612
  %v1639 = vsel %vm1562, %v1612, %v1614
  %v1640 = vsel %vm1562, %v1614, %v1616
  %v1641 = vsel %vm1562, %v1618, %v1620
  %v1642 = vsel %vm1562, %v1620, %v1622
  %v1643 = vsel %vm1562, %v1622, %v1624
  %v1644 = vsel %vm1562, %v1624, %v1626
  %v1645 = vsel %vm1562, %v1628, %v1630
  %v1646 = vsel %vm1562, %v1630, %v1632
  %v1647 = vsel %vm1562, %v1632, %v1634
  %v1648 = vsel %vm1562, %v1634, %v1636
  %v1664 = vadd.f32 %v1482, %v1637
  %v1665 = vadd.f32 %v1483, %v1638
  %v1666 = vadd.f32 %v1484, %v1639
  %v1667 = vadd.f32 %v1485, %v1640
  %v1668 = vadd.f32 %v1486, %v1616
  %v1669 = vadd.f32 %v1487, %v1641
  %v1670 = vadd.f32 %v1488, %v1642
  %v1671 = vadd.f32 %v1489, %v1643
  %v1672 = vadd.f32 %v1490, %v1644
  %v1673 = vadd.f32 %v1491, %v1626
  %v1674 = vadd.f32 %v1492, %v1645
  %v1675 = vadd.f32 %v1493, %v1646
  %v1676 = vadd.f32 %v1494, %v1647
  %v1677 = vadd.f32 %v1495, %v1648
  %v1678 = vadd.f32 %v1496, %v1636
  %s1679 = scalar_lea.vmem %s27, 2
  %v1680 = vld [vmem:[%s1679] ss:$8 sm:$0xf]
  %v1682 = vlaneseq
  %v1683 = vshrl.u32 %v1682, 7
  %v1684 = vsub.s32 0, %v1683
  %v1685 = vrot.slane %v1680, %v1684
  %v1686 = vlaneseq
  %v1687 = vshrl.u32 %v1686, 7
  %v1688 = vsub.s32 1, %v1687
  %v1689 = vrot.slane %v1680, %v1688
  %v1690 = vlaneseq
  %v1691 = vshrl.u32 %v1690, 7
  %v1692 = vsub.s32 2, %v1691
  %v1693 = vrot.slane %v1680, %v1692
  %v1694 = vlaneseq
  %v1695 = vshrl.u32 %v1694, 7
  %v1696 = vsub.s32 3, %v1695
  %v1697 = vrot.slane %v1680, %v1696
  %1698 = vrot.lane.b32.xlu0 %v1685, 112
  %v1699 = vpop.permute.xlu0 %1698
  %1700 = vrot.lane.b32.xlu0 %v1689, 112
  %v1701 = vpop.permute.xlu0 %1700
  %1702 = vrot.lane.b32.xlu0 %v1693, 112
  %v1703 = vpop.permute.xlu0 %1702
  %1704 = vrot.lane.b32.xlu0 %v1697, 112
  %v1705 = vpop.permute.xlu0 %1704
  %v1706 = vsel %vm1524, %v1699, %v1701
  %v1707 = vsel %vm1524, %v1701, %v1703
  %v1708 = vsel %vm1524, %v1703, %v1705
  %v1714 = vmul.f32 %v1406, %v1699
  %v1715 = vmul.f32 %v1407, %v1706
  %v1716 = vmul.f32 %v1408, %v1707
  %v1717 = vmul.f32 %v1409, %v1708
  %v1718 = vmul.f32 %v1410, %v1705
  %1719 = vset.pattern.permute.xlu0 2
  %1720 = vperm.xlu0 %1719, %v1451
  %v1721 = vpop.permute.xlu0 %1720
  %v1723 = vmul.f32 %v1714, %v1721
  %v1724 = vmul.f32 %v1715, %v1721
  %v1725 = vmul.f32 %v1716, %v1721
  %v1726 = vmul.f32 %v1717, %v1721
  %v1727 = vmul.f32 %v1718, %v1721
  %1733 = vrot.lane.b32.xlu0 %v1723, 127
  %v1734 = vpop.permute.xlu0 %1733
  %1735 = vrot.lane.b32.xlu0 %v1724, 127
  %v1736 = vpop.permute.xlu0 %1735
  %1737 = vrot.lane.b32.xlu0 %v1725, 127
  %v1738 = vpop.permute.xlu0 %1737
  %1739 = vrot.lane.b32.xlu0 %v1726, 127
  %v1740 = vpop.permute.xlu0 %1739
  %1741 = vrot.lane.b32.xlu0 %v1727, 127
  %v1742 = vpop.permute.xlu0 %1741
  %v1743 = vsel %vm1562, %v1734, %v1736
  %v1744 = vsel %vm1562, %v1736, %v1738
  %v1745 = vsel %vm1562, %v1738, %v1740
  %v1746 = vsel %vm1562, %v1740, %v1742
  %v1752 = vadd.f32 %v1572, %v1743
  %v1753 = vadd.f32 %v1573, %v1744
  %v1754 = vadd.f32 %v1574, %v1745
  %v1755 = vadd.f32 %v1575, %v1746
  %v1756 = vadd.f32 %v1576, %v1742
  %v1757 = vmul.f32 %v900, %v1699
  %v1758 = vmul.f32 %v901, %v1706
  %v1759 = vmul.f32 %v902, %v1707
  %v1760 = vmul.f32 %v903, %v1708
  %v1761 = vmul.f32 %v904, %v1705
  %v1762 = vmul.f32 %v916, %v1699
  %v1763 = vmul.f32 %v917, %v1706
  %v1764 = vmul.f32 %v918, %v1707
  %v1765 = vmul.f32 %v919, %v1708
  %v1766 = vmul.f32 %v920, %v1705
  %v1767 = vmul.f32 %v932, %v1699
  %v1768 = vmul.f32 %v933, %v1706
  %v1769 = vmul.f32 %v934, %v1707
  %v1770 = vmul.f32 %v935, %v1708
  %v1771 = vmul.f32 %v936, %v1705
  %1787 = vrot.lane.b32.xlu0 %v1757, 127
  %v1788 = vpop.permute.xlu0 %1787
  %1789 = vrot.lane.b32.xlu0 %v1758, 127
  %v1790 = vpop.permute.xlu0 %1789
  %1791 = vrot.lane.b32.xlu0 %v1759, 127
  %v1792 = vpop.permute.xlu0 %1791
  %1793 = vrot.lane.b32.xlu0 %v1760, 127
  %v1794 = vpop.permute.xlu0 %1793
  %1795 = vrot.lane.b32.xlu0 %v1761, 127
  %v1796 = vpop.permute.xlu0 %1795
  %1797 = vrot.lane.b32.xlu0 %v1762, 127
  %v1798 = vpop.permute.xlu0 %1797
  %1799 = vrot.lane.b32.xlu0 %v1763, 127
  %v1800 = vpop.permute.xlu0 %1799
  %1801 = vrot.lane.b32.xlu0 %v1764, 127
  %v1802 = vpop.permute.xlu0 %1801
  %1803 = vrot.lane.b32.xlu0 %v1765, 127
  %v1804 = vpop.permute.xlu0 %1803
  %1805 = vrot.lane.b32.xlu0 %v1766, 127
  %v1806 = vpop.permute.xlu0 %1805
  %1807 = vrot.lane.b32.xlu0 %v1767, 127
  %v1808 = vpop.permute.xlu0 %1807
  %1809 = vrot.lane.b32.xlu0 %v1768, 127
  %v1810 = vpop.permute.xlu0 %1809
  %1811 = vrot.lane.b32.xlu0 %v1769, 127
  %v1812 = vpop.permute.xlu0 %1811
  %1813 = vrot.lane.b32.xlu0 %v1770, 127
  %v1814 = vpop.permute.xlu0 %1813
  %1815 = vrot.lane.b32.xlu0 %v1771, 127
  %v1816 = vpop.permute.xlu0 %1815
  %v1817 = vsel %vm1562, %v1788, %v1790
  %v1818 = vsel %vm1562, %v1790, %v1792
  %v1819 = vsel %vm1562, %v1792, %v1794
  %v1820 = vsel %vm1562, %v1794, %v1796
  %v1821 = vsel %vm1562, %v1798, %v1800
  %v1822 = vsel %vm1562, %v1800, %v1802
  %v1823 = vsel %vm1562, %v1802, %v1804
  %v1824 = vsel %vm1562, %v1804, %v1806
  %v1825 = vsel %vm1562, %v1808, %v1810
  %v1826 = vsel %vm1562, %v1810, %v1812
  %v1827 = vsel %vm1562, %v1812, %v1814
  %v1828 = vsel %vm1562, %v1814, %v1816
  %v1844 = vadd.f32 %v1664, %v1817
  %v1845 = vadd.f32 %v1665, %v1818
  %v1846 = vadd.f32 %v1666, %v1819
  %v1847 = vadd.f32 %v1667, %v1820
  %v1848 = vadd.f32 %v1668, %v1796
  %v1849 = vadd.f32 %v1669, %v1821
  %v1850 = vadd.f32 %v1670, %v1822
  %v1851 = vadd.f32 %v1671, %v1823
  %v1852 = vadd.f32 %v1672, %v1824
  %v1853 = vadd.f32 %v1673, %v1806
  %v1854 = vadd.f32 %v1674, %v1825
  %v1855 = vadd.f32 %v1675, %v1826
  %v1856 = vadd.f32 %v1676, %v1827
  %v1857 = vadd.f32 %v1677, %v1828
  %v1858 = vadd.f32 %v1678, %v1816
  %s1859 = scalar_lea.vmem %s27, 3
  %v1860 = vld [vmem:[%s1859] ss:$8 sm:$0xf]
  %v1862 = vlaneseq
  %v1863 = vshrl.u32 %v1862, 7
  %v1864 = vsub.s32 0, %v1863
  %v1865 = vrot.slane %v1860, %v1864
  %v1866 = vlaneseq
  %v1867 = vshrl.u32 %v1866, 7
  %v1868 = vsub.s32 1, %v1867
  %v1869 = vrot.slane %v1860, %v1868
  %v1870 = vlaneseq
  %v1871 = vshrl.u32 %v1870, 7
  %v1872 = vsub.s32 2, %v1871
  %v1873 = vrot.slane %v1860, %v1872
  %v1874 = vlaneseq
  %v1875 = vshrl.u32 %v1874, 7
  %v1876 = vsub.s32 3, %v1875
  %v1877 = vrot.slane %v1860, %v1876
  %1878 = vrot.lane.b32.xlu0 %v1865, 127
  %v1879 = vpop.permute.xlu0 %1878
  %1880 = vrot.lane.b32.xlu0 %v1869, 127
  %v1881 = vpop.permute.xlu0 %1880
  %1882 = vrot.lane.b32.xlu0 %v1873, 127
  %v1883 = vpop.permute.xlu0 %1882
  %1884 = vrot.lane.b32.xlu0 %v1877, 127
  %v1885 = vpop.permute.xlu0 %1884
  %v1886 = vsel %vm1562, %v1879, %v1881
  %v1887 = vsel %vm1562, %v1881, %v1883
  %v1888 = vsel %vm1562, %v1883, %v1885
  %v1894 = vmul.f32 %v1398, %v1879
  %v1895 = vmul.f32 %v1399, %v1886
  %v1896 = vmul.f32 %v1400, %v1887
  %v1897 = vmul.f32 %v1401, %v1888
  %v1898 = vmul.f32 %v1402, %v1885
  %1899 = vset.pattern.permute.xlu0 3
  %1900 = vperm.xlu0 %1899, %v1451
  %v1901 = vpop.permute.xlu0 %1900
  %v1903 = vmul.f32 %v1894, %v1901
  %v1904 = vmul.f32 %v1895, %v1901
  %v1905 = vmul.f32 %v1896, %v1901
  %v1906 = vmul.f32 %v1897, %v1901
  %v1907 = vmul.f32 %v1898, %v1901
  %1913 = vrot.lane.b32.xlu0 %v1903, 112
  %v1914 = vpop.permute.xlu0 %1913
  %1915 = vrot.lane.b32.xlu0 %v1904, 112
  %v1916 = vpop.permute.xlu0 %1915
  %1917 = vrot.lane.b32.xlu0 %v1905, 112
  %v1918 = vpop.permute.xlu0 %1917
  %1919 = vrot.lane.b32.xlu0 %v1906, 112
  %v1920 = vpop.permute.xlu0 %1919
  %1921 = vrot.lane.b32.xlu0 %v1907, 112
  %v1922 = vpop.permute.xlu0 %1921
  %v1923 = vsel %vm1524, %v1914, %v1916
  %v1924 = vsel %vm1524, %v1916, %v1918
  %v1925 = vsel %vm1524, %v1918, %v1920
  %v1926 = vsel %vm1524, %v1920, %v1922
  %v1932 = vadd.f32 %v1752, %v1923
  %v1933 = vadd.f32 %v1753, %v1924
  %v1934 = vadd.f32 %v1754, %v1925
  %v1935 = vadd.f32 %v1755, %v1926
  %v1936 = vadd.f32 %v1756, %v1922
  %v1937 = vmul.f32 %v892, %v1879
  %v1938 = vmul.f32 %v893, %v1886
  %v1939 = vmul.f32 %v894, %v1887
  %v1940 = vmul.f32 %v895, %v1888
  %v1941 = vmul.f32 %v896, %v1885
  %v1942 = vmul.f32 %v908, %v1879
  %v1943 = vmul.f32 %v909, %v1886
  %v1944 = vmul.f32 %v910, %v1887
  %v1945 = vmul.f32 %v911, %v1888
  %v1946 = vmul.f32 %v912, %v1885
  %v1947 = vmul.f32 %v924, %v1879
  %v1948 = vmul.f32 %v925, %v1886
  %v1949 = vmul.f32 %v926, %v1887
  %v1950 = vmul.f32 %v927, %v1888
  %v1951 = vmul.f32 %v928, %v1885
  %1967 = vrot.lane.b32.xlu0 %v1937, 112
  %v1968 = vpop.permute.xlu0 %1967
  %1969 = vrot.lane.b32.xlu0 %v1938, 112
  %v1970 = vpop.permute.xlu0 %1969
  %1971 = vrot.lane.b32.xlu0 %v1939, 112
  %v1972 = vpop.permute.xlu0 %1971
  %1973 = vrot.lane.b32.xlu0 %v1940, 112
  %v1974 = vpop.permute.xlu0 %1973
  %1975 = vrot.lane.b32.xlu0 %v1941, 112
  %v1976 = vpop.permute.xlu0 %1975
  %1977 = vrot.lane.b32.xlu0 %v1942, 112
  %v1978 = vpop.permute.xlu0 %1977
  %1979 = vrot.lane.b32.xlu0 %v1943, 112
  %v1980 = vpop.permute.xlu0 %1979
  %1981 = vrot.lane.b32.xlu0 %v1944, 112
  %v1982 = vpop.permute.xlu0 %1981
  %1983 = vrot.lane.b32.xlu0 %v1945, 112
  %v1984 = vpop.permute.xlu0 %1983
  %1985 = vrot.lane.b32.xlu0 %v1946, 112
  %v1986 = vpop.permute.xlu0 %1985
  %1987 = vrot.lane.b32.xlu0 %v1947, 112
  %v1988 = vpop.permute.xlu0 %1987
  %1989 = vrot.lane.b32.xlu0 %v1948, 112
  %v1990 = vpop.permute.xlu0 %1989
  %1991 = vrot.lane.b32.xlu0 %v1949, 112
  %v1992 = vpop.permute.xlu0 %1991
  %1993 = vrot.lane.b32.xlu0 %v1950, 112
  %v1994 = vpop.permute.xlu0 %1993
  %1995 = vrot.lane.b32.xlu0 %v1951, 112
  %v1996 = vpop.permute.xlu0 %1995
  %v1997 = vsel %vm1524, %v1968, %v1970
  %v1998 = vsel %vm1524, %v1970, %v1972
  %v1999 = vsel %vm1524, %v1972, %v1974
  %v2000 = vsel %vm1524, %v1974, %v1976
  %v2001 = vsel %vm1524, %v1978, %v1980
  %v2002 = vsel %vm1524, %v1980, %v1982
  %v2003 = vsel %vm1524, %v1982, %v1984
  %v2004 = vsel %vm1524, %v1984, %v1986
  %v2005 = vsel %vm1524, %v1988, %v1990
  %v2006 = vsel %vm1524, %v1990, %v1992
  %v2007 = vsel %vm1524, %v1992, %v1994
  %v2008 = vsel %vm1524, %v1994, %v1996
  %v2024 = vadd.f32 %v1844, %v1997
  %v2025 = vadd.f32 %v1845, %v1998
  %v2026 = vadd.f32 %v1846, %v1999
  %v2027 = vadd.f32 %v1847, %v2000
  %v2028 = vadd.f32 %v1848, %v1976
  %v2029 = vadd.f32 %v1849, %v2001
  %v2030 = vadd.f32 %v1850, %v2002
  %v2031 = vadd.f32 %v1851, %v2003
  %v2032 = vadd.f32 %v1852, %v2004
  %v2033 = vadd.f32 %v1853, %v1986
  %v2034 = vadd.f32 %v1854, %v2005
  %v2035 = vadd.f32 %v1855, %v2006
  %v2036 = vadd.f32 %v1856, %v2007
  %v2037 = vadd.f32 %v1857, %v2008
  %v2038 = vadd.f32 %v1858, %v1996
  %s2039 = scalar_lea.vmem %s27, 4
  %v2040 = vld [vmem:[%s2039] ss:$8 sm:$0xf]
  %v2042 = vlaneseq
  %v2043 = vshrl.u32 %v2042, 7
  %v2044 = vsub.s32 0, %v2043
  %v2045 = vrot.slane %v2040, %v2044
  %v2046 = vlaneseq
  %v2047 = vshrl.u32 %v2046, 7
  %v2048 = vsub.s32 1, %v2047
  %v2049 = vrot.slane %v2040, %v2048
  %v2050 = vlaneseq
  %v2051 = vshrl.u32 %v2050, 7
  %v2052 = vsub.s32 2, %v2051
  %v2053 = vrot.slane %v2040, %v2052
  %v2054 = vlaneseq
  %v2055 = vshrl.u32 %v2054, 7
  %v2056 = vsub.s32 3, %v2055
  %v2057 = vrot.slane %v2040, %v2056
  %v2062 = vmul.f32 %v1395, %v2045
  %v2063 = vmul.f32 %v1396, %v2049
  %v2064 = vmul.f32 %v1397, %v2053
  %v2065 = vmul.f32 %v1398, %v2057
  %2066 = vset.pattern.permute.xlu0 4
  %2067 = vperm.xlu0 %2066, %v1451
  %v2068 = vpop.permute.xlu0 %2067
  %v2070 = vmul.f32 %v2062, %v2068
  %v2071 = vmul.f32 %v2063, %v2068
  %v2072 = vmul.f32 %v2064, %v2068
  %v2073 = vmul.f32 %v2065, %v2068
  %2078 = vrot.lane.b32.xlu0 %v2070, 111
  %v2079 = vpop.permute.xlu0 %2078
  %2080 = vrot.lane.b32.xlu0 %v2071, 111
  %v2081 = vpop.permute.xlu0 %2080
  %2082 = vrot.lane.b32.xlu0 %v2072, 111
  %v2083 = vpop.permute.xlu0 %2082
  %2084 = vrot.lane.b32.xlu0 %v2073, 111
  %v2085 = vpop.permute.xlu0 %2084
  %v2086 = vsel %vm1437, %v2079, %v2081
  %v2087 = vsel %vm1437, %v2081, %v2083
  %v2088 = vsel %vm1437, %v2083, %v2085
  %v2094 = vadd.f32 %v1932, %v2079
  %v2095 = vadd.f32 %v1933, %v2086
  %v2096 = vadd.f32 %v1934, %v2087
  %v2097 = vadd.f32 %v1935, %v2088
  %v2098 = vadd.f32 %v1936, %v2085
  %v2099 = vmul.f32 %v889, %v2045
  %v2100 = vmul.f32 %v890, %v2049
  %v2101 = vmul.f32 %v891, %v2053
  %v2102 = vmul.f32 %v892, %v2057
  %v2103 = vmul.f32 %v905, %v2045
  %v2104 = vmul.f32 %v906, %v2049
  %v2105 = vmul.f32 %v907, %v2053
  %v2106 = vmul.f32 %v908, %v2057
  %v2107 = vmul.f32 %v921, %v2045
  %v2108 = vmul.f32 %v922, %v2049
  %v2109 = vmul.f32 %v923, %v2053
  %v2110 = vmul.f32 %v924, %v2057
  %2123 = vrot.lane.b32.xlu0 %v2099, 111
  %v2124 = vpop.permute.xlu0 %2123
  %2125 = vrot.lane.b32.xlu0 %v2100, 111
  %v2126 = vpop.permute.xlu0 %2125
  %2127 = vrot.lane.b32.xlu0 %v2101, 111
  %v2128 = vpop.permute.xlu0 %2127
  %2129 = vrot.lane.b32.xlu0 %v2102, 111
  %v2130 = vpop.permute.xlu0 %2129
  %2131 = vrot.lane.b32.xlu0 %v2103, 111
  %v2132 = vpop.permute.xlu0 %2131
  %2133 = vrot.lane.b32.xlu0 %v2104, 111
  %v2134 = vpop.permute.xlu0 %2133
  %2135 = vrot.lane.b32.xlu0 %v2105, 111
  %v2136 = vpop.permute.xlu0 %2135
  %2137 = vrot.lane.b32.xlu0 %v2106, 111
  %v2138 = vpop.permute.xlu0 %2137
  %2139 = vrot.lane.b32.xlu0 %v2107, 111
  %v2140 = vpop.permute.xlu0 %2139
  %2141 = vrot.lane.b32.xlu0 %v2108, 111
  %v2142 = vpop.permute.xlu0 %2141
  %2143 = vrot.lane.b32.xlu0 %v2109, 111
  %v2144 = vpop.permute.xlu0 %2143
  %2145 = vrot.lane.b32.xlu0 %v2110, 111
  %v2146 = vpop.permute.xlu0 %2145
  %v2147 = vsel %vm1437, %v2124, %v2126
  %v2148 = vsel %vm1437, %v2126, %v2128
  %v2149 = vsel %vm1437, %v2128, %v2130
  %v2150 = vsel %vm1437, %v2132, %v2134
  %v2151 = vsel %vm1437, %v2134, %v2136
  %v2152 = vsel %vm1437, %v2136, %v2138
  %v2153 = vsel %vm1437, %v2140, %v2142
  %v2154 = vsel %vm1437, %v2142, %v2144
  %v2155 = vsel %vm1437, %v2144, %v2146
  %v2171 = vadd.f32 %v2024, %v2124
  %v2172 = vadd.f32 %v2025, %v2147
  %v2173 = vadd.f32 %v2026, %v2148
  %v2174 = vadd.f32 %v2027, %v2149
  %v2175 = vadd.f32 %v2028, %v2130
  %v2176 = vadd.f32 %v2029, %v2132
  %v2177 = vadd.f32 %v2030, %v2150
  %v2178 = vadd.f32 %v2031, %v2151
  %v2179 = vadd.f32 %v2032, %v2152
  %v2180 = vadd.f32 %v2033, %v2138
  %v2181 = vadd.f32 %v2034, %v2140
  %v2182 = vadd.f32 %v2035, %v2153
  %v2183 = vadd.f32 %v2036, %v2154
  %v2184 = vadd.f32 %v2037, %v2155
  %v2185 = vadd.f32 %v2038, %v2146
  %s2186 = scalar_lea.vmem %s27, 5
  %v2187 = vld [vmem:[%s2186] ss:$8 sm:$0xf]
  %v2189 = vlaneseq
  %v2190 = vshrl.u32 %v2189, 7
  %v2191 = vsub.s32 0, %v2190
  %v2192 = vrot.slane %v2187, %v2191
  %v2193 = vlaneseq
  %v2194 = vshrl.u32 %v2193, 7
  %v2195 = vsub.s32 1, %v2194
  %v2196 = vrot.slane %v2187, %v2195
  %v2197 = vlaneseq
  %v2198 = vshrl.u32 %v2197, 7
  %v2199 = vsub.s32 2, %v2198
  %v2200 = vrot.slane %v2187, %v2199
  %v2201 = vlaneseq
  %v2202 = vshrl.u32 %v2201, 7
  %v2203 = vsub.s32 3, %v2202
  %v2204 = vrot.slane %v2187, %v2203
  %v2209 = vmul.f32 %v1399, %v2192
  %v2210 = vmul.f32 %v1400, %v2196
  %v2211 = vmul.f32 %v1401, %v2200
  %v2212 = vmul.f32 %v1402, %v2204
  %2213 = vset.pattern.permute.xlu0 5
  %2214 = vperm.xlu0 %2213, %v1451
  %v2215 = vpop.permute.xlu0 %2214
  %v2217 = vmul.f32 %v2209, %v2215
  %v2218 = vmul.f32 %v2210, %v2215
  %v2219 = vmul.f32 %v2211, %v2215
  %v2220 = vmul.f32 %v2212, %v2215
  %2225 = vrot.lane.b32.xlu0 %v2217, 111
  %v2226 = vpop.permute.xlu0 %2225
  %2227 = vrot.lane.b32.xlu0 %v2218, 111
  %v2228 = vpop.permute.xlu0 %2227
  %2229 = vrot.lane.b32.xlu0 %v2219, 111
  %v2230 = vpop.permute.xlu0 %2229
  %2231 = vrot.lane.b32.xlu0 %v2220, 111
  %v2232 = vpop.permute.xlu0 %2231
  %v2233 = vsel %vm1437, %v2226, %v2228
  %v2234 = vsel %vm1437, %v2228, %v2230
  %v2235 = vsel %vm1437, %v2230, %v2232
  %v2241 = vadd.f32 %v2094, %v2226
  %v2242 = vadd.f32 %v2095, %v2233
  %v2243 = vadd.f32 %v2096, %v2234
  %v2244 = vadd.f32 %v2097, %v2235
  %v2245 = vadd.f32 %v2098, %v2232
  %v2246 = vmul.f32 %v893, %v2192
  %v2247 = vmul.f32 %v894, %v2196
  %v2248 = vmul.f32 %v895, %v2200
  %v2249 = vmul.f32 %v896, %v2204
  %v2250 = vmul.f32 %v909, %v2192
  %v2251 = vmul.f32 %v910, %v2196
  %v2252 = vmul.f32 %v911, %v2200
  %v2253 = vmul.f32 %v912, %v2204
  %v2254 = vmul.f32 %v925, %v2192
  %v2255 = vmul.f32 %v926, %v2196
  %v2256 = vmul.f32 %v927, %v2200
  %v2257 = vmul.f32 %v928, %v2204
  %2270 = vrot.lane.b32.xlu0 %v2246, 111
  %v2271 = vpop.permute.xlu0 %2270
  %2272 = vrot.lane.b32.xlu0 %v2247, 111
  %v2273 = vpop.permute.xlu0 %2272
  %2274 = vrot.lane.b32.xlu0 %v2248, 111
  %v2275 = vpop.permute.xlu0 %2274
  %2276 = vrot.lane.b32.xlu0 %v2249, 111
  %v2277 = vpop.permute.xlu0 %2276
  %2278 = vrot.lane.b32.xlu0 %v2250, 111
  %v2279 = vpop.permute.xlu0 %2278
  %2280 = vrot.lane.b32.xlu0 %v2251, 111
  %v2281 = vpop.permute.xlu0 %2280
  %2282 = vrot.lane.b32.xlu0 %v2252, 111
  %v2283 = vpop.permute.xlu0 %2282
  %2284 = vrot.lane.b32.xlu0 %v2253, 111
  %v2285 = vpop.permute.xlu0 %2284
  %2286 = vrot.lane.b32.xlu0 %v2254, 111
  %v2287 = vpop.permute.xlu0 %2286
  %2288 = vrot.lane.b32.xlu0 %v2255, 111
  %v2289 = vpop.permute.xlu0 %2288
  %2290 = vrot.lane.b32.xlu0 %v2256, 111
  %v2291 = vpop.permute.xlu0 %2290
  %2292 = vrot.lane.b32.xlu0 %v2257, 111
  %v2293 = vpop.permute.xlu0 %2292
  %v2294 = vsel %vm1437, %v2271, %v2273
  %v2295 = vsel %vm1437, %v2273, %v2275
  %v2296 = vsel %vm1437, %v2275, %v2277
  %v2297 = vsel %vm1437, %v2279, %v2281
  %v2298 = vsel %vm1437, %v2281, %v2283
  %v2299 = vsel %vm1437, %v2283, %v2285
  %v2300 = vsel %vm1437, %v2287, %v2289
  %v2301 = vsel %vm1437, %v2289, %v2291
  %v2302 = vsel %vm1437, %v2291, %v2293
  %v2318 = vadd.f32 %v2171, %v2271
  %v2319 = vadd.f32 %v2172, %v2294
  %v2320 = vadd.f32 %v2173, %v2295
  %v2321 = vadd.f32 %v2174, %v2296
  %v2322 = vadd.f32 %v2175, %v2277
  %v2323 = vadd.f32 %v2176, %v2279
  %v2324 = vadd.f32 %v2177, %v2297
  %v2325 = vadd.f32 %v2178, %v2298
  %v2326 = vadd.f32 %v2179, %v2299
  %v2327 = vadd.f32 %v2180, %v2285
  %v2328 = vadd.f32 %v2181, %v2287
  %v2329 = vadd.f32 %v2182, %v2300
  %v2330 = vadd.f32 %v2183, %v2301
  %v2331 = vadd.f32 %v2184, %v2302
  %v2332 = vadd.f32 %v2185, %v2293
  %s2333 = scalar_lea.vmem %s27, 6
  %v2334 = vld [vmem:[%s2333] ss:$8 sm:$0xf]
  %v2336 = vlaneseq
  %v2337 = vshrl.u32 %v2336, 7
  %v2338 = vsub.s32 0, %v2337
  %v2339 = vrot.slane %v2334, %v2338
  %v2340 = vlaneseq
  %v2341 = vshrl.u32 %v2340, 7
  %v2342 = vsub.s32 1, %v2341
  %v2343 = vrot.slane %v2334, %v2342
  %v2344 = vlaneseq
  %v2345 = vshrl.u32 %v2344, 7
  %v2346 = vsub.s32 2, %v2345
  %v2347 = vrot.slane %v2334, %v2346
  %v2348 = vlaneseq
  %v2349 = vshrl.u32 %v2348, 7
  %v2350 = vsub.s32 3, %v2349
  %v2351 = vrot.slane %v2334, %v2350
  %2352 = vrot.lane.b32.xlu0 %v2339, 127
  %v2353 = vpop.permute.xlu0 %2352
  %2354 = vrot.lane.b32.xlu0 %v2343, 127
  %v2355 = vpop.permute.xlu0 %2354
  %2356 = vrot.lane.b32.xlu0 %v2347, 127
  %v2357 = vpop.permute.xlu0 %2356
  %2358 = vrot.lane.b32.xlu0 %v2351, 127
  %v2359 = vpop.permute.xlu0 %2358
  %v2360 = vsel %vm1562, %v2353, %v2355
  %v2361 = vsel %vm1562, %v2355, %v2357
  %v2362 = vsel %vm1562, %v2357, %v2359
  %v2368 = vmul.f32 %v1406, %v2353
  %v2369 = vmul.f32 %v1407, %v2360
  %v2370 = vmul.f32 %v1408, %v2361
  %v2371 = vmul.f32 %v1409, %v2362
  %v2372 = vmul.f32 %v1410, %v2359
  %2373 = vset.pattern.permute.xlu0 6
  %2374 = vperm.xlu0 %2373, %v1451
  %v2375 = vpop.permute.xlu0 %2374
  %v2377 = vmul.f32 %v2368, %v2375
  %v2378 = vmul.f32 %v2369, %v2375
  %v2379 = vmul.f32 %v2370, %v2375
  %v2380 = vmul.f32 %v2371, %v2375
  %v2381 = vmul.f32 %v2372, %v2375
  %2387 = vrot.lane.b32.xlu0 %v2377, 112
  %v2388 = vpop.permute.xlu0 %2387
  %2389 = vrot.lane.b32.xlu0 %v2378, 112
  %v2390 = vpop.permute.xlu0 %2389
  %2391 = vrot.lane.b32.xlu0 %v2379, 112
  %v2392 = vpop.permute.xlu0 %2391
  %2393 = vrot.lane.b32.xlu0 %v2380, 112
  %v2394 = vpop.permute.xlu0 %2393
  %2395 = vrot.lane.b32.xlu0 %v2381, 112
  %v2396 = vpop.permute.xlu0 %2395
  %v2397 = vsel %vm1524, %v2388, %v2390
  %v2398 = vsel %vm1524, %v2390, %v2392
  %v2399 = vsel %vm1524, %v2392, %v2394
  %v2400 = vsel %vm1524, %v2394, %v2396
  %v2406 = vadd.f32 %v2241, %v2397
  %v2407 = vadd.f32 %v2242, %v2398
  %v2408 = vadd.f32 %v2243, %v2399
  %v2409 = vadd.f32 %v2244, %v2400
  %v2410 = vadd.f32 %v2245, %v2396
  %v2411 = vmul.f32 %v900, %v2353
  %v2412 = vmul.f32 %v901, %v2360
  %v2413 = vmul.f32 %v902, %v2361
  %v2414 = vmul.f32 %v903, %v2362
  %v2415 = vmul.f32 %v904, %v2359
  %v2416 = vmul.f32 %v916, %v2353
  %v2417 = vmul.f32 %v917, %v2360
  %v2418 = vmul.f32 %v918, %v2361
  %v2419 = vmul.f32 %v919, %v2362
  %v2420 = vmul.f32 %v920, %v2359
  %v2421 = vmul.f32 %v932, %v2353
  %v2422 = vmul.f32 %v933, %v2360
  %v2423 = vmul.f32 %v934, %v2361
  %v2424 = vmul.f32 %v935, %v2362
  %v2425 = vmul.f32 %v936, %v2359
  %2441 = vrot.lane.b32.xlu0 %v2411, 112
  %v2442 = vpop.permute.xlu0 %2441
  %2443 = vrot.lane.b32.xlu0 %v2412, 112
  %v2444 = vpop.permute.xlu0 %2443
  %2445 = vrot.lane.b32.xlu0 %v2413, 112
  %v2446 = vpop.permute.xlu0 %2445
  %2447 = vrot.lane.b32.xlu0 %v2414, 112
  %v2448 = vpop.permute.xlu0 %2447
  %2449 = vrot.lane.b32.xlu0 %v2415, 112
  %v2450 = vpop.permute.xlu0 %2449
  %2451 = vrot.lane.b32.xlu0 %v2416, 112
  %v2452 = vpop.permute.xlu0 %2451
  %2453 = vrot.lane.b32.xlu0 %v2417, 112
  %v2454 = vpop.permute.xlu0 %2453
  %2455 = vrot.lane.b32.xlu0 %v2418, 112
  %v2456 = vpop.permute.xlu0 %2455
  %2457 = vrot.lane.b32.xlu0 %v2419, 112
  %v2458 = vpop.permute.xlu0 %2457
  %2459 = vrot.lane.b32.xlu0 %v2420, 112
  %v2460 = vpop.permute.xlu0 %2459
  %2461 = vrot.lane.b32.xlu0 %v2421, 112
  %v2462 = vpop.permute.xlu0 %2461
  %2463 = vrot.lane.b32.xlu0 %v2422, 112
  %v2464 = vpop.permute.xlu0 %2463
  %2465 = vrot.lane.b32.xlu0 %v2423, 112
  %v2466 = vpop.permute.xlu0 %2465
  %2467 = vrot.lane.b32.xlu0 %v2424, 112
  %v2468 = vpop.permute.xlu0 %2467
  %2469 = vrot.lane.b32.xlu0 %v2425, 112
  %v2470 = vpop.permute.xlu0 %2469
  %v2471 = vsel %vm1524, %v2442, %v2444
  %v2472 = vsel %vm1524, %v2444, %v2446
  %v2473 = vsel %vm1524, %v2446, %v2448
  %v2474 = vsel %vm1524, %v2448, %v2450
  %v2475 = vsel %vm1524, %v2452, %v2454
  %v2476 = vsel %vm1524, %v2454, %v2456
  %v2477 = vsel %vm1524, %v2456, %v2458
  %v2478 = vsel %vm1524, %v2458, %v2460
  %v2479 = vsel %vm1524, %v2462, %v2464
  %v2480 = vsel %vm1524, %v2464, %v2466
  %v2481 = vsel %vm1524, %v2466, %v2468
  %v2482 = vsel %vm1524, %v2468, %v2470
  %v2498 = vadd.f32 %v2318, %v2471
  %v2499 = vadd.f32 %v2319, %v2472
  %v2500 = vadd.f32 %v2320, %v2473
  %v2501 = vadd.f32 %v2321, %v2474
  %v2502 = vadd.f32 %v2322, %v2450
  %v2503 = vadd.f32 %v2323, %v2475
  %v2504 = vadd.f32 %v2324, %v2476
  %v2505 = vadd.f32 %v2325, %v2477
  %v2506 = vadd.f32 %v2326, %v2478
  %v2507 = vadd.f32 %v2327, %v2460
  %v2508 = vadd.f32 %v2328, %v2479
  %v2509 = vadd.f32 %v2329, %v2480
  %v2510 = vadd.f32 %v2330, %v2481
  %v2511 = vadd.f32 %v2331, %v2482
  %v2512 = vadd.f32 %v2332, %v2470
  %s2513 = scalar_lea.vmem %s27, 7
  %v2514 = vld [vmem:[%s2513] ss:$8 sm:$0xf]
  %v2516 = vlaneseq
  %v2517 = vshrl.u32 %v2516, 7
  %v2518 = vsub.s32 0, %v2517
  %v2519 = vrot.slane %v2514, %v2518
  %v2520 = vlaneseq
  %v2521 = vshrl.u32 %v2520, 7
  %v2522 = vsub.s32 1, %v2521
  %v2523 = vrot.slane %v2514, %v2522
  %v2524 = vlaneseq
  %v2525 = vshrl.u32 %v2524, 7
  %v2526 = vsub.s32 2, %v2525
  %v2527 = vrot.slane %v2514, %v2526
  %v2528 = vlaneseq
  %v2529 = vshrl.u32 %v2528, 7
  %v2530 = vsub.s32 3, %v2529
  %v2531 = vrot.slane %v2514, %v2530
  %v2536 = vmul.f32 %v1403, %v2519
  %v2537 = vmul.f32 %v1404, %v2523
  %v2538 = vmul.f32 %v1405, %v2527
  %v2539 = vmul.f32 %v1406, %v2531
  %2540 = vset.pattern.permute.xlu0 7
  %2541 = vperm.xlu0 %2540, %v1451
  %v2542 = vpop.permute.xlu0 %2541
  %v2544 = vmul.f32 %v2536, %v2542
  %v2545 = vmul.f32 %v2537, %v2542
  %v2546 = vmul.f32 %v2538, %v2542
  %v2547 = vmul.f32 %v2539, %v2542
  %2552 = vrot.lane.b32.xlu0 %v2544, 111
  %v2553 = vpop.permute.xlu0 %2552
  %2554 = vrot.lane.b32.xlu0 %v2545, 111
  %v2555 = vpop.permute.xlu0 %2554
  %2556 = vrot.lane.b32.xlu0 %v2546, 111
  %v2557 = vpop.permute.xlu0 %2556
  %2558 = vrot.lane.b32.xlu0 %v2547, 111
  %v2559 = vpop.permute.xlu0 %2558
  %v2560 = vsel %vm1437, %v2553, %v2555
  %v2561 = vsel %vm1437, %v2555, %v2557
  %v2562 = vsel %vm1437, %v2557, %v2559
  %v2568 = vadd.f32 %v2406, %v2553
  %v2569 = vadd.f32 %v2407, %v2560
  %v2570 = vadd.f32 %v2408, %v2561
  %v2571 = vadd.f32 %v2409, %v2562
  %v2572 = vadd.f32 %v2410, %v2559
  %v2573 = vmul.f32 %v897, %v2519
  %v2574 = vmul.f32 %v898, %v2523
  %v2575 = vmul.f32 %v899, %v2527
  %v2576 = vmul.f32 %v900, %v2531
  %v2577 = vmul.f32 %v913, %v2519
  %v2578 = vmul.f32 %v914, %v2523
  %v2579 = vmul.f32 %v915, %v2527
  %v2580 = vmul.f32 %v916, %v2531
  %v2581 = vmul.f32 %v929, %v2519
  %v2582 = vmul.f32 %v930, %v2523
  %v2583 = vmul.f32 %v931, %v2527
  %v2584 = vmul.f32 %v932, %v2531
  %2597 = vrot.lane.b32.xlu0 %v2573, 111
  %v2598 = vpop.permute.xlu0 %2597
  %2599 = vrot.lane.b32.xlu0 %v2574, 111
  %v2600 = vpop.permute.xlu0 %2599
  %2601 = vrot.lane.b32.xlu0 %v2575, 111
  %v2602 = vpop.permute.xlu0 %2601
  %2603 = vrot.lane.b32.xlu0 %v2576, 111
  %v2604 = vpop.permute.xlu0 %2603
  %2605 = vrot.lane.b32.xlu0 %v2577, 111
  %v2606 = vpop.permute.xlu0 %2605
  %2607 = vrot.lane.b32.xlu0 %v2578, 111
  %v2608 = vpop.permute.xlu0 %2607
  %2609 = vrot.lane.b32.xlu0 %v2579, 111
  %v2610 = vpop.permute.xlu0 %2609
  %2611 = vrot.lane.b32.xlu0 %v2580, 111
  %v2612 = vpop.permute.xlu0 %2611
  %2613 = vrot.lane.b32.xlu0 %v2581, 111
  %v2614 = vpop.permute.xlu0 %2613
  %2615 = vrot.lane.b32.xlu0 %v2582, 111
  %v2616 = vpop.permute.xlu0 %2615
  %2617 = vrot.lane.b32.xlu0 %v2583, 111
  %v2618 = vpop.permute.xlu0 %2617
  %2619 = vrot.lane.b32.xlu0 %v2584, 111
  %v2620 = vpop.permute.xlu0 %2619
  %v2621 = vsel %vm1437, %v2598, %v2600
  %v2622 = vsel %vm1437, %v2600, %v2602
  %v2623 = vsel %vm1437, %v2602, %v2604
  %v2624 = vsel %vm1437, %v2606, %v2608
  %v2625 = vsel %vm1437, %v2608, %v2610
  %v2626 = vsel %vm1437, %v2610, %v2612
  %v2627 = vsel %vm1437, %v2614, %v2616
  %v2628 = vsel %vm1437, %v2616, %v2618
  %v2629 = vsel %vm1437, %v2618, %v2620
  %v2645 = vadd.f32 %v2498, %v2598
  %v2646 = vadd.f32 %v2499, %v2621
  %v2647 = vadd.f32 %v2500, %v2622
  %v2648 = vadd.f32 %v2501, %v2623
  %v2649 = vadd.f32 %v2502, %v2604
  %v2650 = vadd.f32 %v2503, %v2606
  %v2651 = vadd.f32 %v2504, %v2624
  %v2652 = vadd.f32 %v2505, %v2625
  %v2653 = vadd.f32 %v2506, %v2626
  %v2654 = vadd.f32 %v2507, %v2612
  %v2655 = vadd.f32 %v2508, %v2614
  %v2656 = vadd.f32 %v2509, %v2627
  %v2657 = vadd.f32 %v2510, %v2628
  %v2658 = vadd.f32 %v2511, %v2629
  %v2659 = vadd.f32 %v2512, %v2620
  %s2660 = scalar_lea.vmem %s27, 32
  %v2661 = vld [vmem:[%s2660] ss:$8 sm:$0xf]
  %v2663 = vlaneseq
  %v2664 = vshrl.u32 %v2663, 7
  %v2665 = vsub.s32 0, %v2664
  %v2666 = vrot.slane %v2661, %v2665
  %v2667 = vlaneseq
  %v2668 = vshrl.u32 %v2667, 7
  %v2669 = vsub.s32 1, %v2668
  %v2670 = vrot.slane %v2661, %v2669
  %v2671 = vlaneseq
  %v2672 = vshrl.u32 %v2671, 7
  %v2673 = vsub.s32 2, %v2672
  %v2674 = vrot.slane %v2661, %v2673
  %v2675 = vlaneseq
  %v2676 = vshrl.u32 %v2675, 7
  %v2677 = vsub.s32 3, %v2676
  %v2678 = vrot.slane %v2661, %v2677
  %v2683 = vmul.f32 %v1407, %v2666
  %v2684 = vmul.f32 %v1408, %v2670
  %v2685 = vmul.f32 %v1409, %v2674
  %v2686 = vmul.f32 %v1410, %v2678
  %2687 = vset.pattern.permute.xlu0 8
  %2688 = vperm.xlu0 %2687, %v1451
  %v2689 = vpop.permute.xlu0 %2688
  %v2691 = vmul.f32 %v2683, %v2689
  %v2692 = vmul.f32 %v2684, %v2689
  %v2693 = vmul.f32 %v2685, %v2689
  %v2694 = vmul.f32 %v2686, %v2689
  %2699 = vrot.lane.b32.xlu0 %v2691, 111
  %v2700 = vpop.permute.xlu0 %2699
  %2701 = vrot.lane.b32.xlu0 %v2692, 111
  %v2702 = vpop.permute.xlu0 %2701
  %2703 = vrot.lane.b32.xlu0 %v2693, 111
  %v2704 = vpop.permute.xlu0 %2703
  %2705 = vrot.lane.b32.xlu0 %v2694, 111
  %v2706 = vpop.permute.xlu0 %2705
  %v2707 = vsel %vm1437, %v2700, %v2702
  %v2708 = vsel %vm1437, %v2702, %v2704
  %v2709 = vsel %vm1437, %v2704, %v2706
  %v2715 = vadd.f32 %v2568, %v2700
  %v2716 = vadd.f32 %v2569, %v2707
  %v2717 = vadd.f32 %v2570, %v2708
  %v2718 = vadd.f32 %v2571, %v2709
  %v2719 = vadd.f32 %v2572, %v2706
  %v2720 = vmul.f32 %v901, %v2666
  %v2721 = vmul.f32 %v902, %v2670
  %v2722 = vmul.f32 %v903, %v2674
  %v2723 = vmul.f32 %v904, %v2678
  %v2724 = vmul.f32 %v917, %v2666
  %v2725 = vmul.f32 %v918, %v2670
  %v2726 = vmul.f32 %v919, %v2674
  %v2727 = vmul.f32 %v920, %v2678
  %v2728 = vmul.f32 %v933, %v2666
  %v2729 = vmul.f32 %v934, %v2670
  %v2730 = vmul.f32 %v935, %v2674
  %v2731 = vmul.f32 %v936, %v2678
  %2744 = vrot.lane.b32.xlu0 %v2720, 111
  %v2745 = vpop.permute.xlu0 %2744
  %2746 = vrot.lane.b32.xlu0 %v2721, 111
  %v2747 = vpop.permute.xlu0 %2746
  %2748 = vrot.lane.b32.xlu0 %v2722, 111
  %v2749 = vpop.permute.xlu0 %2748
  %2750 = vrot.lane.b32.xlu0 %v2723, 111
  %v2751 = vpop.permute.xlu0 %2750
  %2752 = vrot.lane.b32.xlu0 %v2724, 111
  %v2753 = vpop.permute.xlu0 %2752
  %2754 = vrot.lane.b32.xlu0 %v2725, 111
  %v2755 = vpop.permute.xlu0 %2754
  %2756 = vrot.lane.b32.xlu0 %v2726, 111
  %v2757 = vpop.permute.xlu0 %2756
  %2758 = vrot.lane.b32.xlu0 %v2727, 111
  %v2759 = vpop.permute.xlu0 %2758
  %2760 = vrot.lane.b32.xlu0 %v2728, 111
  %v2761 = vpop.permute.xlu0 %2760
  %2762 = vrot.lane.b32.xlu0 %v2729, 111
  %v2763 = vpop.permute.xlu0 %2762
  %2764 = vrot.lane.b32.xlu0 %v2730, 111
  %v2765 = vpop.permute.xlu0 %2764
  %2766 = vrot.lane.b32.xlu0 %v2731, 111
  %v2767 = vpop.permute.xlu0 %2766
  %v2768 = vsel %vm1437, %v2745, %v2747
  %v2769 = vsel %vm1437, %v2747, %v2749
  %v2770 = vsel %vm1437, %v2749, %v2751
  %v2771 = vsel %vm1437, %v2753, %v2755
  %v2772 = vsel %vm1437, %v2755, %v2757
  %v2773 = vsel %vm1437, %v2757, %v2759
  %v2774 = vsel %vm1437, %v2761, %v2763
  %v2775 = vsel %vm1437, %v2763, %v2765
  %v2776 = vsel %vm1437, %v2765, %v2767
  %v2792 = vadd.f32 %v2645, %v2745
  %v2793 = vadd.f32 %v2646, %v2768
  %v2794 = vadd.f32 %v2647, %v2769
  %v2795 = vadd.f32 %v2648, %v2770
  %v2796 = vadd.f32 %v2649, %v2751
  %v2797 = vadd.f32 %v2650, %v2753
  %v2798 = vadd.f32 %v2651, %v2771
  %v2799 = vadd.f32 %v2652, %v2772
  %v2800 = vadd.f32 %v2653, %v2773
  %v2801 = vadd.f32 %v2654, %v2759
  %v2802 = vadd.f32 %v2655, %v2761
  %v2803 = vadd.f32 %v2656, %v2774
  %v2804 = vadd.f32 %v2657, %v2775
  %v2805 = vadd.f32 %v2658, %v2776
  %v2806 = vadd.f32 %v2659, %v2767
  %v2807 = vld [vmem:[%s17] sm:$0xf]
  %2809 = vset.pattern.permute.xlu0 0
  %2810 = vperm.xlu0 %2809, %v2807
  %v2811 = vpop.permute.xlu0 %2810
  %v2813 = vmul.f32 %v2715, %v2811
  %v2814 = vmul.f32 %v2716, %v2811
  %v2815 = vmul.f32 %v2717, %v2811
  %v2816 = vmul.f32 %v2718, %v2811
  %v2817 = vmul.f32 %v2719, %v2811
  %v2818 = vld [vmem:[%s19] sm:$0xf]
  %2820 = vset.pattern.permute.xlu0 0
  %2821 = vperm.xlu0 %2820, %v2818
  %v2822 = vpop.permute.xlu0 %2821
  %v2824 = vadd.f32 %v2813, %v2822
  %v2825 = vadd.f32 %v2814, %v2822
  %v2826 = vadd.f32 %v2815, %v2822
  %v2827 = vadd.f32 %v2816, %v2822
  %v2828 = vadd.f32 %v2817, %v2822
  %v2829 = vmax.f32 %v2824, 0.0
  %v2830 = vmax.f32 %v2825, 0.0
  %v2831 = vmax.f32 %v2826, 0.0
  %v2832 = vmax.f32 %v2827, 0.0
  %v2833 = vmax.f32 %v2828, 0.0
  %v2834 = vmul.f32 %v2792, 0.11111111
  %v2835 = vmul.f32 %v2793, 0.11111111
  %v2836 = vmul.f32 %v2794, 0.11111111
  %v2837 = vmul.f32 %v2795, 0.11111111
  %v2838 = vmul.f32 %v2796, 0.11111111
  %v2839 = vmul.f32 %v2797, 0.11111111
  %v2840 = vmul.f32 %v2798, 0.11111111
  %v2841 = vmul.f32 %v2799, 0.11111111
  %v2842 = vmul.f32 %v2800, 0.11111111
  %v2843 = vmul.f32 %v2801, 0.11111111
  %v2844 = vmul.f32 %v2802, 0.11111111
  %v2845 = vmul.f32 %v2803, 0.11111111
  %v2846 = vmul.f32 %v2804, 0.11111111
  %v2847 = vmul.f32 %v2805, 0.11111111
  %v2848 = vmul.f32 %v2806, 0.11111111
  %v2849 = vmax.f32 %v2834, 0.0
  %v2850 = vmax.f32 %v2835, 0.0
  %v2851 = vmax.f32 %v2836, 0.0
  %v2852 = vmax.f32 %v2837, 0.0
  %v2853 = vmax.f32 %v2838, 0.0
  %v2854 = vmax.f32 %v2839, 0.0
  %v2855 = vmax.f32 %v2840, 0.0
  %v2856 = vmax.f32 %v2841, 0.0
  %v2857 = vmax.f32 %v2842, 0.0
  %v2858 = vmax.f32 %v2843, 0.0
  %v2859 = vmax.f32 %v2844, 0.0
  %v2860 = vmax.f32 %v2845, 0.0
  %v2861 = vmax.f32 %v2846, 0.0
  %v2862 = vmax.f32 %v2847, 0.0
  %v2863 = vmax.f32 %v2848, 0.0
  %v2864 = vld [vmem:[%s21] sm:$0xf]
  %v2865 = vld [vmem:[%s21 + $0x4] sm:$0xf]
  %v2866 = vpack.c.bf16 %v2829, %v2829
  %v2867 = vpack.c.bf16 %v2830, %v2830
  %v2868 = vpack.c.bf16 %v2831, %v2831
  %v2869 = vpack.c.bf16 %v2832, %v2832
  %v2870 = vpack.c.bf16 %v2833, %v2833
  %v2873 = vunpack.c.l.b16 %v2864
  %v2874 = vunpack.c.l.b16 %v2865
  %v2875 = vpack.c.b16 %v2874, %v2873
  %2881 = vrot.lane.b32.xlu0 %v2866, 17
  %v2882 = vpop.permute.xlu0 %2881
  %2883 = vrot.lane.b32.xlu0 %v2867, 17
  %v2884 = vpop.permute.xlu0 %2883
  %2885 = vrot.lane.b32.xlu0 %v2868, 17
  %v2886 = vpop.permute.xlu0 %2885
  %2887 = vrot.lane.b32.xlu0 %v2869, 17
  %v2888 = vpop.permute.xlu0 %2887
  %2889 = vrot.lane.b32.xlu0 %v2870, 17
  %v2890 = vpop.permute.xlu0 %2889
  %vm2891 = vcmask 138240
  %v2892 = vsel %vm2891, %v2882, %v2884
  %v2893 = vsel %vm2891, %v2884, %v2886
  %v2894 = vsel %vm2891, %v2886, %v2888
  %v2895 = vsel %vm2891, %v2888, %v2890
  %vm2896 = vcmask 31744
  %v2898 = vsel %vm2896, %v2875, 0
  %v2901 = vsel %vm304, %v2892, 0
  %v2904 = vsel %vm304, %v2893, 0
  %v2907 = vsel %vm304, %v2894, 0
  %v2910 = vsel %vm304, %v2895, 0
  %2912 = vmatprep.subr.bf16.mxu0 0
  %2913 = vmatpush1.bf16.msra.mxu0 0
  %2914 = vmatprep.subr.bf16.mxu0 0
  %2915 = vmatpush1.bf16.msra.mxu0 0
  %2916 = vmatprep.subr.bf16.mxu0 0
  %2917 = vmatpush1.bf16.msra.mxu0 0
  %2918 = vmatprep.subr.bf16.mxu0 0
  %2919 = vmatpush1.bf16.msra.mxu0 0
  %2920 = vmatprep.subr.bf16.mxu0 0
  %2921 = vmatpush1.bf16.msra.mxu0 0
  %2922 = vmatprep.subr.bf16.mxu0 0
  %2923 = vmatpush1.bf16.msra.mxu0 0
  %2924 = vmatprep.subr.bf16.mxu0 0
  %2925 = vmatpush1.bf16.msra.mxu0 0
  %2926 = vmatprep.subr.bf16.mxu0 %v2904
  %2927 = vmatpush1.bf16.msra.mxu0 %v2901
  %2928 = vmatprep.subr.bf16.mxu0 0
  %2929 = vmatpush2.bf16.msra.mxu0 0
  %2930 = vmatprep.subr.bf16.mxu0 0
  %2931 = vmatpush2.bf16.msra.mxu0 0
  %2932 = vmatprep.subr.bf16.mxu0 0
  %2933 = vmatpush2.bf16.msra.mxu0 0
  %2934 = vmatprep.subr.bf16.mxu0 0
  %2935 = vmatpush2.bf16.msra.mxu0 0
  %2936 = vmatprep.subr.bf16.mxu0 0
  %2937 = vmatpush2.bf16.msra.mxu0 0
  %2938 = vmatprep.subr.bf16.mxu0 0
  %2939 = vmatpush2.bf16.msra.mxu0 0
  %2940 = vmatprep.subr.bf16.mxu0 0
  %2941 = vmatpush2.bf16.msra.mxu0 0
  %2942 = vmatprep.subr.bf16.mxu0 0
  %2943 = vmatpush2.bf16.msra.mxu0 0
  %2944 = vmatprep.mubr.bf16.mxu0 0
  %2945 = vmatmul.mubr.bf16.gmra.mxu0 %v2898
  %v2946 = vpop.f32.mrf.mxu0
  %v2947 = vadd.f32 0.0, %v2946
  %v2948 = vpop.f32.mrf.mxu0
  %v2949 = vadd.f32 0.0, %v2948
  %v2950 = vpop.f32.mrf.mxu0
  %v2951 = vadd.f32 0.0, %v2950
  %v2952 = vpop.f32.mrf.mxu0
  %v2953 = vadd.f32 0.0, %v2952
  %2954 = vdwg.mxu0
  %2955 = vmatprep.subr.bf16.mxu0 0
  %2956 = vmatpush1.bf16.msra.mxu0 0
  %2957 = vmatprep.subr.bf16.mxu0 0
  %2958 = vmatpush1.bf16.msra.mxu0 0
  %2959 = vmatprep.subr.bf16.mxu0 0
  %2960 = vmatpush1.bf16.msra.mxu0 0
  %2961 = vmatprep.subr.bf16.mxu0 0
  %2962 = vmatpush1.bf16.msra.mxu0 0
  %2963 = vmatprep.subr.bf16.mxu0 0
  %2964 = vmatpush1.bf16.msra.mxu0 0
  %2965 = vmatprep.subr.bf16.mxu0 0
  %2966 = vmatpush1.bf16.msra.mxu0 0
  %2967 = vmatprep.subr.bf16.mxu0 0
  %2968 = vmatpush1.bf16.msra.mxu0 0
  %2969 = vmatprep.subr.bf16.mxu0 %v2910
  %2970 = vmatpush1.bf16.msra.mxu0 %v2907
  %2971 = vmatprep.subr.bf16.mxu0 0
  %2972 = vmatpush2.bf16.msra.mxu0 0
  %2973 = vmatprep.subr.bf16.mxu0 0
  %2974 = vmatpush2.bf16.msra.mxu0 0
  %2975 = vmatprep.subr.bf16.mxu0 0
  %2976 = vmatpush2.bf16.msra.mxu0 0
  %2977 = vmatprep.subr.bf16.mxu0 0
  %2978 = vmatpush2.bf16.msra.mxu0 0
  %2979 = vmatprep.subr.bf16.mxu0 0
  %2980 = vmatpush2.bf16.msra.mxu0 0
  %2981 = vmatprep.subr.bf16.mxu0 0
  %2982 = vmatpush2.bf16.msra.mxu0 0
  %2983 = vmatprep.subr.bf16.mxu0 0
  %2984 = vmatpush2.bf16.msra.mxu0 0
  %2985 = vmatprep.subr.bf16.mxu0 0
  %2986 = vmatpush2.bf16.msra.mxu0 0
  %2987 = vmatprep.mubr.bf16.mxu0 0
  %2988 = vmatmul.mubr.bf16.gmra.mxu0 %v2898
  %v2989 = vpop.f32.mrf.mxu0
  %v2990 = vadd.f32 0.0, %v2989
  %v2991 = vpop.f32.mrf.mxu0
  %v2992 = vadd.f32 0.0, %v2991
  %v2993 = vpop.f32.mrf.mxu0
  %v2994 = vadd.f32 0.0, %v2993
  %v2995 = vpop.f32.mrf.mxu0
  %v2996 = vadd.f32 0.0, %v2995
  %2997 = vdwg.mxu0
  %v2998 = vld [vmem:[%s23] sm:$0xff]
  %v2999 = vld [vmem:[%s23 + $0x8] sm:$0xff]
  %3001 = vset.pattern.permute.xlu0 0
  %3002 = vperm.xlu0 %3001, %v2998
  %v3003 = vpop.permute.xlu0 %3002
  %3006 = vset.pattern.permute.xlu0 0
  %3007 = vperm.xlu0 %3006, %v2999
  %v3008 = vpop.permute.xlu0 %3007
  %v3010 = vmul.f32 %v2947, %v3003
  %v3011 = vmul.f32 %v2949, %v3003
  %v3012 = vmul.f32 %v2990, %v3003
  %v3013 = vmul.f32 %v2992, %v3003
  %v3014 = vmul.f32 %v2951, %v3008
  %v3015 = vmul.f32 %v2953, %v3008
  %v3016 = vmul.f32 %v2994, %v3008
  %v3017 = vmul.f32 %v2996, %v3008
  %v3018 = vld [vmem:[%s25] sm:$0xff]
  %v3019 = vld [vmem:[%s25 + $0x8] sm:$0xff]
  %3021 = vset.pattern.permute.xlu0 0
  %3022 = vperm.xlu0 %3021, %v3018
  %v3023 = vpop.permute.xlu0 %3022
  %3026 = vset.pattern.permute.xlu0 0
  %3027 = vperm.xlu0 %3026, %v3019
  %v3028 = vpop.permute.xlu0 %3027
  %v3030 = vadd.f32 %v3010, %v3023
  %v3031 = vadd.f32 %v3011, %v3023
  %v3032 = vadd.f32 %v3012, %v3023
  %v3033 = vadd.f32 %v3013, %v3023
  %v3034 = vadd.f32 %v3014, %v3028
  %v3035 = vadd.f32 %v3015, %v3028
  %v3036 = vadd.f32 %v3016, %v3028
  %v3037 = vadd.f32 %v3017, %v3028
  %v3038 = vmax.f32 %v3030, 0.0
  %v3039 = vmax.f32 %v3031, 0.0
  %v3040 = vmax.f32 %v3032, 0.0
  %v3041 = vmax.f32 %v3033, 0.0
  %v3042 = vmax.f32 %v3034, 0.0
  %v3043 = vmax.f32 %v3035, 0.0
  %v3044 = vmax.f32 %v3036, 0.0
  %v3045 = vmax.f32 %v3037, 0.0
  %3046 = vst [vmem:[#allocation2] sm:$0xff] %v3038
  %3047 = vst [vmem:[#allocation2 + $0x8] sm:$0xff] %v3039
  %3048 = vst [vmem:[#allocation2 + $0x10] sm:$0xff] %v3040
  %3049 = vst [vmem:[#allocation2 + $0x18] sm:$0xff] %v3041
  %3050 = vst [vmem:[#allocation2 + $0x20] sm:$0xff] %v3042
  %3051 = vst [vmem:[#allocation2 + $0x28] sm:$0xff] %v3043
  %3052 = vst [vmem:[#allocation2 + $0x30] sm:$0xff] %v3044
  %3053 = vst [vmem:[#allocation2 + $0x38] sm:$0xff] %v3045
  %3069 = vrot.lane.b32.xlu0 %v2849, 17
  %v3070 = vpop.permute.xlu0 %3069
  %3071 = vrot.lane.b32.xlu0 %v2850, 17
  %v3072 = vpop.permute.xlu0 %3071
  %3073 = vrot.lane.b32.xlu0 %v2851, 17
  %v3074 = vpop.permute.xlu0 %3073
  %3075 = vrot.lane.b32.xlu0 %v2852, 17
  %v3076 = vpop.permute.xlu0 %3075
  %3077 = vrot.lane.b32.xlu0 %v2853, 17
  %v3078 = vpop.permute.xlu0 %3077
  %3079 = vrot.lane.b32.xlu0 %v2854, 17
  %v3080 = vpop.permute.xlu0 %3079
  %3081 = vrot.lane.b32.xlu0 %v2855, 17
  %v3082 = vpop.permute.xlu0 %3081
  %3083 = vrot.lane.b32.xlu0 %v2856, 17
  %v3084 = vpop.permute.xlu0 %3083
  %3085 = vrot.lane.b32.xlu0 %v2857, 17
  %v3086 = vpop.permute.xlu0 %3085
  %3087 = vrot.lane.b32.xlu0 %v2858, 17
  %v3088 = vpop.permute.xlu0 %3087
  %3089 = vrot.lane.b32.xlu0 %v2859, 17
  %v3090 = vpop.permute.xlu0 %3089
  %3091 = vrot.lane.b32.xlu0 %v2860, 17
  %v3092 = vpop.permute.xlu0 %3091
  %3093 = vrot.lane.b32.xlu0 %v2861, 17
  %v3094 = vpop.permute.xlu0 %3093
  %3095 = vrot.lane.b32.xlu0 %v2862, 17
  %v3096 = vpop.permute.xlu0 %3095
  %3097 = vrot.lane.b32.xlu0 %v2863, 17
  %v3098 = vpop.permute.xlu0 %3097
  %vm3099 = vcmask 138240
  %v3100 = vsel %vm3099, %v3070, %v3072
  %v3101 = vsel %vm3099, %v3072, %v3074
  %v3102 = vsel %vm3099, %v3074, %v3076
  %v3103 = vsel %vm3099, %v3076, %v3078
  %v3104 = vsel %vm3099, %v3080, %v3082
  %v3105 = vsel %vm3099, %v3082, %v3084
  %v3106 = vsel %vm3099, %v3084, %v3086
  %v3107 = vsel %vm3099, %v3086, %v3088
  %v3108 = vsel %vm3099, %v3090, %v3092
  %v3109 = vsel %vm3099, %v3092, %v3094
  %v3110 = vsel %vm3099, %v3094, %v3096
  %v3111 = vsel %vm3099, %v3096, %v3098
  %3124 = vst [vmem:[#allocation2 + $0x40] sm:$0xff] %v3100
  %3125 = vst [vmem:[#allocation2 + $0x48] sm:$0xff] %v3101
  %3126 = vst [vmem:[#allocation2 + $0x50] sm:$0xff] %v3102
  %3127 = vst [vmem:[#allocation2 + $0x58] sm:$0xff] %v3103
  %3128 = vst [vmem:[#allocation2 + $0x60] sm:$0xff] %v3104
  %3129 = vst [vmem:[#allocation2 + $0x68] sm:$0xff] %v3105
  %3130 = vst [vmem:[#allocation2 + $0x70] sm:$0xff] %v3106
  %3131 = vst [vmem:[#allocation2 + $0x78] sm:$0xff] %v3107
  %3132 = vst [vmem:[#allocation2 + $0x80] sm:$0xff] %v3108
  %3133 = vst [vmem:[#allocation2 + $0x88] sm:$0xff] %v3109
  %3134 = vst [vmem:[#allocation2 + $0x90] sm:$0xff] %v3110
  %3135 = vst [vmem:[#allocation2 + $0x98] sm:$0xff] %v3111
  %v3136 = vld [vmem:[#allocation2] sm:$0xff]
  %v3137 = vld [vmem:[#allocation2 + $0x8] sm:$0xff]
  %v3138 = vld [vmem:[#allocation2 + $0x10] sm:$0xff]
  %v3139 = vld [vmem:[#allocation2 + $0x18] sm:$0xff]
  %v3140 = vld [vmem:[#allocation2 + $0x20] sm:$0xff]
  %v3141 = vld [vmem:[#allocation2 + $0x28] sm:$0xff]
  %v3142 = vld [vmem:[#allocation2 + $0x30] sm:$0xff]
  %v3143 = vld [vmem:[#allocation2 + $0x38] sm:$0xff]
  %v3144 = vld [vmem:[#allocation2 + $0x40] sm:$0xff]
  %v3145 = vld [vmem:[#allocation2 + $0x48] sm:$0xff]
  %v3146 = vld [vmem:[#allocation2 + $0x50] sm:$0xff]
  %v3147 = vld [vmem:[#allocation2 + $0x58] sm:$0xff]
  %v3148 = vld [vmem:[#allocation2 + $0x60] sm:$0xff]
  %v3149 = vld [vmem:[#allocation2 + $0x68] sm:$0xff]
  %v3150 = vld [vmem:[#allocation2 + $0x70] sm:$0xff]
  %v3151 = vld [vmem:[#allocation2 + $0x78] sm:$0xff]
  %v3152 = vld [vmem:[#allocation2 + $0x80] sm:$0xff]
  %v3153 = vld [vmem:[#allocation2 + $0x88] sm:$0xff]
  %v3154 = vld [vmem:[#allocation2 + $0x90] sm:$0xff]
  %v3155 = vld [vmem:[#allocation2 + $0x98] sm:$0xff]
  %v3156 = vpack.c.bf16 %v3140, %v3136
  %v3157 = vpack.c.bf16 %v3141, %v3137
  %v3158 = vpack.c.bf16 %v3142, %v3138
  %v3159 = vpack.c.bf16 %v3143, %v3139
  %v3160 = vpack.c.bf16 %v3148, %v3144
  %v3161 = vpack.c.bf16 %v3149, %v3145
  %v3162 = vpack.c.bf16 %v3150, %v3146
  %v3163 = vpack.c.bf16 %v3151, %v3147
  %v3164 = vpack.c.bf16 %v3152, %v3152
  %v3165 = vpack.c.bf16 %v3153, %v3153
  %v3166 = vpack.c.bf16 %v3154, %v3154
  %v3167 = vpack.c.bf16 %v3155, %v3155
  %v3168 = vld [vmem:[%s29] sm:$0xff]
  %v3169 = vld [vmem:[%s29 + $0x8] sm:$0xff]
  %v3170 = vld [vmem:[%s29 + $0x10] sm:$0xff]
  %v3171 = vld [vmem:[%s29 + $0x18] sm:$0xff]
  %v3172 = vld [vmem:[%s29 + $0x20] sm:$0xff]
  %v3173 = vld [vmem:[%s29 + $0x28] sm:$0xff]
  %v3174 = vld [vmem:[%s29 + $0x30] sm:$0xff]
  %v3175 = vld [vmem:[%s29 + $0x38] sm:$0xff]
  %v3176 = vld [vmem:[%s29 + $0x40] sm:$0xff]
  %v3177 = vld [vmem:[%s29 + $0x48] sm:$0xff]
  %v3178 = vld [vmem:[%s29 + $0x50] sm:$0xff]
  %v3179 = vld [vmem:[%s29 + $0x58] sm:$0xff]
  %v3180 = vld [vmem:[%s29 + $0x60] sm:$0xff]
  %v3181 = vld [vmem:[%s29 + $0x68] sm:$0xff]
  %v3182 = vld [vmem:[%s29 + $0x70] sm:$0xff]
  %v3183 = vld [vmem:[%s29 + $0x78] sm:$0xff]
  %v3184 = vld [vmem:[%s29 + $0x80] sm:$0xff]
  %v3185 = vld [vmem:[%s29 + $0x88] sm:$0xff]
  %v3186 = vld [vmem:[%s29 + $0x90] sm:$0xff]
  %v3187 = vld [vmem:[%s29 + $0x98] sm:$0xff]
  %v3188 = vld [vmem:[%s29 + $0xa0] sm:$0xff]
  %v3189 = vld [vmem:[%s29 + $0xa8] sm:$0xff]
  %v3190 = vld [vmem:[%s29 + $0xb0] sm:$0xff]
  %v3191 = vld [vmem:[%s29 + $0xb8] sm:$0xff]
  %v3192 = vld [vmem:[%s29 + $0xc0] sm:$0xff]
  %v3193 = vld [vmem:[%s29 + $0xc8] sm:$0xff]
  %v3194 = vld [vmem:[%s29 + $0xd0] sm:$0xff]
  %v3195 = vld [vmem:[%s29 + $0xd8] sm:$0xff]
  %v3196 = vld [vmem:[%s29 + $0xe0] sm:$0xff]
  %v3197 = vld [vmem:[%s29 + $0xe8] sm:$0xff]
  %v3198 = vld [vmem:[%s29 + $0xf0] sm:$0xff]
  %v3199 = vld [vmem:[%s29 + $0xf8] sm:$0xff]
  %v3200 = vld [vmem:[%s29 + $0x100] sm:$0xff]
  %v3201 = vld [vmem:[%s29 + $0x108] sm:$0xff]
  %v3202 = vld [vmem:[%s29 + $0x110] sm:$0xff]
  %v3203 = vld [vmem:[%s29 + $0x118] sm:$0xff]
  %v3204 = vld [vmem:[%s29 + $0x120] sm:$0xff]
  %v3205 = vld [vmem:[%s29 + $0x128] sm:$0xff]
  %v3206 = vld [vmem:[%s29 + $0x130] sm:$0xff]
  %v3207 = vld [vmem:[%s29 + $0x138] sm:$0xff]
  %v3208 = vld [vmem:[%s29 + $0x140] sm:$0xff]
  %v3209 = vld [vmem:[%s29 + $0x148] sm:$0xff]
  %v3210 = vld [vmem:[%s29 + $0x150] sm:$0xff]
  %v3211 = vld [vmem:[%s29 + $0x158] sm:$0xff]
  %v3212 = vld [vmem:[%s29 + $0x160] sm:$0xff]
  %v3213 = vld [vmem:[%s29 + $0x168] sm:$0xff]
  %v3214 = vld [vmem:[%s29 + $0x170] sm:$0xff]
  %v3215 = vld [vmem:[%s29 + $0x178] sm:$0xff]
  %v3216 = vld [vmem:[%s29 + $0x180] sm:$0xff]
  %v3217 = vld [vmem:[%s29 + $0x188] sm:$0xff]
  %v3218 = vld [vmem:[%s29 + $0x190] sm:$0xff]
  %v3219 = vld [vmem:[%s29 + $0x198] sm:$0xff]
  %v3220 = vld [vmem:[%s29 + $0x1a0] sm:$0xff]
  %v3221 = vld [vmem:[%s29 + $0x1a8] sm:$0xff]
  %v3222 = vld [vmem:[%s29 + $0x1b0] sm:$0xff]
  %v3223 = vld [vmem:[%s29 + $0x1b8] sm:$0xff]
  %v3224 = vld [vmem:[%s29 + $0x1c0] sm:$0xff]
  %v3225 = vld [vmem:[%s29 + $0x1c8] sm:$0xff]
  %v3226 = vld [vmem:[%s29 + $0x1d0] sm:$0xff]
  %v3227 = vld [vmem:[%s29 + $0x1d8] sm:$0xff]
  %v3228 = vld [vmem:[%s29 + $0x1e0] sm:$0xff]
  %v3229 = vld [vmem:[%s29 + $0x1e8] sm:$0xff]
  %v3230 = vld [vmem:[%s29 + $0x1f0] sm:$0xff]
  %v3231 = vld [vmem:[%s29 + $0x1f8] sm:$0xff]
  %v3232 = vld [vmem:[%s29 + $0x200] sm:$0xff]
  %v3233 = vld [vmem:[%s29 + $0x208] sm:$0xff]
  %v3234 = vld [vmem:[%s29 + $0x210] sm:$0xff]
  %v3235 = vld [vmem:[%s29 + $0x218] sm:$0xff]
  %v3236 = vld [vmem:[%s29 + $0x220] sm:$0xff]
  %v3237 = vld [vmem:[%s29 + $0x228] sm:$0xff]
  %v3238 = vld [vmem:[%s29 + $0x230] sm:$0xff]
  %v3239 = vld [vmem:[%s29 + $0x238] sm:$0xff]
  %v3240 = vld [vmem:[%s29 + $0x240] sm:$0xff]
  %v3241 = vld [vmem:[%s29 + $0x248] sm:$0xff]
  %v3242 = vld [vmem:[%s29 + $0x250] sm:$0xff]
  %v3243 = vld [vmem:[%s29 + $0x258] sm:$0xff]
  %v3244 = vld [vmem:[%s29 + $0x260] sm:$0xff]
  %v3245 = vld [vmem:[%s29 + $0x268] sm:$0xff]
  %v3246 = vld [vmem:[%s29 + $0x270] sm:$0xff]
  %v3247 = vld [vmem:[%s29 + $0x278] sm:$0xff]
  %v3248 = vld [vmem:[%s29 + $0x280] sm:$0xff]
  %v3249 = vld [vmem:[%s29 + $0x288] sm:$0xff]
  %v3250 = vld [vmem:[%s29 + $0x290] sm:$0xff]
  %v3251 = vld [vmem:[%s29 + $0x298] sm:$0xff]
  %v3252 = vld [vmem:[%s29 + $0x2a0] sm:$0xff]
  %v3253 = vld [vmem:[%s29 + $0x2a8] sm:$0xff]
  %v3254 = vld [vmem:[%s29 + $0x2b0] sm:$0xff]
  %v3255 = vld [vmem:[%s29 + $0x2b8] sm:$0xff]
  %v3256 = vld [vmem:[%s29 + $0x2c0] sm:$0xff]
  %v3257 = vld [vmem:[%s29 + $0x2c8] sm:$0xff]
  %v3258 = vld [vmem:[%s29 + $0x2d0] sm:$0xff]
  %v3259 = vld [vmem:[%s29 + $0x2d8] sm:$0xff]
  %v3260 = vld [vmem:[%s29 + $0x2e0] sm:$0xff]
  %v3261 = vld [vmem:[%s29 + $0x2e8] sm:$0xff]
  %v3262 = vld [vmem:[%s29 + $0x2f0] sm:$0xff]
  %v3263 = vld [vmem:[%s29 + $0x2f8] sm:$0xff]
  %v3264 = vld [vmem:[%s29 + $0x300] sm:$0xff]
  %v3265 = vld [vmem:[%s29 + $0x308] sm:$0xff]
  %v3266 = vld [vmem:[%s29 + $0x310] sm:$0xff]
  %v3267 = vld [vmem:[%s29 + $0x318] sm:$0xff]
  %v3268 = vld [vmem:[%s29 + $0x320] sm:$0xff]
  %v3269 = vld [vmem:[%s29 + $0x328] sm:$0xff]
  %v3270 = vld [vmem:[%s29 + $0x330] sm:$0xff]
  %v3271 = vld [vmem:[%s29 + $0x338] sm:$0xff]
  %v3272 = vld [vmem:[%s29 + $0x340] sm:$0xff]
  %v3273 = vld [vmem:[%s29 + $0x348] sm:$0xff]
  %v3274 = vld [vmem:[%s29 + $0x350] sm:$0xff]
  %v3275 = vld [vmem:[%s29 + $0x358] sm:$0xff]
  %v3276 = vld [vmem:[%s29 + $0x360] sm:$0xff]
  %v3277 = vld [vmem:[%s29 + $0x368] sm:$0xff]
  %v3278 = vld [vmem:[%s29 + $0x370] sm:$0xff]
  %v3279 = vld [vmem:[%s29 + $0x378] sm:$0xff]
  %v3280 = vld [vmem:[%s29 + $0x380] sm:$0xff]
  %v3281 = vld [vmem:[%s29 + $0x388] sm:$0xff]
  %v3282 = vld [vmem:[%s29 + $0x390] sm:$0xff]
  %v3283 = vld [vmem:[%s29 + $0x398] sm:$0xff]
  %v3284 = vld [vmem:[%s29 + $0x3a0] sm:$0xff]
  %v3285 = vld [vmem:[%s29 + $0x3a8] sm:$0xff]
  %v3286 = vld [vmem:[%s29 + $0x3b0] sm:$0xff]
  %v3287 = vld [vmem:[%s29 + $0x3b8] sm:$0xff]
  %v3288 = vld [vmem:[%s29 + $0x3c0] sm:$0xff]
  %v3289 = vld [vmem:[%s29 + $0x3c8] sm:$0xff]
  %v3290 = vld [vmem:[%s29 + $0x3d0] sm:$0xff]
  %v3291 = vld [vmem:[%s29 + $0x3d8] sm:$0xff]
  %v3292 = vld [vmem:[%s29 + $0x3e0] sm:$0xff]
  %v3293 = vld [vmem:[%s29 + $0x3e8] sm:$0xff]
  %v3294 = vld [vmem:[%s29 + $0x3f0] sm:$0xff]
  %v3295 = vld [vmem:[%s29 + $0x3f8] sm:$0xff]
  %v3424 = vunpack.c.l.b16 %v3168
  %v3425 = vunpack.c.h.b16 %v3168
  %v3426 = vunpack.c.l.b16 %v3169
  %v3427 = vunpack.c.h.b16 %v3169
  %v3428 = vunpack.c.l.b16 %v3170
  %v3429 = vunpack.c.h.b16 %v3170
  %v3430 = vunpack.c.l.b16 %v3171
  %v3431 = vunpack.c.h.b16 %v3171
  %v3432 = vunpack.c.l.b16 %v3172
  %v3433 = vunpack.c.h.b16 %v3172
  %v3434 = vunpack.c.l.b16 %v3173
  %v3435 = vunpack.c.h.b16 %v3173
  %v3436 = vunpack.c.l.b16 %v3174
  %v3437 = vunpack.c.h.b16 %v3174
  %v3438 = vunpack.c.l.b16 %v3175
  %v3439 = vunpack.c.h.b16 %v3175
  %v3440 = vunpack.c.l.b16 %v3176
  %v3441 = vunpack.c.h.b16 %v3176
  %v3442 = vunpack.c.l.b16 %v3177
  %v3443 = vunpack.c.h.b16 %v3177
  %v3444 = vunpack.c.l.b16 %v3178
  %v3445 = vunpack.c.h.b16 %v3178
  %v3446 = vunpack.c.l.b16 %v3179
  %v3447 = vunpack.c.h.b16 %v3179
  %v3448 = vunpack.c.l.b16 %v3180
  %v3449 = vunpack.c.h.b16 %v3180
  %v3450 = vunpack.c.l.b16 %v3181
  %v3451 = vunpack.c.h.b16 %v3181
  %v3452 = vunpack.c.l.b16 %v3182
  %v3453 = vunpack.c.h.b16 %v3182
  %v3454 = vunpack.c.l.b16 %v3183
  %v3455 = vunpack.c.h.b16 %v3183
  %v3456 = vunpack.c.l.b16 %v3184
  %v3457 = vunpack.c.h.b16 %v3184
  %v3458 = vunpack.c.l.b16 %v3185
  %v3459 = vunpack.c.h.b16 %v3185
  %v3460 = vunpack.c.l.b16 %v3186
  %v3461 = vunpack.c.h.b16 %v3186
  %v3462 = vunpack.c.l.b16 %v3187
  %v3463 = vunpack.c.h.b16 %v3187
  %v3464 = vunpack.c.l.b16 %v3188
  %v3465 = vunpack.c.h.b16 %v3188
  %v3466 = vunpack.c.l.b16 %v3189
  %v3467 = vunpack.c.h.b16 %v3189
  %v3468 = vunpack.c.l.b16 %v3190
  %v3469 = vunpack.c.h.b16 %v3190
  %v3470 = vunpack.c.l.b16 %v3191
  %v3471 = vunpack.c.h.b16 %v3191
  %v3472 = vunpack.c.l.b16 %v3192
  %v3473 = vunpack.c.h.b16 %v3192
  %v3474 = vunpack.c.l.b16 %v3193
  %v3475 = vunpack.c.h.b16 %v3193
  %v3476 = vunpack.c.l.b16 %v3194
  %v3477 = vunpack.c.h.b16 %v3194
  %v3478 = vunpack.c.l.b16 %v3195
  %v3479 = vunpack.c.h.b16 %v3195
  %v3480 = vunpack.c.l.b16 %v3196
  %v3481 = vunpack.c.h.b16 %v3196
  %v3482 = vunpack.c.l.b16 %v3197
  %v3483 = vunpack.c.h.b16 %v3197
  %v3484 = vunpack.c.l.b16 %v3198
  %v3485 = vunpack.c.h.b16 %v3198
  %v3486 = vunpack.c.l.b16 %v3199
  %v3487 = vunpack.c.h.b16 %v3199
  %v3488 = vunpack.c.l.b16 %v3200
  %v3489 = vunpack.c.h.b16 %v3200
  %v3490 = vunpack.c.l.b16 %v3201
  %v3491 = vunpack.c.h.b16 %v3201
  %v3492 = vunpack.c.l.b16 %v3202
  %v3493 = vunpack.c.h.b16 %v3202
  %v3494 = vunpack.c.l.b16 %v3203
  %v3495 = vunpack.c.h.b16 %v3203
  %v3496 = vunpack.c.l.b16 %v3204
  %v3497 = vunpack.c.h.b16 %v3204
  %v3498 = vunpack.c.l.b16 %v3205
  %v3499 = vunpack.c.h.b16 %v3205
  %v3500 = vunpack.c.l.b16 %v3206
  %v3501 = vunpack.c.h.b16 %v3206
  %v3502 = vunpack.c.l.b16 %v3207
  %v3503 = vunpack.c.h.b16 %v3207
  %v3504 = vunpack.c.l.b16 %v3208
  %v3505 = vunpack.c.h.b16 %v3208
  %v3506 = vunpack.c.l.b16 %v3209
  %v3507 = vunpack.c.h.b16 %v3209
  %v3508 = vunpack.c.l.b16 %v3210
  %v3509 = vunpack.c.h.b16 %v3210
  %v3510 = vunpack.c.l.b16 %v3211
  %v3511 = vunpack.c.h.b16 %v3211
  %v3512 = vunpack.c.l.b16 %v3212
  %v3513 = vunpack.c.h.b16 %v3212
  %v3514 = vunpack.c.l.b16 %v3213
  %v3515 = vunpack.c.h.b16 %v3213
  %v3516 = vunpack.c.l.b16 %v3214
  %v3517 = vunpack.c.h.b16 %v3214
  %v3518 = vunpack.c.l.b16 %v3215
  %v3519 = vunpack.c.h.b16 %v3215
  %v3520 = vunpack.c.l.b16 %v3216
  %v3521 = vunpack.c.h.b16 %v3216
  %v3522 = vunpack.c.l.b16 %v3217
  %v3523 = vunpack.c.h.b16 %v3217
  %v3524 = vunpack.c.l.b16 %v3218
  %v3525 = vunpack.c.h.b16 %v3218
  %v3526 = vunpack.c.l.b16 %v3219
  %v3527 = vunpack.c.h.b16 %v3219
  %v3528 = vunpack.c.l.b16 %v3220
  %v3529 = vunpack.c.h.b16 %v3220
  %v3530 = vunpack.c.l.b16 %v3221
  %v3531 = vunpack.c.h.b16 %v3221
  %v3532 = vunpack.c.l.b16 %v3222
  %v3533 = vunpack.c.h.b16 %v3222
  %v3534 = vunpack.c.l.b16 %v3223
  %v3535 = vunpack.c.h.b16 %v3223
  %v3536 = vunpack.c.l.b16 %v3224
  %v3537 = vunpack.c.h.b16 %v3224
  %v3538 = vunpack.c.l.b16 %v3225
  %v3539 = vunpack.c.h.b16 %v3225
  %v3540 = vunpack.c.l.b16 %v3226
  %v3541 = vunpack.c.h.b16 %v3226
  %v3542 = vunpack.c.l.b16 %v3227
  %v3543 = vunpack.c.h.b16 %v3227
  %v3544 = vunpack.c.l.b16 %v3228
  %v3545 = vunpack.c.h.b16 %v3228
  %v3546 = vunpack.c.l.b16 %v3229
  %v3547 = vunpack.c.h.b16 %v3229
  %v3548 = vunpack.c.l.b16 %v3230
  %v3549 = vunpack.c.h.b16 %v3230
  %v3550 = vunpack.c.l.b16 %v3231
  %v3551 = vunpack.c.h.b16 %v3231
  %v3552 = vunpack.c.l.b16 %v3232
  %v3553 = vunpack.c.h.b16 %v3232
  %v3554 = vunpack.c.l.b16 %v3233
  %v3555 = vunpack.c.h.b16 %v3233
  %v3556 = vunpack.c.l.b16 %v3234
  %v3557 = vunpack.c.h.b16 %v3234
  %v3558 = vunpack.c.l.b16 %v3235
  %v3559 = vunpack.c.h.b16 %v3235
  %v3560 = vunpack.c.l.b16 %v3236
  %v3561 = vunpack.c.h.b16 %v3236
  %v3562 = vunpack.c.l.b16 %v3237
  %v3563 = vunpack.c.h.b16 %v3237
  %v3564 = vunpack.c.l.b16 %v3238
  %v3565 = vunpack.c.h.b16 %v3238
  %v3566 = vunpack.c.l.b16 %v3239
  %v3567 = vunpack.c.h.b16 %v3239
  %v3568 = vunpack.c.l.b16 %v3240
  %v3569 = vunpack.c.h.b16 %v3240
  %v3570 = vunpack.c.l.b16 %v3241
  %v3571 = vunpack.c.h.b16 %v3241
  %v3572 = vunpack.c.l.b16 %v3242
  %v3573 = vunpack.c.h.b16 %v3242
  %v3574 = vunpack.c.l.b16 %v3243
  %v3575 = vunpack.c.h.b16 %v3243
  %v3576 = vunpack.c.l.b16 %v3244
  %v3577 = vunpack.c.h.b16 %v3244
  %v3578 = vunpack.c.l.b16 %v3245
  %v3579 = vunpack.c.h.b16 %v3245
  %v3580 = vunpack.c.l.b16 %v3246
  %v3581 = vunpack.c.h.b16 %v3246
  %v3582 = vunpack.c.l.b16 %v3247
  %v3583 = vunpack.c.h.b16 %v3247
  %v3584 = vunpack.c.l.b16 %v3248
  %v3585 = vunpack.c.h.b16 %v3248
  %v3586 = vunpack.c.l.b16 %v3249
  %v3587 = vunpack.c.h.b16 %v3249
  %v3588 = vunpack.c.l.b16 %v3250
  %v3589 = vunpack.c.h.b16 %v3250
  %v3590 = vunpack.c.l.b16 %v3251
  %v3591 = vunpack.c.h.b16 %v3251
  %v3592 = vunpack.c.l.b16 %v3252
  %v3593 = vunpack.c.h.b16 %v3252
  %v3594 = vunpack.c.l.b16 %v3253
  %v3595 = vunpack.c.h.b16 %v3253
  %v3596 = vunpack.c.l.b16 %v3254
  %v3597 = vunpack.c.h.b16 %v3254
  %v3598 = vunpack.c.l.b16 %v3255
  %v3599 = vunpack.c.h.b16 %v3255
  %v3600 = vunpack.c.l.b16 %v3256
  %v3601 = vunpack.c.h.b16 %v3256
  %v3602 = vunpack.c.l.b16 %v3257
  %v3603 = vunpack.c.h.b16 %v3257
  %v3604 = vunpack.c.l.b16 %v3258
  %v3605 = vunpack.c.h.b16 %v3258
  %v3606 = vunpack.c.l.b16 %v3259
  %v3607 = vunpack.c.h.b16 %v3259
  %v3608 = vunpack.c.l.b16 %v3260
  %v3609 = vunpack.c.h.b16 %v3260
  %v3610 = vunpack.c.l.b16 %v3261
  %v3611 = vunpack.c.h.b16 %v3261
  %v3612 = vunpack.c.l.b16 %v3262
  %v3613 = vunpack.c.h.b16 %v3262
  %v3614 = vunpack.c.l.b16 %v3263
  %v3615 = vunpack.c.h.b16 %v3263
  %v3616 = vunpack.c.l.b16 %v3264
  %v3617 = vunpack.c.h.b16 %v3264
  %v3618 = vunpack.c.l.b16 %v3265
  %v3619 = vunpack.c.h.b16 %v3265
  %v3620 = vunpack.c.l.b16 %v3266
  %v3621 = vunpack.c.h.b16 %v3266
  %v3622 = vunpack.c.l.b16 %v3267
  %v3623 = vunpack.c.h.b16 %v3267
  %v3624 = vunpack.c.l.b16 %v3268
  %v3625 = vunpack.c.h.b16 %v3268
  %v3626 = vunpack.c.l.b16 %v3269
  %v3627 = vunpack.c.h.b16 %v3269
  %v3628 = vunpack.c.l.b16 %v3270
  %v3629 = vunpack.c.h.b16 %v3270
  %v3630 = vunpack.c.l.b16 %v3271
  %v3631 = vunpack.c.h.b16 %v3271
  %v3632 = vunpack.c.l.b16 %v3272
  %v3633 = vunpack.c.h.b16 %v3272
  %v3634 = vunpack.c.l.b16 %v3273
  %v3635 = vunpack.c.h.b16 %v3273
  %v3636 = vunpack.c.l.b16 %v3274
  %v3637 = vunpack.c.h.b16 %v3274
  %v3638 = vunpack.c.l.b16 %v3275
  %v3639 = vunpack.c.h.b16 %v3275
  %v3640 = vunpack.c.l.b16 %v3276
  %v3641 = vunpack.c.h.b16 %v3276
  %v3642 = vunpack.c.l.b16 %v3277
  %v3643 = vunpack.c.h.b16 %v3277
  %v3644 = vunpack.c.l.b16 %v3278
  %v3645 = vunpack.c.h.b16 %v3278
  %v3646 = vunpack.c.l.b16 %v3279
  %v3647 = vunpack.c.h.b16 %v3279
  %v3648 = vunpack.c.l.b16 %v3280
  %v3649 = vunpack.c.h.b16 %v3280
  %v3650 = vunpack.c.l.b16 %v3281
  %v3651 = vunpack.c.h.b16 %v3281
  %v3652 = vunpack.c.l.b16 %v3282
  %v3653 = vunpack.c.h.b16 %v3282
  %v3654 = vunpack.c.l.b16 %v3283
  %v3655 = vunpack.c.h.b16 %v3283
  %v3656 = vunpack.c.l.b16 %v3284
  %v3657 = vunpack.c.h.b16 %v3284
  %v3658 = vunpack.c.l.b16 %v3285
  %v3659 = vunpack.c.h.b16 %v3285
  %v3660 = vunpack.c.l.b16 %v3286
  %v3661 = vunpack.c.h.b16 %v3286
  %v3662 = vunpack.c.l.b16 %v3287
  %v3663 = vunpack.c.h.b16 %v3287
  %v3664 = vunpack.c.l.b16 %v3288
  %v3665 = vunpack.c.h.b16 %v3288
  %v3666 = vunpack.c.l.b16 %v3289
  %v3667 = vunpack.c.h.b16 %v3289
  %v3668 = vunpack.c.l.b16 %v3290
  %v3669 = vunpack.c.h.b16 %v3290
  %v3670 = vunpack.c.l.b16 %v3291
  %v3671 = vunpack.c.h.b16 %v3291
  %v3672 = vunpack.c.l.b16 %v3292
  %v3673 = vunpack.c.h.b16 %v3292
  %v3674 = vunpack.c.l.b16 %v3293
  %v3675 = vunpack.c.h.b16 %v3293
  %v3676 = vunpack.c.l.b16 %v3294
  %v3677 = vunpack.c.h.b16 %v3294
  %v3678 = vunpack.c.l.b16 %v3295
  %v3679 = vunpack.c.h.b16 %v3295
  %v3680 = vpack.c.b16 %v3428, %v3424
  %v3681 = vpack.c.b16 %v3429, %v3425
  %v3682 = vpack.c.b16 %v3430, %v3426
  %v3683 = vpack.c.b16 %v3431, %v3427
  %v3684 = vpack.c.b16 %v3436, %v3432
  %v3685 = vpack.c.b16 %v3437, %v3433
  %v3686 = vpack.c.b16 %v3438, %v3434
  %v3687 = vpack.c.b16 %v3439, %v3435
  %v3688 = vpack.c.b16 %v3444, %v3440
  %v3689 = vpack.c.b16 %v3445, %v3441
  %v3690 = vpack.c.b16 %v3446, %v3442
  %v3691 = vpack.c.b16 %v3447, %v3443
  %v3692 = vpack.c.b16 %v3452, %v3448
  %v3693 = vpack.c.b16 %v3453, %v3449
  %v3694 = vpack.c.b16 %v3454, %v3450
  %v3695 = vpack.c.b16 %v3455, %v3451
  %v3696 = vpack.c.b16 %v3460, %v3456
  %v3697 = vpack.c.b16 %v3461, %v3457
  %v3698 = vpack.c.b16 %v3462, %v3458
  %v3699 = vpack.c.b16 %v3463, %v3459
  %v3700 = vpack.c.b16 %v3468, %v3464
  %v3701 = vpack.c.b16 %v3469, %v3465
  %v3702 = vpack.c.b16 %v3470, %v3466
  %v3703 = vpack.c.b16 %v3471, %v3467
  %v3704 = vpack.c.b16 %v3476, %v3472
  %v3705 = vpack.c.b16 %v3477, %v3473
  %v3706 = vpack.c.b16 %v3478, %v3474
  %v3707 = vpack.c.b16 %v3479, %v3475
  %v3708 = vpack.c.b16 %v3484, %v3480
  %v3709 = vpack.c.b16 %v3485, %v3481
  %v3710 = vpack.c.b16 %v3486, %v3482
  %v3711 = vpack.c.b16 %v3487, %v3483
  %v3712 = vpack.c.b16 %v3492, %v3488
  %v3713 = vpack.c.b16 %v3493, %v3489
  %v3714 = vpack.c.b16 %v3494, %v3490
  %v3715 = vpack.c.b16 %v3495, %v3491
  %v3716 = vpack.c.b16 %v3500, %v3496
  %v3717 = vpack.c.b16 %v3501, %v3497
  %v3718 = vpack.c.b16 %v3502, %v3498
  %v3719 = vpack.c.b16 %v3503, %v3499
  %v3720 = vpack.c.b16 %v3508, %v3504
  %v3721 = vpack.c.b16 %v3509, %v3505
  %v3722 = vpack.c.b16 %v3510, %v3506
  %v3723 = vpack.c.b16 %v3511, %v3507
  %v3724 = vpack.c.b16 %v3516, %v3512
  %v3725 = vpack.c.b16 %v3517, %v3513
  %v3726 = vpack.c.b16 %v3518, %v3514
  %v3727 = vpack.c.b16 %v3519, %v3515
  %v3728 = vpack.c.b16 %v3524, %v3520
  %v3729 = vpack.c.b16 %v3525, %v3521
  %v3730 = vpack.c.b16 %v3526, %v3522
  %v3731 = vpack.c.b16 %v3527, %v3523
  %v3732 = vpack.c.b16 %v3532, %v3528
  %v3733 = vpack.c.b16 %v3533, %v3529
  %v3734 = vpack.c.b16 %v3534, %v3530
  %v3735 = vpack.c.b16 %v3535, %v3531
  %v3736 = vpack.c.b16 %v3540, %v3536
  %v3737 = vpack.c.b16 %v3541, %v3537
  %v3738 = vpack.c.b16 %v3542, %v3538
  %v3739 = vpack.c.b16 %v3543, %v3539
  %v3740 = vpack.c.b16 %v3548, %v3544
  %v3741 = vpack.c.b16 %v3549, %v3545
  %v3742 = vpack.c.b16 %v3550, %v3546
  %v3743 = vpack.c.b16 %v3551, %v3547
  %v3744 = vpack.c.b16 %v3556, %v3552
  %v3745 = vpack.c.b16 %v3557, %v3553
  %v3746 = vpack.c.b16 %v3558, %v3554
  %v3747 = vpack.c.b16 %v3559, %v3555
  %v3748 = vpack.c.b16 %v3564, %v3560
  %v3749 = vpack.c.b16 %v3565, %v3561
  %v3750 = vpack.c.b16 %v3566, %v3562
  %v3751 = vpack.c.b16 %v3567, %v3563
  %v3752 = vpack.c.b16 %v3572, %v3568
  %v3753 = vpack.c.b16 %v3573, %v3569
  %v3754 = vpack.c.b16 %v3574, %v3570
  %v3755 = vpack.c.b16 %v3575, %v3571
  %v3756 = vpack.c.b16 %v3580, %v3576
  %v3757 = vpack.c.b16 %v3581, %v3577
  %v3758 = vpack.c.b16 %v3582, %v3578
  %v3759 = vpack.c.b16 %v3583, %v3579
  %v3760 = vpack.c.b16 %v3588, %v3584
  %v3761 = vpack.c.b16 %v3589, %v3585
  %v3762 = vpack.c.b16 %v3590, %v3586
  %v3763 = vpack.c.b16 %v3591, %v3587
  %v3764 = vpack.c.b16 %v3596, %v3592
  %v3765 = vpack.c.b16 %v3597, %v3593
  %v3766 = vpack.c.b16 %v3598, %v3594
  %v3767 = vpack.c.b16 %v3599, %v3595
  %v3768 = vpack.c.b16 %v3604, %v3600
  %v3769 = vpack.c.b16 %v3605, %v3601
  %v3770 = vpack.c.b16 %v3606, %v3602
  %v3771 = vpack.c.b16 %v3607, %v3603
  %v3772 = vpack.c.b16 %v3612, %v3608
  %v3773 = vpack.c.b16 %v3613, %v3609
  %v3774 = vpack.c.b16 %v3614, %v3610
  %v3775 = vpack.c.b16 %v3615, %v3611
  %v3776 = vpack.c.b16 %v3620, %v3616
  %v3777 = vpack.c.b16 %v3621, %v3617
  %v3778 = vpack.c.b16 %v3622, %v3618
  %v3779 = vpack.c.b16 %v3623, %v3619
  %v3780 = vpack.c.b16 %v3628, %v3624
  %v3781 = vpack.c.b16 %v3629, %v3625
  %v3782 = vpack.c.b16 %v3630, %v3626
  %v3783 = vpack.c.b16 %v3631, %v3627
  %v3784 = vpack.c.b16 %v3636, %v3632
  %v3785 = vpack.c.b16 %v3637, %v3633
  %v3786 = vpack.c.b16 %v3638, %v3634
  %v3787 = vpack.c.b16 %v3639, %v3635
  %v3788 = vpack.c.b16 %v3644, %v3640
  %v3789 = vpack.c.b16 %v3645, %v3641
  %v3790 = vpack.c.b16 %v3646, %v3642
  %v3791 = vpack.c.b16 %v3647, %v3643
  %v3792 = vpack.c.b16 %v3652, %v3648
  %v3793 = vpack.c.b16 %v3653, %v3649
  %v3794 = vpack.c.b16 %v3654, %v3650
  %v3795 = vpack.c.b16 %v3655, %v3651
  %v3796 = vpack.c.b16 %v3660, %v3656
  %v3797 = vpack.c.b16 %v3661, %v3657
  %v3798 = vpack.c.b16 %v3662, %v3658
  %v3799 = vpack.c.b16 %v3663, %v3659
  %v3800 = vpack.c.b16 %v3668, %v3664
  %v3801 = vpack.c.b16 %v3669, %v3665
  %v3802 = vpack.c.b16 %v3670, %v3666
  %v3803 = vpack.c.b16 %v3671, %v3667
  %v3804 = vpack.c.b16 %v3676, %v3672
  %v3805 = vpack.c.b16 %v3677, %v3673
  %v3806 = vpack.c.b16 %v3678, %v3674
  %v3807 = vpack.c.b16 %v3679, %v3675
  %3936 = vmatprep.subr.bf16.mxu0 %v3709
  %3937 = vmatpush1.bf16.msra.mxu0 %v3708
  %3938 = vmatprep.subr.bf16.mxu0 %v3705
  %3939 = vmatpush1.bf16.msra.mxu0 %v3704
  %3940 = vmatprep.subr.bf16.mxu0 %v3701
  %3941 = vmatpush1.bf16.msra.mxu0 %v3700
  %3942 = vmatprep.subr.bf16.mxu0 %v3697
  %3943 = vmatpush1.bf16.msra.mxu0 %v3696
  %3944 = vmatprep.subr.bf16.mxu0 %v3693
  %3945 = vmatpush1.bf16.msra.mxu0 %v3692
  %3946 = vmatprep.subr.bf16.mxu0 %v3689
  %3947 = vmatpush1.bf16.msra.mxu0 %v3688
  %3948 = vmatprep.subr.bf16.mxu0 %v3685
  %3949 = vmatpush1.bf16.msra.mxu0 %v3684
  %3950 = vmatprep.subr.bf16.mxu0 %v3681
  %3951 = vmatpush1.bf16.msra.mxu0 %v3680
  %3952 = vmatprep.subr.bf16.mxu0 %v3741
  %3953 = vmatpush2.bf16.msra.mxu0 %v3740
  %3954 = vmatprep.subr.bf16.mxu0 %v3737
  %3955 = vmatpush2.bf16.msra.mxu0 %v3736
  %3956 = vmatprep.subr.bf16.mxu0 %v3733
  %3957 = vmatpush2.bf16.msra.mxu0 %v3732
  %3958 = vmatprep.subr.bf16.mxu0 %v3729
  %3959 = vmatpush2.bf16.msra.mxu0 %v3728
  %3960 = vmatprep.subr.bf16.mxu0 %v3725
  %3961 = vmatpush2.bf16.msra.mxu0 %v3724
  %3962 = vmatprep.subr.bf16.mxu0 %v3721
  %3963 = vmatpush2.bf16.msra.mxu0 %v3720
  %3964 = vmatprep.subr.bf16.mxu0 %v3717
  %3965 = vmatpush2.bf16.msra.mxu0 %v3716
  %3966 = vmatprep.subr.bf16.mxu0 %v3713
  %3967 = vmatpush2.bf16.msra.mxu0 %v3712
  %3968 = vmatprep.mubr.bf16.mxu0 %v3157
  %3969 = vmatmul.mubr.bf16.gmra.mxu0 %v3156
  %v3970 = vpop.f32.mrf.mxu0
  %v3971 = vadd.f32 0.0, %v3970
  %v3972 = vpop.f32.mrf.mxu0
  %v3973 = vadd.f32 0.0, %v3972
  %v3974 = vpop.f32.mrf.mxu0
  %v3975 = vadd.f32 0.0, %v3974
  %v3976 = vpop.f32.mrf.mxu0
  %v3977 = vadd.f32 0.0, %v3976
  %3978 = vmatprep.mubr.bf16.mxu0 %v3161
  %3979 = vmatmul.mubr.bf16.gmra.mxu0 %v3160
  %v3980 = vpop.f32.mrf.mxu0
  %v3981 = vadd.f32 0.0, %v3980
  %v3982 = vpop.f32.mrf.mxu0
  %v3983 = vadd.f32 0.0, %v3982
  %v3984 = vpop.f32.mrf.mxu0
  %v3985 = vadd.f32 0.0, %v3984
  %v3986 = vpop.f32.mrf.mxu0
  %v3987 = vadd.f32 0.0, %v3986
  %3988 = vmatprep.mubr.bf16.mxu0 %v3165
  %3989 = vmatmul.mubr.bf16.gmra.mxu0 %v3164
  %v3990 = vpop.f32.mrf.mxu0
  %v3991 = vadd.f32 0.0, %v3990
  %v3992 = vpop.f32.mrf.mxu0
  %v3993 = vadd.f32 0.0, %v3992
  %v3994 = vpop.f32.mrf.mxu0
  %v3995 = vpop.f32.mrf.mxu0
  %3996 = vdwg.mxu0
  %3997 = vmatprep.subr.bf16.mxu0 %v3773
  %3998 = vmatpush1.bf16.msra.mxu0 %v3772
  %3999 = vmatprep.subr.bf16.mxu0 %v3769
  %4000 = vmatpush1.bf16.msra.mxu0 %v3768
  %4001 = vmatprep.subr.bf16.mxu0 %v3765
  %4002 = vmatpush1.bf16.msra.mxu0 %v3764
  %4003 = vmatprep.subr.bf16.mxu0 %v3761
  %4004 = vmatpush1.bf16.msra.mxu0 %v3760
  %4005 = vmatprep.subr.bf16.mxu0 %v3757
  %4006 = vmatpush1.bf16.msra.mxu0 %v3756
  %4007 = vmatprep.subr.bf16.mxu0 %v3753
  %4008 = vmatpush1.bf16.msra.mxu0 %v3752
  %4009 = vmatprep.subr.bf16.mxu0 %v3749
  %4010 = vmatpush1.bf16.msra.mxu0 %v3748
  %4011 = vmatprep.subr.bf16.mxu0 %v3745
  %4012 = vmatpush1.bf16.msra.mxu0 %v3744
  %4013 = vmatprep.subr.bf16.mxu0 %v3805
  %4014 = vmatpush2.bf16.msra.mxu0 %v3804
  %4015 = vmatprep.subr.bf16.mxu0 %v3801
  %4016 = vmatpush2.bf16.msra.mxu0 %v3800
  %4017 = vmatprep.subr.bf16.mxu0 %v3797
  %4018 = vmatpush2.bf16.msra.mxu0 %v3796
  %4019 = vmatprep.subr.bf16.mxu0 %v3793
  %4020 = vmatpush2.bf16.msra.mxu0 %v3792
  %4021 = vmatprep.subr.bf16.mxu0 %v3789
  %4022 = vmatpush2.bf16.msra.mxu0 %v3788
  %4023 = vmatprep.subr.bf16.mxu0 %v3785
  %4024 = vmatpush2.bf16.msra.mxu0 %v3784
  %4025 = vmatprep.subr.bf16.mxu0 %v3781
  %4026 = vmatpush2.bf16.msra.mxu0 %v3780
  %4027 = vmatprep.subr.bf16.mxu0 %v3777
  %4028 = vmatpush2.bf16.msra.mxu0 %v3776
  %4029 = vmatprep.mubr.bf16.mxu0 %v3159
  %4030 = vmatmul.mubr.bf16.gmra.mxu0 %v3158
  %v4031 = vpop.f32.mrf.mxu0
  %v4032 = vadd.f32 %v3971, %v4031
  %v4033 = vpop.f32.mrf.mxu0
  %v4034 = vadd.f32 %v3973, %v4033
  %v4035 = vpop.f32.mrf.mxu0
  %v4036 = vadd.f32 %v3975, %v4035
  %v4037 = vpop.f32.mrf.mxu0
  %v4038 = vadd.f32 %v3977, %v4037
  %4039 = vmatprep.mubr.bf16.mxu0 %v3163
  %4040 = vmatmul.mubr.bf16.gmra.mxu0 %v3162
  %v4041 = vpop.f32.mrf.mxu0
  %v4042 = vadd.f32 %v3981, %v4041
  %v4043 = vpop.f32.mrf.mxu0
  %v4044 = vadd.f32 %v3983, %v4043
  %v4045 = vpop.f32.mrf.mxu0
  %v4046 = vadd.f32 %v3985, %v4045
  %v4047 = vpop.f32.mrf.mxu0
  %v4048 = vadd.f32 %v3987, %v4047
  %4049 = vmatprep.mubr.bf16.mxu0 %v3167
  %4050 = vmatmul.mubr.bf16.gmra.mxu0 %v3166
  %v4051 = vpop.f32.mrf.mxu0
  %v4052 = vadd.f32 %v3991, %v4051
  %v4053 = vpop.f32.mrf.mxu0
  %v4054 = vadd.f32 %v3993, %v4053
  %v4055 = vpop.f32.mrf.mxu0
  %v4056 = vpop.f32.mrf.mxu0
  %4057 = vdwg.mxu0
  %4058 = vmatprep.subr.bf16.mxu0 %v3711
  %4059 = vmatpush1.bf16.msra.mxu0 %v3710
  %4060 = vmatprep.subr.bf16.mxu0 %v3707
  %4061 = vmatpush1.bf16.msra.mxu0 %v3706
  %4062 = vmatprep.subr.bf16.mxu0 %v3703
  %4063 = vmatpush1.bf16.msra.mxu0 %v3702
  %4064 = vmatprep.subr.bf16.mxu0 %v3699
  %4065 = vmatpush1.bf16.msra.mxu0 %v3698
  %4066 = vmatprep.subr.bf16.mxu0 %v3695
  %4067 = vmatpush1.bf16.msra.mxu0 %v3694
  %4068 = vmatprep.subr.bf16.mxu0 %v3691
  %4069 = vmatpush1.bf16.msra.mxu0 %v3690
  %4070 = vmatprep.subr.bf16.mxu0 %v3687
  %4071 = vmatpush1.bf16.msra.mxu0 %v3686
  %4072 = vmatprep.subr.bf16.mxu0 %v3683
  %4073 = vmatpush1.bf16.msra.mxu0 %v3682
  %4074 = vmatprep.subr.bf16.mxu0 %v3743
  %4075 = vmatpush2.bf16.msra.mxu0 %v3742
  %4076 = vmatprep.subr.bf16.mxu0 %v3739
  %4077 = vmatpush2.bf16.msra.mxu0 %v3738
  %4078 = vmatprep.subr.bf16.mxu0 %v3735
  %4079 = vmatpush2.bf16.msra.mxu0 %v3734
  %4080 = vmatprep.subr.bf16.mxu0 %v3731
  %4081 = vmatpush2.bf16.msra.mxu0 %v3730
  %4082 = vmatprep.subr.bf16.mxu0 %v3727
  %4083 = vmatpush2.bf16.msra.mxu0 %v3726
  %4084 = vmatprep.subr.bf16.mxu0 %v3723
  %4085 = vmatpush2.bf16.msra.mxu0 %v3722
  %4086 = vmatprep.subr.bf16.mxu0 %v3719
  %4087 = vmatpush2.bf16.msra.mxu0 %v3718
  %4088 = vmatprep.subr.bf16.mxu0 %v3715
  %4089 = vmatpush2.bf16.msra.mxu0 %v3714
  %4090 = vmatprep.mubr.bf16.mxu0 %v3157
  %4091 = vmatmul.mubr.bf16.gmra.mxu0 %v3156
  %v4092 = vpop.f32.mrf.mxu0
  %v4093 = vadd.f32 0.0, %v4092
  %v4094 = vpop.f32.mrf.mxu0
  %v4095 = vadd.f32 0.0, %v4094
  %v4096 = vpop.f32.mrf.mxu0
  %v4097 = vadd.f32 0.0, %v4096
  %v4098 = vpop.f32.mrf.mxu0
  %v4099 = vadd.f32 0.0, %v4098
  %4100 = vmatprep.mubr.bf16.mxu0 %v3161
  %4101 = vmatmul.mubr.bf16.gmra.mxu0 %v3160
  %v4102 = vpop.f32.mrf.mxu0
  %v4103 = vadd.f32 0.0, %v4102
  %v4104 = vpop.f32.mrf.mxu0
  %v4105 = vadd.f32 0.0, %v4104
  %v4106 = vpop.f32.mrf.mxu0
  %v4107 = vadd.f32 0.0, %v4106
  %v4108 = vpop.f32.mrf.mxu0
  %v4109 = vadd.f32 0.0, %v4108
  %4110 = vmatprep.mubr.bf16.mxu0 %v3165
  %4111 = vmatmul.mubr.bf16.gmra.mxu0 %v3164
  %v4112 = vpop.f32.mrf.mxu0
  %v4113 = vadd.f32 0.0, %v4112
  %v4114 = vpop.f32.mrf.mxu0
  %v4115 = vadd.f32 0.0, %v4114
  %v4116 = vpop.f32.mrf.mxu0
  %v4117 = vpop.f32.mrf.mxu0
  %4118 = vdwg.mxu0
  %4119 = vmatprep.subr.bf16.mxu0 %v3775
  %4120 = vmatpush1.bf16.msra.mxu0 %v3774
  %4121 = vmatprep.subr.bf16.mxu0 %v3771
  %4122 = vmatpush1.bf16.msra.mxu0 %v3770
  %4123 = vmatprep.subr.bf16.mxu0 %v3767
  %4124 = vmatpush1.bf16.msra.mxu0 %v3766
  %4125 = vmatprep.subr.bf16.mxu0 %v3763
  %4126 = vmatpush1.bf16.msra.mxu0 %v3762
  %4127 = vmatprep.subr.bf16.mxu0 %v3759
  %4128 = vmatpush1.bf16.msra.mxu0 %v3758
  %4129 = vmatprep.subr.bf16.mxu0 %v3755
  %4130 = vmatpush1.bf16.msra.mxu0 %v3754
  %4131 = vmatprep.subr.bf16.mxu0 %v3751
  %4132 = vmatpush1.bf16.msra.mxu0 %v3750
  %4133 = vmatprep.subr.bf16.mxu0 %v3747
  %4134 = vmatpush1.bf16.msra.mxu0 %v3746
  %4135 = vmatprep.subr.bf16.mxu0 %v3807
  %4136 = vmatpush2.bf16.msra.mxu0 %v3806
  %4137 = vmatprep.subr.bf16.mxu0 %v3803
  %4138 = vmatpush2.bf16.msra.mxu0 %v3802
  %4139 = vmatprep.subr.bf16.mxu0 %v3799
  %4140 = vmatpush2.bf16.msra.mxu0 %v3798
  %4141 = vmatprep.subr.bf16.mxu0 %v3795
  %4142 = vmatpush2.bf16.msra.mxu0 %v3794
  %4143 = vmatprep.subr.bf16.mxu0 %v3791
  %4144 = vmatpush2.bf16.msra.mxu0 %v3790
  %4145 = vmatprep.subr.bf16.mxu0 %v3787
  %4146 = vmatpush2.bf16.msra.mxu0 %v3786
  %4147 = vmatprep.subr.bf16.mxu0 %v3783
  %4148 = vmatpush2.bf16.msra.mxu0 %v3782
  %4149 = vmatprep.subr.bf16.mxu0 %v3779
  %4150 = vmatpush2.bf16.msra.mxu0 %v3778
  %4151 = vmatprep.mubr.bf16.mxu0 %v3159
  %4152 = vmatmul.mubr.bf16.gmra.mxu0 %v3158
  %v4153 = vpop.f32.mrf.mxu0
  %v4154 = vadd.f32 %v4093, %v4153
  %v4155 = vpop.f32.mrf.mxu0
  %v4156 = vadd.f32 %v4095, %v4155
  %v4157 = vpop.f32.mrf.mxu0
  %v4158 = vadd.f32 %v4097, %v4157
  %v4159 = vpop.f32.mrf.mxu0
  %v4160 = vadd.f32 %v4099, %v4159
  %4161 = vmatprep.mubr.bf16.mxu0 %v3163
  %4162 = vmatmul.mubr.bf16.gmra.mxu0 %v3162
  %v4163 = vpop.f32.mrf.mxu0
  %v4164 = vadd.f32 %v4103, %v4163
  %v4165 = vpop.f32.mrf.mxu0
  %v4166 = vadd.f32 %v4105, %v4165
  %v4167 = vpop.f32.mrf.mxu0
  %v4168 = vadd.f32 %v4107, %v4167
  %v4169 = vpop.f32.mrf.mxu0
  %v4170 = vadd.f32 %v4109, %v4169
  %4171 = vmatprep.mubr.bf16.mxu0 %v3167
  %4172 = vmatmul.mubr.bf16.gmra.mxu0 %v3166
  %v4173 = vpop.f32.mrf.mxu0
  %v4174 = vadd.f32 %v4113, %v4173
  %v4175 = vpop.f32.mrf.mxu0
  %v4176 = vadd.f32 %v4115, %v4175
  %v4177 = vpop.f32.mrf.mxu0
  %v4178 = vpop.f32.mrf.mxu0
  %4179 = vdwg.mxu0
  %v4180 = vpack.c.bf16 %v4036, %v4032
  %v4181 = vpack.c.bf16 %v4038, %v4034
  %v4182 = vpack.c.bf16 %v4158, %v4154
  %v4183 = vpack.c.bf16 %v4160, %v4156
  %v4184 = vpack.c.bf16 %v4046, %v4042
  %v4185 = vpack.c.bf16 %v4048, %v4044
  %v4186 = vpack.c.bf16 %v4168, %v4164
  %v4187 = vpack.c.bf16 %v4170, %v4166
  %v4188 = vpack.c.bf16 %v4052, %v4052
  %v4189 = vpack.c.bf16 %v4054, %v4054
  %v4190 = vpack.c.bf16 %v4174, %v4174
  %v4191 = vpack.c.bf16 %v4176, %v4176
  %v4192 = vld [vmem:[%s31] sm:$0xf]
  %v4193 = vld [vmem:[%s31 + $0x4] sm:$0x1]
  %v4196 = vunpack.c.l.b16 %v4192
  %v4197 = vunpack.c.l.b16 %v4193
  %v4198 = vpack.c.b16 %v4197, %v4196
  %vm4199 = vcmask 326656
  %v4201 = vsel %vm4199, %v4198, 0
  %v4204 = vsel %vm974, %v4188, 0
  %v4207 = vsel %vm974, %v4189, 0
  %v4210 = vsel %vm974, %v4190, 0
  %v4213 = vsel %vm974, %v4191, 0
  %4215 = vmatprep.subr.bf16.mxu0 0
  %4216 = vmatpush1.bf16.msra.mxu0 0
  %4217 = vmatprep.subr.bf16.mxu0 0
  %4218 = vmatpush1.bf16.msra.mxu0 0
  %4219 = vmatprep.subr.bf16.mxu0 0
  %4220 = vmatpush1.bf16.msra.mxu0 0
  %4221 = vmatprep.subr.bf16.mxu0 0
  %4222 = vmatpush1.bf16.msra.mxu0 0
  %4223 = vmatprep.subr.bf16.mxu0 0
  %4224 = vmatpush1.bf16.msra.mxu0 0
  %4225 = vmatprep.subr.bf16.mxu0 %v4207
  %4226 = vmatpush1.bf16.msra.mxu0 %v4204
  %4227 = vmatprep.subr.bf16.mxu0 %v4185
  %4228 = vmatpush1.bf16.msra.mxu0 %v4184
  %4229 = vmatprep.subr.bf16.mxu0 %v4181
  %4230 = vmatpush1.bf16.msra.mxu0 %v4180
  %4231 = vmatprep.subr.bf16.mxu0 0
  %4232 = vmatpush2.bf16.msra.mxu0 0
  %4233 = vmatprep.subr.bf16.mxu0 0
  %4234 = vmatpush2.bf16.msra.mxu0 0
  %4235 = vmatprep.subr.bf16.mxu0 0
  %4236 = vmatpush2.bf16.msra.mxu0 0
  %4237 = vmatprep.subr.bf16.mxu0 0
  %4238 = vmatpush2.bf16.msra.mxu0 0
  %4239 = vmatprep.subr.bf16.mxu0 0
  %4240 = vmatpush2.bf16.msra.mxu0 0
  %4241 = vmatprep.subr.bf16.mxu0 0
  %4242 = vmatpush2.bf16.msra.mxu0 0
  %4243 = vmatprep.subr.bf16.mxu0 0
  %4244 = vmatpush2.bf16.msra.mxu0 0
  %4245 = vmatprep.subr.bf16.mxu0 0
  %4246 = vmatpush2.bf16.msra.mxu0 0
  %4247 = vmatprep.mubr.bf16.mxu0 0
  %4248 = vmatmul.mubr.bf16.gmra.mxu0 %v4201
  %v4249 = vpop.f32.mrf.mxu0
  %v4250 = vadd.f32 0.0, %v4249
  %v4251 = vpop.f32.mrf.mxu0
  %v4252 = vadd.f32 0.0, %v4251
  %v4253 = vpop.f32.mrf.mxu0
  %v4254 = vadd.f32 0.0, %v4253
  %v4255 = vpop.f32.mrf.mxu0
  %v4256 = vadd.f32 0.0, %v4255
  %4257 = vdwg.mxu0
  %4258 = vmatprep.subr.bf16.mxu0 0
  %4259 = vmatpush1.bf16.msra.mxu0 0
  %4260 = vmatprep.subr.bf16.mxu0 0
  %4261 = vmatpush1.bf16.msra.mxu0 0
  %4262 = vmatprep.subr.bf16.mxu0 0
  %4263 = vmatpush1.bf16.msra.mxu0 0
  %4264 = vmatprep.subr.bf16.mxu0 0
  %4265 = vmatpush1.bf16.msra.mxu0 0
  %4266 = vmatprep.subr.bf16.mxu0 0
  %4267 = vmatpush1.bf16.msra.mxu0 0
  %4268 = vmatprep.subr.bf16.mxu0 %v4213
  %4269 = vmatpush1.bf16.msra.mxu0 %v4210
  %4270 = vmatprep.subr.bf16.mxu0 %v4187
  %4271 = vmatpush1.bf16.msra.mxu0 %v4186
  %4272 = vmatprep.subr.bf16.mxu0 %v4183
  %4273 = vmatpush1.bf16.msra.mxu0 %v4182
  %4274 = vmatprep.subr.bf16.mxu0 0
  %4275 = vmatpush2.bf16.msra.mxu0 0
  %4276 = vmatprep.subr.bf16.mxu0 0
  %4277 = vmatpush2.bf16.msra.mxu0 0
  %4278 = vmatprep.subr.bf16.mxu0 0
  %4279 = vmatpush2.bf16.msra.mxu0 0
  %4280 = vmatprep.subr.bf16.mxu0 0
  %4281 = vmatpush2.bf16.msra.mxu0 0
  %4282 = vmatprep.subr.bf16.mxu0 0
  %4283 = vmatpush2.bf16.msra.mxu0 0
  %4284 = vmatprep.subr.bf16.mxu0 0
  %4285 = vmatpush2.bf16.msra.mxu0 0
  %4286 = vmatprep.subr.bf16.mxu0 0
  %4287 = vmatpush2.bf16.msra.mxu0 0
  %4288 = vmatprep.subr.bf16.mxu0 0
  %4289 = vmatpush2.bf16.msra.mxu0 0
  %4290 = vmatprep.mubr.bf16.mxu0 0
  %4291 = vmatmul.mubr.bf16.gmra.mxu0 %v4201
  %v4292 = vpop.f32.mrf.mxu0
  %v4293 = vadd.f32 0.0, %v4292
  %v4294 = vpop.f32.mrf.mxu0
  %v4295 = vadd.f32 0.0, %v4294
  %v4296 = vpop.f32.mrf.mxu0
  %v4297 = vadd.f32 0.0, %v4296
  %v4298 = vpop.f32.mrf.mxu0
  %v4299 = vadd.f32 0.0, %v4298
  %4300 = vdwg.mxu0
  %v4301 = vld [vmem:[%s33] sm:$0xff]
  %v4302 = vld [vmem:[%s33 + $0x8] sm:$0x3]
  %4304 = vset.pattern.permute.xlu0 0
  %4305 = vperm.xlu0 %4304, %v4301
  %v4306 = vpop.permute.xlu0 %4305
  %4309 = vset.pattern.permute.xlu0 0
  %4310 = vperm.xlu0 %4309, %v4302
  %v4311 = vpop.permute.xlu0 %4310
  %v4313 = vmul.f32 %v4250, %v4306
  %v4314 = vmul.f32 %v4252, %v4306
  %v4315 = vmul.f32 %v4293, %v4306
  %v4316 = vmul.f32 %v4295, %v4306
  %v4317 = vmul.f32 %v4254, %v4311
  %v4318 = vmul.f32 %v4256, %v4311
  %v4319 = vmul.f32 %v4297, %v4311
  %v4320 = vmul.f32 %v4299, %v4311
  %v4321 = vld [vmem:[%s35] sm:$0xff]
  %v4322 = vld [vmem:[%s35 + $0x8] sm:$0x3]
  %4324 = vset.pattern.permute.xlu0 0
  %4325 = vperm.xlu0 %4324, %v4321
  %v4326 = vpop.permute.xlu0 %4325
  %4329 = vset.pattern.permute.xlu0 0
  %4330 = vperm.xlu0 %4329, %v4322
  %v4331 = vpop.permute.xlu0 %4330
  %v4333 = vadd.f32 %v4313, %v4326
  %v4334 = vadd.f32 %v4314, %v4326
  %v4335 = vadd.f32 %v4315, %v4326
  %v4336 = vadd.f32 %v4316, %v4326
  %v4337 = vadd.f32 %v4317, %v4331
  %v4338 = vadd.f32 %v4318, %v4331
  %v4339 = vadd.f32 %v4319, %v4331
  %v4340 = vadd.f32 %v4320, %v4331
  %v4341 = vmax.f32 %v4333, 0.0
  %v4342 = vmax.f32 %v4334, 0.0
  %v4343 = vmax.f32 %v4335, 0.0
  %v4344 = vmax.f32 %v4336, 0.0
  %v4345 = vmax.f32 %v4337, 0.0
  %v4346 = vmax.f32 %v4338, 0.0
  %v4347 = vmax.f32 %v4339, 0.0
  %v4348 = vmax.f32 %v4340, 0.0
  %v4349 = vld [vmem:[%s49] sm:$0x1]
  %v4350 = vlaneseq
  %v4351 = vshrl.u32 %v4350, 7
  %v4352 = vsub.s32 0, %v4351
  %v4353 = vrot.slane %v4349, %v4352
  %4355 = vrot.lane.b32.xlu0 %v4353, 119
  %v4356 = vpop.permute.xlu0 %4355
  %v4358 = vmul.f32 %v4343, %v4356
  %v4359 = vmul.f32 %v4344, %v4356
  %v4360 = vmul.f32 %v4347, %v4356
  %v4361 = vmul.f32 %v4348, %v4356
  %v4362 = vld [vmem:[%s37] sm:$0xff]
  %v4363 = vld [vmem:[%s37 + $0x8] sm:$0x3]
  %4365 = vset.pattern.permute.xlu0 0
  %4366 = vperm.xlu0 %4365, %v4362
  %v4367 = vpop.permute.xlu0 %4366
  %4370 = vset.pattern.permute.xlu0 0
  %4371 = vperm.xlu0 %4370, %v4363
  %v4372 = vpop.permute.xlu0 %4371
  %v4374 = vmul.f32 %v4358, %v4367
  %v4375 = vmul.f32 %v4359, %v4367
  %v4376 = vmul.f32 %v4360, %v4372
  %v4377 = vmul.f32 %v4361, %v4372
  %v4378 = vadd.f32 %v4374, 0.0
  %v4379 = vadd.f32 %v4375, 0.0
  %v4380 = vadd.f32 %v4376, 0.0
  %v4381 = vadd.f32 %v4377, 0.0
  %v4382 = vmul.f32 %v4154, %v4356
  %v4383 = vmul.f32 %v4156, %v4356
  %v4384 = vmul.f32 %v4158, %v4356
  %v4385 = vmul.f32 %v4160, %v4356
  %v4386 = vmul.f32 %v4164, %v4356
  %v4387 = vmul.f32 %v4166, %v4356
  %v4388 = vmul.f32 %v4168, %v4356
  %v4389 = vmul.f32 %v4170, %v4356
  %v4390 = vmul.f32 %v4174, %v4356
  %v4391 = vmul.f32 %v4176, %v4356
  %v4392 = vadd.f32 %v4382, 0.0
  %v4393 = vadd.f32 %v4383, 0.0
  %v4394 = vadd.f32 %v4384, 0.0
  %v4395 = vadd.f32 %v4385, 0.0
  %v4396 = vadd.f32 %v4386, 0.0
  %v4397 = vadd.f32 %v4387, 0.0
  %v4398 = vadd.f32 %v4388, 0.0
  %v4399 = vadd.f32 %v4389, 0.0
  %v4400 = vadd.f32 %v4390, 0.0
  %v4401 = vadd.f32 %v4391, 0.0
  %v4402 = vld [vmem:[%s49 + $0x1] sm:$0x1]
  %v4403 = vlaneseq
  %v4404 = vshrl.u32 %v4403, 7
  %v4405 = vsub.s32 0, %v4404
  %v4406 = vrot.slane %v4402, %v4405
  %4408 = vrot.lane.b32.xlu0 %v4406, 120
  %v4409 = vpop.permute.xlu0 %4408
  %v4411 = vmul.f32 %v4342, %v4409
  %v4412 = vmul.f32 %v4343, %v4409
  %v4413 = vmul.f32 %v4346, %v4409
  %v4414 = vmul.f32 %v4347, %v4409
  %4415 = vset.pattern.permute.xlu0 1
  %4416 = vperm.xlu0 %4415, %v4362
  %v4417 = vpop.permute.xlu0 %4416
  %4419 = vset.pattern.permute.xlu0 1
  %4420 = vperm.xlu0 %4419, %v4363
  %v4421 = vpop.permute.xlu0 %4420
  %v4423 = vmul.f32 %v4411, %v4417
  %v4424 = vmul.f32 %v4412, %v4417
  %v4425 = vmul.f32 %v4413, %v4421
  %v4426 = vmul.f32 %v4414, %v4421
  %4431 = vrot.lane.b32.xlu0 %v4423, 127
  %v4432 = vpop.permute.xlu0 %4431
  %4433 = vrot.lane.b32.xlu0 %v4424, 127
  %v4434 = vpop.permute.xlu0 %4433
  %4435 = vrot.lane.b32.xlu0 %v4425, 127
  %v4436 = vpop.permute.xlu0 %4435
  %4437 = vrot.lane.b32.xlu0 %v4426, 127
  %v4438 = vpop.permute.xlu0 %4437
  %v4439 = vsel %vm1562, %v4432, %v4434
  %v4440 = vsel %vm1562, %v4436, %v4438
  %v4445 = vadd.f32 %v4378, %v4439
  %v4446 = vadd.f32 %v4379, %v4434
  %v4447 = vadd.f32 %v4380, %v4440
  %v4448 = vadd.f32 %v4381, %v4438
  %v4449 = vmul.f32 %v4034, %v4409
  %v4450 = vmul.f32 %v4154, %v4409
  %v4451 = vmul.f32 %v4038, %v4409
  %v4452 = vmul.f32 %v4158, %v4409
  %v4453 = vmul.f32 %v4044, %v4409
  %v4454 = vmul.f32 %v4164, %v4409
  %v4455 = vmul.f32 %v4048, %v4409
  %v4456 = vmul.f32 %v4168, %v4409
  %v4457 = vmul.f32 %v4054, %v4409
  %v4458 = vmul.f32 %v4174, %v4409
  %4469 = vrot.lane.b32.xlu0 %v4449, 127
  %v4470 = vpop.permute.xlu0 %4469
  %4471 = vrot.lane.b32.xlu0 %v4450, 127
  %v4472 = vpop.permute.xlu0 %4471
  %4473 = vrot.lane.b32.xlu0 %v4451, 127
  %v4474 = vpop.permute.xlu0 %4473
  %4475 = vrot.lane.b32.xlu0 %v4452, 127
  %v4476 = vpop.permute.xlu0 %4475
  %4477 = vrot.lane.b32.xlu0 %v4453, 127
  %v4478 = vpop.permute.xlu0 %4477
  %4479 = vrot.lane.b32.xlu0 %v4454, 127
  %v4480 = vpop.permute.xlu0 %4479
  %4481 = vrot.lane.b32.xlu0 %v4455, 127
  %v4482 = vpop.permute.xlu0 %4481
  %4483 = vrot.lane.b32.xlu0 %v4456, 127
  %v4484 = vpop.permute.xlu0 %4483
  %4485 = vrot.lane.b32.xlu0 %v4457, 127
  %v4486 = vpop.permute.xlu0 %4485
  %4487 = vrot.lane.b32.xlu0 %v4458, 127
  %v4488 = vpop.permute.xlu0 %4487
  %v4489 = vsel %vm1562, %v4470, %v4472
  %v4490 = vsel %vm1562, %v4474, %v4476
  %v4491 = vsel %vm1562, %v4478, %v4480
  %v4492 = vsel %vm1562, %v4482, %v4484
  %v4493 = vsel %vm1562, %v4486, %v4488
  %v4504 = vadd.f32 %v4392, %v4489
  %v4505 = vadd.f32 %v4393, %v4472
  %v4506 = vadd.f32 %v4394, %v4490
  %v4507 = vadd.f32 %v4395, %v4476
  %v4508 = vadd.f32 %v4396, %v4491
  %v4509 = vadd.f32 %v4397, %v4480
  %v4510 = vadd.f32 %v4398, %v4492
  %v4511 = vadd.f32 %v4399, %v4484
  %v4512 = vadd.f32 %v4400, %v4493
  %v4513 = vadd.f32 %v4401, %v4488
  %v4514 = vld [vmem:[%s49 + $0x2] sm:$0x1]
  %v4515 = vlaneseq
  %v4516 = vshrl.u32 %v4515, 7
  %v4517 = vsub.s32 0, %v4516
  %v4518 = vrot.slane %v4514, %v4517
  %4520 = vrot.lane.b32.xlu0 %v4518, 120
  %v4521 = vpop.permute.xlu0 %4520
  %v4523 = vmul.f32 %v4343, %v4521
  %v4524 = vmul.f32 %v4344, %v4521
  %v4525 = vmul.f32 %v4347, %v4521
  %v4526 = vmul.f32 %v4348, %v4521
  %4527 = vset.pattern.permute.xlu0 2
  %4528 = vperm.xlu0 %4527, %v4362
  %v4529 = vpop.permute.xlu0 %4528
  %4531 = vset.pattern.permute.xlu0 2
  %4532 = vperm.xlu0 %4531, %v4363
  %v4533 = vpop.permute.xlu0 %4532
  %v4535 = vmul.f32 %v4523, %v4529
  %v4536 = vmul.f32 %v4524, %v4529
  %v4537 = vmul.f32 %v4525, %v4533
  %v4538 = vmul.f32 %v4526, %v4533
  %4543 = vrot.lane.b32.xlu0 %v4535, 127
  %v4544 = vpop.permute.xlu0 %4543
  %4545 = vrot.lane.b32.xlu0 %v4536, 127
  %v4546 = vpop.permute.xlu0 %4545
  %4547 = vrot.lane.b32.xlu0 %v4537, 127
  %v4548 = vpop.permute.xlu0 %4547
  %4549 = vrot.lane.b32.xlu0 %v4538, 127
  %v4550 = vpop.permute.xlu0 %4549
  %v4551 = vsel %vm1562, %v4544, %v4546
  %v4552 = vsel %vm1562, %v4548, %v4550
  %v4557 = vadd.f32 %v4445, %v4551
  %v4558 = vadd.f32 %v4446, %v4546
  %v4559 = vadd.f32 %v4447, %v4552
  %v4560 = vadd.f32 %v4448, %v4550
  %v4561 = vmul.f32 %v4154, %v4521
  %v4562 = vmul.f32 %v4156, %v4521
  %v4563 = vmul.f32 %v4158, %v4521
  %v4564 = vmul.f32 %v4160, %v4521
  %v4565 = vmul.f32 %v4164, %v4521
  %v4566 = vmul.f32 %v4166, %v4521
  %v4567 = vmul.f32 %v4168, %v4521
  %v4568 = vmul.f32 %v4170, %v4521
  %v4569 = vmul.f32 %v4174, %v4521
  %v4570 = vmul.f32 %v4176, %v4521
  %4581 = vrot.lane.b32.xlu0 %v4561, 127
  %v4582 = vpop.permute.xlu0 %4581
  %4583 = vrot.lane.b32.xlu0 %v4562, 127
  %v4584 = vpop.permute.xlu0 %4583
  %4585 = vrot.lane.b32.xlu0 %v4563, 127
  %v4586 = vpop.permute.xlu0 %4585
  %4587 = vrot.lane.b32.xlu0 %v4564, 127
  %v4588 = vpop.permute.xlu0 %4587
  %4589 = vrot.lane.b32.xlu0 %v4565, 127
  %v4590 = vpop.permute.xlu0 %4589
  %4591 = vrot.lane.b32.xlu0 %v4566, 127
  %v4592 = vpop.permute.xlu0 %4591
  %4593 = vrot.lane.b32.xlu0 %v4567, 127
  %v4594 = vpop.permute.xlu0 %4593
  %4595 = vrot.lane.b32.xlu0 %v4568, 127
  %v4596 = vpop.permute.xlu0 %4595
  %4597 = vrot.lane.b32.xlu0 %v4569, 127
  %v4598 = vpop.permute.xlu0 %4597
  %4599 = vrot.lane.b32.xlu0 %v4570, 127
  %v4600 = vpop.permute.xlu0 %4599
  %v4601 = vsel %vm1562, %v4582, %v4584
  %v4602 = vsel %vm1562, %v4586, %v4588
  %v4603 = vsel %vm1562, %v4590, %v4592
  %v4604 = vsel %vm1562, %v4594, %v4596
  %v4605 = vsel %vm1562, %v4598, %v4600
  %v4616 = vadd.f32 %v4504, %v4601
  %v4617 = vadd.f32 %v4505, %v4584
  %v4618 = vadd.f32 %v4506, %v4602
  %v4619 = vadd.f32 %v4507, %v4588
  %v4620 = vadd.f32 %v4508, %v4603
  %v4621 = vadd.f32 %v4509, %v4592
  %v4622 = vadd.f32 %v4510, %v4604
  %v4623 = vadd.f32 %v4511, %v4596
  %v4624 = vadd.f32 %v4512, %v4605
  %v4625 = vadd.f32 %v4513, %v4600
  %v4626 = vld [vmem:[%s49 + $0x3] sm:$0x1]
  %v4627 = vlaneseq
  %v4628 = vshrl.u32 %v4627, 7
  %v4629 = vsub.s32 0, %v4628
  %v4630 = vrot.slane %v4626, %v4629
  %4632 = vrot.lane.b32.xlu0 %v4630, 127
  %v4633 = vpop.permute.xlu0 %4632
  %v4635 = vmul.f32 %v4341, %v4633
  %v4636 = vmul.f32 %v4342, %v4633
  %v4637 = vmul.f32 %v4345, %v4633
  %v4638 = vmul.f32 %v4346, %v4633
  %4639 = vset.pattern.permute.xlu0 3
  %4640 = vperm.xlu0 %4639, %v4362
  %v4641 = vpop.permute.xlu0 %4640
  %4643 = vset.pattern.permute.xlu0 3
  %4644 = vperm.xlu0 %4643, %v4363
  %v4645 = vpop.permute.xlu0 %4644
  %v4647 = vmul.f32 %v4635, %v4641
  %v4648 = vmul.f32 %v4636, %v4641
  %v4649 = vmul.f32 %v4637, %v4645
  %v4650 = vmul.f32 %v4638, %v4645
  %4655 = vrot.lane.b32.xlu0 %v4647, 120
  %v4656 = vpop.permute.xlu0 %4655
  %4657 = vrot.lane.b32.xlu0 %v4648, 120
  %v4658 = vpop.permute.xlu0 %4657
  %4659 = vrot.lane.b32.xlu0 %v4649, 120
  %v4660 = vpop.permute.xlu0 %4659
  %4661 = vrot.lane.b32.xlu0 %v4650, 120
  %v4662 = vpop.permute.xlu0 %4661
  %vm4663 = vcmask 982016
  %v4664 = vsel %vm4663, %v4656, %v4658
  %v4665 = vsel %vm4663, %v4660, %v4662
  %v4670 = vadd.f32 %v4557, %v4664
  %v4671 = vadd.f32 %v4558, %v4658
  %v4672 = vadd.f32 %v4559, %v4665
  %v4673 = vadd.f32 %v4560, %v4662
  %v4674 = vmul.f32 %v4032, %v4633
  %v4675 = vmul.f32 %v4034, %v4633
  %v4676 = vmul.f32 %v4036, %v4633
  %v4677 = vmul.f32 %v4038, %v4633
  %v4678 = vmul.f32 %v4042, %v4633
  %v4679 = vmul.f32 %v4044, %v4633
  %v4680 = vmul.f32 %v4046, %v4633
  %v4681 = vmul.f32 %v4048, %v4633
  %v4682 = vmul.f32 %v4052, %v4633
  %v4683 = vmul.f32 %v4054, %v4633
  %4694 = vrot.lane.b32.xlu0 %v4674, 120
  %v4695 = vpop.permute.xlu0 %4694
  %4696 = vrot.lane.b32.xlu0 %v4675, 120
  %v4697 = vpop.permute.xlu0 %4696
  %4698 = vrot.lane.b32.xlu0 %v4676, 120
  %v4699 = vpop.permute.xlu0 %4698
  %4700 = vrot.lane.b32.xlu0 %v4677, 120
  %v4701 = vpop.permute.xlu0 %4700
  %4702 = vrot.lane.b32.xlu0 %v4678, 120
  %v4703 = vpop.permute.xlu0 %4702
  %4704 = vrot.lane.b32.xlu0 %v4679, 120
  %v4705 = vpop.permute.xlu0 %4704
  %4706 = vrot.lane.b32.xlu0 %v4680, 120
  %v4707 = vpop.permute.xlu0 %4706
  %4708 = vrot.lane.b32.xlu0 %v4681, 120
  %v4709 = vpop.permute.xlu0 %4708
  %4710 = vrot.lane.b32.xlu0 %v4682, 120
  %v4711 = vpop.permute.xlu0 %4710
  %4712 = vrot.lane.b32.xlu0 %v4683, 120
  %v4713 = vpop.permute.xlu0 %4712
  %v4714 = vsel %vm4663, %v4695, %v4697
  %v4715 = vsel %vm4663, %v4699, %v4701
  %v4716 = vsel %vm4663, %v4703, %v4705
  %v4717 = vsel %vm4663, %v4707, %v4709
  %v4718 = vsel %vm4663, %v4711, %v4713
  %v4729 = vadd.f32 %v4616, %v4714
  %v4730 = vadd.f32 %v4617, %v4697
  %v4731 = vadd.f32 %v4618, %v4715
  %v4732 = vadd.f32 %v4619, %v4701
  %v4733 = vadd.f32 %v4620, %v4716
  %v4734 = vadd.f32 %v4621, %v4705
  %v4735 = vadd.f32 %v4622, %v4717
  %v4736 = vadd.f32 %v4623, %v4709
  %v4737 = vadd.f32 %v4624, %v4718
  %v4738 = vadd.f32 %v4625, %v4713
  %v4739 = vld [vmem:[%s49 + $0x4] sm:$0x1]
  %v4740 = vlaneseq
  %v4741 = vshrl.u32 %v4740, 7
  %v4742 = vsub.s32 0, %v4741
  %v4743 = vrot.slane %v4739, %v4742
  %v4744 = vmul.f32 %v4341, %v4743
  %v4745 = vmul.f32 %v4345, %v4743
  %4746 = vset.pattern.permute.xlu0 4
  %4747 = vperm.xlu0 %4746, %v4362
  %v4748 = vpop.permute.xlu0 %4747
  %4750 = vset.pattern.permute.xlu0 4
  %4751 = vperm.xlu0 %4750, %v4363
  %v4752 = vpop.permute.xlu0 %4751
  %v4754 = vmul.f32 %v4744, %v4748
  %v4755 = vmul.f32 %v4745, %v4752
  %4758 = vrot.lane.b32.xlu0 %v4754, 119
  %v4759 = vpop.permute.xlu0 %4758
  %4760 = vrot.lane.b32.xlu0 %v4755, 119
  %v4761 = vpop.permute.xlu0 %4760
  %v4764 = vadd.f32 %v4670, %v4759
  %v4765 = vadd.f32 %v4671, %v4759
  %v4766 = vadd.f32 %v4672, %v4761
  %v4767 = vadd.f32 %v4673, %v4761
  %v4768 = vmul.f32 %v4032, %v4743
  %v4769 = vmul.f32 %v4036, %v4743
  %v4770 = vmul.f32 %v4042, %v4743
  %v4771 = vmul.f32 %v4046, %v4743
  %v4772 = vmul.f32 %v4052, %v4743
  %4778 = vrot.lane.b32.xlu0 %v4768, 119
  %v4779 = vpop.permute.xlu0 %4778
  %4780 = vrot.lane.b32.xlu0 %v4769, 119
  %v4781 = vpop.permute.xlu0 %4780
  %4782 = vrot.lane.b32.xlu0 %v4770, 119
  %v4783 = vpop.permute.xlu0 %4782
  %4784 = vrot.lane.b32.xlu0 %v4771, 119
  %v4785 = vpop.permute.xlu0 %4784
  %4786 = vrot.lane.b32.xlu0 %v4772, 119
  %v4787 = vpop.permute.xlu0 %4786
  %v4793 = vadd.f32 %v4729, %v4779
  %v4794 = vadd.f32 %v4730, %v4779
  %v4795 = vadd.f32 %v4731, %v4781
  %v4796 = vadd.f32 %v4732, %v4781
  %v4797 = vadd.f32 %v4733, %v4783
  %v4798 = vadd.f32 %v4734, %v4783
  %v4799 = vadd.f32 %v4735, %v4785
  %v4800 = vadd.f32 %v4736, %v4785
  %v4801 = vadd.f32 %v4737, %v4787
  %v4802 = vadd.f32 %v4738, %v4787
  %v4803 = vld [vmem:[%s49 + $0x5] sm:$0x1]
  %v4804 = vlaneseq
  %v4805 = vshrl.u32 %v4804, 7
  %v4806 = vsub.s32 0, %v4805
  %v4807 = vrot.slane %v4803, %v4806
  %v4808 = vmul.f32 %v4342, %v4807
  %v4809 = vmul.f32 %v4346, %v4807
  %4810 = vset.pattern.permute.xlu0 5
  %4811 = vperm.xlu0 %4810, %v4362
  %v4812 = vpop.permute.xlu0 %4811
  %4814 = vset.pattern.permute.xlu0 5
  %4815 = vperm.xlu0 %4814, %v4363
  %v4816 = vpop.permute.xlu0 %4815
  %v4818 = vmul.f32 %v4808, %v4812
  %v4819 = vmul.f32 %v4809, %v4816
  %4822 = vrot.lane.b32.xlu0 %v4818, 119
  %v4823 = vpop.permute.xlu0 %4822
  %4824 = vrot.lane.b32.xlu0 %v4819, 119
  %v4825 = vpop.permute.xlu0 %4824
  %v4828 = vadd.f32 %v4764, %v4823
  %v4829 = vadd.f32 %v4765, %v4823
  %v4830 = vadd.f32 %v4766, %v4825
  %v4831 = vadd.f32 %v4767, %v4825
  %v4832 = vmul.f32 %v4034, %v4807
  %v4833 = vmul.f32 %v4038, %v4807
  %v4834 = vmul.f32 %v4044, %v4807
  %v4835 = vmul.f32 %v4048, %v4807
  %v4836 = vmul.f32 %v4054, %v4807
  %4842 = vrot.lane.b32.xlu0 %v4832, 119
  %v4843 = vpop.permute.xlu0 %4842
  %4844 = vrot.lane.b32.xlu0 %v4833, 119
  %v4845 = vpop.permute.xlu0 %4844
  %4846 = vrot.lane.b32.xlu0 %v4834, 119
  %v4847 = vpop.permute.xlu0 %4846
  %4848 = vrot.lane.b32.xlu0 %v4835, 119
  %v4849 = vpop.permute.xlu0 %4848
  %4850 = vrot.lane.b32.xlu0 %v4836, 119
  %v4851 = vpop.permute.xlu0 %4850
  %v4857 = vadd.f32 %v4793, %v4843
  %v4858 = vadd.f32 %v4794, %v4843
  %v4859 = vadd.f32 %v4795, %v4845
  %v4860 = vadd.f32 %v4796, %v4845
  %v4861 = vadd.f32 %v4797, %v4847
  %v4862 = vadd.f32 %v4798, %v4847
  %v4863 = vadd.f32 %v4799, %v4849
  %v4864 = vadd.f32 %v4800, %v4849
  %v4865 = vadd.f32 %v4801, %v4851
  %v4866 = vadd.f32 %v4802, %v4851
  %v4867 = vld [vmem:[%s49 + $0x6] sm:$0x1]
  %v4868 = vlaneseq
  %v4869 = vshrl.u32 %v4868, 7
  %v4870 = vsub.s32 0, %v4869
  %v4871 = vrot.slane %v4867, %v4870
  %4873 = vrot.lane.b32.xlu0 %v4871, 127
  %v4874 = vpop.permute.xlu0 %4873
  %v4876 = vmul.f32 %v4343, %v4874
  %v4877 = vmul.f32 %v4344, %v4874
  %v4878 = vmul.f32 %v4347, %v4874
  %v4879 = vmul.f32 %v4348, %v4874
  %4880 = vset.pattern.permute.xlu0 6
  %4881 = vperm.xlu0 %4880, %v4362
  %v4882 = vpop.permute.xlu0 %4881
  %4884 = vset.pattern.permute.xlu0 6
  %4885 = vperm.xlu0 %4884, %v4363
  %v4886 = vpop.permute.xlu0 %4885
  %v4888 = vmul.f32 %v4876, %v4882
  %v4889 = vmul.f32 %v4877, %v4882
  %v4890 = vmul.f32 %v4878, %v4886
  %v4891 = vmul.f32 %v4879, %v4886
  %4896 = vrot.lane.b32.xlu0 %v4888, 120
  %v4897 = vpop.permute.xlu0 %4896
  %4898 = vrot.lane.b32.xlu0 %v4889, 120
  %v4899 = vpop.permute.xlu0 %4898
  %4900 = vrot.lane.b32.xlu0 %v4890, 120
  %v4901 = vpop.permute.xlu0 %4900
  %4902 = vrot.lane.b32.xlu0 %v4891, 120
  %v4903 = vpop.permute.xlu0 %4902
  %v4904 = vsel %vm4663, %v4897, %v4899
  %v4905 = vsel %vm4663, %v4901, %v4903
  %v4910 = vadd.f32 %v4828, %v4904
  %v4911 = vadd.f32 %v4829, %v4899
  %v4912 = vadd.f32 %v4830, %v4905
  %v4913 = vadd.f32 %v4831, %v4903
  %v4914 = vmul.f32 %v4154, %v4874
  %v4915 = vmul.f32 %v4156, %v4874
  %v4916 = vmul.f32 %v4158, %v4874
  %v4917 = vmul.f32 %v4160, %v4874
  %v4918 = vmul.f32 %v4164, %v4874
  %v4919 = vmul.f32 %v4166, %v4874
  %v4920 = vmul.f32 %v4168, %v4874
  %v4921 = vmul.f32 %v4170, %v4874
  %v4922 = vmul.f32 %v4174, %v4874
  %v4923 = vmul.f32 %v4176, %v4874
  %4934 = vrot.lane.b32.xlu0 %v4914, 120
  %v4935 = vpop.permute.xlu0 %4934
  %4936 = vrot.lane.b32.xlu0 %v4915, 120
  %v4937 = vpop.permute.xlu0 %4936
  %4938 = vrot.lane.b32.xlu0 %v4916, 120
  %v4939 = vpop.permute.xlu0 %4938
  %4940 = vrot.lane.b32.xlu0 %v4917, 120
  %v4941 = vpop.permute.xlu0 %4940
  %4942 = vrot.lane.b32.xlu0 %v4918, 120
  %v4943 = vpop.permute.xlu0 %4942
  %4944 = vrot.lane.b32.xlu0 %v4919, 120
  %v4945 = vpop.permute.xlu0 %4944
  %4946 = vrot.lane.b32.xlu0 %v4920, 120
  %v4947 = vpop.permute.xlu0 %4946
  %4948 = vrot.lane.b32.xlu0 %v4921, 120
  %v4949 = vpop.permute.xlu0 %4948
  %4950 = vrot.lane.b32.xlu0 %v4922, 120
  %v4951 = vpop.permute.xlu0 %4950
  %4952 = vrot.lane.b32.xlu0 %v4923, 120
  %v4953 = vpop.permute.xlu0 %4952
  %v4954 = vsel %vm4663, %v4935, %v4937
  %v4955 = vsel %vm4663, %v4939, %v4941
  %v4956 = vsel %vm4663, %v4943, %v4945
  %v4957 = vsel %vm4663, %v4947, %v4949
  %v4958 = vsel %vm4663, %v4951, %v4953
  %v4969 = vadd.f32 %v4857, %v4954
  %v4970 = vadd.f32 %v4858, %v4937
  %v4971 = vadd.f32 %v4859, %v4955
  %v4972 = vadd.f32 %v4860, %v4941
  %v4973 = vadd.f32 %v4861, %v4956
  %v4974 = vadd.f32 %v4862, %v4945
  %v4975 = vadd.f32 %v4863, %v4957
  %v4976 = vadd.f32 %v4864, %v4949
  %v4977 = vadd.f32 %v4865, %v4958
  %v4978 = vadd.f32 %v4866, %v4953
  %v4979 = vld [vmem:[%s49 + $0x7] sm:$0x1]
  %v4980 = vlaneseq
  %v4981 = vshrl.u32 %v4980, 7
  %v4982 = vsub.s32 0, %v4981
  %v4983 = vrot.slane %v4979, %v4982
  %v4984 = vmul.f32 %v4343, %v4983
  %v4985 = vmul.f32 %v4347, %v4983
  %4986 = vset.pattern.permute.xlu0 7
  %4987 = vperm.xlu0 %4986, %v4362
  %v4988 = vpop.permute.xlu0 %4987
  %4990 = vset.pattern.permute.xlu0 7
  %4991 = vperm.xlu0 %4990, %v4363
  %v4992 = vpop.permute.xlu0 %4991
  %v4994 = vmul.f32 %v4984, %v4988
  %v4995 = vmul.f32 %v4985, %v4992
  %4998 = vrot.lane.b32.xlu0 %v4994, 119
  %v4999 = vpop.permute.xlu0 %4998
  %5000 = vrot.lane.b32.xlu0 %v4995, 119
  %v5001 = vpop.permute.xlu0 %5000
  %v5004 = vadd.f32 %v4910, %v4999
  %v5005 = vadd.f32 %v4911, %v4999
  %v5006 = vadd.f32 %v4912, %v5001
  %v5007 = vadd.f32 %v4913, %v5001
  %v5008 = vmul.f32 %v4154, %v4983
  %v5009 = vmul.f32 %v4158, %v4983
  %v5010 = vmul.f32 %v4164, %v4983
  %v5011 = vmul.f32 %v4168, %v4983
  %v5012 = vmul.f32 %v4174, %v4983
  %5018 = vrot.lane.b32.xlu0 %v5008, 119
  %v5019 = vpop.permute.xlu0 %5018
  %5020 = vrot.lane.b32.xlu0 %v5009, 119
  %v5021 = vpop.permute.xlu0 %5020
  %5022 = vrot.lane.b32.xlu0 %v5010, 119
  %v5023 = vpop.permute.xlu0 %5022
  %5024 = vrot.lane.b32.xlu0 %v5011, 119
  %v5025 = vpop.permute.xlu0 %5024
  %5026 = vrot.lane.b32.xlu0 %v5012, 119
  %v5027 = vpop.permute.xlu0 %5026
  %v5033 = vadd.f32 %v4969, %v5019
  %v5034 = vadd.f32 %v4970, %v5019
  %v5035 = vadd.f32 %v4971, %v5021
  %v5036 = vadd.f32 %v4972, %v5021
  %v5037 = vadd.f32 %v4973, %v5023
  %v5038 = vadd.f32 %v4974, %v5023
  %v5039 = vadd.f32 %v4975, %v5025
  %v5040 = vadd.f32 %v4976, %v5025
  %v5041 = vadd.f32 %v4977, %v5027
  %v5042 = vadd.f32 %v4978, %v5027
  %v5043 = vld [vmem:[%s49 + $0x8] sm:$0x1]
  %v5044 = vlaneseq
  %v5045 = vshrl.u32 %v5044, 7
  %v5046 = vsub.s32 0, %v5045
  %v5047 = vrot.slane %v5043, %v5046
  %v5048 = vmul.f32 %v4344, %v5047
  %v5049 = vmul.f32 %v4348, %v5047
  %5050 = vset.pattern.permute.xlu0 8
  %5051 = vperm.xlu0 %5050, %v4362
  %v5052 = vpop.permute.xlu0 %5051
  %5054 = vset.pattern.permute.xlu0 8
  %5055 = vperm.xlu0 %5054, %v4363
  %v5056 = vpop.permute.xlu0 %5055
  %v5058 = vmul.f32 %v5048, %v5052
  %v5059 = vmul.f32 %v5049, %v5056
  %5062 = vrot.lane.b32.xlu0 %v5058, 119
  %v5063 = vpop.permute.xlu0 %5062
  %5064 = vrot.lane.b32.xlu0 %v5059, 119
  %v5065 = vpop.permute.xlu0 %5064
  %v5068 = vadd.f32 %v5004, %v5063
  %v5069 = vadd.f32 %v5005, %v5063
  %v5070 = vadd.f32 %v5006, %v5065
  %v5071 = vadd.f32 %v5007, %v5065
  %v5072 = vmul.f32 %v4156, %v5047
  %v5073 = vmul.f32 %v4160, %v5047
  %v5074 = vmul.f32 %v4166, %v5047
  %v5075 = vmul.f32 %v4170, %v5047
  %v5076 = vmul.f32 %v4176, %v5047
  %5082 = vrot.lane.b32.xlu0 %v5072, 119
  %v5083 = vpop.permute.xlu0 %5082
  %5084 = vrot.lane.b32.xlu0 %v5073, 119
  %v5085 = vpop.permute.xlu0 %5084
  %5086 = vrot.lane.b32.xlu0 %v5074, 119
  %v5087 = vpop.permute.xlu0 %5086
  %5088 = vrot.lane.b32.xlu0 %v5075, 119
  %v5089 = vpop.permute.xlu0 %5088
  %5090 = vrot.lane.b32.xlu0 %v5076, 119
  %v5091 = vpop.permute.xlu0 %5090
  %v5097 = vadd.f32 %v5033, %v5083
  %v5098 = vadd.f32 %v5034, %v5083
  %v5099 = vadd.f32 %v5035, %v5085
  %v5100 = vadd.f32 %v5036, %v5085
  %v5101 = vadd.f32 %v5037, %v5087
  %v5102 = vadd.f32 %v5038, %v5087
  %v5103 = vadd.f32 %v5039, %v5089
  %v5104 = vadd.f32 %v5040, %v5089
  %v5105 = vadd.f32 %v5041, %v5091
  %v5106 = vadd.f32 %v5042, %v5091
  %v5107 = vld [vmem:[%s39] sm:$0xff]
  %v5108 = vld [vmem:[%s39 + $0x8] sm:$0x3]
  %5110 = vset.pattern.permute.xlu0 0
  %5111 = vperm.xlu0 %5110, %v5107
  %v5112 = vpop.permute.xlu0 %5111
  %5115 = vset.pattern.permute.xlu0 0
  %5116 = vperm.xlu0 %5115, %v5108
  %v5117 = vpop.permute.xlu0 %5116
  %v5119 = vmul.f32 %v5068, %v5112
  %v5120 = vmul.f32 %v5069, %v5112
  %v5121 = vmul.f32 %v5070, %v5117
  %v5122 = vmul.f32 %v5071, %v5117
  %v5123 = vld [vmem:[%s41] sm:$0xff]
  %v5124 = vld [vmem:[%s41 + $0x8] sm:$0x3]
  %5126 = vset.pattern.permute.xlu0 0
  %5127 = vperm.xlu0 %5126, %v5123
  %v5128 = vpop.permute.xlu0 %5127
  %5131 = vset.pattern.permute.xlu0 0
  %5132 = vperm.xlu0 %5131, %v5124
  %v5133 = vpop.permute.xlu0 %5132
  %v5135 = vadd.f32 %v5119, %v5128
  %v5136 = vadd.f32 %v5120, %v5128
  %v5137 = vadd.f32 %v5121, %v5133
  %v5138 = vadd.f32 %v5122, %v5133
  %v5139 = vmax.f32 %v5135, 0.0
  %v5140 = vmax.f32 %v5136, 0.0
  %v5141 = vmax.f32 %v5137, 0.0
  %v5142 = vmax.f32 %v5138, 0.0
  %v5143 = vmul.f32 %v5097, 0.11111111
  %v5144 = vmul.f32 %v5098, 0.11111111
  %v5145 = vmul.f32 %v5099, 0.11111111
  %v5146 = vmul.f32 %v5100, 0.11111111
  %v5147 = vmul.f32 %v5101, 0.11111111
  %v5148 = vmul.f32 %v5102, 0.11111111
  %v5149 = vmul.f32 %v5103, 0.11111111
  %v5150 = vmul.f32 %v5104, 0.11111111
  %v5151 = vmul.f32 %v5105, 0.11111111
  %v5152 = vmul.f32 %v5106, 0.11111111
  %v5153 = vmax.f32 %v5143, 0.0
  %v5154 = vmax.f32 %v5144, 0.0
  %v5155 = vmax.f32 %v5145, 0.0
  %v5156 = vmax.f32 %v5146, 0.0
  %v5157 = vmax.f32 %v5147, 0.0
  %v5158 = vmax.f32 %v5148, 0.0
  %v5159 = vmax.f32 %v5149, 0.0
  %v5160 = vmax.f32 %v5150, 0.0
  %v5161 = vmax.f32 %v5151, 0.0
  %v5162 = vmax.f32 %v5152, 0.0
  %v5163 = vld [vmem:[%s43] sm:$0xf]
  %v5164 = vld [vmem:[%s43 + $0x4] sm:$0xf]
  %v5165 = vld [vmem:[%s43 + $0x8] sm:$0xf]
  %v5166 = vld [vmem:[%s43 + $0xc] sm:$0xf]
  %v5167 = vld [vmem:[%s43 + $0x10] sm:$0xf]
  %v5168 = vpack.c.bf16 %v5141, %v5139
  %v5169 = vpack.c.bf16 %v5142, %v5140
  %v5175 = vunpack.c.l.b16 %v5163
  %v5176 = vunpack.c.l.b16 %v5164
  %v5177 = vunpack.c.l.b16 %v5165
  %v5178 = vunpack.c.l.b16 %v5166
  %v5179 = vunpack.c.l.b16 %v5167
  %v5180 = vpack.c.b16 %v5176, %v5175
  %v5181 = vpack.c.b16 %v5178, %v5177
  %v5182 = vpack.c.b16 %v5179, %v5179
  %5185 = vrot.lane.b32.xlu0 %v5168, 9
  %v5186 = vpop.permute.xlu0 %5185
  %5187 = vrot.lane.b32.xlu0 %v5169, 9
  %v5188 = vpop.permute.xlu0 %5187
  %vm5189 = vcmask 72704
  %v5190 = vsel %vm5189, %v5186, %v5188
  %vm5191 = vcmask 80896
  %v5193 = vsel %vm5191, %v5180, 0
  %v5196 = vsel %vm5191, %v5181, 0
  %v5199 = vsel %vm5191, %v5182, 0
  %vm5201 = vcmask 1044480
  %v5203 = vsel %vm5201, %v5190, 0
  %5205 = vmatprep.subr.bf16.mxu0 0
  %5206 = vmatpush1.bf16.msra.mxu0 0
  %5207 = vmatprep.subr.bf16.mxu0 0
  %5208 = vmatpush1.bf16.msra.mxu0 0
  %5209 = vmatprep.subr.bf16.mxu0 0
  %5210 = vmatpush1.bf16.msra.mxu0 0
  %5211 = vmatprep.subr.bf16.mxu0 0
  %5212 = vmatpush1.bf16.msra.mxu0 0
  %5213 = vmatprep.subr.bf16.mxu0 0
  %5214 = vmatpush1.bf16.msra.mxu0 0
  %5215 = vmatprep.subr.bf16.mxu0 0
  %5216 = vmatpush1.bf16.msra.mxu0 0
  %5217 = vmatprep.subr.bf16.mxu0 0
  %5218 = vmatpush1.bf16.msra.mxu0 0
  %5219 = vmatprep.subr.bf16.mxu0 0
  %5220 = vmatpush1.bf16.msra.mxu0 %v5203
  %5221 = vmatprep.subr.bf16.mxu0 0
  %5222 = vmatpush2.bf16.msra.mxu0 0
  %5223 = vmatprep.subr.bf16.mxu0 0
  %5224 = vmatpush2.bf16.msra.mxu0 0
  %5225 = vmatprep.subr.bf16.mxu0 0
  %5226 = vmatpush2.bf16.msra.mxu0 0
  %5227 = vmatprep.subr.bf16.mxu0 0
  %5228 = vmatpush2.bf16.msra.mxu0 0
  %5229 = vmatprep.subr.bf16.mxu0 0
  %5230 = vmatpush2.bf16.msra.mxu0 0
  %5231 = vmatprep.subr.bf16.mxu0 0
  %5232 = vmatpush2.bf16.msra.mxu0 0
  %5233 = vmatprep.subr.bf16.mxu0 0
  %5234 = vmatpush2.bf16.msra.mxu0 0
  %5235 = vmatprep.subr.bf16.mxu0 0
  %5236 = vmatpush2.bf16.msra.mxu0 0
  %5237 = vmatprep.mubr.bf16.mxu0 0
  %5238 = vmatmul.mubr.bf16.gmra.mxu0 %v5193
  %v5239 = vpop.f32.mrf.mxu0
  %v5240 = vadd.f32 0.0, %v5239
  %v5241 = vpop.f32.mrf.mxu0
  %v5242 = vpop.f32.mrf.mxu0
  %v5243 = vadd.f32 0.0, %v5242
  %v5244 = vpop.f32.mrf.mxu0
  %5245 = vmatprep.mubr.bf16.mxu0 0
  %5246 = vmatmul.mubr.bf16.gmra.mxu0 %v5196
  %v5247 = vpop.f32.mrf.mxu0
  %v5248 = vadd.f32 0.0, %v5247
  %v5249 = vpop.f32.mrf.mxu0
  %v5250 = vpop.f32.mrf.mxu0
  %v5251 = vadd.f32 0.0, %v5250
  %v5252 = vpop.f32.mrf.mxu0
  %5253 = vmatprep.mubr.bf16.mxu0 0
  %5254 = vmatmul.mubr.bf16.gmra.mxu0 %v5199
  %v5255 = vpop.f32.mrf.mxu0
  %v5256 = vadd.f32 0.0, %v5255
  %v5257 = vpop.f32.mrf.mxu0
  %v5258 = vpop.f32.mrf.mxu0
  %v5259 = vpop.f32.mrf.mxu0
  %5260 = vdwg.mxu0
  %v5261 = vld [vmem:[%s45] sm:$0xff]
  %v5262 = vld [vmem:[%s45 + $0x8] sm:$0xff]
  %v5263 = vld [vmem:[%s45 + $0x10] sm:$0xff]
  %v5264 = vld [vmem:[%s45 + $0x18] sm:$0xff]
  %v5265 = vld [vmem:[%s45 + $0x20] sm:$0xff]
  %5267 = vset.pattern.permute.xlu0 0
  %5268 = vperm.xlu0 %5267, %v5261
  %v5269 = vpop.permute.xlu0 %5268
  %5272 = vset.pattern.permute.xlu0 0
  %5273 = vperm.xlu0 %5272, %v5262
  %v5274 = vpop.permute.xlu0 %5273
  %5277 = vset.pattern.permute.xlu0 0
  %5278 = vperm.xlu0 %5277, %v5263
  %v5279 = vpop.permute.xlu0 %5278
  %5282 = vset.pattern.permute.xlu0 0
  %5283 = vperm.xlu0 %5282, %v5264
  %v5284 = vpop.permute.xlu0 %5283
  %5287 = vset.pattern.permute.xlu0 0
  %5288 = vperm.xlu0 %5287, %v5265
  %v5289 = vpop.permute.xlu0 %5288
  %v5291 = vmul.f32 %v5240, %v5269
  %v5292 = vmul.f32 %v5243, %v5274
  %v5293 = vmul.f32 %v5248, %v5279
  %v5294 = vmul.f32 %v5251, %v5284
  %v5295 = vmul.f32 %v5256, %v5289
  %v5296 = vld [vmem:[%s47] sm:$0xff]
  %v5297 = vld [vmem:[%s47 + $0x8] sm:$0xff]
  %v5298 = vld [vmem:[%s47 + $0x10] sm:$0xff]
  %v5299 = vld [vmem:[%s47 + $0x18] sm:$0xff]
  %v5300 = vld [vmem:[%s47 + $0x20] sm:$0xff]
  %5302 = vset.pattern.permute.xlu0 0
  %5303 = vperm.xlu0 %5302, %v5296
  %v5304 = vpop.permute.xlu0 %5303
  %5307 = vset.pattern.permute.xlu0 0
  %5308 = vperm.xlu0 %5307, %v5297
  %v5309 = vpop.permute.xlu0 %5308
  %5312 = vset.pattern.permute.xlu0 0
  %5313 = vperm.xlu0 %5312, %v5298
  %v5314 = vpop.permute.xlu0 %5313
  %5317 = vset.pattern.permute.xlu0 0
  %5318 = vperm.xlu0 %5317, %v5299
  %v5319 = vpop.permute.xlu0 %5318
  %5322 = vset.pattern.permute.xlu0 0
  %5323 = vperm.xlu0 %5322, %v5300
  %v5324 = vpop.permute.xlu0 %5323
  %v5326 = vadd.f32 %v5291, %v5304
  %v5327 = vadd.f32 %v5292, %v5309
  %v5328 = vadd.f32 %v5293, %v5314
  %v5329 = vadd.f32 %v5294, %v5319
  %v5330 = vadd.f32 %v5295, %v5324
  %v5331 = vmax.f32 %v5326, 0.0
  %v5332 = vmax.f32 %v5327, 0.0
  %v5333 = vmax.f32 %v5328, 0.0
  %v5334 = vmax.f32 %v5329, 0.0
  %v5335 = vmax.f32 %v5330, 0.0
  %5336 = vst [vmem:[#allocation2] sm:$0xff] %v5331
  %5337 = vst [vmem:[#allocation2 + $0x20] sm:$0xff] %v5332
  %5338 = vst [vmem:[#allocation2 + $0x40] sm:$0xff] %v5333
  %5339 = vst [vmem:[#allocation2 + $0x60] sm:$0xff] %v5334
  %5340 = vst [vmem:[#allocation2 + $0x80] sm:$0xff] %v5335
  %5351 = vrot.lane.b32.xlu0 %v5153, 9
  %v5352 = vpop.permute.xlu0 %5351
  %5353 = vrot.lane.b32.xlu0 %v5154, 9
  %v5354 = vpop.permute.xlu0 %5353
  %5355 = vrot.lane.b32.xlu0 %v5155, 9
  %v5356 = vpop.permute.xlu0 %5355
  %5357 = vrot.lane.b32.xlu0 %v5156, 9
  %v5358 = vpop.permute.xlu0 %5357
  %5359 = vrot.lane.b32.xlu0 %v5157, 9
  %v5360 = vpop.permute.xlu0 %5359
  %5361 = vrot.lane.b32.xlu0 %v5158, 9
  %v5362 = vpop.permute.xlu0 %5361
  %5363 = vrot.lane.b32.xlu0 %v5159, 9
  %v5364 = vpop.permute.xlu0 %5363
  %5365 = vrot.lane.b32.xlu0 %v5160, 9
  %v5366 = vpop.permute.xlu0 %5365
  %5367 = vrot.lane.b32.xlu0 %v5161, 9
  %v5368 = vpop.permute.xlu0 %5367
  %5369 = vrot.lane.b32.xlu0 %v5162, 9
  %v5370 = vpop.permute.xlu0 %5369
  %vm5371 = vcmask 72704
  %v5372 = vsel %vm5371, %v5352, %v5354
  %v5373 = vsel %vm5371, %v5356, %v5358
  %v5374 = vsel %vm5371, %v5360, %v5362
  %v5375 = vsel %vm5371, %v5364, %v5366
  %v5376 = vsel %vm5371, %v5368, %v5370
  %5382 = vst [vmem:[#allocation2 + $0xa0] sm:$0xff] %v5372
  %5383 = vst [vmem:[#allocation2 + $0xc0] sm:$0xff] %v5373
  %5384 = vst [vmem:[#allocation2 + $0xe0] sm:$0xff] %v5374
  %5385 = vst [vmem:[#allocation2 + $0x100] sm:$0xff] %v5375
  %5386 = vst [vmem:[#allocation2 + $0x120] sm:$0xff] %v5376
  %v5387 = vld [vmem:[#allocation2] sm:$0xff]
  %v5388 = vld [vmem:[#allocation2 + $0x20] sm:$0xff]
  %v5389 = vld [vmem:[#allocation2 + $0x40] sm:$0xff]
  %v5390 = vld [vmem:[#allocation2 + $0x60] sm:$0xff]
  %v5391 = vld [vmem:[#allocation2 + $0x80] sm:$0xff]
  %v5392 = vld [vmem:[#allocation2 + $0xa0] sm:$0xff]
  %v5393 = vld [vmem:[#allocation2 + $0xc0] sm:$0xff]
  %v5394 = vld [vmem:[#allocation2 + $0xe0] sm:$0xff]
  %v5395 = vld [vmem:[#allocation2 + $0x100] sm:$0xff]
  %v5396 = vld [vmem:[#allocation2 + $0x120] sm:$0xff]
  %v5397 = vpack.c.bf16 %v5388, %v5387
  %v5398 = vpack.c.bf16 %v5390, %v5389
  %v5399 = vpack.c.bf16 %v5392, %v5391
  %v5400 = vpack.c.bf16 %v5394, %v5393
  %v5401 = vpack.c.bf16 %v5396, %v5395
  %5402 = vst [vmem:[#allocation3] sm:$0xff] 0
  %5403 = vst [vmem:[#allocation3 + $0x8] sm:$0xf] 0
  %5404 = vst [vmem:[#allocation3 + $0xc] sm:$0xff] 0
  %5405 = vst [vmem:[#allocation3 + $0x14] sm:$0xf] 0
  %5406 = vst [vmem:[#allocation3 + $0x18] sm:$0xff] 0
  %5407 = vst [vmem:[#allocation3 + $0x20] sm:$0xf] 0
  %5408 = vst [vmem:[#allocation3 + $0x24] sm:$0xff] 0
  %5409 = vst [vmem:[#allocation3 + $0x2c] sm:$0xf] 0
  %5410 = vst [vmem:[#allocation3 + $0x30] sm:$0xff] 0
  %5411 = vst [vmem:[#allocation3 + $0x38] sm:$0xf] 0
  %5412 = vst [vmem:[#allocation3 + $0x3c] sm:$0xff] 0
  %5413 = vst [vmem:[#allocation3 + $0x44] sm:$0xf] 0
  %5414 = vst [vmem:[#allocation3 + $0x48] sm:$0xff] 0
  %5415 = vst [vmem:[#allocation3 + $0x50] sm:$0xf] 0
  %5416 = vst [vmem:[#allocation3 + $0x54] sm:$0xff] 0
  %5417 = vst [vmem:[#allocation3 + $0x5c] sm:$0xf] 0
  %5418 = vst [vmem:[#allocation3 + $0x60] sm:$0xff] 0
  %5419 = vst [vmem:[#allocation3 + $0x68] sm:$0xf] 0
  %5420 = vst [vmem:[#allocation3 + $0x6c] sm:$0xff] 0
  %5421 = vst [vmem:[#allocation3 + $0x74] sm:$0xf] 0
  %v5427 = vunpack.c.l.b16 %v5397
  %v5428 = vunpack.c.h.b16 %v5397
  %v5429 = vunpack.c.l.b16 %v5398
  %v5430 = vunpack.c.h.b16 %v5398
  %v5431 = vunpack.c.l.b16 %v5399
  %v5432 = vunpack.c.h.b16 %v5399
  %v5433 = vunpack.c.l.b16 %v5400
  %v5434 = vunpack.c.h.b16 %v5400
  %v5435 = vunpack.c.l.b16 %v5401
  %v5436 = vunpack.c.h.b16 %v5401
  %v5437 = vpack.c.b16 %v5427, %v5427
  %v5438 = vpack.c.b16 %v5428, %v5428
  %v5439 = vpack.c.b16 %v5429, %v5429
  %v5440 = vpack.c.b16 %v5430, %v5430
  %v5441 = vpack.c.b16 %v5431, %v5431
  %v5442 = vpack.c.b16 %v5432, %v5432
  %v5443 = vpack.c.b16 %v5433, %v5433
  %v5444 = vpack.c.b16 %v5434, %v5434
  %v5445 = vpack.c.b16 %v5435, %v5435
  %v5446 = vpack.c.b16 %v5436, %v5436
  %5457 = vst [vmem:[#allocation3 + $0x4] sm:$0xf] %v5437
  %5458 = vst [vmem:[#allocation3 + $0x10] sm:$0xf] %v5438
  %5459 = vst [vmem:[#allocation3 + $0x1c] sm:$0xf] %v5439
  %5460 = vst [vmem:[#allocation3 + $0x28] sm:$0xf] %v5440
  %5461 = vst [vmem:[#allocation3 + $0x34] sm:$0xf] %v5441
  %5462 = vst [vmem:[#allocation3 + $0x40] sm:$0xf] %v5442
  %5463 = vst [vmem:[#allocation3 + $0x4c] sm:$0xf] %v5443
  %5464 = vst [vmem:[#allocation3 + $0x58] sm:$0xf] %v5444
  %5465 = vst [vmem:[#allocation3 + $0x64] sm:$0xf] %v5445
  %5466 = vst [vmem:[#allocation3 + $0x70] sm:$0xf] %v5446
  %v5467 = vld [vmem:[#allocation3] sm:$0xff]
  %v5468 = vld [vmem:[#allocation3 + $0x8] sm:$0xf]
  %v5469 = vld [vmem:[#allocation3 + $0xc] sm:$0xff]
  %v5470 = vld [vmem:[#allocation3 + $0x14] sm:$0xf]
  %v5471 = vld [vmem:[#allocation3 + $0x18] sm:$0xff]
  %v5472 = vld [vmem:[#allocation3 + $0x20] sm:$0xf]
  %v5473 = vld [vmem:[#allocation3 + $0x24] sm:$0xff]
  %v5474 = vld [vmem:[#allocation3 + $0x2c] sm:$0xf]
  %v5475 = vld [vmem:[#allocation3 + $0x30] sm:$0xff]
  %v5476 = vld [vmem:[#allocation3 + $0x38] sm:$0xf]
  %v5477 = vld [vmem:[#allocation3 + $0x3c] sm:$0xff]
  %v5478 = vld [vmem:[#allocation3 + $0x44] sm:$0xf]
  %v5479 = vld [vmem:[#allocation3 + $0x48] sm:$0xff]
  %v5480 = vld [vmem:[#allocation3 + $0x50] sm:$0xf]
  %v5481 = vld [vmem:[#allocation3 + $0x54] sm:$0xff]
  %v5482 = vld [vmem:[#allocation3 + $0x5c] sm:$0xf]
  %v5483 = vld [vmem:[#allocation3 + $0x60] sm:$0xff]
  %v5484 = vld [vmem:[#allocation3 + $0x68] sm:$0xf]
  %v5485 = vld [vmem:[#allocation3 + $0x6c] sm:$0xff]
  %v5486 = vld [vmem:[#allocation3 + $0x74] sm:$0xf]
  %v5487 = vld [vmem:[%s51] sm:$0xf]
  %v5488 = vld [vmem:[%s51 + $0x4] sm:$0xf]
  %v5489 = vld [vmem:[%s51 + $0x8] sm:$0x3]
  %v5493 = vunpack.c.l.b16 %v5487
  %v5494 = vunpack.c.l.b16 %v5488
  %v5495 = vunpack.c.l.b16 %v5489
  %v5496 = vpack.c.b16 %v5494, %v5493
  %v5497 = vpack.c.b16 %v5495, %v5495
  %v5518 = vunpack.c.l.b16 %v5467
  %v5519 = vunpack.c.h.b16 %v5467
  %v5520 = vunpack.c.l.b16 %v5468
  %v5521 = vunpack.c.l.b16 %v5469
  %v5522 = vunpack.c.h.b16 %v5469
  %v5523 = vunpack.c.l.b16 %v5470
  %v5524 = vunpack.c.l.b16 %v5471
  %v5525 = vunpack.c.h.b16 %v5471
  %v5526 = vunpack.c.l.b16 %v5472
  %v5527 = vunpack.c.l.b16 %v5473
  %v5528 = vunpack.c.h.b16 %v5473
  %v5529 = vunpack.c.l.b16 %v5474
  %v5530 = vunpack.c.l.b16 %v5475
  %v5531 = vunpack.c.h.b16 %v5475
  %v5532 = vunpack.c.l.b16 %v5476
  %v5533 = vunpack.c.l.b16 %v5477
  %v5534 = vunpack.c.h.b16 %v5477
  %v5535 = vunpack.c.l.b16 %v5478
  %v5536 = vunpack.c.l.b16 %v5479
  %v5537 = vunpack.c.h.b16 %v5479
  %v5538 = vunpack.c.l.b16 %v5480
  %v5539 = vunpack.c.l.b16 %v5481
  %v5540 = vunpack.c.h.b16 %v5481
  %v5541 = vunpack.c.l.b16 %v5482
  %v5542 = vunpack.c.l.b16 %v5483
  %v5543 = vunpack.c.h.b16 %v5483
  %v5544 = vunpack.c.l.b16 %v5484
  %v5545 = vunpack.c.l.b16 %v5485
  %v5546 = vunpack.c.h.b16 %v5485
  %v5547 = vunpack.c.l.b16 %v5486
  %v5548 = vpack.c.b16 %v5521, %v5518
  %v5549 = vpack.c.b16 %v5522, %v5519
  %v5550 = vpack.c.b16 %v5523, %v5520
  %v5551 = vpack.c.b16 %v5527, %v5524
  %v5552 = vpack.c.b16 %v5528, %v5525
  %v5553 = vpack.c.b16 %v5529, %v5526
  %v5554 = vpack.c.b16 %v5533, %v5530
  %v5555 = vpack.c.b16 %v5534, %v5531
  %v5556 = vpack.c.b16 %v5535, %v5532
  %v5557 = vpack.c.b16 %v5539, %v5536
  %v5558 = vpack.c.b16 %v5540, %v5537
  %v5559 = vpack.c.b16 %v5541, %v5538
  %v5560 = vpack.c.b16 %v5545, %v5542
  %v5561 = vpack.c.b16 %v5546, %v5543
  %v5562 = vpack.c.b16 %v5547, %v5544
  %vm5578 = vcmask 654336
  %v5580 = vsel %vm5578, %v5496, 0
  %v5583 = vsel %vm5578, %v5497, 0
  %5585 = vmatprep.subr.bf16.mxu0 0
  %5586 = vmatpush1.bf16.msra.mxu0 0
  %5587 = vmatprep.subr.bf16.mxu0 0
  %5588 = vmatpush1.bf16.msra.mxu0 0
  %5589 = vmatprep.subr.bf16.mxu0 0
  %5590 = vmatpush1.bf16.msra.mxu0 0
  %5591 = vmatprep.subr.bf16.mxu0 %v5561
  %5592 = vmatpush1.bf16.msra.mxu0 %v5560
  %5593 = vmatprep.subr.bf16.mxu0 %v5558
  %5594 = vmatpush1.bf16.msra.mxu0 %v5557
  %5595 = vmatprep.subr.bf16.mxu0 %v5555
  %5596 = vmatpush1.bf16.msra.mxu0 %v5554
  %5597 = vmatprep.subr.bf16.mxu0 %v5552
  %5598 = vmatpush1.bf16.msra.mxu0 %v5551
  %5599 = vmatprep.subr.bf16.mxu0 %v5549
  %5600 = vmatpush1.bf16.msra.mxu0 %v5548
  %5601 = vmatprep.subr.bf16.mxu0 0
  %5602 = vmatpush2.bf16.msra.mxu0 0
  %5603 = vmatprep.subr.bf16.mxu0 0
  %5604 = vmatpush2.bf16.msra.mxu0 0
  %5605 = vmatprep.subr.bf16.mxu0 0
  %5606 = vmatpush2.bf16.msra.mxu0 0
  %5607 = vmatprep.subr.bf16.mxu0 0
  %5608 = vmatpush2.bf16.msra.mxu0 0
  %5609 = vmatprep.subr.bf16.mxu0 0
  %5610 = vmatpush2.bf16.msra.mxu0 0
  %5611 = vmatprep.subr.bf16.mxu0 0
  %5612 = vmatpush2.bf16.msra.mxu0 0
  %5613 = vmatprep.subr.bf16.mxu0 0
  %5614 = vmatpush2.bf16.msra.mxu0 0
  %5615 = vmatprep.subr.bf16.mxu0 0
  %5616 = vmatpush2.bf16.msra.mxu0 0
  %5617 = vmatprep.mubr.bf16.mxu0 0
  %5618 = vmatmul.mubr.bf16.gmra.mxu0 %v5580
  %v5619 = vpop.f32.mrf.mxu0
  %v5620 = vadd.f32 0.0, %v5619
  %v5621 = vpop.f32.mrf.mxu0
  %v5622 = vadd.f32 0.0, %v5621
  %v5623 = vpop.f32.mrf.mxu0
  %v5624 = vadd.f32 0.0, %v5623
  %v5625 = vpop.f32.mrf.mxu0
  %v5626 = vadd.f32 0.0, %v5625
  %5627 = vmatprep.mubr.bf16.mxu0 0
  %5628 = vmatmul.mubr.bf16.gmra.mxu0 %v5583
  %v5629 = vpop.f32.mrf.mxu0
  %v5630 = vadd.f32 0.0, %v5629
  %v5631 = vpop.f32.mrf.mxu0
  %v5632 = vadd.f32 0.0, %v5631
  %v5633 = vpop.f32.mrf.mxu0
  %v5634 = vpop.f32.mrf.mxu0
  %5635 = vdwg.mxu0
  %5636 = vmatprep.subr.bf16.mxu0 0
  %5637 = vmatpush1.bf16.msra.mxu0 0
  %5638 = vmatprep.subr.bf16.mxu0 0
  %5639 = vmatpush1.bf16.msra.mxu0 0
  %5640 = vmatprep.subr.bf16.mxu0 0
  %5641 = vmatpush1.bf16.msra.mxu0 0
  %5642 = vmatprep.subr.bf16.mxu0 0
  %5643 = vmatpush1.bf16.msra.mxu0 %v5562
  %5644 = vmatprep.subr.bf16.mxu0 0
  %5645 = vmatpush1.bf16.msra.mxu0 %v5559
  %5646 = vmatprep.subr.bf16.mxu0 0
  %5647 = vmatpush1.bf16.msra.mxu0 %v5556
  %5648 = vmatprep.subr.bf16.mxu0 0
  %5649 = vmatpush1.bf16.msra.mxu0 %v5553
  %5650 = vmatprep.subr.bf16.mxu0 0
  %5651 = vmatpush1.bf16.msra.mxu0 %v5550
  %5652 = vmatprep.subr.bf16.mxu0 0
  %5653 = vmatpush2.bf16.msra.mxu0 0
  %5654 = vmatprep.subr.bf16.mxu0 0
  %5655 = vmatpush2.bf16.msra.mxu0 0
  %5656 = vmatprep.subr.bf16.mxu0 0
  %5657 = vmatpush2.bf16.msra.mxu0 0
  %5658 = vmatprep.subr.bf16.mxu0 0
  %5659 = vmatpush2.bf16.msra.mxu0 0
  %5660 = vmatprep.subr.bf16.mxu0 0
  %5661 = vmatpush2.bf16.msra.mxu0 0
  %5662 = vmatprep.subr.bf16.mxu0 0
  %5663 = vmatpush2.bf16.msra.mxu0 0
  %5664 = vmatprep.subr.bf16.mxu0 0
  %5665 = vmatpush2.bf16.msra.mxu0 0
  %5666 = vmatprep.subr.bf16.mxu0 0
  %5667 = vmatpush2.bf16.msra.mxu0 0
  %5668 = vmatprep.mubr.bf16.mxu0 0
  %5669 = vmatmul.mubr.bf16.gmra.mxu0 %v5580
  %v5670 = vpop.f32.mrf.mxu0
  %v5671 = vadd.f32 0.0, %v5670
  %v5672 = vpop.f32.mrf.mxu0
  %v5673 = vpop.f32.mrf.mxu0
  %v5674 = vadd.f32 0.0, %v5673
  %v5675 = vpop.f32.mrf.mxu0
  %5676 = vmatprep.mubr.bf16.mxu0 0
  %5677 = vmatmul.mubr.bf16.gmra.mxu0 %v5583
  %v5678 = vpop.f32.mrf.mxu0
  %v5679 = vadd.f32 0.0, %v5678
  %v5680 = vpop.f32.mrf.mxu0
  %v5681 = vpop.f32.mrf.mxu0
  %v5682 = vpop.f32.mrf.mxu0
  %5683 = vdwg.mxu0
  %v5684 = vld [vmem:[%s53] sm:$0xff]
  %v5685 = vld [vmem:[%s53 + $0x8] sm:$0xff]
  %v5686 = vld [vmem:[%s53 + $0x10] sm:$0xf]
  %5688 = vset.pattern.permute.xlu0 0
  %5689 = vperm.xlu0 %5688, %v5684
  %v5690 = vpop.permute.xlu0 %5689
  %5693 = vset.pattern.permute.xlu0 0
  %5694 = vperm.xlu0 %5693, %v5685
  %v5695 = vpop.permute.xlu0 %5694
  %5698 = vset.pattern.permute.xlu0 0
  %5699 = vperm.xlu0 %5698, %v5686
  %v5700 = vpop.permute.xlu0 %5699
  %v5702 = vmul.f32 %v5620, %v5690
  %v5703 = vmul.f32 %v5622, %v5690
  %v5704 = vmul.f32 %v5671, %v5690
  %v5705 = vmul.f32 %v5624, %v5695
  %v5706 = vmul.f32 %v5626, %v5695
  %v5707 = vmul.f32 %v5674, %v5695
  %v5708 = vmul.f32 %v5630, %v5700
  %v5709 = vmul.f32 %v5632, %v5700
  %v5710 = vmul.f32 %v5679, %v5700
  %v5711 = vld [vmem:[%s55] sm:$0xff]
  %v5712 = vld [vmem:[%s55 + $0x8] sm:$0xff]
  %v5713 = vld [vmem:[%s55 + $0x10] sm:$0xf]
  %5715 = vset.pattern.permute.xlu0 0
  %5716 = vperm.xlu0 %5715, %v5711
  %v5717 = vpop.permute.xlu0 %5716
  %5720 = vset.pattern.permute.xlu0 0
  %5721 = vperm.xlu0 %5720, %v5712
  %v5722 = vpop.permute.xlu0 %5721
  %5725 = vset.pattern.permute.xlu0 0
  %5726 = vperm.xlu0 %5725, %v5713
  %v5727 = vpop.permute.xlu0 %5726
  %v5729 = vadd.f32 %v5702, %v5717
  %v5730 = vadd.f32 %v5703, %v5717
  %v5731 = vadd.f32 %v5704, %v5717
  %v5732 = vadd.f32 %v5705, %v5722
  %v5733 = vadd.f32 %v5706, %v5722
  %v5734 = vadd.f32 %v5707, %v5722
  %v5735 = vadd.f32 %v5708, %v5727
  %v5736 = vadd.f32 %v5709, %v5727
  %v5737 = vadd.f32 %v5710, %v5727
  %v5738 = vmax.f32 %v5729, 0.0
  %v5739 = vmax.f32 %v5730, 0.0
  %v5740 = vmax.f32 %v5731, 0.0
  %v5741 = vmax.f32 %v5732, 0.0
  %v5742 = vmax.f32 %v5733, 0.0
  %v5743 = vmax.f32 %v5734, 0.0
  %v5744 = vmax.f32 %v5735, 0.0
  %v5745 = vmax.f32 %v5736, 0.0
  %v5746 = vmax.f32 %v5737, 0.0
  %v5747 = vld [vmem:[%s69] sm:$0x1]
  %v5748 = vlaneseq
  %v5749 = vshrl.u32 %v5748, 7
  %v5750 = vsub.s32 0, %v5749
  %v5751 = vrot.slane %v5747, %v5750
  %5753 = vrot.lane.b32.xlu0 %v5751, 119
  %v5754 = vpop.permute.xlu0 %5753
  %v5756 = vmul.f32 %v5738, %v5754
  %v5757 = vmul.f32 %v5739, %v5754
  %v5758 = vmul.f32 %v5741, %v5754
  %v5759 = vmul.f32 %v5742, %v5754
  %v5760 = vmul.f32 %v5744, %v5754
  %v5761 = vmul.f32 %v5745, %v5754
  %v5762 = vld [vmem:[%s57] sm:$0xff]
  %v5763 = vld [vmem:[%s57 + $0x8] sm:$0xff]
  %v5764 = vld [vmem:[%s57 + $0x10] sm:$0xf]
  %5766 = vset.pattern.permute.xlu0 0
  %5767 = vperm.xlu0 %5766, %v5762
  %v5768 = vpop.permute.xlu0 %5767
  %5771 = vset.pattern.permute.xlu0 0
  %5772 = vperm.xlu0 %5771, %v5763
  %v5773 = vpop.permute.xlu0 %5772
  %5776 = vset.pattern.permute.xlu0 0
  %5777 = vperm.xlu0 %5776, %v5764
  %v5778 = vpop.permute.xlu0 %5777
  %v5780 = vmul.f32 %v5756, %v5768
  %v5781 = vmul.f32 %v5757, %v5768
  %v5782 = vmul.f32 %v5758, %v5773
  %v5783 = vmul.f32 %v5759, %v5773
  %v5784 = vmul.f32 %v5760, %v5778
  %v5785 = vmul.f32 %v5761, %v5778
  %v5786 = vadd.f32 %v5780, 0.0
  %v5787 = vadd.f32 %v5781, 0.0
  %v5788 = vadd.f32 %v5782, 0.0
  %v5789 = vadd.f32 %v5783, 0.0
  %v5790 = vadd.f32 %v5784, 0.0
  %v5791 = vadd.f32 %v5785, 0.0
  %v5792 = vld [vmem:[%s69 + $0x1] sm:$0x1]
  %v5793 = vlaneseq
  %v5794 = vshrl.u32 %v5793, 7
  %v5795 = vsub.s32 0, %v5794
  %v5796 = vrot.slane %v5792, %v5795
  %5798 = vrot.lane.b32.xlu0 %v5796, 120
  %v5799 = vpop.permute.xlu0 %5798
  %v5801 = vmul.f32 %v5738, %v5799
  %v5802 = vmul.f32 %v5739, %v5799
  %v5803 = vmul.f32 %v5741, %v5799
  %v5804 = vmul.f32 %v5742, %v5799
  %v5805 = vmul.f32 %v5744, %v5799
  %v5806 = vmul.f32 %v5745, %v5799
  %5807 = vset.pattern.permute.xlu0 1
  %5808 = vperm.xlu0 %5807, %v5762
  %v5809 = vpop.permute.xlu0 %5808
  %5811 = vset.pattern.permute.xlu0 1
  %5812 = vperm.xlu0 %5811, %v5763
  %v5813 = vpop.permute.xlu0 %5812
  %5815 = vset.pattern.permute.xlu0 1
  %5816 = vperm.xlu0 %5815, %v5764
  %v5817 = vpop.permute.xlu0 %5816
  %v5819 = vmul.f32 %v5801, %v5809
  %v5820 = vmul.f32 %v5802, %v5809
  %v5821 = vmul.f32 %v5803, %v5813
  %v5822 = vmul.f32 %v5804, %v5813
  %v5823 = vmul.f32 %v5805, %v5817
  %v5824 = vmul.f32 %v5806, %v5817
  %5831 = vrot.lane.b32.xlu0 %v5819, 127
  %v5832 = vpop.permute.xlu0 %5831
  %5833 = vrot.lane.b32.xlu0 %v5820, 127
  %v5834 = vpop.permute.xlu0 %5833
  %5835 = vrot.lane.b32.xlu0 %v5821, 127
  %v5836 = vpop.permute.xlu0 %5835
  %5837 = vrot.lane.b32.xlu0 %v5822, 127
  %v5838 = vpop.permute.xlu0 %5837
  %5839 = vrot.lane.b32.xlu0 %v5823, 127
  %v5840 = vpop.permute.xlu0 %5839
  %5841 = vrot.lane.b32.xlu0 %v5824, 127
  %v5842 = vpop.permute.xlu0 %5841
  %v5843 = vsel %vm1562, %v5832, %v5834
  %v5844 = vsel %vm1562, %v5836, %v5838
  %v5845 = vsel %vm1562, %v5840, %v5842
  %v5852 = vadd.f32 %v5786, %v5843
  %v5853 = vadd.f32 %v5787, %v5834
  %v5854 = vadd.f32 %v5788, %v5844
  %v5855 = vadd.f32 %v5789, %v5838
  %v5856 = vadd.f32 %v5790, %v5845
  %v5857 = vadd.f32 %v5791, %v5842
  %v5858 = vld [vmem:[%s69 + $0x2] sm:$0x1]
  %v5859 = vlaneseq
  %v5860 = vshrl.u32 %v5859, 7
  %v5861 = vsub.s32 0, %v5860
  %v5862 = vrot.slane %v5858, %v5861
  %5864 = vrot.lane.b32.xlu0 %v5862, 121
  %v5865 = vpop.permute.xlu0 %5864
  %v5867 = vmul.f32 %v5738, %v5865
  %v5868 = vmul.f32 %v5739, %v5865
  %v5869 = vmul.f32 %v5741, %v5865
  %v5870 = vmul.f32 %v5742, %v5865
  %v5871 = vmul.f32 %v5744, %v5865
  %v5872 = vmul.f32 %v5745, %v5865
  %5873 = vset.pattern.permute.xlu0 2
  %5874 = vperm.xlu0 %5873, %v5762
  %v5875 = vpop.permute.xlu0 %5874
  %5877 = vset.pattern.permute.xlu0 2
  %5878 = vperm.xlu0 %5877, %v5763
  %v5879 = vpop.permute.xlu0 %5878
  %5881 = vset.pattern.permute.xlu0 2
  %5882 = vperm.xlu0 %5881, %v5764
  %v5883 = vpop.permute.xlu0 %5882
  %v5885 = vmul.f32 %v5867, %v5875
  %v5886 = vmul.f32 %v5868, %v5875
  %v5887 = vmul.f32 %v5869, %v5879
  %v5888 = vmul.f32 %v5870, %v5879
  %v5889 = vmul.f32 %v5871, %v5883
  %v5890 = vmul.f32 %v5872, %v5883
  %5897 = vrot.lane.b32.xlu0 %v5885, 126
  %v5898 = vpop.permute.xlu0 %5897
  %5899 = vrot.lane.b32.xlu0 %v5886, 126
  %v5900 = vpop.permute.xlu0 %5899
  %5901 = vrot.lane.b32.xlu0 %v5887, 126
  %v5902 = vpop.permute.xlu0 %5901
  %5903 = vrot.lane.b32.xlu0 %v5888, 126
  %v5904 = vpop.permute.xlu0 %5903
  %5905 = vrot.lane.b32.xlu0 %v5889, 126
  %v5906 = vpop.permute.xlu0 %5905
  %5907 = vrot.lane.b32.xlu0 %v5890, 126
  %v5908 = vpop.permute.xlu0 %5907
  %vm5909 = vcmask 1031168
  %v5910 = vsel %vm5909, %v5898, %v5900
  %v5911 = vsel %vm5909, %v5902, %v5904
  %v5912 = vsel %vm5909, %v5906, %v5908
  %v5919 = vadd.f32 %v5852, %v5910
  %v5920 = vadd.f32 %v5853, %v5900
  %v5921 = vadd.f32 %v5854, %v5911
  %v5922 = vadd.f32 %v5855, %v5904
  %v5923 = vadd.f32 %v5856, %v5912
  %v5924 = vadd.f32 %v5857, %v5908
  %v5925 = vld [vmem:[%s69 + $0x3] sm:$0x1]
  %v5926 = vlaneseq
  %v5927 = vshrl.u32 %v5926, 7
  %v5928 = vsub.s32 0, %v5927
  %v5929 = vrot.slane %v5925, %v5928
  %5931 = vrot.lane.b32.xlu0 %v5929, 127
  %v5932 = vpop.permute.xlu0 %5931
  %v5934 = vmul.f32 %v5738, %v5932
  %v5935 = vmul.f32 %v5739, %v5932
  %v5936 = vmul.f32 %v5741, %v5932
  %v5937 = vmul.f32 %v5742, %v5932
  %v5938 = vmul.f32 %v5744, %v5932
  %v5939 = vmul.f32 %v5745, %v5932
  %5940 = vset.pattern.permute.xlu0 3
  %5941 = vperm.xlu0 %5940, %v5762
  %v5942 = vpop.permute.xlu0 %5941
  %5944 = vset.pattern.permute.xlu0 3
  %5945 = vperm.xlu0 %5944, %v5763
  %v5946 = vpop.permute.xlu0 %5945
  %5948 = vset.pattern.permute.xlu0 3
  %5949 = vperm.xlu0 %5948, %v5764
  %v5950 = vpop.permute.xlu0 %5949
  %v5952 = vmul.f32 %v5934, %v5942
  %v5953 = vmul.f32 %v5935, %v5942
  %v5954 = vmul.f32 %v5936, %v5946
  %v5955 = vmul.f32 %v5937, %v5946
  %v5956 = vmul.f32 %v5938, %v5950
  %v5957 = vmul.f32 %v5939, %v5950
  %5964 = vrot.lane.b32.xlu0 %v5952, 120
  %v5965 = vpop.permute.xlu0 %5964
  %5966 = vrot.lane.b32.xlu0 %v5953, 120
  %v5967 = vpop.permute.xlu0 %5966
  %5968 = vrot.lane.b32.xlu0 %v5954, 120
  %v5969 = vpop.permute.xlu0 %5968
  %5970 = vrot.lane.b32.xlu0 %v5955, 120
  %v5971 = vpop.permute.xlu0 %5970
  %5972 = vrot.lane.b32.xlu0 %v5956, 120
  %v5973 = vpop.permute.xlu0 %5972
  %5974 = vrot.lane.b32.xlu0 %v5957, 120
  %v5975 = vpop.permute.xlu0 %5974
  %v5976 = vsel %vm4663, %v5965, %v5967
  %v5977 = vsel %vm4663, %v5969, %v5971
  %v5978 = vsel %vm4663, %v5973, %v5975
  %v5985 = vadd.f32 %v5919, %v5976
  %v5986 = vadd.f32 %v5920, %v5967
  %v5987 = vadd.f32 %v5921, %v5977
  %v5988 = vadd.f32 %v5922, %v5971
  %v5989 = vadd.f32 %v5923, %v5978
  %v5990 = vadd.f32 %v5924, %v5975
  %v5991 = vld [vmem:[%s69 + $0x4] sm:$0x1]
  %v5992 = vlaneseq
  %v5993 = vshrl.u32 %v5992, 7
  %v5994 = vsub.s32 0, %v5993
  %v5995 = vrot.slane %v5991, %v5994
  %v5996 = vmul.f32 %v5739, %v5995
  %v5997 = vmul.f32 %v5742, %v5995
  %v5998 = vmul.f32 %v5745, %v5995
  %5999 = vset.pattern.permute.xlu0 4
  %6000 = vperm.xlu0 %5999, %v5762
  %v6001 = vpop.permute.xlu0 %6000
  %6003 = vset.pattern.permute.xlu0 4
  %6004 = vperm.xlu0 %6003, %v5763
  %v6005 = vpop.permute.xlu0 %6004
  %6007 = vset.pattern.permute.xlu0 4
  %6008 = vperm.xlu0 %6007, %v5764
  %v6009 = vpop.permute.xlu0 %6008
  %v6011 = vmul.f32 %v5996, %v6001
  %v6012 = vmul.f32 %v5997, %v6005
  %v6013 = vmul.f32 %v5998, %v6009
  %6017 = vrot.lane.b32.xlu0 %v6011, 119
  %v6018 = vpop.permute.xlu0 %6017
  %6019 = vrot.lane.b32.xlu0 %v6012, 119
  %v6020 = vpop.permute.xlu0 %6019
  %6021 = vrot.lane.b32.xlu0 %v6013, 119
  %v6022 = vpop.permute.xlu0 %6021
  %v6026 = vadd.f32 %v5985, %v6018
  %v6027 = vadd.f32 %v5986, %v6018
  %v6028 = vadd.f32 %v5987, %v6020
  %v6029 = vadd.f32 %v5988, %v6020
  %v6030 = vadd.f32 %v5989, %v6022
  %v6031 = vadd.f32 %v5990, %v6022
  %v6032 = vld [vmem:[%s69 + $0x5] sm:$0x1]
  %v6033 = vlaneseq
  %v6034 = vshrl.u32 %v6033, 7
  %v6035 = vsub.s32 0, %v6034
  %v6036 = vrot.slane %v6032, %v6035
  %6038 = vrot.lane.b32.xlu0 %v6036, 1
  %v6039 = vpop.permute.xlu0 %6038
  %v6041 = vmul.f32 %v5739, %v6039
  %v6042 = vmul.f32 %v5740, %v6039
  %v6043 = vmul.f32 %v5742, %v6039
  %v6044 = vmul.f32 %v5743, %v6039
  %v6045 = vmul.f32 %v5745, %v6039
  %v6046 = vmul.f32 %v5746, %v6039
  %6047 = vset.pattern.permute.xlu0 5
  %6048 = vperm.xlu0 %6047, %v5762
  %v6049 = vpop.permute.xlu0 %6048
  %6051 = vset.pattern.permute.xlu0 5
  %6052 = vperm.xlu0 %6051, %v5763
  %v6053 = vpop.permute.xlu0 %6052
  %6055 = vset.pattern.permute.xlu0 5
  %6056 = vperm.xlu0 %6055, %v5764
  %v6057 = vpop.permute.xlu0 %6056
  %v6059 = vmul.f32 %v6041, %v6049
  %v6060 = vmul.f32 %v6042, %v6049
  %v6061 = vmul.f32 %v6043, %v6053
  %v6062 = vmul.f32 %v6044, %v6053
  %v6063 = vmul.f32 %v6045, %v6057
  %v6064 = vmul.f32 %v6046, %v6057
  %6071 = vrot.lane.b32.xlu0 %v6059, 118
  %v6072 = vpop.permute.xlu0 %6071
  %6073 = vrot.lane.b32.xlu0 %v6060, 118
  %v6074 = vpop.permute.xlu0 %6073
  %6075 = vrot.lane.b32.xlu0 %v6061, 118
  %v6076 = vpop.permute.xlu0 %6075
  %6077 = vrot.lane.b32.xlu0 %v6062, 118
  %v6078 = vpop.permute.xlu0 %6077
  %6079 = vrot.lane.b32.xlu0 %v6063, 118
  %v6080 = vpop.permute.xlu0 %6079
  %6081 = vrot.lane.b32.xlu0 %v6064, 118
  %v6082 = vpop.permute.xlu0 %6081
  %vm6083 = vcmask 965632
  %v6084 = vsel %vm6083, %v6072, %v6074
  %v6085 = vsel %vm6083, %v6076, %v6078
  %v6086 = vsel %vm6083, %v6080, %v6082
  %v6093 = vadd.f32 %v6026, %v6072
  %v6094 = vadd.f32 %v6027, %v6084
  %v6095 = vadd.f32 %v6028, %v6076
  %v6096 = vadd.f32 %v6029, %v6085
  %v6097 = vadd.f32 %v6030, %v6080
  %v6098 = vadd.f32 %v6031, %v6086
  %v6099 = vld [vmem:[%s69 + $0x6] sm:$0x1]
  %v6100 = vlaneseq
  %v6101 = vshrl.u32 %v6100, 7
  %v6102 = vsub.s32 0, %v6101
  %v6103 = vrot.slane %v6099, %v6102
  %6105 = vrot.lane.b32.xlu0 %v6103, 7
  %v6106 = vpop.permute.xlu0 %6105
  %v6108 = vmul.f32 %v5739, %v6106
  %v6109 = vmul.f32 %v5740, %v6106
  %v6110 = vmul.f32 %v5742, %v6106
  %v6111 = vmul.f32 %v5743, %v6106
  %v6112 = vmul.f32 %v5745, %v6106
  %v6113 = vmul.f32 %v5746, %v6106
  %6114 = vset.pattern.permute.xlu0 6
  %6115 = vperm.xlu0 %6114, %v5762
  %v6116 = vpop.permute.xlu0 %6115
  %6118 = vset.pattern.permute.xlu0 6
  %6119 = vperm.xlu0 %6118, %v5763
  %v6120 = vpop.permute.xlu0 %6119
  %6122 = vset.pattern.permute.xlu0 6
  %6123 = vperm.xlu0 %6122, %v5764
  %v6124 = vpop.permute.xlu0 %6123
  %v6126 = vmul.f32 %v6108, %v6116
  %v6127 = vmul.f32 %v6109, %v6116
  %v6128 = vmul.f32 %v6110, %v6120
  %v6129 = vmul.f32 %v6111, %v6120
  %v6130 = vmul.f32 %v6112, %v6124
  %v6131 = vmul.f32 %v6113, %v6124
  %6138 = vrot.lane.b32.xlu0 %v6126, 112
  %v6139 = vpop.permute.xlu0 %6138
  %6140 = vrot.lane.b32.xlu0 %v6127, 112
  %v6141 = vpop.permute.xlu0 %6140
  %6142 = vrot.lane.b32.xlu0 %v6128, 112
  %v6143 = vpop.permute.xlu0 %6142
  %6144 = vrot.lane.b32.xlu0 %v6129, 112
  %v6145 = vpop.permute.xlu0 %6144
  %6146 = vrot.lane.b32.xlu0 %v6130, 112
  %v6147 = vpop.permute.xlu0 %6146
  %6148 = vrot.lane.b32.xlu0 %v6131, 112
  %v6149 = vpop.permute.xlu0 %6148
  %v6150 = vsel %vm1524, %v6139, %v6141
  %v6151 = vsel %vm1524, %v6143, %v6145
  %v6152 = vsel %vm1524, %v6147, %v6149
  %v6159 = vadd.f32 %v6093, %v6139
  %v6160 = vadd.f32 %v6094, %v6150
  %v6161 = vadd.f32 %v6095, %v6143
  %v6162 = vadd.f32 %v6096, %v6151
  %v6163 = vadd.f32 %v6097, %v6147
  %v6164 = vadd.f32 %v6098, %v6152
  %v6165 = vld [vmem:[%s69 + $0x7] sm:$0x1]
  %v6166 = vlaneseq
  %v6167 = vshrl.u32 %v6166, 7
  %v6168 = vsub.s32 0, %v6167
  %v6169 = vrot.slane %v6165, %v6168
  %6171 = vrot.lane.b32.xlu0 %v6169, 8
  %v6172 = vpop.permute.xlu0 %6171
  %v6174 = vmul.f32 %v5739, %v6172
  %v6175 = vmul.f32 %v5740, %v6172
  %v6176 = vmul.f32 %v5742, %v6172
  %v6177 = vmul.f32 %v5743, %v6172
  %v6178 = vmul.f32 %v5745, %v6172
  %v6179 = vmul.f32 %v5746, %v6172
  %6180 = vset.pattern.permute.xlu0 7
  %6181 = vperm.xlu0 %6180, %v5762
  %v6182 = vpop.permute.xlu0 %6181
  %6184 = vset.pattern.permute.xlu0 7
  %6185 = vperm.xlu0 %6184, %v5763
  %v6186 = vpop.permute.xlu0 %6185
  %6188 = vset.pattern.permute.xlu0 7
  %6189 = vperm.xlu0 %6188, %v5764
  %v6190 = vpop.permute.xlu0 %6189
  %v6192 = vmul.f32 %v6174, %v6182
  %v6193 = vmul.f32 %v6175, %v6182
  %v6194 = vmul.f32 %v6176, %v6186
  %v6195 = vmul.f32 %v6177, %v6186
  %v6196 = vmul.f32 %v6178, %v6190
  %v6197 = vmul.f32 %v6179, %v6190
  %6204 = vrot.lane.b32.xlu0 %v6192, 111
  %v6205 = vpop.permute.xlu0 %6204
  %6206 = vrot.lane.b32.xlu0 %v6193, 111
  %v6207 = vpop.permute.xlu0 %6206
  %6208 = vrot.lane.b32.xlu0 %v6194, 111
  %v6209 = vpop.permute.xlu0 %6208
  %6210 = vrot.lane.b32.xlu0 %v6195, 111
  %v6211 = vpop.permute.xlu0 %6210
  %6212 = vrot.lane.b32.xlu0 %v6196, 111
  %v6213 = vpop.permute.xlu0 %6212
  %6214 = vrot.lane.b32.xlu0 %v6197, 111
  %v6215 = vpop.permute.xlu0 %6214
  %v6216 = vsel %vm1437, %v6205, %v6207
  %v6217 = vsel %vm1437, %v6209, %v6211
  %v6218 = vsel %vm1437, %v6213, %v6215
  %v6225 = vadd.f32 %v6159, %v6205
  %v6226 = vadd.f32 %v6160, %v6216
  %v6227 = vadd.f32 %v6161, %v6209
  %v6228 = vadd.f32 %v6162, %v6217
  %v6229 = vadd.f32 %v6163, %v6213
  %v6230 = vadd.f32 %v6164, %v6218
  %v6231 = vld [vmem:[%s69 + $0x8] sm:$0x1]
  %v6232 = vlaneseq
  %v6233 = vshrl.u32 %v6232, 7
  %v6234 = vsub.s32 0, %v6233
  %v6235 = vrot.slane %v6231, %v6234
  %6237 = vrot.lane.b32.xlu0 %v6235, 9
  %v6238 = vpop.permute.xlu0 %6237
  %v6240 = vmul.f32 %v5739, %v6238
  %v6241 = vmul.f32 %v5740, %v6238
  %v6242 = vmul.f32 %v5742, %v6238
  %v6243 = vmul.f32 %v5743, %v6238
  %v6244 = vmul.f32 %v5745, %v6238
  %v6245 = vmul.f32 %v5746, %v6238
  %6246 = vset.pattern.permute.xlu0 8
  %6247 = vperm.xlu0 %6246, %v5762
  %v6248 = vpop.permute.xlu0 %6247
  %6250 = vset.pattern.permute.xlu0 8
  %6251 = vperm.xlu0 %6250, %v5763
  %v6252 = vpop.permute.xlu0 %6251
  %6254 = vset.pattern.permute.xlu0 8
  %6255 = vperm.xlu0 %6254, %v5764
  %v6256 = vpop.permute.xlu0 %6255
  %v6258 = vmul.f32 %v6240, %v6248
  %v6259 = vmul.f32 %v6241, %v6248
  %v6260 = vmul.f32 %v6242, %v6252
  %v6261 = vmul.f32 %v6243, %v6252
  %v6262 = vmul.f32 %v6244, %v6256
  %v6263 = vmul.f32 %v6245, %v6256
  %6270 = vrot.lane.b32.xlu0 %v6258, 110
  %v6271 = vpop.permute.xlu0 %6270
  %6272 = vrot.lane.b32.xlu0 %v6259, 110
  %v6273 = vpop.permute.xlu0 %6272
  %6274 = vrot.lane.b32.xlu0 %v6260, 110
  %v6275 = vpop.permute.xlu0 %6274
  %6276 = vrot.lane.b32.xlu0 %v6261, 110
  %v6277 = vpop.permute.xlu0 %6276
  %6278 = vrot.lane.b32.xlu0 %v6262, 110
  %v6279 = vpop.permute.xlu0 %6278
  %6280 = vrot.lane.b32.xlu0 %v6263, 110
  %v6281 = vpop.permute.xlu0 %6280
  %vm6282 = vcmask 900096
  %v6283 = vsel %vm6282, %v6271, %v6273
  %v6284 = vsel %vm6282, %v6275, %v6277
  %v6285 = vsel %vm6282, %v6279, %v6281
  %v6292 = vadd.f32 %v6225, %v6271
  %v6293 = vadd.f32 %v6226, %v6283
  %v6294 = vadd.f32 %v6227, %v6275
  %v6295 = vadd.f32 %v6228, %v6284
  %v6296 = vadd.f32 %v6229, %v6279
  %v6297 = vadd.f32 %v6230, %v6285
  %v6298 = vld [vmem:[%s59] sm:$0xff]
  %v6299 = vld [vmem:[%s59 + $0x8] sm:$0xff]
  %v6300 = vld [vmem:[%s59 + $0x10] sm:$0xf]
  %6302 = vset.pattern.permute.xlu0 0
  %6303 = vperm.xlu0 %6302, %v6298
  %v6304 = vpop.permute.xlu0 %6303
  %6307 = vset.pattern.permute.xlu0 0
  %6308 = vperm.xlu0 %6307, %v6299
  %v6309 = vpop.permute.xlu0 %6308
  %6312 = vset.pattern.permute.xlu0 0
  %6313 = vperm.xlu0 %6312, %v6300
  %v6314 = vpop.permute.xlu0 %6313
  %v6316 = vmul.f32 %v6292, %v6304
  %v6317 = vmul.f32 %v6293, %v6304
  %v6318 = vmul.f32 %v6294, %v6309
  %v6319 = vmul.f32 %v6295, %v6309
  %v6320 = vmul.f32 %v6296, %v6314
  %v6321 = vmul.f32 %v6297, %v6314
  %v6322 = vld [vmem:[%s61] sm:$0xff]
  %v6323 = vld [vmem:[%s61 + $0x8] sm:$0xff]
  %v6324 = vld [vmem:[%s61 + $0x10] sm:$0xf]
  %6326 = vset.pattern.permute.xlu0 0
  %6327 = vperm.xlu0 %6326, %v6322
  %v6328 = vpop.permute.xlu0 %6327
  %6331 = vset.pattern.permute.xlu0 0
  %6332 = vperm.xlu0 %6331, %v6323
  %v6333 = vpop.permute.xlu0 %6332
  %6336 = vset.pattern.permute.xlu0 0
  %6337 = vperm.xlu0 %6336, %v6324
  %v6338 = vpop.permute.xlu0 %6337
  %v6340 = vadd.f32 %v6316, %v6328
  %v6341 = vadd.f32 %v6317, %v6328
  %v6342 = vadd.f32 %v6318, %v6333
  %v6343 = vadd.f32 %v6319, %v6333
  %v6344 = vadd.f32 %v6320, %v6338
  %v6345 = vadd.f32 %v6321, %v6338
  %v6346 = vmax.f32 %v6340, 0.0
  %v6347 = vmax.f32 %v6341, 0.0
  %v6348 = vmax.f32 %v6342, 0.0
  %v6349 = vmax.f32 %v6343, 0.0
  %v6350 = vmax.f32 %v6344, 0.0
  %v6351 = vmax.f32 %v6345, 0.0
  %v6352 = vld [vmem:[%s63] sm:$0xf]
  %v6353 = vld [vmem:[%s63 + $0x4] sm:$0xf]
  %v6354 = vld [vmem:[%s63 + $0x8] sm:$0xf]
  %v6355 = vld [vmem:[%s63 + $0xc] sm:$0xf]
  %v6356 = vld [vmem:[%s63 + $0x10] sm:$0xf]
  %v6357 = vld [vmem:[%s63 + $0x14] sm:$0xf]
  %v6358 = vld [vmem:[%s63 + $0x18] sm:$0xf]
  %v6359 = vld [vmem:[%s63 + $0x1c] sm:$0xf]
  %v6360 = vld [vmem:[%s63 + $0x20] sm:$0xf]
  %v6361 = vld [vmem:[%s63 + $0x24] sm:$0xf]
  %v6362 = vpack.c.bf16 %v6348, %v6346
  %v6363 = vpack.c.bf16 %v6349, %v6347
  %v6364 = vpack.c.bf16 %v6350, %v6350
  %v6365 = vpack.c.bf16 %v6351, %v6351
  %v6376 = vunpack.c.l.b16 %v6352
  %v6377 = vunpack.c.l.b16 %v6353
  %v6378 = vunpack.c.l.b16 %v6354
  %v6379 = vunpack.c.l.b16 %v6355
  %v6380 = vunpack.c.l.b16 %v6356
  %v6381 = vunpack.c.l.b16 %v6357
  %v6382 = vunpack.c.l.b16 %v6358
  %v6383 = vunpack.c.l.b16 %v6359
  %v6384 = vunpack.c.l.b16 %v6360
  %v6385 = vunpack.c.l.b16 %v6361
  %v6386 = vpack.c.b16 %v6377, %v6376
  %v6387 = vpack.c.b16 %v6379, %v6378
  %v6388 = vpack.c.b16 %v6381, %v6380
  %v6389 = vpack.c.b16 %v6383, %v6382
  %v6390 = vpack.c.b16 %v6385, %v6384
  %6395 = vrot.lane.b32.xlu0 %v6362, 9
  %v6396 = vpop.permute.xlu0 %6395
  %6397 = vrot.lane.b32.xlu0 %v6363, 9
  %v6398 = vpop.permute.xlu0 %6397
  %6399 = vrot.lane.b32.xlu0 %v6364, 9
  %v6400 = vpop.permute.xlu0 %6399
  %6401 = vrot.lane.b32.xlu0 %v6365, 9
  %v6402 = vpop.permute.xlu0 %6401
  %v6403 = vsel %vm5189, %v6396, %v6398
  %v6404 = vsel %vm5189, %v6400, %v6402
  %vm6406 = vcmask 162816
  %v6408 = vsel %vm6406, %v6386, 0
  %v6411 = vsel %vm6406, %v6387, 0
  %v6414 = vsel %vm6406, %v6388, 0
  %v6417 = vsel %vm6406, %v6389, 0
  %v6420 = vsel %vm6406, %v6390, 0
  %v6423 = vsel %vm304, %v6404, 0
  %6425 = vmatprep.subr.bf16.mxu0 0
  %6426 = vmatpush1.bf16.msra.mxu0 0
  %6427 = vmatprep.subr.bf16.mxu0 0
  %6428 = vmatpush1.bf16.msra.mxu0 0
  %6429 = vmatprep.subr.bf16.mxu0 0
  %6430 = vmatpush1.bf16.msra.mxu0 0
  %6431 = vmatprep.subr.bf16.mxu0 0
  %6432 = vmatpush1.bf16.msra.mxu0 0
  %6433 = vmatprep.subr.bf16.mxu0 0
  %6434 = vmatpush1.bf16.msra.mxu0 0
  %6435 = vmatprep.subr.bf16.mxu0 0
  %6436 = vmatpush1.bf16.msra.mxu0 0
  %6437 = vmatprep.subr.bf16.mxu0 0
  %6438 = vmatpush1.bf16.msra.mxu0 %v6423
  %6439 = vmatprep.subr.bf16.mxu0 0
  %6440 = vmatpush1.bf16.msra.mxu0 %v6403
  %6441 = vmatprep.subr.bf16.mxu0 0
  %6442 = vmatpush2.bf16.msra.mxu0 0
  %6443 = vmatprep.subr.bf16.mxu0 0
  %6444 = vmatpush2.bf16.msra.mxu0 0
  %6445 = vmatprep.subr.bf16.mxu0 0
  %6446 = vmatpush2.bf16.msra.mxu0 0
  %6447 = vmatprep.subr.bf16.mxu0 0
  %6448 = vmatpush2.bf16.msra.mxu0 0
  %6449 = vmatprep.subr.bf16.mxu0 0
  %6450 = vmatpush2.bf16.msra.mxu0 0
  %6451 = vmatprep.subr.bf16.mxu0 0
  %6452 = vmatpush2.bf16.msra.mxu0 0
  %6453 = vmatprep.subr.bf16.mxu0 0
  %6454 = vmatpush2.bf16.msra.mxu0 0
  %6455 = vmatprep.subr.bf16.mxu0 0
  %6456 = vmatpush2.bf16.msra.mxu0 0
  %6457 = vmatprep.mubr.bf16.mxu0 0
  %6458 = vmatmul.mubr.bf16.gmra.mxu0 %v6408
  %v6459 = vpop.f32.mrf.mxu0
  %v6460 = vadd.f32 0.0, %v6459
  %v6461 = vpop.f32.mrf.mxu0
  %v6462 = vpop.f32.mrf.mxu0
  %v6463 = vadd.f32 0.0, %v6462
  %v6464 = vpop.f32.mrf.mxu0
  %6465 = vmatprep.mubr.bf16.mxu0 0
  %6466 = vmatmul.mubr.bf16.gmra.mxu0 %v6411
  %v6467 = vpop.f32.mrf.mxu0
  %v6468 = vadd.f32 0.0, %v6467
  %v6469 = vpop.f32.mrf.mxu0
  %v6470 = vpop.f32.mrf.mxu0
  %v6471 = vadd.f32 0.0, %v6470
  %v6472 = vpop.f32.mrf.mxu0
  %6473 = vmatprep.mubr.bf16.mxu0 0
  %6474 = vmatmul.mubr.bf16.gmra.mxu0 %v6414
  %v6475 = vpop.f32.mrf.mxu0
  %v6476 = vadd.f32 0.0, %v6475
  %v6477 = vpop.f32.mrf.mxu0
  %v6478 = vpop.f32.mrf.mxu0
  %v6479 = vadd.f32 0.0, %v6478
  %v6480 = vpop.f32.mrf.mxu0
  %6481 = vmatprep.mubr.bf16.mxu0 0
  %6482 = vmatmul.mubr.bf16.gmra.mxu0 %v6417
  %v6483 = vpop.f32.mrf.mxu0
  %v6484 = vadd.f32 0.0, %v6483
  %v6485 = vpop.f32.mrf.mxu0
  %v6486 = vpop.f32.mrf.mxu0
  %v6487 = vadd.f32 0.0, %v6486
  %v6488 = vpop.f32.mrf.mxu0
  %6489 = vmatprep.mubr.bf16.mxu0 0
  %6490 = vmatmul.mubr.bf16.gmra.mxu0 %v6420
  %v6491 = vpop.f32.mrf.mxu0
  %v6492 = vadd.f32 0.0, %v6491
  %v6493 = vpop.f32.mrf.mxu0
  %v6494 = vpop.f32.mrf.mxu0
  %v6495 = vadd.f32 0.0, %v6494
  %v6496 = vpop.f32.mrf.mxu0
  %6497 = vdwg.mxu0
  %v6498 = vld [vmem:[%s65] sm:$0xff]
  %v6499 = vld [vmem:[%s65 + $0x8] sm:$0xff]
  %v6500 = vld [vmem:[%s65 + $0x10] sm:$0xff]
  %v6501 = vld [vmem:[%s65 + $0x18] sm:$0xff]
  %v6502 = vld [vmem:[%s65 + $0x20] sm:$0xff]
  %v6503 = vld [vmem:[%s65 + $0x28] sm:$0xff]
  %v6504 = vld [vmem:[%s65 + $0x30] sm:$0xff]
  %v6505 = vld [vmem:[%s65 + $0x38] sm:$0xff]
  %v6506 = vld [vmem:[%s65 + $0x40] sm:$0xff]
  %v6507 = vld [vmem:[%s65 + $0x48] sm:$0xff]
  %6509 = vset.pattern.permute.xlu0 0
  %6510 = vperm.xlu0 %6509, %v6498
  %v6511 = vpop.permute.xlu0 %6510
  %6514 = vset.pattern.permute.xlu0 0
  %6515 = vperm.xlu0 %6514, %v6499
  %v6516 = vpop.permute.xlu0 %6515
  %6519 = vset.pattern.permute.xlu0 0
  %6520 = vperm.xlu0 %6519, %v6500
  %v6521 = vpop.permute.xlu0 %6520
  %6524 = vset.pattern.permute.xlu0 0
  %6525 = vperm.xlu0 %6524, %v6501
  %v6526 = vpop.permute.xlu0 %6525
  %6529 = vset.pattern.permute.xlu0 0
  %6530 = vperm.xlu0 %6529, %v6502
  %v6531 = vpop.permute.xlu0 %6530
  %6534 = vset.pattern.permute.xlu0 0
  %6535 = vperm.xlu0 %6534, %v6503
  %v6536 = vpop.permute.xlu0 %6535
  %6539 = vset.pattern.permute.xlu0 0
  %6540 = vperm.xlu0 %6539, %v6504
  %v6541 = vpop.permute.xlu0 %6540
  %6544 = vset.pattern.permute.xlu0 0
  %6545 = vperm.xlu0 %6544, %v6505
  %v6546 = vpop.permute.xlu0 %6545
  %6549 = vset.pattern.permute.xlu0 0
  %6550 = vperm.xlu0 %6549, %v6506
  %v6551 = vpop.permute.xlu0 %6550
  %6554 = vset.pattern.permute.xlu0 0
  %6555 = vperm.xlu0 %6554, %v6507
  %v6556 = vpop.permute.xlu0 %6555
  %v6558 = vmul.f32 %v6460, %v6511
  %v6559 = vmul.f32 %v6463, %v6516
  %v6560 = vmul.f32 %v6468, %v6521
  %v6561 = vmul.f32 %v6471, %v6526
  %v6562 = vmul.f32 %v6476, %v6531
  %v6563 = vmul.f32 %v6479, %v6536
  %v6564 = vmul.f32 %v6484, %v6541
  %v6565 = vmul.f32 %v6487, %v6546
  %v6566 = vmul.f32 %v6492, %v6551
  %v6567 = vmul.f32 %v6495, %v6556
  %v6568 = vld [vmem:[%s67] sm:$0xff]
  %v6569 = vld [vmem:[%s67 + $0x8] sm:$0xff]
  %v6570 = vld [vmem:[%s67 + $0x10] sm:$0xff]
  %v6571 = vld [vmem:[%s67 + $0x18] sm:$0xff]
  %v6572 = vld [vmem:[%s67 + $0x20] sm:$0xff]
  %v6573 = vld [vmem:[%s67 + $0x28] sm:$0xff]
  %v6574 = vld [vmem:[%s67 + $0x30] sm:$0xff]
  %v6575 = vld [vmem:[%s67 + $0x38] sm:$0xff]
  %v6576 = vld [vmem:[%s67 + $0x40] sm:$0xff]
  %v6577 = vld [vmem:[%s67 + $0x48] sm:$0xff]
  %6579 = vset.pattern.permute.xlu0 0
  %6580 = vperm.xlu0 %6579, %v6568
  %v6581 = vpop.permute.xlu0 %6580
  %6584 = vset.pattern.permute.xlu0 0
  %6585 = vperm.xlu0 %6584, %v6569
  %v6586 = vpop.permute.xlu0 %6585
  %6589 = vset.pattern.permute.xlu0 0
  %6590 = vperm.xlu0 %6589, %v6570
  %v6591 = vpop.permute.xlu0 %6590
  %6594 = vset.pattern.permute.xlu0 0
  %6595 = vperm.xlu0 %6594, %v6571
  %v6596 = vpop.permute.xlu0 %6595
  %6599 = vset.pattern.permute.xlu0 0
  %6600 = vperm.xlu0 %6599, %v6572
  %v6601 = vpop.permute.xlu0 %6600
  %6604 = vset.pattern.permute.xlu0 0
  %6605 = vperm.xlu0 %6604, %v6573
  %v6606 = vpop.permute.xlu0 %6605
  %6609 = vset.pattern.permute.xlu0 0
  %6610 = vperm.xlu0 %6609, %v6574
  %v6611 = vpop.permute.xlu0 %6610
  %6614 = vset.pattern.permute.xlu0 0
  %6615 = vperm.xlu0 %6614, %v6575
  %v6616 = vpop.permute.xlu0 %6615
  %6619 = vset.pattern.permute.xlu0 0
  %6620 = vperm.xlu0 %6619, %v6576
  %v6621 = vpop.permute.xlu0 %6620
  %6624 = vset.pattern.permute.xlu0 0
  %6625 = vperm.xlu0 %6624, %v6577
  %v6626 = vpop.permute.xlu0 %6625
  %v6628 = vadd.f32 %v6558, %v6581
  %v6629 = vadd.f32 %v6559, %v6586
  %v6630 = vadd.f32 %v6560, %v6591
  %v6631 = vadd.f32 %v6561, %v6596
  %v6632 = vadd.f32 %v6562, %v6601
  %v6633 = vadd.f32 %v6563, %v6606
  %v6634 = vadd.f32 %v6564, %v6611
  %v6635 = vadd.f32 %v6565, %v6616
  %v6636 = vadd.f32 %v6566, %v6621
  %v6637 = vadd.f32 %v6567, %v6626
  %v6638 = vadd.f32 %v6628, %v5387
  %v6639 = vadd.f32 %v6629, %v5388
  %v6640 = vadd.f32 %v6630, %v5389
  %v6641 = vadd.f32 %v6631, %v5390
  %v6642 = vadd.f32 %v6632, %v5391
  %v6643 = vadd.f32 %v6633, %v5392
  %v6644 = vadd.f32 %v6634, %v5393
  %v6645 = vadd.f32 %v6635, %v5394
  %v6646 = vadd.f32 %v6636, %v5395
  %v6647 = vadd.f32 %v6637, %v5396
  %v6648 = vmax.f32 %v6638, 0.0
  %v6649 = vmax.f32 %v6639, 0.0
  %v6650 = vmax.f32 %v6640, 0.0
  %v6651 = vmax.f32 %v6641, 0.0
  %v6652 = vmax.f32 %v6642, 0.0
  %v6653 = vmax.f32 %v6643, 0.0
  %v6654 = vmax.f32 %v6644, 0.0
  %v6655 = vmax.f32 %v6645, 0.0
  %v6656 = vmax.f32 %v6646, 0.0
  %v6657 = vmax.f32 %v6647, 0.0
  %v6658 = vpack.c.bf16 %v6649, %v6648
  %v6659 = vpack.c.bf16 %v6651, %v6650
  %v6660 = vpack.c.bf16 %v6653, %v6652
  %v6661 = vpack.c.bf16 %v6655, %v6654
  %v6662 = vpack.c.bf16 %v6657, %v6656
  %v6663 = vld [vmem:[%s71] sm:$0xf]
  %v6664 = vld [vmem:[%s71 + $0x4] sm:$0xf]
  %v6665 = vld [vmem:[%s71 + $0x8] sm:$0xf]
  %v6666 = vld [vmem:[%s71 + $0xc] sm:$0xf]
  %v6667 = vld [vmem:[%s71 + $0x10] sm:$0xf]
  %v6668 = vld [vmem:[%s71 + $0x14] sm:$0xf]
  %v6669 = vld [vmem:[%s71 + $0x18] sm:$0xf]
  %v6670 = vld [vmem:[%s71 + $0x1c] sm:$0xf]
  %v6671 = vld [vmem:[%s71 + $0x20] sm:$0xf]
  %v6672 = vld [vmem:[%s71 + $0x24] sm:$0xf]
  %v6673 = vld [vmem:[%s71 + $0x28] sm:$0xf]
  %v6674 = vld [vmem:[%s71 + $0x2c] sm:$0xf]
  %v6675 = vld [vmem:[%s71 + $0x30] sm:$0xf]
  %v6676 = vld [vmem:[%s71 + $0x34] sm:$0xf]
  %v6677 = vld [vmem:[%s71 + $0x38] sm:$0xf]
  %v6678 = vld [vmem:[%s71 + $0x3c] sm:$0xf]
  %v6695 = vunpack.c.l.b16 %v6663
  %v6696 = vunpack.c.l.b16 %v6664
  %v6697 = vunpack.c.l.b16 %v6665
  %v6698 = vunpack.c.l.b16 %v6666
  %v6699 = vunpack.c.l.b16 %v6667
  %v6700 = vunpack.c.l.b16 %v6668
  %v6701 = vunpack.c.l.b16 %v6669
  %v6702 = vunpack.c.l.b16 %v6670
  %v6703 = vunpack.c.l.b16 %v6671
  %v6704 = vunpack.c.l.b16 %v6672
  %v6705 = vunpack.c.l.b16 %v6673
  %v6706 = vunpack.c.l.b16 %v6674
  %v6707 = vunpack.c.l.b16 %v6675
  %v6708 = vunpack.c.l.b16 %v6676
  %v6709 = vunpack.c.l.b16 %v6677
  %v6710 = vunpack.c.l.b16 %v6678
  %v6711 = vpack.c.b16 %v6696, %v6695
  %v6712 = vpack.c.b16 %v6698, %v6697
  %v6713 = vpack.c.b16 %v6700, %v6699
  %v6714 = vpack.c.b16 %v6702, %v6701
  %v6715 = vpack.c.b16 %v6704, %v6703
  %v6716 = vpack.c.b16 %v6706, %v6705
  %v6717 = vpack.c.b16 %v6708, %v6707
  %v6718 = vpack.c.b16 %v6710, %v6709
  %6727 = vmatprep.subr.bf16.mxu0 0
  %6728 = vmatpush1.bf16.msra.mxu0 %v6718
  %6729 = vmatprep.subr.bf16.mxu0 0
  %6730 = vmatpush1.bf16.msra.mxu0 %v6717
  %6731 = vmatprep.subr.bf16.mxu0 0
  %6732 = vmatpush1.bf16.msra.mxu0 %v6716
  %6733 = vmatprep.subr.bf16.mxu0 0
  %6734 = vmatpush1.bf16.msra.mxu0 %v6715
  %6735 = vmatprep.subr.bf16.mxu0 0
  %6736 = vmatpush1.bf16.msra.mxu0 %v6714
  %6737 = vmatprep.subr.bf16.mxu0 0
  %6738 = vmatpush1.bf16.msra.mxu0 %v6713
  %6739 = vmatprep.subr.bf16.mxu0 0
  %6740 = vmatpush1.bf16.msra.mxu0 %v6712
  %6741 = vmatprep.subr.bf16.mxu0 0
  %6742 = vmatpush1.bf16.msra.mxu0 %v6711
  %6743 = vmatprep.subr.bf16.mxu0 0
  %6744 = vmatpush2.bf16.msra.mxu0 0
  %6745 = vmatprep.subr.bf16.mxu0 0
  %6746 = vmatpush2.bf16.msra.mxu0 0
  %6747 = vmatprep.subr.bf16.mxu0 0
  %6748 = vmatpush2.bf16.msra.mxu0 0
  %6749 = vmatprep.subr.bf16.mxu0 0
  %6750 = vmatpush2.bf16.msra.mxu0 0
  %6751 = vmatprep.subr.bf16.mxu0 0
  %6752 = vmatpush2.bf16.msra.mxu0 0
  %6753 = vmatprep.subr.bf16.mxu0 0
  %6754 = vmatpush2.bf16.msra.mxu0 0
  %6755 = vmatprep.subr.bf16.mxu0 0
  %6756 = vmatpush2.bf16.msra.mxu0 0
  %6757 = vmatprep.subr.bf16.mxu0 0
  %6758 = vmatpush2.bf16.msra.mxu0 0
  %6759 = vmatprep.mubr.bf16.mxu0 0
  %6760 = vmatmul.mubr.bf16.gmra.mxu0 %v6658
  %v6761 = vpop.f32.mrf.mxu0
  %v6762 = vadd.f32 0.0, %v6761
  %v6763 = vpop.f32.mrf.mxu0
  %v6764 = vpop.f32.mrf.mxu0
  %v6765 = vadd.f32 0.0, %v6764
  %v6766 = vpop.f32.mrf.mxu0
  %6767 = vmatprep.mubr.bf16.mxu0 0
  %6768 = vmatmul.mubr.bf16.gmra.mxu0 %v6659
  %v6769 = vpop.f32.mrf.mxu0
  %v6770 = vadd.f32 0.0, %v6769
  %v6771 = vpop.f32.mrf.mxu0
  %v6772 = vpop.f32.mrf.mxu0
  %v6773 = vadd.f32 0.0, %v6772
  %v6774 = vpop.f32.mrf.mxu0
  %6775 = vmatprep.mubr.bf16.mxu0 0
  %6776 = vmatmul.mubr.bf16.gmra.mxu0 %v6660
  %v6777 = vpop.f32.mrf.mxu0
  %v6778 = vadd.f32 0.0, %v6777
  %v6779 = vpop.f32.mrf.mxu0
  %v6780 = vpop.f32.mrf.mxu0
  %v6781 = vadd.f32 0.0, %v6780
  %v6782 = vpop.f32.mrf.mxu0
  %6783 = vmatprep.mubr.bf16.mxu0 0
  %6784 = vmatmul.mubr.bf16.gmra.mxu0 %v6661
  %v6785 = vpop.f32.mrf.mxu0
  %v6786 = vadd.f32 0.0, %v6785
  %v6787 = vpop.f32.mrf.mxu0
  %v6788 = vpop.f32.mrf.mxu0
  %v6789 = vadd.f32 0.0, %v6788
  %v6790 = vpop.f32.mrf.mxu0
  %6791 = vmatprep.mubr.bf16.mxu0 0
  %6792 = vmatmul.mubr.bf16.gmra.mxu0 %v6662
  %v6793 = vpop.f32.mrf.mxu0
  %v6794 = vadd.f32 0.0, %v6793
  %v6795 = vpop.f32.mrf.mxu0
  %v6796 = vpop.f32.mrf.mxu0
  %v6797 = vadd.f32 0.0, %v6796
  %v6798 = vpop.f32.mrf.mxu0
  %6799 = vdwg.mxu0
  %v6800 = vpack.c.bf16 %v6765, %v6762
  %v6801 = vpack.c.bf16 %v6773, %v6770
  %v6802 = vpack.c.bf16 %v6781, %v6778
  %v6803 = vpack.c.bf16 %v6789, %v6786
  %v6804 = vpack.c.bf16 %v6797, %v6794
  %v6805 = vld [vmem:[%s73] sm:$0xf]
  %v6806 = vld [vmem:[%s73 + $0x4] sm:$0xf]
  %v6807 = vld [vmem:[%s73 + $0x8] sm:$0x3]
  %v6811 = vunpack.c.l.b16 %v6805
  %v6812 = vunpack.c.l.b16 %v6806
  %v6813 = vunpack.c.l.b16 %v6807
  %v6814 = vpack.c.b16 %v6812, %v6811
  %v6815 = vpack.c.b16 %v6813, %v6813
  %v6817 = vsel %vm5578, %v6814, 0
  %v6820 = vsel %vm5578, %v6815, 0
  %6822 = vmatprep.subr.bf16.mxu0 0
  %6823 = vmatpush1.bf16.msra.mxu0 0
  %6824 = vmatprep.subr.bf16.mxu0 0
  %6825 = vmatpush1.bf16.msra.mxu0 0
  %6826 = vmatprep.subr.bf16.mxu0 0
  %6827 = vmatpush1.bf16.msra.mxu0 0
  %6828 = vmatprep.subr.bf16.mxu0 0
  %6829 = vmatpush1.bf16.msra.mxu0 %v6804
  %6830 = vmatprep.subr.bf16.mxu0 0
  %6831 = vmatpush1.bf16.msra.mxu0 %v6803
  %6832 = vmatprep.subr.bf16.mxu0 0
  %6833 = vmatpush1.bf16.msra.mxu0 %v6802
  %6834 = vmatprep.subr.bf16.mxu0 0
  %6835 = vmatpush1.bf16.msra.mxu0 %v6801
  %6836 = vmatprep.subr.bf16.mxu0 0
  %6837 = vmatpush1.bf16.msra.mxu0 %v6800
  %6838 = vmatprep.subr.bf16.mxu0 0
  %6839 = vmatpush2.bf16.msra.mxu0 0
  %6840 = vmatprep.subr.bf16.mxu0 0
  %6841 = vmatpush2.bf16.msra.mxu0 0
  %6842 = vmatprep.subr.bf16.mxu0 0
  %6843 = vmatpush2.bf16.msra.mxu0 0
  %6844 = vmatprep.subr.bf16.mxu0 0
  %6845 = vmatpush2.bf16.msra.mxu0 0
  %6846 = vmatprep.subr.bf16.mxu0 0
  %6847 = vmatpush2.bf16.msra.mxu0 0
  %6848 = vmatprep.subr.bf16.mxu0 0
  %6849 = vmatpush2.bf16.msra.mxu0 0
  %6850 = vmatprep.subr.bf16.mxu0 0
  %6851 = vmatpush2.bf16.msra.mxu0 0
  %6852 = vmatprep.subr.bf16.mxu0 0
  %6853 = vmatpush2.bf16.msra.mxu0 0
  %6854 = vmatprep.mubr.bf16.mxu0 0
  %6855 = vmatmul.mubr.bf16.gmra.mxu0 %v6817
  %v6856 = vpop.f32.mrf.mxu0
  %v6857 = vadd.f32 0.0, %v6856
  %v6858 = vpop.f32.mrf.mxu0
  %v6859 = vpop.f32.mrf.mxu0
  %v6860 = vadd.f32 0.0, %v6859
  %v6861 = vpop.f32.mrf.mxu0
  %6862 = vmatprep.mubr.bf16.mxu0 0
  %6863 = vmatmul.mubr.bf16.gmra.mxu0 %v6820
  %v6864 = vpop.f32.mrf.mxu0
  %v6865 = vadd.f32 0.0, %v6864
  %v6866 = vpop.f32.mrf.mxu0
  %v6867 = vpop.f32.mrf.mxu0
  %v6868 = vpop.f32.mrf.mxu0
  %6869 = vdwg.mxu0
  %v6870 = vld [vmem:[%s75] sm:$0xff]
  %v6871 = vld [vmem:[%s75 + $0x8] sm:$0xff]
  %v6872 = vld [vmem:[%s75 + $0x10] sm:$0xf]
  %6874 = vset.pattern.permute.xlu0 0
  %6875 = vperm.xlu0 %6874, %v6870
  %v6876 = vpop.permute.xlu0 %6875
  %6879 = vset.pattern.permute.xlu0 0
  %6880 = vperm.xlu0 %6879, %v6871
  %v6881 = vpop.permute.xlu0 %6880
  %6884 = vset.pattern.permute.xlu0 0
  %6885 = vperm.xlu0 %6884, %v6872
  %v6886 = vpop.permute.xlu0 %6885
  %v6888 = vmul.f32 %v6857, %v6876
  %v6889 = vmul.f32 %v6860, %v6881
  %v6890 = vmul.f32 %v6865, %v6886
  %v6891 = vld [vmem:[%s77] sm:$0xff]
  %v6892 = vld [vmem:[%s77 + $0x8] sm:$0xff]
  %v6893 = vld [vmem:[%s77 + $0x10] sm:$0xf]
  %6895 = vset.pattern.permute.xlu0 0
  %6896 = vperm.xlu0 %6895, %v6891
  %v6897 = vpop.permute.xlu0 %6896
  %6900 = vset.pattern.permute.xlu0 0
  %6901 = vperm.xlu0 %6900, %v6892
  %v6902 = vpop.permute.xlu0 %6901
  %6905 = vset.pattern.permute.xlu0 0
  %6906 = vperm.xlu0 %6905, %v6893
  %v6907 = vpop.permute.xlu0 %6906
  %v6909 = vadd.f32 %v6888, %v6897
  %v6910 = vadd.f32 %v6889, %v6902
  %v6911 = vadd.f32 %v6890, %v6907
  %v6912 = vmax.f32 %v6909, 0.0
  %v6913 = vmax.f32 %v6910, 0.0
  %v6914 = vmax.f32 %v6911, 0.0
  %v6915 = vld [vmem:[%s91] sm:$0x1]
  %v6916 = vlaneseq
  %v6917 = vshrl.u32 %v6916, 7
  %v6918 = vsub.s32 0, %v6917
  %v6919 = vrot.slane %v6915, %v6918
  %6921 = vrot.lane.b32.xlu0 %v6919, 91
  %v6922 = vpop.permute.xlu0 %6921
  %v6924 = vmul.f32 %v6912, %v6922
  %v6925 = vmul.f32 %v6913, %v6922
  %v6926 = vmul.f32 %v6914, %v6922
  %v6927 = vld [vmem:[%s79] sm:$0xff]
  %v6928 = vld [vmem:[%s79 + $0x8] sm:$0xff]
  %v6929 = vld [vmem:[%s79 + $0x10] sm:$0xf]
  %6931 = vset.pattern.permute.xlu0 0
  %6932 = vperm.xlu0 %6931, %v6927
  %v6933 = vpop.permute.xlu0 %6932
  %6936 = vset.pattern.permute.xlu0 0
  %6937 = vperm.xlu0 %6936, %v6928
  %v6938 = vpop.permute.xlu0 %6937
  %6941 = vset.pattern.permute.xlu0 0
  %6942 = vperm.xlu0 %6941, %v6929
  %v6943 = vpop.permute.xlu0 %6942
  %v6945 = vmul.f32 %v6924, %v6933
  %v6946 = vmul.f32 %v6925, %v6938
  %v6947 = vmul.f32 %v6926, %v6943
  %v6948 = vadd.f32 %v6945, 0.0
  %v6949 = vadd.f32 %v6946, 0.0
  %v6950 = vadd.f32 %v6947, 0.0
  %v6951 = vmul.f32 %v6762, %v6922
  %v6952 = vmul.f32 %v6765, %v6922
  %v6953 = vmul.f32 %v6770, %v6922
  %v6954 = vmul.f32 %v6773, %v6922
  %v6955 = vmul.f32 %v6778, %v6922
  %v6956 = vmul.f32 %v6781, %v6922
  %v6957 = vmul.f32 %v6786, %v6922
  %v6958 = vmul.f32 %v6789, %v6922
  %v6959 = vmul.f32 %v6794, %v6922
  %v6960 = vmul.f32 %v6797, %v6922
  %v6961 = vadd.f32 %v6951, 0.0
  %v6962 = vadd.f32 %v6952, 0.0
  %v6963 = vadd.f32 %v6953, 0.0
  %v6964 = vadd.f32 %v6954, 0.0
  %v6965 = vadd.f32 %v6955, 0.0
  %v6966 = vadd.f32 %v6956, 0.0
  %v6967 = vadd.f32 %v6957, 0.0
  %v6968 = vadd.f32 %v6958, 0.0
  %v6969 = vadd.f32 %v6959, 0.0
  %v6970 = vadd.f32 %v6960, 0.0
  %v6971 = vld [vmem:[%s91 + $0x1] sm:$0x1]
  %v6972 = vlaneseq
  %v6973 = vshrl.u32 %v6972, 7
  %v6974 = vsub.s32 0, %v6973
  %v6975 = vrot.slane %v6971, %v6974
  %6977 = vrot.lane.b32.xlu0 %v6975, 60
  %v6978 = vpop.permute.xlu0 %6977
  %v6980 = vmul.f32 %v6912, %v6978
  %v6981 = vmul.f32 %v6913, %v6978
  %v6982 = vmul.f32 %v6914, %v6978
  %6983 = vset.pattern.permute.xlu0 1
  %6984 = vperm.xlu0 %6983, %v6927
  %v6985 = vpop.permute.xlu0 %6984
  %6987 = vset.pattern.permute.xlu0 1
  %6988 = vperm.xlu0 %6987, %v6928
  %v6989 = vpop.permute.xlu0 %6988
  %6991 = vset.pattern.permute.xlu0 1
  %6992 = vperm.xlu0 %6991, %v6929
  %v6993 = vpop.permute.xlu0 %6992
  %v6995 = vmul.f32 %v6980, %v6985
  %v6996 = vmul.f32 %v6981, %v6989
  %v6997 = vmul.f32 %v6982, %v6993
  %7001 = vrot.lane.b32.xlu0 %v6995, 31
  %v7002 = vpop.permute.xlu0 %7001
  %7003 = vrot.lane.b32.xlu0 %v6996, 31
  %v7004 = vpop.permute.xlu0 %7003
  %7005 = vrot.lane.b32.xlu0 %v6997, 31
  %v7006 = vpop.permute.xlu0 %7005
  %v7010 = vadd.f32 %v6948, %v7002
  %v7011 = vadd.f32 %v6949, %v7004
  %v7012 = vadd.f32 %v6950, %v7006
  %v7013 = vmul.f32 %v6762, %v6978
  %v7014 = vmul.f32 %v6765, %v6978
  %v7015 = vmul.f32 %v6770, %v6978
  %v7016 = vmul.f32 %v6773, %v6978
  %v7017 = vmul.f32 %v6778, %v6978
  %v7018 = vmul.f32 %v6781, %v6978
  %v7019 = vmul.f32 %v6786, %v6978
  %v7020 = vmul.f32 %v6789, %v6978
  %v7021 = vmul.f32 %v6794, %v6978
  %v7022 = vmul.f32 %v6797, %v6978
  %7033 = vrot.lane.b32.xlu0 %v7013, 31
  %v7034 = vpop.permute.xlu0 %7033
  %7035 = vrot.lane.b32.xlu0 %v7014, 31
  %v7036 = vpop.permute.xlu0 %7035
  %7037 = vrot.lane.b32.xlu0 %v7015, 31
  %v7038 = vpop.permute.xlu0 %7037
  %7039 = vrot.lane.b32.xlu0 %v7016, 31
  %v7040 = vpop.permute.xlu0 %7039
  %7041 = vrot.lane.b32.xlu0 %v7017, 31
  %v7042 = vpop.permute.xlu0 %7041
  %7043 = vrot.lane.b32.xlu0 %v7018, 31
  %v7044 = vpop.permute.xlu0 %7043
  %7045 = vrot.lane.b32.xlu0 %v7019, 31
  %v7046 = vpop.permute.xlu0 %7045
  %7047 = vrot.lane.b32.xlu0 %v7020, 31
  %v7048 = vpop.permute.xlu0 %7047
  %7049 = vrot.lane.b32.xlu0 %v7021, 31
  %v7050 = vpop.permute.xlu0 %7049
  %7051 = vrot.lane.b32.xlu0 %v7022, 31
  %v7052 = vpop.permute.xlu0 %7051
  %v7063 = vadd.f32 %v6961, %v7034
  %v7064 = vadd.f32 %v6962, %v7036
  %v7065 = vadd.f32 %v6963, %v7038
  %v7066 = vadd.f32 %v6964, %v7040
  %v7067 = vadd.f32 %v6965, %v7042
  %v7068 = vadd.f32 %v6966, %v7044
  %v7069 = vadd.f32 %v6967, %v7046
  %v7070 = vadd.f32 %v6968, %v7048
  %v7071 = vadd.f32 %v6969, %v7050
  %v7072 = vadd.f32 %v6970, %v7052
  %v7073 = vld [vmem:[%s91 + $0x2] sm:$0x1]
  %v7074 = vlaneseq
  %v7075 = vshrl.u32 %v7074, 7
  %v7076 = vsub.s32 0, %v7075
  %v7077 = vrot.slane %v7073, %v7076
  %7079 = vrot.lane.b32.xlu0 %v7077, 92
  %v7080 = vpop.permute.xlu0 %7079
  %v7082 = vmul.f32 %v6912, %v7080
  %v7083 = vmul.f32 %v6913, %v7080
  %v7084 = vmul.f32 %v6914, %v7080
  %7085 = vset.pattern.permute.xlu0 2
  %7086 = vperm.xlu0 %7085, %v6927
  %v7087 = vpop.permute.xlu0 %7086
  %7089 = vset.pattern.permute.xlu0 2
  %7090 = vperm.xlu0 %7089, %v6928
  %v7091 = vpop.permute.xlu0 %7090
  %7093 = vset.pattern.permute.xlu0 2
  %7094 = vperm.xlu0 %7093, %v6929
  %v7095 = vpop.permute.xlu0 %7094
  %v7097 = vmul.f32 %v7082, %v7087
  %v7098 = vmul.f32 %v7083, %v7091
  %v7099 = vmul.f32 %v7084, %v7095
  %7103 = vrot.lane.b32.xlu0 %v7097, 127
  %v7104 = vpop.permute.xlu0 %7103
  %7105 = vrot.lane.b32.xlu0 %v7098, 127
  %v7106 = vpop.permute.xlu0 %7105
  %7107 = vrot.lane.b32.xlu0 %v7099, 127
  %v7108 = vpop.permute.xlu0 %7107
  %v7112 = vadd.f32 %v7010, %v7104
  %v7113 = vadd.f32 %v7011, %v7106
  %v7114 = vadd.f32 %v7012, %v7108
  %v7115 = vmul.f32 %v6762, %v7080
  %v7116 = vmul.f32 %v6765, %v7080
  %v7117 = vmul.f32 %v6770, %v7080
  %v7118 = vmul.f32 %v6773, %v7080
  %v7119 = vmul.f32 %v6778, %v7080
  %v7120 = vmul.f32 %v6781, %v7080
  %v7121 = vmul.f32 %v6786, %v7080
  %v7122 = vmul.f32 %v6789, %v7080
  %v7123 = vmul.f32 %v6794, %v7080
  %v7124 = vmul.f32 %v6797, %v7080
  %7135 = vrot.lane.b32.xlu0 %v7115, 127
  %v7136 = vpop.permute.xlu0 %7135
  %7137 = vrot.lane.b32.xlu0 %v7116, 127
  %v7138 = vpop.permute.xlu0 %7137
  %7139 = vrot.lane.b32.xlu0 %v7117, 127
  %v7140 = vpop.permute.xlu0 %7139
  %7141 = vrot.lane.b32.xlu0 %v7118, 127
  %v7142 = vpop.permute.xlu0 %7141
  %7143 = vrot.lane.b32.xlu0 %v7119, 127
  %v7144 = vpop.permute.xlu0 %7143
  %7145 = vrot.lane.b32.xlu0 %v7120, 127
  %v7146 = vpop.permute.xlu0 %7145
  %7147 = vrot.lane.b32.xlu0 %v7121, 127
  %v7148 = vpop.permute.xlu0 %7147
  %7149 = vrot.lane.b32.xlu0 %v7122, 127
  %v7150 = vpop.permute.xlu0 %7149
  %7151 = vrot.lane.b32.xlu0 %v7123, 127
  %v7152 = vpop.permute.xlu0 %7151
  %7153 = vrot.lane.b32.xlu0 %v7124, 127
  %v7154 = vpop.permute.xlu0 %7153
  %v7165 = vadd.f32 %v7063, %v7136
  %v7166 = vadd.f32 %v7064, %v7138
  %v7167 = vadd.f32 %v7065, %v7140
  %v7168 = vadd.f32 %v7066, %v7142
  %v7169 = vadd.f32 %v7067, %v7144
  %v7170 = vadd.f32 %v7068, %v7146
  %v7171 = vadd.f32 %v7069, %v7148
  %v7172 = vadd.f32 %v7070, %v7150
  %v7173 = vadd.f32 %v7071, %v7152
  %v7174 = vadd.f32 %v7072, %v7154
  %v7175 = vld [vmem:[%s91 + $0x3] sm:$0x1]
  %v7176 = vlaneseq
  %v7177 = vshrl.u32 %v7176, 7
  %v7178 = vsub.s32 0, %v7177
  %v7179 = vrot.slane %v7175, %v7178
  %7181 = vrot.lane.b32.xlu0 %v7179, 31
  %v7182 = vpop.permute.xlu0 %7181
  %v7184 = vmul.f32 %v6912, %v7182
  %v7185 = vmul.f32 %v6913, %v7182
  %v7186 = vmul.f32 %v6914, %v7182
  %7187 = vset.pattern.permute.xlu0 3
  %7188 = vperm.xlu0 %7187, %v6927
  %v7189 = vpop.permute.xlu0 %7188
  %7191 = vset.pattern.permute.xlu0 3
  %7192 = vperm.xlu0 %7191, %v6928
  %v7193 = vpop.permute.xlu0 %7192
  %7195 = vset.pattern.permute.xlu0 3
  %7196 = vperm.xlu0 %7195, %v6929
  %v7197 = vpop.permute.xlu0 %7196
  %v7199 = vmul.f32 %v7184, %v7189
  %v7200 = vmul.f32 %v7185, %v7193
  %v7201 = vmul.f32 %v7186, %v7197
  %7205 = vrot.lane.b32.xlu0 %v7199, 60
  %v7206 = vpop.permute.xlu0 %7205
  %7207 = vrot.lane.b32.xlu0 %v7200, 60
  %v7208 = vpop.permute.xlu0 %7207
  %7209 = vrot.lane.b32.xlu0 %v7201, 60
  %v7210 = vpop.permute.xlu0 %7209
  %v7214 = vadd.f32 %v7112, %v7206
  %v7215 = vadd.f32 %v7113, %v7208
  %v7216 = vadd.f32 %v7114, %v7210
  %v7217 = vmul.f32 %v6762, %v7182
  %v7218 = vmul.f32 %v6765, %v7182
  %v7219 = vmul.f32 %v6770, %v7182
  %v7220 = vmul.f32 %v6773, %v7182
  %v7221 = vmul.f32 %v6778, %v7182
  %v7222 = vmul.f32 %v6781, %v7182
  %v7223 = vmul.f32 %v6786, %v7182
  %v7224 = vmul.f32 %v6789, %v7182
  %v7225 = vmul.f32 %v6794, %v7182
  %v7226 = vmul.f32 %v6797, %v7182
  %7237 = vrot.lane.b32.xlu0 %v7217, 60
  %v7238 = vpop.permute.xlu0 %7237
  %7239 = vrot.lane.b32.xlu0 %v7218, 60
  %v7240 = vpop.permute.xlu0 %7239
  %7241 = vrot.lane.b32.xlu0 %v7219, 60
  %v7242 = vpop.permute.xlu0 %7241
  %7243 = vrot.lane.b32.xlu0 %v7220, 60
  %v7244 = vpop.permute.xlu0 %7243
  %7245 = vrot.lane.b32.xlu0 %v7221, 60
  %v7246 = vpop.permute.xlu0 %7245
  %7247 = vrot.lane.b32.xlu0 %v7222, 60
  %v7248 = vpop.permute.xlu0 %7247
  %7249 = vrot.lane.b32.xlu0 %v7223, 60
  %v7250 = vpop.permute.xlu0 %7249
  %7251 = vrot.lane.b32.xlu0 %v7224, 60
  %v7252 = vpop.permute.xlu0 %7251
  %7253 = vrot.lane.b32.xlu0 %v7225, 60
  %v7254 = vpop.permute.xlu0 %7253
  %7255 = vrot.lane.b32.xlu0 %v7226, 60
  %v7256 = vpop.permute.xlu0 %7255
  %v7267 = vadd.f32 %v7165, %v7238
  %v7268 = vadd.f32 %v7166, %v7240
  %v7269 = vadd.f32 %v7167, %v7242
  %v7270 = vadd.f32 %v7168, %v7244
  %v7271 = vadd.f32 %v7169, %v7246
  %v7272 = vadd.f32 %v7170, %v7248
  %v7273 = vadd.f32 %v7171, %v7250
  %v7274 = vadd.f32 %v7172, %v7252
  %v7275 = vadd.f32 %v7173, %v7254
  %v7276 = vadd.f32 %v7174, %v7256
  %v7277 = vld [vmem:[%s91 + $0x4] sm:$0x1]
  %v7278 = vlaneseq
  %v7279 = vshrl.u32 %v7278, 7
  %v7280 = vsub.s32 0, %v7279
  %v7281 = vrot.slane %v7277, %v7280
  %v7282 = vmul.f32 %v6912, %v7281
  %v7283 = vmul.f32 %v6913, %v7281
  %v7284 = vmul.f32 %v6914, %v7281
  %7285 = vset.pattern.permute.xlu0 4
  %7286 = vperm.xlu0 %7285, %v6927
  %v7287 = vpop.permute.xlu0 %7286
  %7289 = vset.pattern.permute.xlu0 4
  %7290 = vperm.xlu0 %7289, %v6928
  %v7291 = vpop.permute.xlu0 %7290
  %7293 = vset.pattern.permute.xlu0 4
  %7294 = vperm.xlu0 %7293, %v6929
  %v7295 = vpop.permute.xlu0 %7294
  %v7297 = vmul.f32 %v7282, %v7287
  %v7298 = vmul.f32 %v7283, %v7291
  %v7299 = vmul.f32 %v7284, %v7295
  %7303 = vrot.lane.b32.xlu0 %v7297, 91
  %v7304 = vpop.permute.xlu0 %7303
  %7305 = vrot.lane.b32.xlu0 %v7298, 91
  %v7306 = vpop.permute.xlu0 %7305
  %7307 = vrot.lane.b32.xlu0 %v7299, 91
  %v7308 = vpop.permute.xlu0 %7307
  %v7312 = vadd.f32 %v7214, %v7304
  %v7313 = vadd.f32 %v7215, %v7306
  %v7314 = vadd.f32 %v7216, %v7308
  %v7315 = vmul.f32 %v6762, %v7281
  %v7316 = vmul.f32 %v6765, %v7281
  %v7317 = vmul.f32 %v6770, %v7281
  %v7318 = vmul.f32 %v6773, %v7281
  %v7319 = vmul.f32 %v6778, %v7281
  %v7320 = vmul.f32 %v6781, %v7281
  %v7321 = vmul.f32 %v6786, %v7281
  %v7322 = vmul.f32 %v6789, %v7281
  %v7323 = vmul.f32 %v6794, %v7281
  %v7324 = vmul.f32 %v6797, %v7281
  %7335 = vrot.lane.b32.xlu0 %v7315, 91
  %v7336 = vpop.permute.xlu0 %7335
  %7337 = vrot.lane.b32.xlu0 %v7316, 91
  %v7338 = vpop.permute.xlu0 %7337
  %7339 = vrot.lane.b32.xlu0 %v7317, 91
  %v7340 = vpop.permute.xlu0 %7339
  %7341 = vrot.lane.b32.xlu0 %v7318, 91
  %v7342 = vpop.permute.xlu0 %7341
  %7343 = vrot.lane.b32.xlu0 %v7319, 91
  %v7344 = vpop.permute.xlu0 %7343
  %7345 = vrot.lane.b32.xlu0 %v7320, 91
  %v7346 = vpop.permute.xlu0 %7345
  %7347 = vrot.lane.b32.xlu0 %v7321, 91
  %v7348 = vpop.permute.xlu0 %7347
  %7349 = vrot.lane.b32.xlu0 %v7322, 91
  %v7350 = vpop.permute.xlu0 %7349
  %7351 = vrot.lane.b32.xlu0 %v7323, 91
  %v7352 = vpop.permute.xlu0 %7351
  %7353 = vrot.lane.b32.xlu0 %v7324, 91
  %v7354 = vpop.permute.xlu0 %7353
  %v7365 = vadd.f32 %v7267, %v7336
  %v7366 = vadd.f32 %v7268, %v7338
  %v7367 = vadd.f32 %v7269, %v7340
  %v7368 = vadd.f32 %v7270, %v7342
  %v7369 = vadd.f32 %v7271, %v7344
  %v7370 = vadd.f32 %v7272, %v7346
  %v7371 = vadd.f32 %v7273, %v7348
  %v7372 = vadd.f32 %v7274, %v7350
  %v7373 = vadd.f32 %v7275, %v7352
  %v7374 = vadd.f32 %v7276, %v7354
  %v7375 = vld [vmem:[%s91 + $0x5] sm:$0x1]
  %v7376 = vlaneseq
  %v7377 = vshrl.u32 %v7376, 7
  %v7378 = vsub.s32 0, %v7377
  %v7379 = vrot.slane %v7375, %v7378
  %7381 = vrot.lane.b32.xlu0 %v7379, 32
  %v7382 = vpop.permute.xlu0 %7381
  %v7384 = vmul.f32 %v6912, %v7382
  %v7385 = vmul.f32 %v6913, %v7382
  %v7386 = vmul.f32 %v6914, %v7382
  %7387 = vset.pattern.permute.xlu0 5
  %7388 = vperm.xlu0 %7387, %v6927
  %v7389 = vpop.permute.xlu0 %7388
  %7391 = vset.pattern.permute.xlu0 5
  %7392 = vperm.xlu0 %7391, %v6928
  %v7393 = vpop.permute.xlu0 %7392
  %7395 = vset.pattern.permute.xlu0 5
  %7396 = vperm.xlu0 %7395, %v6929
  %v7397 = vpop.permute.xlu0 %7396
  %v7399 = vmul.f32 %v7384, %v7389
  %v7400 = vmul.f32 %v7385, %v7393
  %v7401 = vmul.f32 %v7386, %v7397
  %7405 = vrot.lane.b32.xlu0 %v7399, 59
  %v7406 = vpop.permute.xlu0 %7405
  %7407 = vrot.lane.b32.xlu0 %v7400, 59
  %v7408 = vpop.permute.xlu0 %7407
  %7409 = vrot.lane.b32.xlu0 %v7401, 59
  %v7410 = vpop.permute.xlu0 %7409
  %v7414 = vadd.f32 %v7312, %v7406
  %v7415 = vadd.f32 %v7313, %v7408
  %v7416 = vadd.f32 %v7314, %v7410
  %v7417 = vmul.f32 %v6762, %v7382
  %v7418 = vmul.f32 %v6765, %v7382
  %v7419 = vmul.f32 %v6770, %v7382
  %v7420 = vmul.f32 %v6773, %v7382
  %v7421 = vmul.f32 %v6778, %v7382
  %v7422 = vmul.f32 %v6781, %v7382
  %v7423 = vmul.f32 %v6786, %v7382
  %v7424 = vmul.f32 %v6789, %v7382
  %v7425 = vmul.f32 %v6794, %v7382
  %v7426 = vmul.f32 %v6797, %v7382
  %7437 = vrot.lane.b32.xlu0 %v7417, 59
  %v7438 = vpop.permute.xlu0 %7437
  %7439 = vrot.lane.b32.xlu0 %v7418, 59
  %v7440 = vpop.permute.xlu0 %7439
  %7441 = vrot.lane.b32.xlu0 %v7419, 59
  %v7442 = vpop.permute.xlu0 %7441
  %7443 = vrot.lane.b32.xlu0 %v7420, 59
  %v7444 = vpop.permute.xlu0 %7443
  %7445 = vrot.lane.b32.xlu0 %v7421, 59
  %v7446 = vpop.permute.xlu0 %7445
  %7447 = vrot.lane.b32.xlu0 %v7422, 59
  %v7448 = vpop.permute.xlu0 %7447
  %7449 = vrot.lane.b32.xlu0 %v7423, 59
  %v7450 = vpop.permute.xlu0 %7449
  %7451 = vrot.lane.b32.xlu0 %v7424, 59
  %v7452 = vpop.permute.xlu0 %7451
  %7453 = vrot.lane.b32.xlu0 %v7425, 59
  %v7454 = vpop.permute.xlu0 %7453
  %7455 = vrot.lane.b32.xlu0 %v7426, 59
  %v7456 = vpop.permute.xlu0 %7455
  %v7467 = vadd.f32 %v7365, %v7438
  %v7468 = vadd.f32 %v7366, %v7440
  %v7469 = vadd.f32 %v7367, %v7442
  %v7470 = vadd.f32 %v7368, %v7444
  %v7471 = vadd.f32 %v7369, %v7446
  %v7472 = vadd.f32 %v7370, %v7448
  %v7473 = vadd.f32 %v7371, %v7450
  %v7474 = vadd.f32 %v7372, %v7452
  %v7475 = vadd.f32 %v7373, %v7454
  %v7476 = vadd.f32 %v7374, %v7456
  %v7477 = vld [vmem:[%s91 + $0x6] sm:$0x1]
  %v7478 = vlaneseq
  %v7479 = vshrl.u32 %v7478, 7
  %v7480 = vsub.s32 0, %v7479
  %v7481 = vrot.slane %v7477, %v7480
  %7483 = vrot.lane.b32.xlu0 %v7481, 95
  %v7484 = vpop.permute.xlu0 %7483
  %v7486 = vmul.f32 %v6912, %v7484
  %v7487 = vmul.f32 %v6913, %v7484
  %v7488 = vmul.f32 %v6914, %v7484
  %7489 = vset.pattern.permute.xlu0 6
  %7490 = vperm.xlu0 %7489, %v6927
  %v7491 = vpop.permute.xlu0 %7490
  %7493 = vset.pattern.permute.xlu0 6
  %7494 = vperm.xlu0 %7493, %v6928
  %v7495 = vpop.permute.xlu0 %7494
  %7497 = vset.pattern.permute.xlu0 6
  %7498 = vperm.xlu0 %7497, %v6929
  %v7499 = vpop.permute.xlu0 %7498
  %v7501 = vmul.f32 %v7486, %v7491
  %v7502 = vmul.f32 %v7487, %v7495
  %v7503 = vmul.f32 %v7488, %v7499
  %7507 = vrot.lane.b32.xlu0 %v7501, 124
  %v7508 = vpop.permute.xlu0 %7507
  %7509 = vrot.lane.b32.xlu0 %v7502, 124
  %v7510 = vpop.permute.xlu0 %7509
  %7511 = vrot.lane.b32.xlu0 %v7503, 124
  %v7512 = vpop.permute.xlu0 %7511
  %v7516 = vadd.f32 %v7414, %v7508
  %v7517 = vadd.f32 %v7415, %v7510
  %v7518 = vadd.f32 %v7416, %v7512
  %v7519 = vmul.f32 %v6762, %v7484
  %v7520 = vmul.f32 %v6765, %v7484
  %v7521 = vmul.f32 %v6770, %v7484
  %v7522 = vmul.f32 %v6773, %v7484
  %v7523 = vmul.f32 %v6778, %v7484
  %v7524 = vmul.f32 %v6781, %v7484
  %v7525 = vmul.f32 %v6786, %v7484
  %v7526 = vmul.f32 %v6789, %v7484
  %v7527 = vmul.f32 %v6794, %v7484
  %v7528 = vmul.f32 %v6797, %v7484
  %7539 = vrot.lane.b32.xlu0 %v7519, 124
  %v7540 = vpop.permute.xlu0 %7539
  %7541 = vrot.lane.b32.xlu0 %v7520, 124
  %v7542 = vpop.permute.xlu0 %7541
  %7543 = vrot.lane.b32.xlu0 %v7521, 124
  %v7544 = vpop.permute.xlu0 %7543
  %7545 = vrot.lane.b32.xlu0 %v7522, 124
  %v7546 = vpop.permute.xlu0 %7545
  %7547 = vrot.lane.b32.xlu0 %v7523, 124
  %v7548 = vpop.permute.xlu0 %7547
  %7549 = vrot.lane.b32.xlu0 %v7524, 124
  %v7550 = vpop.permute.xlu0 %7549
  %7551 = vrot.lane.b32.xlu0 %v7525, 124
  %v7552 = vpop.permute.xlu0 %7551
  %7553 = vrot.lane.b32.xlu0 %v7526, 124
  %v7554 = vpop.permute.xlu0 %7553
  %7555 = vrot.lane.b32.xlu0 %v7527, 124
  %v7556 = vpop.permute.xlu0 %7555
  %7557 = vrot.lane.b32.xlu0 %v7528, 124
  %v7558 = vpop.permute.xlu0 %7557
  %v7569 = vadd.f32 %v7467, %v7540
  %v7570 = vadd.f32 %v7468, %v7542
  %v7571 = vadd.f32 %v7469, %v7544
  %v7572 = vadd.f32 %v7470, %v7546
  %v7573 = vadd.f32 %v7471, %v7548
  %v7574 = vadd.f32 %v7472, %v7550
  %v7575 = vadd.f32 %v7473, %v7552
  %v7576 = vadd.f32 %v7474, %v7554
  %v7577 = vadd.f32 %v7475, %v7556
  %v7578 = vadd.f32 %v7476, %v7558
  %v7579 = vld [vmem:[%s91 + $0x7] sm:$0x1]
  %v7580 = vlaneseq
  %v7581 = vshrl.u32 %v7580, 7
  %v7582 = vsub.s32 0, %v7581
  %v7583 = vrot.slane %v7579, %v7582
  %7585 = vrot.lane.b32.xlu0 %v7583, 64
  %v7586 = vpop.permute.xlu0 %7585
  %v7588 = vmul.f32 %v6912, %v7586
  %v7589 = vmul.f32 %v6913, %v7586
  %v7590 = vmul.f32 %v6914, %v7586
  %7591 = vset.pattern.permute.xlu0 7
  %7592 = vperm.xlu0 %7591, %v6927
  %v7593 = vpop.permute.xlu0 %7592
  %7595 = vset.pattern.permute.xlu0 7
  %7596 = vperm.xlu0 %7595, %v6928
  %v7597 = vpop.permute.xlu0 %7596
  %7599 = vset.pattern.permute.xlu0 7
  %7600 = vperm.xlu0 %7599, %v6929
  %v7601 = vpop.permute.xlu0 %7600
  %v7603 = vmul.f32 %v7588, %v7593
  %v7604 = vmul.f32 %v7589, %v7597
  %v7605 = vmul.f32 %v7590, %v7601
  %7609 = vrot.lane.b32.xlu0 %v7603, 27
  %v7610 = vpop.permute.xlu0 %7609
  %7611 = vrot.lane.b32.xlu0 %v7604, 27
  %v7612 = vpop.permute.xlu0 %7611
  %7613 = vrot.lane.b32.xlu0 %v7605, 27
  %v7614 = vpop.permute.xlu0 %7613
  %v7618 = vadd.f32 %v7516, %v7610
  %v7619 = vadd.f32 %v7517, %v7612
  %v7620 = vadd.f32 %v7518, %v7614
  %v7621 = vmul.f32 %v6762, %v7586
  %v7622 = vmul.f32 %v6765, %v7586
  %v7623 = vmul.f32 %v6770, %v7586
  %v7624 = vmul.f32 %v6773, %v7586
  %v7625 = vmul.f32 %v6778, %v7586
  %v7626 = vmul.f32 %v6781, %v7586
  %v7627 = vmul.f32 %v6786, %v7586
  %v7628 = vmul.f32 %v6789, %v7586
  %v7629 = vmul.f32 %v6794, %v7586
  %v7630 = vmul.f32 %v6797, %v7586
  %7641 = vrot.lane.b32.xlu0 %v7621, 27
  %v7642 = vpop.permute.xlu0 %7641
  %7643 = vrot.lane.b32.xlu0 %v7622, 27
  %v7644 = vpop.permute.xlu0 %7643
  %7645 = vrot.lane.b32.xlu0 %v7623, 27
  %v7646 = vpop.permute.xlu0 %7645
  %7647 = vrot.lane.b32.xlu0 %v7624, 27
  %v7648 = vpop.permute.xlu0 %7647
  %7649 = vrot.lane.b32.xlu0 %v7625, 27
  %v7650 = vpop.permute.xlu0 %7649
  %7651 = vrot.lane.b32.xlu0 %v7626, 27
  %v7652 = vpop.permute.xlu0 %7651
  %7653 = vrot.lane.b32.xlu0 %v7627, 27
  %v7654 = vpop.permute.xlu0 %7653
  %7655 = vrot.lane.b32.xlu0 %v7628, 27
  %v7656 = vpop.permute.xlu0 %7655
  %7657 = vrot.lane.b32.xlu0 %v7629, 27
  %v7658 = vpop.permute.xlu0 %7657
  %7659 = vrot.lane.b32.xlu0 %v7630, 27
  %v7660 = vpop.permute.xlu0 %7659
  %v7671 = vadd.f32 %v7569, %v7642
  %v7672 = vadd.f32 %v7570, %v7644
  %v7673 = vadd.f32 %v7571, %v7646
  %v7674 = vadd.f32 %v7572, %v7648
  %v7675 = vadd.f32 %v7573, %v7650
  %v7676 = vadd.f32 %v7574, %v7652
  %v7677 = vadd.f32 %v7575, %v7654
  %v7678 = vadd.f32 %v7576, %v7656
  %v7679 = vadd.f32 %v7577, %v7658
  %v7680 = vadd.f32 %v7578, %v7660
  %v7681 = vld [vmem:[%s91 + $0x8] sm:$0x1]
  %v7682 = vlaneseq
  %v7683 = vshrl.u32 %v7682, 7
  %v7684 = vsub.s32 0, %v7683
  %v7685 = vrot.slane %v7681, %v7684
  %7687 = vrot.lane.b32.xlu0 %v7685, 96
  %v7688 = vpop.permute.xlu0 %7687
  %v7690 = vmul.f32 %v6912, %v7688
  %v7691 = vmul.f32 %v6913, %v7688
  %v7692 = vmul.f32 %v6914, %v7688
  %7693 = vset.pattern.permute.xlu0 8
  %7694 = vperm.xlu0 %7693, %v6927
  %v7695 = vpop.permute.xlu0 %7694
  %7697 = vset.pattern.permute.xlu0 8
  %7698 = vperm.xlu0 %7697, %v6928
  %v7699 = vpop.permute.xlu0 %7698
  %7701 = vset.pattern.permute.xlu0 8
  %7702 = vperm.xlu0 %7701, %v6929
  %v7703 = vpop.permute.xlu0 %7702
  %v7705 = vmul.f32 %v7690, %v7695
  %v7706 = vmul.f32 %v7691, %v7699
  %v7707 = vmul.f32 %v7692, %v7703
  %7711 = vrot.lane.b32.xlu0 %v7705, 123
  %v7712 = vpop.permute.xlu0 %7711
  %7713 = vrot.lane.b32.xlu0 %v7706, 123
  %v7714 = vpop.permute.xlu0 %7713
  %7715 = vrot.lane.b32.xlu0 %v7707, 123
  %v7716 = vpop.permute.xlu0 %7715
  %v7720 = vadd.f32 %v7618, %v7712
  %v7721 = vadd.f32 %v7619, %v7714
  %v7722 = vadd.f32 %v7620, %v7716
  %v7723 = vmul.f32 %v6762, %v7688
  %v7724 = vmul.f32 %v6765, %v7688
  %v7725 = vmul.f32 %v6770, %v7688
  %v7726 = vmul.f32 %v6773, %v7688
  %v7727 = vmul.f32 %v6778, %v7688
  %v7728 = vmul.f32 %v6781, %v7688
  %v7729 = vmul.f32 %v6786, %v7688
  %v7730 = vmul.f32 %v6789, %v7688
  %v7731 = vmul.f32 %v6794, %v7688
  %v7732 = vmul.f32 %v6797, %v7688
  %7743 = vrot.lane.b32.xlu0 %v7723, 123
  %v7744 = vpop.permute.xlu0 %7743
  %7745 = vrot.lane.b32.xlu0 %v7724, 123
  %v7746 = vpop.permute.xlu0 %7745
  %7747 = vrot.lane.b32.xlu0 %v7725, 123
  %v7748 = vpop.permute.xlu0 %7747
  %7749 = vrot.lane.b32.xlu0 %v7726, 123
  %v7750 = vpop.permute.xlu0 %7749
  %7751 = vrot.lane.b32.xlu0 %v7727, 123
  %v7752 = vpop.permute.xlu0 %7751
  %7753 = vrot.lane.b32.xlu0 %v7728, 123
  %v7754 = vpop.permute.xlu0 %7753
  %7755 = vrot.lane.b32.xlu0 %v7729, 123
  %v7756 = vpop.permute.xlu0 %7755
  %7757 = vrot.lane.b32.xlu0 %v7730, 123
  %v7758 = vpop.permute.xlu0 %7757
  %7759 = vrot.lane.b32.xlu0 %v7731, 123
  %v7760 = vpop.permute.xlu0 %7759
  %7761 = vrot.lane.b32.xlu0 %v7732, 123
  %v7762 = vpop.permute.xlu0 %7761
  %v7773 = vadd.f32 %v7671, %v7744
  %v7774 = vadd.f32 %v7672, %v7746
  %v7775 = vadd.f32 %v7673, %v7748
  %v7776 = vadd.f32 %v7674, %v7750
  %v7777 = vadd.f32 %v7675, %v7752
  %v7778 = vadd.f32 %v7676, %v7754
  %v7779 = vadd.f32 %v7677, %v7756
  %v7780 = vadd.f32 %v7678, %v7758
  %v7781 = vadd.f32 %v7679, %v7760
  %v7782 = vadd.f32 %v7680, %v7762
  %v7783 = vld [vmem:[%s81] sm:$0xff]
  %v7784 = vld [vmem:[%s81 + $0x8] sm:$0xff]
  %v7785 = vld [vmem:[%s81 + $0x10] sm:$0xf]
  %7787 = vset.pattern.permute.xlu0 0
  %7788 = vperm.xlu0 %7787, %v7783
  %v7789 = vpop.permute.xlu0 %7788
  %7792 = vset.pattern.permute.xlu0 0
  %7793 = vperm.xlu0 %7792, %v7784
  %v7794 = vpop.permute.xlu0 %7793
  %7797 = vset.pattern.permute.xlu0 0
  %7798 = vperm.xlu0 %7797, %v7785
  %v7799 = vpop.permute.xlu0 %7798
  %v7801 = vmul.f32 %v7720, %v7789
  %v7802 = vmul.f32 %v7721, %v7794
  %v7803 = vmul.f32 %v7722, %v7799
  %v7804 = vld [vmem:[%s83] sm:$0xff]
  %v7805 = vld [vmem:[%s83 + $0x8] sm:$0xff]
  %v7806 = vld [vmem:[%s83 + $0x10] sm:$0xf]
  %7808 = vset.pattern.permute.xlu0 0
  %7809 = vperm.xlu0 %7808, %v7804
  %v7810 = vpop.permute.xlu0 %7809
  %7813 = vset.pattern.permute.xlu0 0
  %7814 = vperm.xlu0 %7813, %v7805
  %v7815 = vpop.permute.xlu0 %7814
  %7818 = vset.pattern.permute.xlu0 0
  %7819 = vperm.xlu0 %7818, %v7806
  %v7820 = vpop.permute.xlu0 %7819
  %v7822 = vadd.f32 %v7801, %v7810
  %v7823 = vadd.f32 %v7802, %v7815
  %v7824 = vadd.f32 %v7803, %v7820
  %v7825 = vmax.f32 %v7822, 0.0
  %v7826 = vmax.f32 %v7823, 0.0
  %v7827 = vmax.f32 %v7824, 0.0
  %v7828 = vmul.f32 %v7773, 0.11111111
  %v7829 = vmul.f32 %v7774, 0.11111111
  %v7830 = vmul.f32 %v7775, 0.11111111
  %v7831 = vmul.f32 %v7776, 0.11111111
  %v7832 = vmul.f32 %v7777, 0.11111111
  %v7833 = vmul.f32 %v7778, 0.11111111
  %v7834 = vmul.f32 %v7779, 0.11111111
  %v7835 = vmul.f32 %v7780, 0.11111111
  %v7836 = vmul.f32 %v7781, 0.11111111
  %v7837 = vmul.f32 %v7782, 0.11111111
  %v7838 = vmax.f32 %v7828, 0.0
  %v7839 = vmax.f32 %v7829, 0.0
  %v7840 = vmax.f32 %v7830, 0.0
  %v7841 = vmax.f32 %v7831, 0.0
  %v7842 = vmax.f32 %v7832, 0.0
  %v7843 = vmax.f32 %v7833, 0.0
  %v7844 = vmax.f32 %v7834, 0.0
  %v7845 = vmax.f32 %v7835, 0.0
  %v7846 = vmax.f32 %v7836, 0.0
  %v7847 = vmax.f32 %v7837, 0.0
  %v7848 = vld [vmem:[%s85] sm:$0xf]
  %v7849 = vld [vmem:[%s85 + $0x4] sm:$0xf]
  %v7850 = vld [vmem:[%s85 + $0x8] sm:$0xf]
  %v7851 = vld [vmem:[%s85 + $0xc] sm:$0xf]
  %v7852 = vld [vmem:[%s85 + $0x10] sm:$0xf]
  %v7853 = vld [vmem:[%s85 + $0x14] sm:$0xf]
  %v7854 = vld [vmem:[%s85 + $0x18] sm:$0xf]
  %v7855 = vld [vmem:[%s85 + $0x1c] sm:$0xf]
  %v7856 = vld [vmem:[%s85 + $0x20] sm:$0xf]
  %v7857 = vld [vmem:[%s85 + $0x24] sm:$0xf]
  %v7858 = vpack.c.bf16 %v7826, %v7825
  %v7859 = vpack.c.bf16 %v7827, %v7827
  %v7870 = vunpack.c.l.b16 %v7848
  %v7871 = vunpack.c.l.b16 %v7849
  %v7872 = vunpack.c.l.b16 %v7850
  %v7873 = vunpack.c.l.b16 %v7851
  %v7874 = vunpack.c.l.b16 %v7852
  %v7875 = vunpack.c.l.b16 %v7853
  %v7876 = vunpack.c.l.b16 %v7854
  %v7877 = vunpack.c.l.b16 %v7855
  %v7878 = vunpack.c.l.b16 %v7856
  %v7879 = vunpack.c.l.b16 %v7857
  %v7880 = vpack.c.b16 %v7871, %v7870
  %v7881 = vpack.c.b16 %v7873, %v7872
  %v7882 = vpack.c.b16 %v7875, %v7874
  %v7883 = vpack.c.b16 %v7877, %v7876
  %v7884 = vpack.c.b16 %v7879, %v7878
  %7887 = vrot.lane.b32.xlu0 %v7858, 37
  %v7888 = vpop.permute.xlu0 %7887
  %7889 = vrot.lane.b32.xlu0 %v7859, 37
  %v7890 = vpop.permute.xlu0 %7889
  %v7893 = vsel %vm6406, %v7880, 0
  %v7896 = vsel %vm6406, %v7881, 0
  %v7899 = vsel %vm6406, %v7882, 0
  %v7902 = vsel %vm6406, %v7883, 0
  %v7905 = vsel %vm6406, %v7884, 0
  %v7908 = vsel %vm304, %v7890, 0
  %7910 = vmatprep.subr.bf16.mxu0 0
  %7911 = vmatpush1.bf16.msra.mxu0 0
  %7912 = vmatprep.subr.bf16.mxu0 0
  %7913 = vmatpush1.bf16.msra.mxu0 0
  %7914 = vmatprep.subr.bf16.mxu0 0
  %7915 = vmatpush1.bf16.msra.mxu0 0
  %7916 = vmatprep.subr.bf16.mxu0 0
  %7917 = vmatpush1.bf16.msra.mxu0 0
  %7918 = vmatprep.subr.bf16.mxu0 0
  %7919 = vmatpush1.bf16.msra.mxu0 0
  %7920 = vmatprep.subr.bf16.mxu0 0
  %7921 = vmatpush1.bf16.msra.mxu0 0
  %7922 = vmatprep.subr.bf16.mxu0 0
  %7923 = vmatpush1.bf16.msra.mxu0 %v7908
  %7924 = vmatprep.subr.bf16.mxu0 0
  %7925 = vmatpush1.bf16.msra.mxu0 %v7888
  %7926 = vmatprep.subr.bf16.mxu0 0
  %7927 = vmatpush2.bf16.msra.mxu0 0
  %7928 = vmatprep.subr.bf16.mxu0 0
  %7929 = vmatpush2.bf16.msra.mxu0 0
  %7930 = vmatprep.subr.bf16.mxu0 0
  %7931 = vmatpush2.bf16.msra.mxu0 0
  %7932 = vmatprep.subr.bf16.mxu0 0
  %7933 = vmatpush2.bf16.msra.mxu0 0
  %7934 = vmatprep.subr.bf16.mxu0 0
  %7935 = vmatpush2.bf16.msra.mxu0 0
  %7936 = vmatprep.subr.bf16.mxu0 0
  %7937 = vmatpush2.bf16.msra.mxu0 0
  %7938 = vmatprep.subr.bf16.mxu0 0
  %7939 = vmatpush2.bf16.msra.mxu0 0
  %7940 = vmatprep.subr.bf16.mxu0 0
  %7941 = vmatpush2.bf16.msra.mxu0 0
  %7942 = vmatprep.mubr.bf16.mxu0 0
  %7943 = vmatmul.mubr.bf16.gmra.mxu0 %v7893
  %v7944 = vpop.f32.mrf.mxu0
  %v7945 = vadd.f32 0.0, %v7944
  %v7946 = vpop.f32.mrf.mxu0
  %v7947 = vpop.f32.mrf.mxu0
  %v7948 = vadd.f32 0.0, %v7947
  %v7949 = vpop.f32.mrf.mxu0
  %7950 = vmatprep.mubr.bf16.mxu0 0
  %7951 = vmatmul.mubr.bf16.gmra.mxu0 %v7896
  %v7952 = vpop.f32.mrf.mxu0
  %v7953 = vadd.f32 0.0, %v7952
  %v7954 = vpop.f32.mrf.mxu0
  %v7955 = vpop.f32.mrf.mxu0
  %v7956 = vadd.f32 0.0, %v7955
  %v7957 = vpop.f32.mrf.mxu0
  %7958 = vmatprep.mubr.bf16.mxu0 0
  %7959 = vmatmul.mubr.bf16.gmra.mxu0 %v7899
  %v7960 = vpop.f32.mrf.mxu0
  %v7961 = vadd.f32 0.0, %v7960
  %v7962 = vpop.f32.mrf.mxu0
  %v7963 = vpop.f32.mrf.mxu0
  %v7964 = vadd.f32 0.0, %v7963
  %v7965 = vpop.f32.mrf.mxu0
  %7966 = vmatprep.mubr.bf16.mxu0 0
  %7967 = vmatmul.mubr.bf16.gmra.mxu0 %v7902
  %v7968 = vpop.f32.mrf.mxu0
  %v7969 = vadd.f32 0.0, %v7968
  %v7970 = vpop.f32.mrf.mxu0
  %v7971 = vpop.f32.mrf.mxu0
  %v7972 = vadd.f32 0.0, %v7971
  %v7973 = vpop.f32.mrf.mxu0
  %7974 = vmatprep.mubr.bf16.mxu0 0
  %7975 = vmatmul.mubr.bf16.gmra.mxu0 %v7905
  %v7976 = vpop.f32.mrf.mxu0
  %v7977 = vadd.f32 0.0, %v7976
  %v7978 = vpop.f32.mrf.mxu0
  %v7979 = vpop.f32.mrf.mxu0
  %v7980 = vadd.f32 0.0, %v7979
  %v7981 = vpop.f32.mrf.mxu0
  %7982 = vdwg.mxu0
  %v7983 = vld [vmem:[%s87] sm:$0xff]
  %v7984 = vld [vmem:[%s87 + $0x8] sm:$0xff]
  %v7985 = vld [vmem:[%s87 + $0x10] sm:$0xff]
  %v7986 = vld [vmem:[%s87 + $0x18] sm:$0xff]
  %v7987 = vld [vmem:[%s87 + $0x20] sm:$0xff]
  %v7988 = vld [vmem:[%s87 + $0x28] sm:$0xff]
  %v7989 = vld [vmem:[%s87 + $0x30] sm:$0xff]
  %v7990 = vld [vmem:[%s87 + $0x38] sm:$0xff]
  %v7991 = vld [vmem:[%s87 + $0x40] sm:$0xff]
  %v7992 = vld [vmem:[%s87 + $0x48] sm:$0xff]
  %7994 = vset.pattern.permute.xlu0 0
  %7995 = vperm.xlu0 %7994, %v7983
  %v7996 = vpop.permute.xlu0 %7995
  %7999 = vset.pattern.permute.xlu0 0
  %8000 = vperm.xlu0 %7999, %v7984
  %v8001 = vpop.permute.xlu0 %8000
  %8004 = vset.pattern.permute.xlu0 0
  %8005 = vperm.xlu0 %8004, %v7985
  %v8006 = vpop.permute.xlu0 %8005
  %8009 = vset.pattern.permute.xlu0 0
  %8010 = vperm.xlu0 %8009, %v7986
  %v8011 = vpop.permute.xlu0 %8010
  %8014 = vset.pattern.permute.xlu0 0
  %8015 = vperm.xlu0 %8014, %v7987
  %v8016 = vpop.permute.xlu0 %8015
  %8019 = vset.pattern.permute.xlu0 0
  %8020 = vperm.xlu0 %8019, %v7988
  %v8021 = vpop.permute.xlu0 %8020
  %8024 = vset.pattern.permute.xlu0 0
  %8025 = vperm.xlu0 %8024, %v7989
  %v8026 = vpop.permute.xlu0 %8025
  %8029 = vset.pattern.permute.xlu0 0
  %8030 = vperm.xlu0 %8029, %v7990
  %v8031 = vpop.permute.xlu0 %8030
  %8034 = vset.pattern.permute.xlu0 0
  %8035 = vperm.xlu0 %8034, %v7991
  %v8036 = vpop.permute.xlu0 %8035
  %8039 = vset.pattern.permute.xlu0 0
  %8040 = vperm.xlu0 %8039, %v7992
  %v8041 = vpop.permute.xlu0 %8040
  %v8043 = vmul.f32 %v7945, %v7996
  %v8044 = vmul.f32 %v7948, %v8001
  %v8045 = vmul.f32 %v7953, %v8006
  %v8046 = vmul.f32 %v7956, %v8011
  %v8047 = vmul.f32 %v7961, %v8016
  %v8048 = vmul.f32 %v7964, %v8021
  %v8049 = vmul.f32 %v7969, %v8026
  %v8050 = vmul.f32 %v7972, %v8031
  %v8051 = vmul.f32 %v7977, %v8036
  %v8052 = vmul.f32 %v7980, %v8041
  %v8053 = vld [vmem:[%s89] sm:$0xff]
  %v8054 = vld [vmem:[%s89 + $0x8] sm:$0xff]
  %v8055 = vld [vmem:[%s89 + $0x10] sm:$0xff]
  %v8056 = vld [vmem:[%s89 + $0x18] sm:$0xff]
  %v8057 = vld [vmem:[%s89 + $0x20] sm:$0xff]
  %v8058 = vld [vmem:[%s89 + $0x28] sm:$0xff]
  %v8059 = vld [vmem:[%s89 + $0x30] sm:$0xff]
  %v8060 = vld [vmem:[%s89 + $0x38] sm:$0xff]
  %v8061 = vld [vmem:[%s89 + $0x40] sm:$0xff]
  %v8062 = vld [vmem:[%s89 + $0x48] sm:$0xff]
  %8064 = vset.pattern.permute.xlu0 0
  %8065 = vperm.xlu0 %8064, %v8053
  %v8066 = vpop.permute.xlu0 %8065
  %8069 = vset.pattern.permute.xlu0 0
  %8070 = vperm.xlu0 %8069, %v8054
  %v8071 = vpop.permute.xlu0 %8070
  %8074 = vset.pattern.permute.xlu0 0
  %8075 = vperm.xlu0 %8074, %v8055
  %v8076 = vpop.permute.xlu0 %8075
  %8079 = vset.pattern.permute.xlu0 0
  %8080 = vperm.xlu0 %8079, %v8056
  %v8081 = vpop.permute.xlu0 %8080
  %8084 = vset.pattern.permute.xlu0 0
  %8085 = vperm.xlu0 %8084, %v8057
  %v8086 = vpop.permute.xlu0 %8085
  %8089 = vset.pattern.permute.xlu0 0
  %8090 = vperm.xlu0 %8089, %v8058
  %v8091 = vpop.permute.xlu0 %8090
  %8094 = vset.pattern.permute.xlu0 0
  %8095 = vperm.xlu0 %8094, %v8059
  %v8096 = vpop.permute.xlu0 %8095
  %8099 = vset.pattern.permute.xlu0 0
  %8100 = vperm.xlu0 %8099, %v8060
  %v8101 = vpop.permute.xlu0 %8100
  %8104 = vset.pattern.permute.xlu0 0
  %8105 = vperm.xlu0 %8104, %v8061
  %v8106 = vpop.permute.xlu0 %8105
  %8109 = vset.pattern.permute.xlu0 0
  %8110 = vperm.xlu0 %8109, %v8062
  %v8111 = vpop.permute.xlu0 %8110
  %v8113 = vadd.f32 %v8043, %v8066
  %v8114 = vadd.f32 %v8044, %v8071
  %v8115 = vadd.f32 %v8045, %v8076
  %v8116 = vadd.f32 %v8046, %v8081
  %v8117 = vadd.f32 %v8047, %v8086
  %v8118 = vadd.f32 %v8048, %v8091
  %v8119 = vadd.f32 %v8049, %v8096
  %v8120 = vadd.f32 %v8050, %v8101
  %v8121 = vadd.f32 %v8051, %v8106
  %v8122 = vadd.f32 %v8052, %v8111
  %v8123 = vmax.f32 %v8113, 0.0
  %v8124 = vmax.f32 %v8114, 0.0
  %v8125 = vmax.f32 %v8115, 0.0
  %v8126 = vmax.f32 %v8116, 0.0
  %v8127 = vmax.f32 %v8117, 0.0
  %v8128 = vmax.f32 %v8118, 0.0
  %v8129 = vmax.f32 %v8119, 0.0
  %v8130 = vmax.f32 %v8120, 0.0
  %v8131 = vmax.f32 %v8121, 0.0
  %v8132 = vmax.f32 %v8122, 0.0
  %v8133 = vld [vmem:[%s93] sm:$0xff]
  %v8134 = vld [vmem:[%s93 + $0x8] sm:$0xff]
  %v8135 = vld [vmem:[%s93 + $0x10] sm:$0xff]
  %v8136 = vld [vmem:[%s93 + $0x18] sm:$0xff]
  %v8137 = vld [vmem:[%s95] sm:$0xff]
  %v8138 = vld [vmem:[%s95 + $0x8] sm:$0xff]
  %v8139 = vld [vmem:[%s95 + $0x10] sm:$0x3]
  %v8140 = vld [vmem:[%s95 + $0x18] sm:$0x3]
  %v8141 = vld [vmem:[%s97] sm:$0xff]
  %v8142 = vld [vmem:[%s97 + $0x8] sm:$0x3]
  %vm8143 = vcmask 261120
  %v8145 = vsel %vm8143, %v8123, 0
  %v8148 = vsel %vm8143, %v8124, 0
  %v8151 = vsel %vm8143, %v8125, 0
  %v8154 = vsel %vm8143, %v8126, 0
  %v8157 = vsel %vm8143, %v8127, 0
  %v8160 = vsel %vm8143, %v8128, 0
  %v8163 = vsel %vm8143, %v8129, 0
  %v8166 = vsel %vm8143, %v8130, 0
  %v8169 = vsel %vm8143, %v8131, 0
  %v8172 = vsel %vm8143, %v8132, 0
  %8174 = vmatprep.subr.mxu0 0.0
  %8175 = vmatpush1.msra.mxu0 0.0
  %8176 = vmatprep.subr.mxu0 0.0
  %8177 = vmatpush1.msra.mxu0 0.0
  %8178 = vmatprep.subr.mxu0 0.0
  %8179 = vmatpush1.msra.mxu0 0.0
  %8180 = vmatprep.subr.mxu0 0.0
  %8181 = vmatpush1.msra.mxu0 0.0
  %8182 = vmatprep.subr.mxu0 0.0
  %8183 = vmatpush1.msra.mxu0 0.0
  %8184 = vmatprep.subr.mxu0 0.0
  %8185 = vmatpush1.msra.mxu0 0.0
  %8186 = vmatprep.subr.mxu0 0.0
  %8187 = vmatpush1.msra.mxu0 0.0
  %8188 = vmatprep.subr.mxu0 0.0
  %8189 = vmatpush1.msra.mxu0 0.0
  %8190 = vmatprep.subr.mxu0 0.0
  %8191 = vmatpush1.msra.mxu0 0.0
  %8192 = vmatprep.subr.mxu0 0.0
  %8193 = vmatpush1.msra.mxu0 0.0
  %8194 = vmatprep.subr.mxu0 0.0
  %8195 = vmatpush1.msra.mxu0 0.0
  %8196 = vmatprep.subr.mxu0 0.0
  %8197 = vmatpush1.msra.mxu0 0.0
  %8198 = vmatprep.subr.mxu0 0.0
  %8199 = vmatpush1.msra.mxu0 %v8136
  %8200 = vmatprep.subr.mxu0 0.0
  %8201 = vmatpush1.msra.mxu0 %v8135
  %8202 = vmatprep.subr.mxu0 0.0
  %8203 = vmatpush1.msra.mxu0 %v8134
  %8204 = vmatprep.subr.mxu0 0.0
  %8205 = vmatpush1.msra.mxu0 %v8133
  %8206 = vmatprep.subr.mxu0 0.0
  %8207 = vmatpush2.msra.mxu0 0.0
  %8208 = vmatprep.subr.mxu0 0.0
  %8209 = vmatpush2.msra.mxu0 0.0
  %8210 = vmatprep.subr.mxu0 0.0
  %8211 = vmatpush2.msra.mxu0 0.0
  %8212 = vmatprep.subr.mxu0 0.0
  %8213 = vmatpush2.msra.mxu0 0.0
  %8214 = vmatprep.subr.mxu0 0.0
  %8215 = vmatpush2.msra.mxu0 0.0
  %8216 = vmatprep.subr.mxu0 0.0
  %8217 = vmatpush2.msra.mxu0 0.0
  %8218 = vmatprep.subr.mxu0 0.0
  %8219 = vmatpush2.msra.mxu0 0.0
  %8220 = vmatprep.subr.mxu0 0.0
  %8221 = vmatpush2.msra.mxu0 0.0
  %8222 = vmatprep.subr.mxu0 0.0
  %8223 = vmatpush2.msra.mxu0 0.0
  %8224 = vmatprep.subr.mxu0 0.0
  %8225 = vmatpush2.msra.mxu0 0.0
  %8226 = vmatprep.subr.mxu0 0.0
  %8227 = vmatpush2.msra.mxu0 0.0
  %8228 = vmatprep.subr.mxu0 0.0
  %8229 = vmatpush2.msra.mxu0 0.0
  %8230 = vmatprep.subr.mxu0 0.0
  %8231 = vmatpush2.msra.mxu0 0.0
  %8232 = vmatprep.subr.mxu0 0.0
  %8233 = vmatpush2.msra.mxu0 0.0
  %8234 = vmatprep.subr.mxu0 0.0
  %8235 = vmatpush2.msra.mxu0 0.0
  %8236 = vmatprep.subr.mxu0 0.0
  %8237 = vmatpush2.msra.mxu0 0.0
  %8238 = vmatprep.mubr.f32.mxu0 0.0
  %8239 = vmatmul.mubr.f32.gmra.mxu0 %v8145
  %v8240 = vpop.f32.mrf.mxu0
  %v8241 = vadd.f32 0.0, %v8240
  %v8242 = vpop.f32.mrf.mxu0
  %8243 = vmatprep.mubr.f32.mxu0 0.0
  %8244 = vmatmul.mubr.f32.gmra.mxu0 %v8148
  %v8245 = vpop.f32.mrf.mxu0
  %v8246 = vadd.f32 0.0, %v8245
  %v8247 = vpop.f32.mrf.mxu0
  %8248 = vmatprep.mubr.f32.mxu0 0.0
  %8249 = vmatmul.mubr.f32.gmra.mxu0 %v8151
  %v8250 = vpop.f32.mrf.mxu0
  %v8251 = vadd.f32 0.0, %v8250
  %v8252 = vpop.f32.mrf.mxu0
  %8253 = vmatprep.mubr.f32.mxu0 0.0
  %8254 = vmatmul.mubr.f32.gmra.mxu0 %v8154
  %v8255 = vpop.f32.mrf.mxu0
  %v8256 = vadd.f32 0.0, %v8255
  %v8257 = vpop.f32.mrf.mxu0
  %8258 = vmatprep.mubr.f32.mxu0 0.0
  %8259 = vmatmul.mubr.f32.gmra.mxu0 %v8157
  %v8260 = vpop.f32.mrf.mxu0
  %v8261 = vadd.f32 0.0, %v8260
  %v8262 = vpop.f32.mrf.mxu0
  %8263 = vmatprep.mubr.f32.mxu0 0.0
  %8264 = vmatmul.mubr.f32.gmra.mxu0 %v8160
  %v8265 = vpop.f32.mrf.mxu0
  %v8266 = vadd.f32 0.0, %v8265
  %v8267 = vpop.f32.mrf.mxu0
  %8268 = vmatprep.mubr.f32.mxu0 0.0
  %8269 = vmatmul.mubr.f32.gmra.mxu0 %v8163
  %v8270 = vpop.f32.mrf.mxu0
  %v8271 = vadd.f32 0.0, %v8270
  %v8272 = vpop.f32.mrf.mxu0
  %8273 = vmatprep.mubr.f32.mxu0 0.0
  %8274 = vmatmul.mubr.f32.gmra.mxu0 %v8166
  %v8275 = vpop.f32.mrf.mxu0
  %v8276 = vadd.f32 0.0, %v8275
  %v8277 = vpop.f32.mrf.mxu0
  %8278 = vmatprep.mubr.f32.mxu0 0.0
  %8279 = vmatmul.mubr.f32.gmra.mxu0 %v8169
  %v8280 = vpop.f32.mrf.mxu0
  %v8281 = vadd.f32 0.0, %v8280
  %v8282 = vpop.f32.mrf.mxu0
  %8283 = vmatprep.mubr.f32.mxu0 0.0
  %8284 = vmatmul.mubr.f32.gmra.mxu0 %v8172
  %v8285 = vpop.f32.mrf.mxu0
  %v8286 = vadd.f32 0.0, %v8285
  %v8287 = vpop.f32.mrf.mxu0
  %8288 = vdwg.mxu0
  %8299 = vrot.lane.b32.xlu0 %v7838, 37
  %v8300 = vpop.permute.xlu0 %8299
  %8301 = vrot.lane.b32.xlu0 %v7839, 37
  %v8302 = vpop.permute.xlu0 %8301
  %8303 = vrot.lane.b32.xlu0 %v7840, 37
  %v8304 = vpop.permute.xlu0 %8303
  %8305 = vrot.lane.b32.xlu0 %v7841, 37
  %v8306 = vpop.permute.xlu0 %8305
  %8307 = vrot.lane.b32.xlu0 %v7842, 37
  %v8308 = vpop.permute.xlu0 %8307
  %8309 = vrot.lane.b32.xlu0 %v7843, 37
  %v8310 = vpop.permute.xlu0 %8309
  %8311 = vrot.lane.b32.xlu0 %v7844, 37
  %v8312 = vpop.permute.xlu0 %8311
  %8313 = vrot.lane.b32.xlu0 %v7845, 37
  %v8314 = vpop.permute.xlu0 %8313
  %8315 = vrot.lane.b32.xlu0 %v7846, 37
  %v8316 = vpop.permute.xlu0 %8315
  %8317 = vrot.lane.b32.xlu0 %v7847, 37
  %v8318 = vpop.permute.xlu0 %8317
  %v8319 = vsel %vm8143, %v8300, 0
  %v8321 = vsel %vm8143, %v8302, 0
  %v8323 = vsel %vm8143, %v8304, 0
  %v8325 = vsel %vm8143, %v8306, 0
  %v8327 = vsel %vm8143, %v8308, 0
  %v8329 = vsel %vm8143, %v8310, 0
  %v8331 = vsel %vm8143, %v8312, 0
  %v8333 = vsel %vm8143, %v8314, 0
  %v8335 = vsel %vm8143, %v8316, 0
  %v8337 = vsel %vm8143, %v8318, 0
  %8339 = vmatprep.subr.mxu0 0.0
  %8340 = vmatpush1.msra.mxu0 0.0
  %8341 = vmatprep.subr.mxu0 0.0
  %8342 = vmatpush1.msra.mxu0 0.0
  %8343 = vmatprep.subr.mxu0 0.0
  %8344 = vmatpush1.msra.mxu0 0.0
  %8345 = vmatprep.subr.mxu0 0.0
  %8346 = vmatpush1.msra.mxu0 0.0
  %8347 = vmatprep.subr.mxu0 0.0
  %8348 = vmatpush1.msra.mxu0 0.0
  %8349 = vmatprep.subr.mxu0 0.0
  %8350 = vmatpush1.msra.mxu0 0.0
  %8351 = vmatprep.subr.mxu0 0.0
  %8352 = vmatpush1.msra.mxu0 0.0
  %8353 = vmatprep.subr.mxu0 0.0
  %8354 = vmatpush1.msra.mxu0 0.0
  %8355 = vmatprep.subr.mxu0 0.0
  %8356 = vmatpush1.msra.mxu0 0.0
  %8357 = vmatprep.subr.mxu0 0.0
  %8358 = vmatpush1.msra.mxu0 0.0
  %8359 = vmatprep.subr.mxu0 0.0
  %8360 = vmatpush1.msra.mxu0 0.0
  %8361 = vmatprep.subr.mxu0 0.0
  %8362 = vmatpush1.msra.mxu0 0.0
  %8363 = vmatprep.subr.mxu0 0.0
  %8364 = vmatpush1.msra.mxu0 %v8136
  %8365 = vmatprep.subr.mxu0 0.0
  %8366 = vmatpush1.msra.mxu0 %v8135
  %8367 = vmatprep.subr.mxu0 0.0
  %8368 = vmatpush1.msra.mxu0 %v8134
  %8369 = vmatprep.subr.mxu0 0.0
  %8370 = vmatpush1.msra.mxu0 %v8133
  %8371 = vmatprep.subr.mxu0 0.0
  %8372 = vmatpush2.msra.mxu0 0.0
  %8373 = vmatprep.subr.mxu0 0.0
  %8374 = vmatpush2.msra.mxu0 0.0
  %8375 = vmatprep.subr.mxu0 0.0
  %8376 = vmatpush2.msra.mxu0 0.0
  %8377 = vmatprep.subr.mxu0 0.0
  %8378 = vmatpush2.msra.mxu0 0.0
  %8379 = vmatprep.subr.mxu0 0.0
  %8380 = vmatpush2.msra.mxu0 0.0
  %8381 = vmatprep.subr.mxu0 0.0
  %8382 = vmatpush2.msra.mxu0 0.0
  %8383 = vmatprep.subr.mxu0 0.0
  %8384 = vmatpush2.msra.mxu0 0.0
  %8385 = vmatprep.subr.mxu0 0.0
  %8386 = vmatpush2.msra.mxu0 0.0
  %8387 = vmatprep.subr.mxu0 0.0
  %8388 = vmatpush2.msra.mxu0 0.0
  %8389 = vmatprep.subr.mxu0 0.0
  %8390 = vmatpush2.msra.mxu0 0.0
  %8391 = vmatprep.subr.mxu0 0.0
  %8392 = vmatpush2.msra.mxu0 0.0
  %8393 = vmatprep.subr.mxu0 0.0
  %8394 = vmatpush2.msra.mxu0 0.0
  %8395 = vmatprep.subr.mxu0 0.0
  %8396 = vmatpush2.msra.mxu0 0.0
  %8397 = vmatprep.subr.mxu0 0.0
  %8398 = vmatpush2.msra.mxu0 0.0
  %8399 = vmatprep.subr.mxu0 0.0
  %8400 = vmatpush2.msra.mxu0 0.0
  %8401 = vmatprep.subr.mxu0 0.0
  %8402 = vmatpush2.msra.mxu0 0.0
  %8403 = vmatprep.mubr.f32.mxu0 0.0
  %8404 = vmatmul.mubr.f32.gmra.mxu0 %v8319
  %v8405 = vpop.f32.mrf.mxu0
  %v8406 = vadd.f32 0.0, %v8405
  %v8407 = vpop.f32.mrf.mxu0
  %8408 = vmatprep.mubr.f32.mxu0 0.0
  %8409 = vmatmul.mubr.f32.gmra.mxu0 %v8321
  %v8410 = vpop.f32.mrf.mxu0
  %v8411 = vadd.f32 0.0, %v8410
  %v8412 = vpop.f32.mrf.mxu0
  %8413 = vmatprep.mubr.f32.mxu0 0.0
  %8414 = vmatmul.mubr.f32.gmra.mxu0 %v8323
  %v8415 = vpop.f32.mrf.mxu0
  %v8416 = vadd.f32 0.0, %v8415
  %v8417 = vpop.f32.mrf.mxu0
  %8418 = vmatprep.mubr.f32.mxu0 0.0
  %8419 = vmatmul.mubr.f32.gmra.mxu0 %v8325
  %v8420 = vpop.f32.mrf.mxu0
  %v8421 = vadd.f32 0.0, %v8420
  %v8422 = vpop.f32.mrf.mxu0
  %8423 = vmatprep.mubr.f32.mxu0 0.0
  %8424 = vmatmul.mubr.f32.gmra.mxu0 %v8327
  %v8425 = vpop.f32.mrf.mxu0
  %v8426 = vadd.f32 0.0, %v8425
  %v8427 = vpop.f32.mrf.mxu0
  %8428 = vmatprep.mubr.f32.mxu0 0.0
  %8429 = vmatmul.mubr.f32.gmra.mxu0 %v8329
  %v8430 = vpop.f32.mrf.mxu0
  %v8431 = vadd.f32 0.0, %v8430
  %v8432 = vpop.f32.mrf.mxu0
  %8433 = vmatprep.mubr.f32.mxu0 0.0
  %8434 = vmatmul.mubr.f32.gmra.mxu0 %v8331
  %v8435 = vpop.f32.mrf.mxu0
  %v8436 = vadd.f32 0.0, %v8435
  %v8437 = vpop.f32.mrf.mxu0
  %8438 = vmatprep.mubr.f32.mxu0 0.0
  %8439 = vmatmul.mubr.f32.gmra.mxu0 %v8333
  %v8440 = vpop.f32.mrf.mxu0
  %v8441 = vadd.f32 0.0, %v8440
  %v8442 = vpop.f32.mrf.mxu0
  %8443 = vmatprep.mubr.f32.mxu0 0.0
  %8444 = vmatmul.mubr.f32.gmra.mxu0 %v8335
  %v8445 = vpop.f32.mrf.mxu0
  %v8446 = vadd.f32 0.0, %v8445
  %v8447 = vpop.f32.mrf.mxu0
  %8448 = vmatprep.mubr.f32.mxu0 0.0
  %8449 = vmatmul.mubr.f32.gmra.mxu0 %v8337
  %v8450 = vpop.f32.mrf.mxu0
  %v8451 = vadd.f32 0.0, %v8450
  %v8452 = vpop.f32.mrf.mxu0
  %8453 = vdwg.mxu0
  %8458 = vrot.lane.b32.xlu0 %v8137, 48
  %v8459 = vpop.permute.xlu0 %8458
  %8460 = vrot.lane.b32.xlu0 %v8138, 48
  %v8461 = vpop.permute.xlu0 %8460
  %8462 = vrot.lane.b32.xlu0 %v8139, 48
  %v8463 = vpop.permute.xlu0 %8462
  %8464 = vrot.lane.b32.xlu0 %v8140, 48
  %v8465 = vpop.permute.xlu0 %8464
  %vm8466 = vcmask 392192
  %v8467 = vsel %vm8466, %v8459, %v8461
  %v8468 = vsel %vm8466, %v8463, %v8465
  %v8469 = vsel %vm5578, %v8467, 0
  %v8471 = vsel %vm5578, %v8468, 0
  %8473 = vmatprep.subr.mxu0 0.0
  %8474 = vmatpush1.msra.mxu0 0.0
  %8475 = vmatprep.subr.mxu0 0.0
  %8476 = vmatpush1.msra.mxu0 0.0
  %8477 = vmatprep.subr.mxu0 0.0
  %8478 = vmatpush1.msra.mxu0 0.0
  %8479 = vmatprep.subr.mxu0 0.0
  %8480 = vmatpush1.msra.mxu0 0.0
  %8481 = vmatprep.subr.mxu0 0.0
  %8482 = vmatpush1.msra.mxu0 0.0
  %8483 = vmatprep.subr.mxu0 0.0
  %8484 = vmatpush1.msra.mxu0 0.0
  %8485 = vmatprep.subr.mxu0 0.0
  %8486 = vmatpush1.msra.mxu0 %v8451
  %8487 = vmatprep.subr.mxu0 0.0
  %8488 = vmatpush1.msra.mxu0 %v8446
  %8489 = vmatprep.subr.mxu0 0.0
  %8490 = vmatpush1.msra.mxu0 %v8441
  %8491 = vmatprep.subr.mxu0 0.0
  %8492 = vmatpush1.msra.mxu0 %v8436
  %8493 = vmatprep.subr.mxu0 0.0
  %8494 = vmatpush1.msra.mxu0 %v8431
  %8495 = vmatprep.subr.mxu0 0.0
  %8496 = vmatpush1.msra.mxu0 %v8426
  %8497 = vmatprep.subr.mxu0 0.0
  %8498 = vmatpush1.msra.mxu0 %v8421
  %8499 = vmatprep.subr.mxu0 0.0
  %8500 = vmatpush1.msra.mxu0 %v8416
  %8501 = vmatprep.subr.mxu0 0.0
  %8502 = vmatpush1.msra.mxu0 %v8411
  %8503 = vmatprep.subr.mxu0 0.0
  %8504 = vmatpush1.msra.mxu0 %v8406
  %8505 = vmatprep.subr.mxu0 0.0
  %8506 = vmatpush2.msra.mxu0 0.0
  %8507 = vmatprep.subr.mxu0 0.0
  %8508 = vmatpush2.msra.mxu0 0.0
  %8509 = vmatprep.subr.mxu0 0.0
  %8510 = vmatpush2.msra.mxu0 0.0
  %8511 = vmatprep.subr.mxu0 0.0
  %8512 = vmatpush2.msra.mxu0 0.0
  %8513 = vmatprep.subr.mxu0 0.0
  %8514 = vmatpush2.msra.mxu0 0.0
  %8515 = vmatprep.subr.mxu0 0.0
  %8516 = vmatpush2.msra.mxu0 0.0
  %8517 = vmatprep.subr.mxu0 0.0
  %8518 = vmatpush2.msra.mxu0 0.0
  %8519 = vmatprep.subr.mxu0 0.0
  %8520 = vmatpush2.msra.mxu0 0.0
  %8521 = vmatprep.subr.mxu0 0.0
  %8522 = vmatpush2.msra.mxu0 0.0
  %8523 = vmatprep.subr.mxu0 0.0
  %8524 = vmatpush2.msra.mxu0 0.0
  %8525 = vmatprep.subr.mxu0 0.0
  %8526 = vmatpush2.msra.mxu0 0.0
  %8527 = vmatprep.subr.mxu0 0.0
  %8528 = vmatpush2.msra.mxu0 0.0
  %8529 = vmatprep.subr.mxu0 0.0
  %8530 = vmatpush2.msra.mxu0 0.0
  %8531 = vmatprep.subr.mxu0 0.0
  %8532 = vmatpush2.msra.mxu0 0.0
  %8533 = vmatprep.subr.mxu0 0.0
  %8534 = vmatpush2.msra.mxu0 0.0
  %8535 = vmatprep.subr.mxu0 0.0
  %8536 = vmatpush2.msra.mxu0 0.0
  %8537 = vmatprep.mubr.f32.mxu0 0.0
  %8538 = vmatmul.mubr.f32.gmra.mxu0 %v8469
  %v8539 = vpop.f32.mrf.mxu0
  %v8540 = vadd.f32 0.0, %v8539
  %v8541 = vpop.f32.mrf.mxu0
  %8542 = vmatprep.mubr.f32.mxu0 0.0
  %8543 = vmatmul.mubr.f32.gmra.mxu0 %v8471
  %v8544 = vpop.f32.mrf.mxu0
  %v8545 = vadd.f32 0.0, %v8544
  %v8546 = vpop.f32.mrf.mxu0
  %8547 = vdwg.mxu0
  %v8548 = vsel %vm5578, %v8137, 0
  %v8550 = vsel %vm5578, %v8139, 0
  %8552 = vmatprep.subr.mxu0 0.0
  %8553 = vmatpush1.msra.mxu0 0.0
  %8554 = vmatprep.subr.mxu0 0.0
  %8555 = vmatpush1.msra.mxu0 0.0
  %8556 = vmatprep.subr.mxu0 0.0
  %8557 = vmatpush1.msra.mxu0 0.0
  %8558 = vmatprep.subr.mxu0 0.0
  %8559 = vmatpush1.msra.mxu0 0.0
  %8560 = vmatprep.subr.mxu0 0.0
  %8561 = vmatpush1.msra.mxu0 0.0
  %8562 = vmatprep.subr.mxu0 0.0
  %8563 = vmatpush1.msra.mxu0 0.0
  %8564 = vmatprep.subr.mxu0 0.0
  %8565 = vmatpush1.msra.mxu0 %v8286
  %8566 = vmatprep.subr.mxu0 0.0
  %8567 = vmatpush1.msra.mxu0 %v8281
  %8568 = vmatprep.subr.mxu0 0.0
  %8569 = vmatpush1.msra.mxu0 %v8276
  %8570 = vmatprep.subr.mxu0 0.0
  %8571 = vmatpush1.msra.mxu0 %v8271
  %8572 = vmatprep.subr.mxu0 0.0
  %8573 = vmatpush1.msra.mxu0 %v8266
  %8574 = vmatprep.subr.mxu0 0.0
  %8575 = vmatpush1.msra.mxu0 %v8261
  %8576 = vmatprep.subr.mxu0 0.0
  %8577 = vmatpush1.msra.mxu0 %v8256
  %8578 = vmatprep.subr.mxu0 0.0
  %8579 = vmatpush1.msra.mxu0 %v8251
  %8580 = vmatprep.subr.mxu0 0.0
  %8581 = vmatpush1.msra.mxu0 %v8246
  %8582 = vmatprep.subr.mxu0 0.0
  %8583 = vmatpush1.msra.mxu0 %v8241
  %8584 = vmatprep.subr.mxu0 0.0
  %8585 = vmatpush2.msra.mxu0 0.0
  %8586 = vmatprep.subr.mxu0 0.0
  %8587 = vmatpush2.msra.mxu0 0.0
  %8588 = vmatprep.subr.mxu0 0.0
  %8589 = vmatpush2.msra.mxu0 0.0
  %8590 = vmatprep.subr.mxu0 0.0
  %8591 = vmatpush2.msra.mxu0 0.0
  %8592 = vmatprep.subr.mxu0 0.0
  %8593 = vmatpush2.msra.mxu0 0.0
  %8594 = vmatprep.subr.mxu0 0.0
  %8595 = vmatpush2.msra.mxu0 0.0
  %8596 = vmatprep.subr.mxu0 0.0
  %8597 = vmatpush2.msra.mxu0 0.0
  %8598 = vmatprep.subr.mxu0 0.0
  %8599 = vmatpush2.msra.mxu0 0.0
  %8600 = vmatprep.subr.mxu0 0.0
  %8601 = vmatpush2.msra.mxu0 0.0
  %8602 = vmatprep.subr.mxu0 0.0
  %8603 = vmatpush2.msra.mxu0 0.0
  %8604 = vmatprep.subr.mxu0 0.0
  %8605 = vmatpush2.msra.mxu0 0.0
  %8606 = vmatprep.subr.mxu0 0.0
  %8607 = vmatpush2.msra.mxu0 0.0
  %8608 = vmatprep.subr.mxu0 0.0
  %8609 = vmatpush2.msra.mxu0 0.0
  %8610 = vmatprep.subr.mxu0 0.0
  %8611 = vmatpush2.msra.mxu0 0.0
  %8612 = vmatprep.subr.mxu0 0.0
  %8613 = vmatpush2.msra.mxu0 0.0
  %8614 = vmatprep.subr.mxu0 0.0
  %8615 = vmatpush2.msra.mxu0 0.0
  %8616 = vmatprep.mubr.f32.mxu0 0.0
  %8617 = vmatmul.mubr.f32.gmra.mxu0 %v8548
  %v8618 = vpop.f32.mrf.mxu0
  %v8619 = vadd.f32 %v8540, %v8618
  %v8620 = vpop.f32.mrf.mxu0
  %8621 = vmatprep.mubr.f32.mxu0 0.0
  %8622 = vmatmul.mubr.f32.gmra.mxu0 %v8550
  %v8623 = vpop.f32.mrf.mxu0
  %v8624 = vadd.f32 %v8545, %v8623
  %v8625 = vpop.f32.mrf.mxu0
  %8626 = vdwg.mxu0
  %8628 = vset.pattern.permute.xlu0 0
  %8629 = vperm.xlu0 %8628, %v8141
  %v8630 = vpop.permute.xlu0 %8629
  %8633 = vset.pattern.permute.xlu0 0
  %8634 = vperm.xlu0 %8633, %v8142
  %v8635 = vpop.permute.xlu0 %8634
  %v8637 = vadd.f32 %v8619, %v8630
  %v8638 = vadd.f32 %v8624, %v8635
  %vm8639 = vcmask 15360
  %8640 = vst.msk [vmem:[%s99] sm:$0xff] %vm8639, %v8637
  %vm8641 = vcmask 9216
  %8642 = vst.msk [vmem:[%s99 + $0x8] sm:$0x3] %vm8641, %v8638
  // Predicated region
  $region198: #{forward.1} parent=0 // pred_check
    _
  $region199: #{forward.1} parent=0 // pred_check_branch
    %8644 = sbr.rel (0) target = $region201
  $region200: #{forward.1} parent=0 // pred_region
    _
  $region201: #{forward.1} parent=0 // pred_fallthru
    _
  // Predicated region
  $region202: #{forward.1} parent=0 // pred_check
    _
  $region203: #{forward.1} parent=0 // pred_check_branch
    %8646 = sbr.rel (0) target = $region205
  $region204: #{forward.1} parent=0 // pred_region
    _
  $region205: #{forward.1} parent=0 // pred_fallthru
    _

</llo_original>
